<compile_context>
chip_gen: v5e
topology: v5e:2x2
jax: 0.10.0
libtpu: 0.0.40
codegen_flags: <defaults>
</compile_context>

<pallas_src>
import functools

import jax
import jax.numpy as jnp
import numpy as np
from jax.experimental import pallas as pl
from jax.experimental.pallas import tpu as pltpu

D = 8192       # feature dim (skip path in/out)
H = 100        # bottleneck dim
HP = 128       # bottleneck padded to lane width (weights/bias zero-padded)


def _down_kernel(x_ref, wdown_ref, bdown_ref, hid_ref):
    """Single-step kernel: hidden = tanh(x @ Wdown + bdown).  Whole operands
    (x: 256 KiB, Wdown: 4 MiB) fit comfortably in VMEM."""
    hid_ref[...] = jnp.tanh(
        jnp.dot(x_ref[...], wdown_ref[...], preferred_element_type=jnp.float32)
        + bdown_ref[...])


def _hopfield_kernel(x_ref, wskip_ref, bskip_ref, hidden_ref, wup_ref, bup_ref,
                     out_ref):
    """Grid = (NJ, NK): j tiles the 8192 output columns (independent -> can run
    in parallel across TensorCores), k tiles the 8192 contraction dim
    (innermost; the f32 output block is the resident skip-path accumulator)."""
    k = pl.program_id(1)
    nk = pl.num_programs(1)

    # Initialize this output tile with the (broadcast) skip bias.
    @pl.when(k == 0)
    def _():
        out_ref[...] = jnp.broadcast_to(bskip_ref[...], out_ref.shape)

    # Skip path: accumulate x @ Wskip[k-tile, j-tile] on the MXU in f32.
    out_ref[...] += jnp.dot(x_ref[...], wskip_ref[...],
                            preferred_element_type=jnp.float32)

    # Fuse the (cheap) up-projection once the contraction is complete.
    @pl.when(k == nk - 1)
    def _():
        up = jnp.tanh(
            jnp.dot(hidden_ref[...], wup_ref[...],
                    preferred_element_type=jnp.float32) + bup_ref[...])
        out_ref[...] += up


@functools.partial(jax.jit, static_argnames=("tn", "tk"))
def hopfield_xavier_forward(x, wskip, bskip, wdown, bdown, wup, bup,
                            *, tn=1024, tk=2048):
    B, d = x.shape
    assert d == D and wskip.shape == (D, D)
    assert wdown.shape == (D, HP) and wup.shape == (HP, D)
    assert D % tn == 0 and D % tk == 0

    # Bottleneck activation, computed exactly once (reads Wdown a single time).
    hidden = pl.pallas_call(
        _down_kernel,
        out_shape=jax.ShapeDtypeStruct((B, HP), jnp.float32),
    )(x, wdown, bdown)

    nj = D // tn
    nk = D // tk

    grid_spec = pltpu.PrefetchScalarGridSpec(
        num_scalar_prefetch=0,
        grid=(nj, nk),
        in_specs=[
            pl.BlockSpec((B, tk), lambda j, k: (0, k)),    # x (64 KiB tiles)
            pl.BlockSpec((tk, tn), lambda j, k: (k, j)),   # Wskip (8 MiB tiles)
            pl.BlockSpec((1, tn), lambda j, k: (0, j)),    # bskip
            pl.BlockSpec((B, HP), lambda j, k: (0, 0)),    # hidden (resident)
            pl.BlockSpec((HP, tn), lambda j, k: (0, j)),   # Wup
            pl.BlockSpec((1, tn), lambda j, k: (0, j)),    # bup
        ],
        out_specs=pl.BlockSpec((B, tn), lambda j, k: (0, j)),
    )

    return pl.pallas_call(
        _hopfield_kernel,
        out_shape=jax.ShapeDtypeStruct((B, D), jnp.float32),
        grid_spec=grid_spec,
        compiler_params=pltpu.CompilerParams(
            # j tiles are fully independent -> parallel (enables v7x megacore);
            # k is the contraction axis carrying the output accumulator.
            dimension_semantics=("parallel", "arbitrary"),
            # ~17 MiB live set; 48 MiB limit works on v5e/v6e/v7x with headroom.
            vmem_limit_bytes=48 << 20,
        ),
    )(x, wskip, bskip, hidden, wup, bup)


def _init_params(key):
    """Deterministic xavier-uniform-style init in (in, out) layout."""
    k1, k2, k3, k4, k5, k6 = jax.random.split(key, 6)

    def xavier(k, fan_in, fan_out, shape):
        bound = float(np.sqrt(6.0 / (fan_in + fan_out)))
        return jax.random.uniform(k, shape, jnp.float32, -bound, bound)

    wskip = xavier(k1, D, D, (D, D))
    bskip = xavier(k2, D, D, (1, D))
    wdown = xavier(k3, D, H, (D, H))
    bdown = xavier(k4, D, H, (1, H))
    wup = xavier(k5, H, D, (H, D))
    bup = xavier(k6, H, D, (1, D))

    # Pad the bottleneck dim 100 -> 128 with zeros: padded hidden units come
    # out as tanh(0) = 0 and padded Wup rows are zero, so results are unchanged.
    wdown_p = jnp.zeros((D, HP), jnp.float32).at[:, :H].set(wdown)
    bdown_p = jnp.zeros((1, HP), jnp.float32).at[:, :H].set(bdown)
    wup_p = jnp.zeros((HP, D), jnp.float32).at[:H, :].set(wup)

    return wskip, bskip, wdown_p, bdown_p, wup_p, bup


def _reference(x, wskip, bskip, wdown, bdown, wup, bup):
    x_skip = x @ wskip + bskip
    h = jnp.tanh(x @ wdown + bdown)
    h = jnp.tanh(h @ wup + bup)
    return x_skip + h


if __name__ == "__main__":
    key = jax.random.PRNGKey(0)
    kx, kp = jax.random.split(key)

    B = 8  # small batch; feature dims (8192, 100) are fixed by the module
    x = jax.random.normal(kx, (B, D), jnp.float32)
    params = _init_params(kp)

    out = hopfield_xavier_forward(x, *params)
    out = jax.block_until_ready(out)

    ref = jax.block_until_ready(_reference(x, *params))
    np.testing.assert_allclose(np.asarray(out), np.asarray(ref),
                               rtol=2e-4, atol=2e-4)

    print("KERNEL_OK")
</pallas_src>

<mosaic_0001>
module attributes {stable_mosaic.version = 11 : i64} {
  func.func @_down_kernel(%arg0: memref<8x8192xf32, #tpu.memory_space<vmem>>, %arg1: memref<8192x128xf32, #tpu.memory_space<vmem>>, %arg2: memref<1x128xf32, #tpu.memory_space<vmem>>, %arg3: memref<8x128xf32, #tpu.memory_space<vmem>>) attributes {dimension_semantics = [], scalar_prefetch = 0 : i64, scratch_operands = 0 : i64, tpu.core_type = #tpu.core_type<tc>} {
    %c0 = arith.constant 0 : index
    %c0_0 = arith.constant 0 : index
    %0 = vector.load %arg0[%c0, %c0_0] : memref<8x8192xf32, #tpu.memory_space<vmem>>, vector<8x8192xf32>
    %c0_1 = arith.constant 0 : index
    %c0_2 = arith.constant 0 : index
    %1 = vector.load %arg1[%c0_1, %c0_2] : memref<8192x128xf32, #tpu.memory_space<vmem>>, vector<8192x128xf32>
    %cst = arith.constant dense<0.000000e+00> : vector<8x128xf32>
    %2 = tpu.matmul %0, %1, %cst {dimension_numbers = #tpu.dot_dimension_numbers<[1], [0], [0], [1], [0, 0, 1, 1], [], []>} : vector<8x8192xf32>, vector<8192x128xf32>, vector<8x128xf32> -> vector<8x128xf32>
    %c0_3 = arith.constant 0 : index
    %c0_4 = arith.constant 0 : index
    %3 = vector.load %arg2[%c0_3, %c0_4] : memref<1x128xf32, #tpu.memory_space<vmem>>, vector<1x128xf32>
    %4 = vector.broadcast %3 : vector<1x128xf32> to vector<8x128xf32>
    %5 = arith.addf %2, %4 : vector<8x128xf32>
    %6 = math.tanh %5 : vector<8x128xf32>
    %c0_5 = arith.constant 0 : index
    %c0_6 = arith.constant 0 : index
    %7 = vector.load %arg3[%c0_5, %c0_6] : memref<8x128xf32, #tpu.memory_space<vmem>>, vector<8x128xf32>
    tpu.vector_store %arg3[%c0_5, %c0_6], %6 {strides = array<i32>} : memref<8x128xf32, #tpu.memory_space<vmem>>, vector<8x128xf32>,
    return
  }
}

module attributes {stable_mosaic.version = 11 : i64} {
  func.func @_hopfield_kernel(%arg0: i32, %arg1: i32, %arg2: memref<8x2048xf32, #tpu.memory_space<vmem>>, %arg3: memref<2048x1024xf32, #tpu.memory_space<vmem>>, %arg4: memref<1x1024xf32, #tpu.memory_space<vmem>>, %arg5: memref<8x128xf32, #tpu.memory_space<vmem>>, %arg6: memref<128x1024xf32, #tpu.memory_space<vmem>>, %arg7: memref<1x1024xf32, #tpu.memory_space<vmem>>, %arg8: memref<8x1024xf32, #tpu.memory_space<vmem>>) attributes {dimension_semantics = [#tpu.dimension_semantics<parallel>, #tpu.dimension_semantics<arbitrary>], iteration_bounds = array<i64: 8, 4>, scalar_prefetch = 0 : i64, scratch_operands = 0 : i64, tpu.core_type = #tpu.core_type<tc>, window_params = [{transform_indices = @transform_0, window_bounds = array<i64: 8, 2048>}, {transform_indices = @transform_1, window_bounds = array<i64: 2048, 1024>}, {transform_indices = @transform_2, window_bounds = array<i64: 1, 1024>}, {pipeline_mode = #tpu.pipeline_mode<synchronous>, transform_indices = @transform_3, window_bounds = array<i64: 8, 128>}, {transform_indices = @transform_4, window_bounds = array<i64: 128, 1024>}, {transform_indices = @transform_5, window_bounds = array<i64: 1, 1024>}, {transform_indices = @transform_6, window_bounds = array<i64: 8, 1024>}]} {
    %c0_i32 = arith.constant 0 : i32
    %0 = arith.cmpi eq, %arg1, %c0_i32 : i32
    %1 = arith.extui %0 : i1 to i32
    %c0_i32_0 = arith.constant 0 : i32
    %2 = arith.cmpi ne, %1, %c0_i32_0 : i32
    scf.if %2 {
      %c0_9 = arith.constant 0 : index
      %c0_10 = arith.constant 0 : index
      %12 = vector.load %arg4[%c0_9, %c0_10] : memref<1x1024xf32, #tpu.memory_space<vmem>>, vector<1x1024xf32>
      %13 = vector.shape_cast %12 : vector<1x1024xf32> to vector<1x1024xf32>
      %14 = vector.broadcast %13 : vector<1x1024xf32> to vector<8x1024xf32>
      %c0_11 = arith.constant 0 : index
      %c0_12 = arith.constant 0 : index
      %15 = vector.load %arg8[%c0_11, %c0_12] : memref<8x1024xf32, #tpu.memory_space<vmem>>, vector<8x1024xf32>
      tpu.vector_store %arg8[%c0_11, %c0_12], %14 {strides = array<i32>} : memref<8x1024xf32, #tpu.memory_space<vmem>>, vector<8x1024xf32>,
    } else {
    }
    %c0 = arith.constant 0 : index
    %c0_1 = arith.constant 0 : index
    %3 = vector.load %arg8[%c0, %c0_1] : memref<8x1024xf32, #tpu.memory_space<vmem>>, vector<8x1024xf32>
    %c0_2 = arith.constant 0 : index
    %c0_3 = arith.constant 0 : index
    %4 = vector.load %arg2[%c0_2, %c0_3] : memref<8x2048xf32, #tpu.memory_space<vmem>>, vector<8x2048xf32>
    %c0_4 = arith.constant 0 : index
    %c0_5 = arith.constant 0 : index
    %5 = vector.load %arg3[%c0_4, %c0_5] : memref<2048x1024xf32, #tpu.memory_space<vmem>>, vector<2048x1024xf32>
    %cst = arith.constant dense<0.000000e+00> : vector<8x1024xf32>
    %6 = tpu.matmul %4, %5, %cst {dimension_numbers = #tpu.dot_dimension_numbers<[1], [0], [0], [1], [0, 0, 1, 1], [], []>} : vector<8x2048xf32>, vector<2048x1024xf32>, vector<8x1024xf32> -> vector<8x1024xf32>
    %7 = arith.addf %3, %6 : vector<8x1024xf32>
    %c0_6 = arith.constant 0 : index
    %c0_7 = arith.constant 0 : index
    %8 = vector.load %arg8[%c0_6, %c0_7] : memref<8x1024xf32, #tpu.memory_space<vmem>>, vector<8x1024xf32>
    tpu.vector_store %arg8[%c0_6, %c0_7], %7 {strides = array<i32>} : memref<8x1024xf32, #tpu.memory_space<vmem>>, vector<8x1024xf32>,
    %c3_i32 = arith.constant 3 : i32
    %9 = arith.cmpi eq, %arg1, %c3_i32 : i32
    %10 = arith.extui %9 : i1 to i32
    %c0_i32_8 = arith.constant 0 : i32
    %11 = arith.cmpi ne, %10, %c0_i32_8 : i32
    scf.if %11 {
      %c0_9 = arith.constant 0 : index
      %c0_10 = arith.constant 0 : index
      %12 = vector.load %arg5[%c0_9, %c0_10] : memref<8x128xf32, #tpu.memory_space<vmem>>, vector<8x128xf32>
      %c0_11 = arith.constant 0 : index
      %c0_12 = arith.constant 0 : index
      %13 = vector.load %arg6[%c0_11, %c0_12] : memref<128x1024xf32, #tpu.memory_space<vmem>>, vector<128x1024xf32>
      %cst_13 = arith.constant dense<0.000000e+00> : vector<8x1024xf32>
      %14 = tpu.matmul %12, %13, %cst_13 {dimension_numbers = #tpu.dot_dimension_numbers<[1], [0], [0], [1], [0, 0, 1, 1], [], []>} : vector<8x128xf32>, vector<128x1024xf32>, vector<8x1024xf32> -> vector<8x1024xf32>
      %c0_14 = arith.constant 0 : index
      %c0_15 = arith.constant 0 : index
      %15 = vector.load %arg7[%c0_14, %c0_15] : memref<1x1024xf32, #tpu.memory_space<vmem>>, vector<1x1024xf32>
      %16 = vector.broadcast %15 : vector<1x1024xf32> to vector<8x1024xf32>
      %17 = arith.addf %14, %16 : vector<8x1024xf32>
      %18 = math.tanh %17 : vector<8x1024xf32>
      %c0_16 = arith.constant 0 : index
      %c0_17 = arith.constant 0 : index
      %19 = vector.load %arg8[%c0_16, %c0_17] : memref<8x1024xf32, #tpu.memory_space<vmem>>, vector<8x1024xf32>
      %20 = arith.addf %19, %18 : vector<8x1024xf32>
      %c0_18 = arith.constant 0 : index
      %c0_19 = arith.constant 0 : index
      %21 = vector.load %arg8[%c0_18, %c0_19] : memref<8x1024xf32, #tpu.memory_space<vmem>>, vector<8x1024xf32>
      tpu.vector_store %arg8[%c0_18, %c0_19], %20 {strides = array<i32>} : memref<8x1024xf32, #tpu.memory_space<vmem>>, vector<8x1024xf32>,
    } else {
    }
    return
  }
  func.func @transform_0(%arg0: i32, %arg1: i32) -> (i32, i32) {
    %c0_i32 = arith.constant 0 : i32
    %c0_i32_0 = arith.constant 0 : i32
    return %c0_i32, %arg1 : i32, i32
  }
  func.func @transform_1(%arg0: i32, %arg1: i32) -> (i32, i32) {
    %c0_i32 = arith.constant 0 : i32
    return %arg1, %arg0 : i32, i32
  }
  func.func @transform_2(%arg0: i32, %arg1: i32) -> (i32, i32) {
    %c0_i32 = arith.constant 0 : i32
    %c0_i32_0 = arith.constant 0 : i32
    return %c0_i32, %arg0 : i32, i32
  }
  func.func @transform_3(%arg0: i32, %arg1: i32) -> (i32, i32) {
    %c0_i32 = arith.constant 0 : i32
    %c0_i32_0 = arith.constant 0 : i32
    %c0_i32_1 = arith.constant 0 : i32
    return %c0_i32, %c0_i32_0 : i32, i32
  }
  func.func @transform_4(%arg0: i32, %arg1: i32) -> (i32, i32) {
    %c0_i32 = arith.constant 0 : i32
    %c0_i32_0 = arith.constant 0 : i32
    return %c0_i32, %arg0 : i32, i32
  }
  func.func @transform_5(%arg0: i32, %arg1: i32) -> (i32, i32) {
    %c0_i32 = arith.constant 0 : i32
    %c0_i32_0 = arith.constant 0 : i32
    return %c0_i32, %arg0 : i32, i32
  }
  func.func @transform_6(%arg0: i32, %arg1: i32) -> (i32, i32) {
    %c0_i32 = arith.constant 0 : i32
    %c0_i32_0 = arith.constant 0 : i32
    return %c0_i32, %arg0 : i32, i32
  }
}

</mosaic_0001>

<llo_original>
// kernel: hopfield_xavier_forward.2
$region0: #{hopfield_xavier_forward.2}
  #allocation0 [shape = 'u32[]', space=smem, size = 0x4, offset = 0x4, fixed_abs, tag = 'smem constant byte address 0x4 - core index']
  #allocation1 [shape = 'u32[72,128]{1,0:T(1,128)}', space=vmem, size = 0x9000, scoped, tag = 'internal scratch']
  %s0 = inlined_call_operand.hbm [shape: f32[8,8192], index: 0, kind: input, shape index: {}]
  %s1 = inlined_call_operand.hbm [shape: f32[8192,128], index: 1, kind: input, shape index: {}]
  %s2 = inlined_call_operand.hbm [shape: f32[1,128], index: 2, kind: input, shape index: {}]
  %s3 = inlined_call_operand.vmem [shape: f32[8,128], index: 3, kind: output, shape index: {}]
  %s4 = sld [smem:[#allocation0]]
  $region34: #{hopfield_xavier_forward.2} parent=0
    _
  %s6 = ssub.s32 1, %s4
  %s7 = scalar_select 0, %s6, %s4
  $region1: #{hopfield_xavier_forward.2} parent=0
    #allocation2 [shape = 'u8[262144]{0}', space=vmem, size = 0x40000, scoped, tag = 'input window, operand 0, single buffered']
    #allocation3 [shape = 's32[1]{0}', space=sflag, size = 0x4, scoped, tag = 'scoped memory for hopfield_xavier_forward.2']
    #allocation4 [shape = 'u8[4194304]{0}', space=vmem, size = 0x400000, scoped, tag = 'input window, operand 1, single buffered']
    #allocation5 [shape = 's32[1]{0}', space=sflag, size = 0x4, scoped, tag = 'scoped memory for hopfield_xavier_forward.2']
    #allocation6 [shape = 'u8[512]{0}', space=vmem, size = 0x400, scoped, tag = 'input window, operand 2, single buffered']
    %8 = vsyncpa [#allocation3], 0
    %9 = vsyncpa [#allocation5], 0
    // Predicated region
    $region2: #{hopfield_xavier_forward.2} parent=1 // pred_check
      _
    $region3: #{hopfield_xavier_forward.2} parent=1 // pred_check_branch
      %11 = sbr.rel (0) target = $region5
    $region4: #{hopfield_xavier_forward.2} parent=1 // pred_region
      %13 = vsyncadd [#allocation3], 0
      %s15 = sshll.u32 %s0, 4
      %s16 = int_to_ptr.hbm [resolvable:$true] %s15
      %s17 = sshll.u32 [#allocation2], 4
      %s18 = int_to_ptr.vmem [resolvable:$true] %s17
      %20 = dma.hbm_to_vmem [thread:$0]  %s16, 8192, %s18, [#allocation3]
    $region5: #{hopfield_xavier_forward.2} parent=1 // pred_fallthru
      _
    // Predicated region
    $region6: #{hopfield_xavier_forward.2} parent=1 // pred_check
      _
    $region7: #{hopfield_xavier_forward.2} parent=1 // pred_check_branch
      %22 = sbr.rel (0) target = $region9
    $region8: #{hopfield_xavier_forward.2} parent=1 // pred_region
      %24 = vsyncadd [#allocation5], 0
      %s25 = sshll.u32 %s1, 4
      %s26 = int_to_ptr.hbm [resolvable:$true] %s25
      %s27 = sshll.u32 [#allocation4], 4
      %s28 = int_to_ptr.vmem [resolvable:$true] %s27
      %33 = dma.hbm_to_vmem [thread:$0]  %s26, 131072, %s28, [#allocation5], 128, 128, 8
    $region9: #{hopfield_xavier_forward.2} parent=1 // pred_fallthru
      _
    // Predicated region
    $region10: #{hopfield_xavier_forward.2} parent=1 // pred_check
      _
    $region11: #{hopfield_xavier_forward.2} parent=1 // pred_check_branch
      %35 = sbr.rel (0) target = $region13
    $region12: #{hopfield_xavier_forward.2} parent=1 // pred_region
      %37 = vsyncadd [#allocation5], 0
      %s39 = sshll.u32 %s2, 4
      %s40 = int_to_ptr.hbm [resolvable:$true] %s39
      %s41 = sshll.u32 [#allocation6], 4
      %s42 = int_to_ptr.vmem [resolvable:$true] %s41
      %44 = dma.hbm_to_vmem [thread:$0]  %s40, 16, %s42, [#allocation5]
    $region13: #{hopfield_xavier_forward.2} parent=1 // pred_fallthru
      _
    // Predicated region
    $region14: #{hopfield_xavier_forward.2} parent=1 // pred_check
      _
    $region15: #{hopfield_xavier_forward.2} parent=1 // pred_check_branch
      %46 = sbr.rel (0) target = $region17
    $region16: #{hopfield_xavier_forward.2} parent=1 // pred_region
      %48 = dma.done [#allocation3], 8192
    $region17: #{hopfield_xavier_forward.2} parent=1 // pred_fallthru
      _
    // Predicated region
    $region18: #{hopfield_xavier_forward.2} parent=1 // pred_check
      _
    $region19: #{hopfield_xavier_forward.2} parent=1 // pred_check_branch
      %50 = sbr.rel (0) target = $region21
    $region20: #{hopfield_xavier_forward.2} parent=1 // pred_region
      %52 = dma.done [#allocation5], 131072
    $region21: #{hopfield_xavier_forward.2} parent=1 // pred_fallthru
      _
    // Predicated region
    $region22: #{hopfield_xavier_forward.2} parent=1 // pred_check
      _
    $region23: #{hopfield_xavier_forward.2} parent=1 // pred_check_branch
      %54 = sbr.rel (0) target = $region25
    $region24: #{hopfield_xavier_forward.2} parent=1 // pred_region
      %56 = dma.done [#allocation5], 16
    $region25: #{hopfield_xavier_forward.2} parent=1 // pred_fallthru
      _
    %v57 = vld [vmem:[#allocation2] sm:$0xff]
    %v58 = vld [vmem:[#allocation2 + $0x8] sm:$0xff]
    %v59 = vld [vmem:[#allocation2 + $0x10] sm:$0xff]
    %v60 = vld [vmem:[#allocation2 + $0x18] sm:$0xff]
    %v61 = vld [vmem:[#allocation2 + $0x20] sm:$0xff]
    %v62 = vld [vmem:[#allocation2 + $0x28] sm:$0xff]
    %v63 = vld [vmem:[#allocation2 + $0x30] sm:$0xff]
    %v64 = vld [vmem:[#allocation2 + $0x38] sm:$0xff]
    %v65 = vld [vmem:[#allocation2 + $0x40] sm:$0xff]
    %v66 = vld [vmem:[#allocation2 + $0x48] sm:$0xff]
    %v67 = vld [vmem:[#allocation2 + $0x50] sm:$0xff]
    %v68 = vld [vmem:[#allocation2 + $0x58] sm:$0xff]
    %v69 = vld [vmem:[#allocation2 + $0x60] sm:$0xff]
    %v70 = vld [vmem:[#allocation2 + $0x68] sm:$0xff]
    %v71 = vld [vmem:[#allocation2 + $0x70] sm:$0xff]
    %v72 = vld [vmem:[#allocation2 + $0x78] sm:$0xff]
    %v73 = vld [vmem:[#allocation2 + $0x80] sm:$0xff]
    %v74 = vld [vmem:[#allocation2 + $0x88] sm:$0xff]
    %v75 = vld [vmem:[#allocation2 + $0x90] sm:$0xff]
    %v76 = vld [vmem:[#allocation2 + $0x98] sm:$0xff]
    %v77 = vld [vmem:[#allocation2 + $0xa0] sm:$0xff]
    %v78 = vld [vmem:[#allocation2 + $0xa8] sm:$0xff]
    %v79 = vld [vmem:[#allocation2 + $0xb0] sm:$0xff]
    %v80 = vld [vmem:[#allocation2 + $0xb8] sm:$0xff]
    %v81 = vld [vmem:[#allocation2 + $0xc0] sm:$0xff]
    %v82 = vld [vmem:[#allocation2 + $0xc8] sm:$0xff]
    %v83 = vld [vmem:[#allocation2 + $0xd0] sm:$0xff]
    %v84 = vld [vmem:[#allocation2 + $0xd8] sm:$0xff]
    %v85 = vld [vmem:[#allocation2 + $0xe0] sm:$0xff]
    %v86 = vld [vmem:[#allocation2 + $0xe8] sm:$0xff]
    %v87 = vld [vmem:[#allocation2 + $0xf0] sm:$0xff]
    %v88 = vld [vmem:[#allocation2 + $0xf8] sm:$0xff]
    %v89 = vld [vmem:[#allocation2 + $0x100] sm:$0xff]
    %v90 = vld [vmem:[#allocation2 + $0x108] sm:$0xff]
    %v91 = vld [vmem:[#allocation2 + $0x110] sm:$0xff]
    %v92 = vld [vmem:[#allocation2 + $0x118] sm:$0xff]
    %v93 = vld [vmem:[#allocation2 + $0x120] sm:$0xff]
    %v94 = vld [vmem:[#allocation2 + $0x128] sm:$0xff]
    %v95 = vld [vmem:[#allocation2 + $0x130] sm:$0xff]
    %v96 = vld [vmem:[#allocation2 + $0x138] sm:$0xff]
    %v97 = vld [vmem:[#allocation2 + $0x140] sm:$0xff]
    %v98 = vld [vmem:[#allocation2 + $0x148] sm:$0xff]
    %v99 = vld [vmem:[#allocation2 + $0x150] sm:$0xff]
    %v100 = vld [vmem:[#allocation2 + $0x158] sm:$0xff]
    %v101 = vld [vmem:[#allocation2 + $0x160] sm:$0xff]
    %v102 = vld [vmem:[#allocation2 + $0x168] sm:$0xff]
    %v103 = vld [vmem:[#allocation2 + $0x170] sm:$0xff]
    %v104 = vld [vmem:[#allocation2 + $0x178] sm:$0xff]
    %v105 = vld [vmem:[#allocation2 + $0x180] sm:$0xff]
    %v106 = vld [vmem:[#allocation2 + $0x188] sm:$0xff]
    %v107 = vld [vmem:[#allocation2 + $0x190] sm:$0xff]
    %v108 = vld [vmem:[#allocation2 + $0x198] sm:$0xff]
    %v109 = vld [vmem:[#allocation2 + $0x1a0] sm:$0xff]
    %v110 = vld [vmem:[#allocation2 + $0x1a8] sm:$0xff]
    %v111 = vld [vmem:[#allocation2 + $0x1b0] sm:$0xff]
    %v112 = vld [vmem:[#allocation2 + $0x1b8] sm:$0xff]
    %v113 = vld [vmem:[#allocation2 + $0x1c0] sm:$0xff]
    %v114 = vld [vmem:[#allocation2 + $0x1c8] sm:$0xff]
    %v115 = vld [vmem:[#allocation2 + $0x1d0] sm:$0xff]
    %v116 = vld [vmem:[#allocation2 + $0x1d8] sm:$0xff]
    %v117 = vld [vmem:[#allocation2 + $0x1e0] sm:$0xff]
    %v118 = vld [vmem:[#allocation2 + $0x1e8] sm:$0xff]
    %v119 = vld [vmem:[#allocation2 + $0x1f0] sm:$0xff]
    %v120 = vld [vmem:[#allocation2 + $0x1f8] sm:$0xff]
    %v121 = vld [vmem:[#allocation4] sm:$0xff]
    %v122 = vld [vmem:[#allocation4 + $0x8] sm:$0xff]
    %v123 = vld [vmem:[#allocation4 + $0x10] sm:$0xff]
    %v124 = vld [vmem:[#allocation4 + $0x18] sm:$0xff]
    %v125 = vld [vmem:[#allocation4 + $0x20] sm:$0xff]
    %v126 = vld [vmem:[#allocation4 + $0x28] sm:$0xff]
    %v127 = vld [vmem:[#allocation4 + $0x30] sm:$0xff]
    %v128 = vld [vmem:[#allocation4 + $0x38] sm:$0xff]
    %v129 = vld [vmem:[#allocation4 + $0x40] sm:$0xff]
    %v130 = vld [vmem:[#allocation4 + $0x48] sm:$0xff]
    %v131 = vld [vmem:[#allocation4 + $0x50] sm:$0xff]
    %v132 = vld [vmem:[#allocation4 + $0x58] sm:$0xff]
    %v133 = vld [vmem:[#allocation4 + $0x60] sm:$0xff]
    %v134 = vld [vmem:[#allocation4 + $0x68] sm:$0xff]
    %v135 = vld [vmem:[#allocation4 + $0x70] sm:$0xff]
    %v136 = vld [vmem:[#allocation4 + $0x78] sm:$0xff]
    %v137 = vld [vmem:[#allocation4 + $0x80] sm:$0xff]
    %v138 = vld [vmem:[#allocation4 + $0x88] sm:$0xff]
    %v139 = vld [vmem:[#allocation4 + $0x90] sm:$0xff]
    %v140 = vld [vmem:[#allocation4 + $0x98] sm:$0xff]
    %v141 = vld [vmem:[#allocation4 + $0xa0] sm:$0xff]
    %v142 = vld [vmem:[#allocation4 + $0xa8] sm:$0xff]
    %v143 = vld [vmem:[#allocation4 + $0xb0] sm:$0xff]
    %v144 = vld [vmem:[#allocation4 + $0xb8] sm:$0xff]
    %v145 = vld [vmem:[#allocation4 + $0xc0] sm:$0xff]
    %v146 = vld [vmem:[#allocation4 + $0xc8] sm:$0xff]
    %v147 = vld [vmem:[#allocation4 + $0xd0] sm:$0xff]
    %v148 = vld [vmem:[#allocation4 + $0xd8] sm:$0xff]
    %v149 = vld [vmem:[#allocation4 + $0xe0] sm:$0xff]
    %v150 = vld [vmem:[#allocation4 + $0xe8] sm:$0xff]
    %v151 = vld [vmem:[#allocation4 + $0xf0] sm:$0xff]
    %v152 = vld [vmem:[#allocation4 + $0xf8] sm:$0xff]
    %v153 = vld [vmem:[#allocation4 + $0x100] sm:$0xff]
    %v154 = vld [vmem:[#allocation4 + $0x108] sm:$0xff]
    %v155 = vld [vmem:[#allocation4 + $0x110] sm:$0xff]
    %v156 = vld [vmem:[#allocation4 + $0x118] sm:$0xff]
    %v157 = vld [vmem:[#allocation4 + $0x120] sm:$0xff]
    %v158 = vld [vmem:[#allocation4 + $0x128] sm:$0xff]
    %v159 = vld [vmem:[#allocation4 + $0x130] sm:$0xff]
    %v160 = vld [vmem:[#allocation4 + $0x138] sm:$0xff]
    %v161 = vld [vmem:[#allocation4 + $0x140] sm:$0xff]
    %v162 = vld [vmem:[#allocation4 + $0x148] sm:$0xff]
    %v163 = vld [vmem:[#allocation4 + $0x150] sm:$0xff]
    %v164 = vld [vmem:[#allocation4 + $0x158] sm:$0xff]
    %v165 = vld [vmem:[#allocation4 + $0x160] sm:$0xff]
    %v166 = vld [vmem:[#allocation4 + $0x168] sm:$0xff]
    %v167 = vld [vmem:[#allocation4 + $0x170] sm:$0xff]
    %v168 = vld [vmem:[#allocation4 + $0x178] sm:$0xff]
    %v169 = vld [vmem:[#allocation4 + $0x180] sm:$0xff]
    %v170 = vld [vmem:[#allocation4 + $0x188] sm:$0xff]
    %v171 = vld [vmem:[#allocation4 + $0x190] sm:$0xff]
    %v172 = vld [vmem:[#allocation4 + $0x198] sm:$0xff]
    %v173 = vld [vmem:[#allocation4 + $0x1a0] sm:$0xff]
    %v174 = vld [vmem:[#allocation4 + $0x1a8] sm:$0xff]
    %v175 = vld [vmem:[#allocation4 + $0x1b0] sm:$0xff]
    %v176 = vld [vmem:[#allocation4 + $0x1b8] sm:$0xff]
    %v177 = vld [vmem:[#allocation4 + $0x1c0] sm:$0xff]
    %v178 = vld [vmem:[#allocation4 + $0x1c8] sm:$0xff]
    %v179 = vld [vmem:[#allocation4 + $0x1d0] sm:$0xff]
    %v180 = vld [vmem:[#allocation4 + $0x1d8] sm:$0xff]
    %v181 = vld [vmem:[#allocation4 + $0x1e0] sm:$0xff]
    %v182 = vld [vmem:[#allocation4 + $0x1e8] sm:$0xff]
    %v183 = vld [vmem:[#allocation4 + $0x1f0] sm:$0xff]
    %v184 = vld [vmem:[#allocation4 + $0x1f8] sm:$0xff]
    %v185 = vld [vmem:[#allocation4 + $0x200] sm:$0xff]
    %v186 = vld [vmem:[#allocation4 + $0x208] sm:$0xff]
    %v187 = vld [vmem:[#allocation4 + $0x210] sm:$0xff]
    %v188 = vld [vmem:[#allocation4 + $0x218] sm:$0xff]
    %v189 = vld [vmem:[#allocation4 + $0x220] sm:$0xff]
    %v190 = vld [vmem:[#allocation4 + $0x228] sm:$0xff]
    %v191 = vld [vmem:[#allocation4 + $0x230] sm:$0xff]
    %v192 = vld [vmem:[#allocation4 + $0x238] sm:$0xff]
    %v193 = vld [vmem:[#allocation4 + $0x240] sm:$0xff]
    %v194 = vld [vmem:[#allocation4 + $0x248] sm:$0xff]
    %v195 = vld [vmem:[#allocation4 + $0x250] sm:$0xff]
    %v196 = vld [vmem:[#allocation4 + $0x258] sm:$0xff]
    %v197 = vld [vmem:[#allocation4 + $0x260] sm:$0xff]
    %v198 = vld [vmem:[#allocation4 + $0x268] sm:$0xff]
    %v199 = vld [vmem:[#allocation4 + $0x270] sm:$0xff]
    %v200 = vld [vmem:[#allocation4 + $0x278] sm:$0xff]
    %v201 = vld [vmem:[#allocation4 + $0x280] sm:$0xff]
    %v202 = vld [vmem:[#allocation4 + $0x288] sm:$0xff]
    %v203 = vld [vmem:[#allocation4 + $0x290] sm:$0xff]
    %v204 = vld [vmem:[#allocation4 + $0x298] sm:$0xff]
    %v205 = vld [vmem:[#allocation4 + $0x2a0] sm:$0xff]
    %v206 = vld [vmem:[#allocation4 + $0x2a8] sm:$0xff]
    %v207 = vld [vmem:[#allocation4 + $0x2b0] sm:$0xff]
    %v208 = vld [vmem:[#allocation4 + $0x2b8] sm:$0xff]
    %v209 = vld [vmem:[#allocation4 + $0x2c0] sm:$0xff]
    %v210 = vld [vmem:[#allocation4 + $0x2c8] sm:$0xff]
    %v211 = vld [vmem:[#allocation4 + $0x2d0] sm:$0xff]
    %v212 = vld [vmem:[#allocation4 + $0x2d8] sm:$0xff]
    %v213 = vld [vmem:[#allocation4 + $0x2e0] sm:$0xff]
    %v214 = vld [vmem:[#allocation4 + $0x2e8] sm:$0xff]
    %v215 = vld [vmem:[#allocation4 + $0x2f0] sm:$0xff]
    %v216 = vld [vmem:[#allocation4 + $0x2f8] sm:$0xff]
    %v217 = vld [vmem:[#allocation4 + $0x300] sm:$0xff]
    %v218 = vld [vmem:[#allocation4 + $0x308] sm:$0xff]
    %v219 = vld [vmem:[#allocation4 + $0x310] sm:$0xff]
    %v220 = vld [vmem:[#allocation4 + $0x318] sm:$0xff]
    %v221 = vld [vmem:[#allocation4 + $0x320] sm:$0xff]
    %v222 = vld [vmem:[#allocation4 + $0x328] sm:$0xff]
    %v223 = vld [vmem:[#allocation4 + $0x330] sm:$0xff]
    %v224 = vld [vmem:[#allocation4 + $0x338] sm:$0xff]
    %v225 = vld [vmem:[#allocation4 + $0x340] sm:$0xff]
    %v226 = vld [vmem:[#allocation4 + $0x348] sm:$0xff]
    %v227 = vld [vmem:[#allocation4 + $0x350] sm:$0xff]
    %v228 = vld [vmem:[#allocation4 + $0x358] sm:$0xff]
    %v229 = vld [vmem:[#allocation4 + $0x360] sm:$0xff]
    %v230 = vld [vmem:[#allocation4 + $0x368] sm:$0xff]
    %v231 = vld [vmem:[#allocation4 + $0x370] sm:$0xff]
    %v232 = vld [vmem:[#allocation4 + $0x378] sm:$0xff]
    %v233 = vld [vmem:[#allocation4 + $0x380] sm:$0xff]
    %v234 = vld [vmem:[#allocation4 + $0x388] sm:$0xff]
    %v235 = vld [vmem:[#allocation4 + $0x390] sm:$0xff]
    %v236 = vld [vmem:[#allocation4 + $0x398] sm:$0xff]
    %v237 = vld [vmem:[#allocation4 + $0x3a0] sm:$0xff]
    %v238 = vld [vmem:[#allocation4 + $0x3a8] sm:$0xff]
    %v239 = vld [vmem:[#allocation4 + $0x3b0] sm:$0xff]
    %v240 = vld [vmem:[#allocation4 + $0x3b8] sm:$0xff]
    %v241 = vld [vmem:[#allocation4 + $0x3c0] sm:$0xff]
    %v242 = vld [vmem:[#allocation4 + $0x3c8] sm:$0xff]
    %v243 = vld [vmem:[#allocation4 + $0x3d0] sm:$0xff]
    %v244 = vld [vmem:[#allocation4 + $0x3d8] sm:$0xff]
    %v245 = vld [vmem:[#allocation4 + $0x3e0] sm:$0xff]
    %v246 = vld [vmem:[#allocation4 + $0x3e8] sm:$0xff]
    %v247 = vld [vmem:[#allocation4 + $0x3f0] sm:$0xff]
    %v248 = vld [vmem:[#allocation4 + $0x3f8] sm:$0xff]
    %v249 = vld [vmem:[#allocation4 + $0x400] sm:$0xff]
    %v250 = vld [vmem:[#allocation4 + $0x408] sm:$0xff]
    %v251 = vld [vmem:[#allocation4 + $0x410] sm:$0xff]
    %v252 = vld [vmem:[#allocation4 + $0x418] sm:$0xff]
    %v253 = vld [vmem:[#allocation4 + $0x420] sm:$0xff]
    %v254 = vld [vmem:[#allocation4 + $0x428] sm:$0xff]
    %v255 = vld [vmem:[#allocation4 + $0x430] sm:$0xff]
    %v256 = vld [vmem:[#allocation4 + $0x438] sm:$0xff]
    %v257 = vld [vmem:[#allocation4 + $0x440] sm:$0xff]
    %v258 = vld [vmem:[#allocation4 + $0x448] sm:$0xff]
    %v259 = vld [vmem:[#allocation4 + $0x450] sm:$0xff]
    %v260 = vld [vmem:[#allocation4 + $0x458] sm:$0xff]
    %v261 = vld [vmem:[#allocation4 + $0x460] sm:$0xff]
    %v262 = vld [vmem:[#allocation4 + $0x468] sm:$0xff]
    %v263 = vld [vmem:[#allocation4 + $0x470] sm:$0xff]
    %v264 = vld [vmem:[#allocation4 + $0x478] sm:$0xff]
    %v265 = vld [vmem:[#allocation4 + $0x480] sm:$0xff]
    %v266 = vld [vmem:[#allocation4 + $0x488] sm:$0xff]
    %v267 = vld [vmem:[#allocation4 + $0x490] sm:$0xff]
    %v268 = vld [vmem:[#allocation4 + $0x498] sm:$0xff]
    %v269 = vld [vmem:[#allocation4 + $0x4a0] sm:$0xff]
    %v270 = vld [vmem:[#allocation4 + $0x4a8] sm:$0xff]
    %v271 = vld [vmem:[#allocation4 + $0x4b0] sm:$0xff]
    %v272 = vld [vmem:[#allocation4 + $0x4b8] sm:$0xff]
    %v273 = vld [vmem:[#allocation4 + $0x4c0] sm:$0xff]
    %v274 = vld [vmem:[#allocation4 + $0x4c8] sm:$0xff]
    %v275 = vld [vmem:[#allocation4 + $0x4d0] sm:$0xff]
    %v276 = vld [vmem:[#allocation4 + $0x4d8] sm:$0xff]
    %v277 = vld [vmem:[#allocation4 + $0x4e0] sm:$0xff]
    %v278 = vld [vmem:[#allocation4 + $0x4e8] sm:$0xff]
    %v279 = vld [vmem:[#allocation4 + $0x4f0] sm:$0xff]
    %v280 = vld [vmem:[#allocation4 + $0x4f8] sm:$0xff]
    %v281 = vld [vmem:[#allocation4 + $0x500] sm:$0xff]
    %v282 = vld [vmem:[#allocation4 + $0x508] sm:$0xff]
    %v283 = vld [vmem:[#allocation4 + $0x510] sm:$0xff]
    %v284 = vld [vmem:[#allocation4 + $0x518] sm:$0xff]
    %v285 = vld [vmem:[#allocation4 + $0x520] sm:$0xff]
    %v286 = vld [vmem:[#allocation4 + $0x528] sm:$0xff]
    %v287 = vld [vmem:[#allocation4 + $0x530] sm:$0xff]
    %v288 = vld [vmem:[#allocation4 + $0x538] sm:$0xff]
    %v289 = vld [vmem:[#allocation4 + $0x540] sm:$0xff]
    %v290 = vld [vmem:[#allocation4 + $0x548] sm:$0xff]
    %v291 = vld [vmem:[#allocation4 + $0x550] sm:$0xff]
    %v292 = vld [vmem:[#allocation4 + $0x558] sm:$0xff]
    %v293 = vld [vmem:[#allocation4 + $0x560] sm:$0xff]
    %v294 = vld [vmem:[#allocation4 + $0x568] sm:$0xff]
    %v295 = vld [vmem:[#allocation4 + $0x570] sm:$0xff]
    %v296 = vld [vmem:[#allocation4 + $0x578] sm:$0xff]
    %v297 = vld [vmem:[#allocation4 + $0x580] sm:$0xff]
    %v298 = vld [vmem:[#allocation4 + $0x588] sm:$0xff]
    %v299 = vld [vmem:[#allocation4 + $0x590] sm:$0xff]
    %v300 = vld [vmem:[#allocation4 + $0x598] sm:$0xff]
    %v301 = vld [vmem:[#allocation4 + $0x5a0] sm:$0xff]
    %v302 = vld [vmem:[#allocation4 + $0x5a8] sm:$0xff]
    %v303 = vld [vmem:[#allocation4 + $0x5b0] sm:$0xff]
    %v304 = vld [vmem:[#allocation4 + $0x5b8] sm:$0xff]
    %v305 = vld [vmem:[#allocation4 + $0x5c0] sm:$0xff]
    %v306 = vld [vmem:[#allocation4 + $0x5c8] sm:$0xff]
    %v307 = vld [vmem:[#allocation4 + $0x5d0] sm:$0xff]
    %v308 = vld [vmem:[#allocation4 + $0x5d8] sm:$0xff]
    %v309 = vld [vmem:[#allocation4 + $0x5e0] sm:$0xff]
    %v310 = vld [vmem:[#allocation4 + $0x5e8] sm:$0xff]
    %v311 = vld [vmem:[#allocation4 + $0x5f0] sm:$0xff]
    %v312 = vld [vmem:[#allocation4 + $0x5f8] sm:$0xff]
    %v313 = vld [vmem:[#allocation4 + $0x600] sm:$0xff]
    %v314 = vld [vmem:[#allocation4 + $0x608] sm:$0xff]
    %v315 = vld [vmem:[#allocation4 + $0x610] sm:$0xff]
    %v316 = vld [vmem:[#allocation4 + $0x618] sm:$0xff]
    %v317 = vld [vmem:[#allocation4 + $0x620] sm:$0xff]
    %v318 = vld [vmem:[#allocation4 + $0x628] sm:$0xff]
    %v319 = vld [vmem:[#allocation4 + $0x630] sm:$0xff]
    %v320 = vld [vmem:[#allocation4 + $0x638] sm:$0xff]
    %v321 = vld [vmem:[#allocation4 + $0x640] sm:$0xff]
    %v322 = vld [vmem:[#allocation4 + $0x648] sm:$0xff]
    %v323 = vld [vmem:[#allocation4 + $0x650] sm:$0xff]
    %v324 = vld [vmem:[#allocation4 + $0x658] sm:$0xff]
    %v325 = vld [vmem:[#allocation4 + $0x660] sm:$0xff]
    %v326 = vld [vmem:[#allocation4 + $0x668] sm:$0xff]
    %v327 = vld [vmem:[#allocation4 + $0x670] sm:$0xff]
    %v328 = vld [vmem:[#allocation4 + $0x678] sm:$0xff]
    %v329 = vld [vmem:[#allocation4 + $0x680] sm:$0xff]
    %v330 = vld [vmem:[#allocation4 + $0x688] sm:$0xff]
    %v331 = vld [vmem:[#allocation4 + $0x690] sm:$0xff]
    %v332 = vld [vmem:[#allocation4 + $0x698] sm:$0xff]
    %v333 = vld [vmem:[#allocation4 + $0x6a0] sm:$0xff]
    %v334 = vld [vmem:[#allocation4 + $0x6a8] sm:$0xff]
    %v335 = vld [vmem:[#allocation4 + $0x6b0] sm:$0xff]
    %v336 = vld [vmem:[#allocation4 + $0x6b8] sm:$0xff]
    %v337 = vld [vmem:[#allocation4 + $0x6c0] sm:$0xff]
    %v338 = vld [vmem:[#allocation4 + $0x6c8] sm:$0xff]
    %v339 = vld [vmem:[#allocation4 + $0x6d0] sm:$0xff]
    %v340 = vld [vmem:[#allocation4 + $0x6d8] sm:$0xff]
    %v341 = vld [vmem:[#allocation4 + $0x6e0] sm:$0xff]
    %v342 = vld [vmem:[#allocation4 + $0x6e8] sm:$0xff]
    %v343 = vld [vmem:[#allocation4 + $0x6f0] sm:$0xff]
    %v344 = vld [vmem:[#allocation4 + $0x6f8] sm:$0xff]
    %v345 = vld [vmem:[#allocation4 + $0x700] sm:$0xff]
    %v346 = vld [vmem:[#allocation4 + $0x708] sm:$0xff]
    %v347 = vld [vmem:[#allocation4 + $0x710] sm:$0xff]
    %v348 = vld [vmem:[#allocation4 + $0x718] sm:$0xff]
    %v349 = vld [vmem:[#allocation4 + $0x720] sm:$0xff]
    %v350 = vld [vmem:[#allocation4 + $0x728] sm:$0xff]
    %v351 = vld [vmem:[#allocation4 + $0x730] sm:$0xff]
    %v352 = vld [vmem:[#allocation4 + $0x738] sm:$0xff]
    %v353 = vld [vmem:[#allocation4 + $0x740] sm:$0xff]
    %v354 = vld [vmem:[#allocation4 + $0x748] sm:$0xff]
    %v355 = vld [vmem:[#allocation4 + $0x750] sm:$0xff]
    %v356 = vld [vmem:[#allocation4 + $0x758] sm:$0xff]
    %v357 = vld [vmem:[#allocation4 + $0x760] sm:$0xff]
    %v358 = vld [vmem:[#allocation4 + $0x768] sm:$0xff]
    %v359 = vld [vmem:[#allocation4 + $0x770] sm:$0xff]
    %v360 = vld [vmem:[#allocation4 + $0x778] sm:$0xff]
    %v361 = vld [vmem:[#allocation4 + $0x780] sm:$0xff]
    %v362 = vld [vmem:[#allocation4 + $0x788] sm:$0xff]
    %v363 = vld [vmem:[#allocation4 + $0x790] sm:$0xff]
    %v364 = vld [vmem:[#allocation4 + $0x798] sm:$0xff]
    %v365 = vld [vmem:[#allocation4 + $0x7a0] sm:$0xff]
    %v366 = vld [vmem:[#allocation4 + $0x7a8] sm:$0xff]
    %v367 = vld [vmem:[#allocation4 + $0x7b0] sm:$0xff]
    %v368 = vld [vmem:[#allocation4 + $0x7b8] sm:$0xff]
    %v369 = vld [vmem:[#allocation4 + $0x7c0] sm:$0xff]
    %v370 = vld [vmem:[#allocation4 + $0x7c8] sm:$0xff]
    %v371 = vld [vmem:[#allocation4 + $0x7d0] sm:$0xff]
    %v372 = vld [vmem:[#allocation4 + $0x7d8] sm:$0xff]
    %v373 = vld [vmem:[#allocation4 + $0x7e0] sm:$0xff]
    %v374 = vld [vmem:[#allocation4 + $0x7e8] sm:$0xff]
    %v375 = vld [vmem:[#allocation4 + $0x7f0] sm:$0xff]
    %v376 = vld [vmem:[#allocation4 + $0x7f8] sm:$0xff]
    %v377 = vld [vmem:[#allocation4 + $0x800] sm:$0xff]
    %v378 = vld [vmem:[#allocation4 + $0x808] sm:$0xff]
    %v379 = vld [vmem:[#allocation4 + $0x810] sm:$0xff]
    %v380 = vld [vmem:[#allocation4 + $0x818] sm:$0xff]
    %v381 = vld [vmem:[#allocation4 + $0x820] sm:$0xff]
    %v382 = vld [vmem:[#allocation4 + $0x828] sm:$0xff]
    %v383 = vld [vmem:[#allocation4 + $0x830] sm:$0xff]
    %v384 = vld [vmem:[#allocation4 + $0x838] sm:$0xff]
    %v385 = vld [vmem:[#allocation4 + $0x840] sm:$0xff]
    %v386 = vld [vmem:[#allocation4 + $0x848] sm:$0xff]
    %v387 = vld [vmem:[#allocation4 + $0x850] sm:$0xff]
    %v388 = vld [vmem:[#allocation4 + $0x858] sm:$0xff]
    %v389 = vld [vmem:[#allocation4 + $0x860] sm:$0xff]
    %v390 = vld [vmem:[#allocation4 + $0x868] sm:$0xff]
    %v391 = vld [vmem:[#allocation4 + $0x870] sm:$0xff]
    %v392 = vld [vmem:[#allocation4 + $0x878] sm:$0xff]
    %v393 = vld [vmem:[#allocation4 + $0x880] sm:$0xff]
    %v394 = vld [vmem:[#allocation4 + $0x888] sm:$0xff]
    %v395 = vld [vmem:[#allocation4 + $0x890] sm:$0xff]
    %v396 = vld [vmem:[#allocation4 + $0x898] sm:$0xff]
    %v397 = vld [vmem:[#allocation4 + $0x8a0] sm:$0xff]
    %v398 = vld [vmem:[#allocation4 + $0x8a8] sm:$0xff]
    %v399 = vld [vmem:[#allocation4 + $0x8b0] sm:$0xff]
    %v400 = vld [vmem:[#allocation4 + $0x8b8] sm:$0xff]
    %v401 = vld [vmem:[#allocation4 + $0x8c0] sm:$0xff]
    %v402 = vld [vmem:[#allocation4 + $0x8c8] sm:$0xff]
    %v403 = vld [vmem:[#allocation4 + $0x8d0] sm:$0xff]
    %v404 = vld [vmem:[#allocation4 + $0x8d8] sm:$0xff]
    %v405 = vld [vmem:[#allocation4 + $0x8e0] sm:$0xff]
    %v406 = vld [vmem:[#allocation4 + $0x8e8] sm:$0xff]
    %v407 = vld [vmem:[#allocation4 + $0x8f0] sm:$0xff]
    %v408 = vld [vmem:[#allocation4 + $0x8f8] sm:$0xff]
    %v409 = vld [vmem:[#allocation4 + $0x900] sm:$0xff]
    %v410 = vld [vmem:[#allocation4 + $0x908] sm:$0xff]
    %v411 = vld [vmem:[#allocation4 + $0x910] sm:$0xff]
    %v412 = vld [vmem:[#allocation4 + $0x918] sm:$0xff]
    %v413 = vld [vmem:[#allocation4 + $0x920] sm:$0xff]
    %v414 = vld [vmem:[#allocation4 + $0x928] sm:$0xff]
    %v415 = vld [vmem:[#allocation4 + $0x930] sm:$0xff]
    %v416 = vld [vmem:[#allocation4 + $0x938] sm:$0xff]
    %v417 = vld [vmem:[#allocation4 + $0x940] sm:$0xff]
    %v418 = vld [vmem:[#allocation4 + $0x948] sm:$0xff]
    %v419 = vld [vmem:[#allocation4 + $0x950] sm:$0xff]
    %v420 = vld [vmem:[#allocation4 + $0x958] sm:$0xff]
    %v421 = vld [vmem:[#allocation4 + $0x960] sm:$0xff]
    %v422 = vld [vmem:[#allocation4 + $0x968] sm:$0xff]
    %v423 = vld [vmem:[#allocation4 + $0x970] sm:$0xff]
    %v424 = vld [vmem:[#allocation4 + $0x978] sm:$0xff]
    %v425 = vld [vmem:[#allocation4 + $0x980] sm:$0xff]
    %v426 = vld [vmem:[#allocation4 + $0x988] sm:$0xff]
    %v427 = vld [vmem:[#allocation4 + $0x990] sm:$0xff]
    %v428 = vld [vmem:[#allocation4 + $0x998] sm:$0xff]
    %v429 = vld [vmem:[#allocation4 + $0x9a0] sm:$0xff]
    %v430 = vld [vmem:[#allocation4 + $0x9a8] sm:$0xff]
    %v431 = vld [vmem:[#allocation4 + $0x9b0] sm:$0xff]
    %v432 = vld [vmem:[#allocation4 + $0x9b8] sm:$0xff]
    %v433 = vld [vmem:[#allocation4 + $0x9c0] sm:$0xff]
    %v434 = vld [vmem:[#allocation4 + $0x9c8] sm:$0xff]
    %v435 = vld [vmem:[#allocation4 + $0x9d0] sm:$0xff]
    %v436 = vld [vmem:[#allocation4 + $0x9d8] sm:$0xff]
    %v437 = vld [vmem:[#allocation4 + $0x9e0] sm:$0xff]
    %v438 = vld [vmem:[#allocation4 + $0x9e8] sm:$0xff]
    %v439 = vld [vmem:[#allocation4 + $0x9f0] sm:$0xff]
    %v440 = vld [vmem:[#allocation4 + $0x9f8] sm:$0xff]
    %v441 = vld [vmem:[#allocation4 + $0xa00] sm:$0xff]
    %v442 = vld [vmem:[#allocation4 + $0xa08] sm:$0xff]
    %v443 = vld [vmem:[#allocation4 + $0xa10] sm:$0xff]
    %v444 = vld [vmem:[#allocation4 + $0xa18] sm:$0xff]
    %v445 = vld [vmem:[#allocation4 + $0xa20] sm:$0xff]
    %v446 = vld [vmem:[#allocation4 + $0xa28] sm:$0xff]
    %v447 = vld [vmem:[#allocation4 + $0xa30] sm:$0xff]
    %v448 = vld [vmem:[#allocation4 + $0xa38] sm:$0xff]
    %v449 = vld [vmem:[#allocation4 + $0xa40] sm:$0xff]
    %v450 = vld [vmem:[#allocation4 + $0xa48] sm:$0xff]
    %v451 = vld [vmem:[#allocation4 + $0xa50] sm:$0xff]
    %v452 = vld [vmem:[#allocation4 + $0xa58] sm:$0xff]
    %v453 = vld [vmem:[#allocation4 + $0xa60] sm:$0xff]
    %v454 = vld [vmem:[#allocation4 + $0xa68] sm:$0xff]
    %v455 = vld [vmem:[#allocation4 + $0xa70] sm:$0xff]
    %v456 = vld [vmem:[#allocation4 + $0xa78] sm:$0xff]
    %v457 = vld [vmem:[#allocation4 + $0xa80] sm:$0xff]
    %v458 = vld [vmem:[#allocation4 + $0xa88] sm:$0xff]
    %v459 = vld [vmem:[#allocation4 + $0xa90] sm:$0xff]
    %v460 = vld [vmem:[#allocation4 + $0xa98] sm:$0xff]
    %v461 = vld [vmem:[#allocation4 + $0xaa0] sm:$0xff]
    %v462 = vld [vmem:[#allocation4 + $0xaa8] sm:$0xff]
    %v463 = vld [vmem:[#allocation4 + $0xab0] sm:$0xff]
    %v464 = vld [vmem:[#allocation4 + $0xab8] sm:$0xff]
    %v465 = vld [vmem:[#allocation4 + $0xac0] sm:$0xff]
    %v466 = vld [vmem:[#allocation4 + $0xac8] sm:$0xff]
    %v467 = vld [vmem:[#allocation4 + $0xad0] sm:$0xff]
    %v468 = vld [vmem:[#allocation4 + $0xad8] sm:$0xff]
    %v469 = vld [vmem:[#allocation4 + $0xae0] sm:$0xff]
    %v470 = vld [vmem:[#allocation4 + $0xae8] sm:$0xff]
    %v471 = vld [vmem:[#allocation4 + $0xaf0] sm:$0xff]
    %v472 = vld [vmem:[#allocation4 + $0xaf8] sm:$0xff]
    %v473 = vld [vmem:[#allocation4 + $0xb00] sm:$0xff]
    %v474 = vld [vmem:[#allocation4 + $0xb08] sm:$0xff]
    %v475 = vld [vmem:[#allocation4 + $0xb10] sm:$0xff]
    %v476 = vld [vmem:[#allocation4 + $0xb18] sm:$0xff]
    %v477 = vld [vmem:[#allocation4 + $0xb20] sm:$0xff]
    %v478 = vld [vmem:[#allocation4 + $0xb28] sm:$0xff]
    %v479 = vld [vmem:[#allocation4 + $0xb30] sm:$0xff]
    %v480 = vld [vmem:[#allocation4 + $0xb38] sm:$0xff]
    %v481 = vld [vmem:[#allocation4 + $0xb40] sm:$0xff]
    %v482 = vld [vmem:[#allocation4 + $0xb48] sm:$0xff]
    %v483 = vld [vmem:[#allocation4 + $0xb50] sm:$0xff]
    %v484 = vld [vmem:[#allocation4 + $0xb58] sm:$0xff]
    %v485 = vld [vmem:[#allocation4 + $0xb60] sm:$0xff]
    %v486 = vld [vmem:[#allocation4 + $0xb68] sm:$0xff]
    %v487 = vld [vmem:[#allocation4 + $0xb70] sm:$0xff]
    %v488 = vld [vmem:[#allocation4 + $0xb78] sm:$0xff]
    %v489 = vld [vmem:[#allocation4 + $0xb80] sm:$0xff]
    %v490 = vld [vmem:[#allocation4 + $0xb88] sm:$0xff]
    %v491 = vld [vmem:[#allocation4 + $0xb90] sm:$0xff]
    %v492 = vld [vmem:[#allocation4 + $0xb98] sm:$0xff]
    %v493 = vld [vmem:[#allocation4 + $0xba0] sm:$0xff]
    %v494 = vld [vmem:[#allocation4 + $0xba8] sm:$0xff]
    %v495 = vld [vmem:[#allocation4 + $0xbb0] sm:$0xff]
    %v496 = vld [vmem:[#allocation4 + $0xbb8] sm:$0xff]
    %v497 = vld [vmem:[#allocation4 + $0xbc0] sm:$0xff]
    %v498 = vld [vmem:[#allocation4 + $0xbc8] sm:$0xff]
    %v499 = vld [vmem:[#allocation4 + $0xbd0] sm:$0xff]
    %v500 = vld [vmem:[#allocation4 + $0xbd8] sm:$0xff]
    %v501 = vld [vmem:[#allocation4 + $0xbe0] sm:$0xff]
    %v502 = vld [vmem:[#allocation4 + $0xbe8] sm:$0xff]
    %v503 = vld [vmem:[#allocation4 + $0xbf0] sm:$0xff]
    %v504 = vld [vmem:[#allocation4 + $0xbf8] sm:$0xff]
    %v505 = vld [vmem:[#allocation4 + $0xc00] sm:$0xff]
    %v506 = vld [vmem:[#allocation4 + $0xc08] sm:$0xff]
    %v507 = vld [vmem:[#allocation4 + $0xc10] sm:$0xff]
    %v508 = vld [vmem:[#allocation4 + $0xc18] sm:$0xff]
    %v509 = vld [vmem:[#allocation4 + $0xc20] sm:$0xff]
    %v510 = vld [vmem:[#allocation4 + $0xc28] sm:$0xff]
    %v511 = vld [vmem:[#allocation4 + $0xc30] sm:$0xff]
    %v512 = vld [vmem:[#allocation4 + $0xc38] sm:$0xff]
    %v513 = vld [vmem:[#allocation4 + $0xc40] sm:$0xff]
    %v514 = vld [vmem:[#allocation4 + $0xc48] sm:$0xff]
    %v515 = vld [vmem:[#allocation4 + $0xc50] sm:$0xff]
    %v516 = vld [vmem:[#allocation4 + $0xc58] sm:$0xff]
    %v517 = vld [vmem:[#allocation4 + $0xc60] sm:$0xff]
    %v518 = vld [vmem:[#allocation4 + $0xc68] sm:$0xff]
    %v519 = vld [vmem:[#allocation4 + $0xc70] sm:$0xff]
    %v520 = vld [vmem:[#allocation4 + $0xc78] sm:$0xff]
    %v521 = vld [vmem:[#allocation4 + $0xc80] sm:$0xff]
    %v522 = vld [vmem:[#allocation4 + $0xc88] sm:$0xff]
    %v523 = vld [vmem:[#allocation4 + $0xc90] sm:$0xff]
    %v524 = vld [vmem:[#allocation4 + $0xc98] sm:$0xff]
    %v525 = vld [vmem:[#allocation4 + $0xca0] sm:$0xff]
    %v526 = vld [vmem:[#allocation4 + $0xca8] sm:$0xff]
    %v527 = vld [vmem:[#allocation4 + $0xcb0] sm:$0xff]
    %v528 = vld [vmem:[#allocation4 + $0xcb8] sm:$0xff]
    %v529 = vld [vmem:[#allocation4 + $0xcc0] sm:$0xff]
    %v530 = vld [vmem:[#allocation4 + $0xcc8] sm:$0xff]
    %v531 = vld [vmem:[#allocation4 + $0xcd0] sm:$0xff]
    %v532 = vld [vmem:[#allocation4 + $0xcd8] sm:$0xff]
    %v533 = vld [vmem:[#allocation4 + $0xce0] sm:$0xff]
    %v534 = vld [vmem:[#allocation4 + $0xce8] sm:$0xff]
    %v535 = vld [vmem:[#allocation4 + $0xcf0] sm:$0xff]
    %v536 = vld [vmem:[#allocation4 + $0xcf8] sm:$0xff]
    %v537 = vld [vmem:[#allocation4 + $0xd00] sm:$0xff]
    %v538 = vld [vmem:[#allocation4 + $0xd08] sm:$0xff]
    %v539 = vld [vmem:[#allocation4 + $0xd10] sm:$0xff]
    %v540 = vld [vmem:[#allocation4 + $0xd18] sm:$0xff]
    %v541 = vld [vmem:[#allocation4 + $0xd20] sm:$0xff]
    %v542 = vld [vmem:[#allocation4 + $0xd28] sm:$0xff]
    %v543 = vld [vmem:[#allocation4 + $0xd30] sm:$0xff]
    %v544 = vld [vmem:[#allocation4 + $0xd38] sm:$0xff]
    %v545 = vld [vmem:[#allocation4 + $0xd40] sm:$0xff]
    %v546 = vld [vmem:[#allocation4 + $0xd48] sm:$0xff]
    %v547 = vld [vmem:[#allocation4 + $0xd50] sm:$0xff]
    %v548 = vld [vmem:[#allocation4 + $0xd58] sm:$0xff]
    %v549 = vld [vmem:[#allocation4 + $0xd60] sm:$0xff]
    %v550 = vld [vmem:[#allocation4 + $0xd68] sm:$0xff]
    %v551 = vld [vmem:[#allocation4 + $0xd70] sm:$0xff]
    %v552 = vld [vmem:[#allocation4 + $0xd78] sm:$0xff]
    %v553 = vld [vmem:[#allocation4 + $0xd80] sm:$0xff]
    %v554 = vld [vmem:[#allocation4 + $0xd88] sm:$0xff]
    %v555 = vld [vmem:[#allocation4 + $0xd90] sm:$0xff]
    %v556 = vld [vmem:[#allocation4 + $0xd98] sm:$0xff]
    %v557 = vld [vmem:[#allocation4 + $0xda0] sm:$0xff]
    %v558 = vld [vmem:[#allocation4 + $0xda8] sm:$0xff]
    %v559 = vld [vmem:[#allocation4 + $0xdb0] sm:$0xff]
    %v560 = vld [vmem:[#allocation4 + $0xdb8] sm:$0xff]
    %v561 = vld [vmem:[#allocation4 + $0xdc0] sm:$0xff]
    %v562 = vld [vmem:[#allocation4 + $0xdc8] sm:$0xff]
    %v563 = vld [vmem:[#allocation4 + $0xdd0] sm:$0xff]
    %v564 = vld [vmem:[#allocation4 + $0xdd8] sm:$0xff]
    %v565 = vld [vmem:[#allocation4 + $0xde0] sm:$0xff]
    %v566 = vld [vmem:[#allocation4 + $0xde8] sm:$0xff]
    %v567 = vld [vmem:[#allocation4 + $0xdf0] sm:$0xff]
    %v568 = vld [vmem:[#allocation4 + $0xdf8] sm:$0xff]
    %v569 = vld [vmem:[#allocation4 + $0xe00] sm:$0xff]
    %v570 = vld [vmem:[#allocation4 + $0xe08] sm:$0xff]
    %v571 = vld [vmem:[#allocation4 + $0xe10] sm:$0xff]
    %v572 = vld [vmem:[#allocation4 + $0xe18] sm:$0xff]
    %v573 = vld [vmem:[#allocation4 + $0xe20] sm:$0xff]
    %v574 = vld [vmem:[#allocation4 + $0xe28] sm:$0xff]
    %v575 = vld [vmem:[#allocation4 + $0xe30] sm:$0xff]
    %v576 = vld [vmem:[#allocation4 + $0xe38] sm:$0xff]
    %v577 = vld [vmem:[#allocation4 + $0xe40] sm:$0xff]
    %v578 = vld [vmem:[#allocation4 + $0xe48] sm:$0xff]
    %v579 = vld [vmem:[#allocation4 + $0xe50] sm:$0xff]
    %v580 = vld [vmem:[#allocation4 + $0xe58] sm:$0xff]
    %v581 = vld [vmem:[#allocation4 + $0xe60] sm:$0xff]
    %v582 = vld [vmem:[#allocation4 + $0xe68] sm:$0xff]
    %v583 = vld [vmem:[#allocation4 + $0xe70] sm:$0xff]
    %v584 = vld [vmem:[#allocation4 + $0xe78] sm:$0xff]
    %v585 = vld [vmem:[#allocation4 + $0xe80] sm:$0xff]
    %v586 = vld [vmem:[#allocation4 + $0xe88] sm:$0xff]
    %v587 = vld [vmem:[#allocation4 + $0xe90] sm:$0xff]
    %v588 = vld [vmem:[#allocation4 + $0xe98] sm:$0xff]
    %v589 = vld [vmem:[#allocation4 + $0xea0] sm:$0xff]
    %v590 = vld [vmem:[#allocation4 + $0xea8] sm:$0xff]
    %v591 = vld [vmem:[#allocation4 + $0xeb0] sm:$0xff]
    %v592 = vld [vmem:[#allocation4 + $0xeb8] sm:$0xff]
    %v593 = vld [vmem:[#allocation4 + $0xec0] sm:$0xff]
    %v594 = vld [vmem:[#allocation4 + $0xec8] sm:$0xff]
    %v595 = vld [vmem:[#allocation4 + $0xed0] sm:$0xff]
    %v596 = vld [vmem:[#allocation4 + $0xed8] sm:$0xff]
    %v597 = vld [vmem:[#allocation4 + $0xee0] sm:$0xff]
    %v598 = vld [vmem:[#allocation4 + $0xee8] sm:$0xff]
    %v599 = vld [vmem:[#allocation4 + $0xef0] sm:$0xff]
    %v600 = vld [vmem:[#allocation4 + $0xef8] sm:$0xff]
    %v601 = vld [vmem:[#allocation4 + $0xf00] sm:$0xff]
    %v602 = vld [vmem:[#allocation4 + $0xf08] sm:$0xff]
    %v603 = vld [vmem:[#allocation4 + $0xf10] sm:$0xff]
    %v604 = vld [vmem:[#allocation4 + $0xf18] sm:$0xff]
    %v605 = vld [vmem:[#allocation4 + $0xf20] sm:$0xff]
    %v606 = vld [vmem:[#allocation4 + $0xf28] sm:$0xff]
    %v607 = vld [vmem:[#allocation4 + $0xf30] sm:$0xff]
    %v608 = vld [vmem:[#allocation4 + $0xf38] sm:$0xff]
    %v609 = vld [vmem:[#allocation4 + $0xf40] sm:$0xff]
    %v610 = vld [vmem:[#allocation4 + $0xf48] sm:$0xff]
    %v611 = vld [vmem:[#allocation4 + $0xf50] sm:$0xff]
    %v612 = vld [vmem:[#allocation4 + $0xf58] sm:$0xff]
    %v613 = vld [vmem:[#allocation4 + $0xf60] sm:$0xff]
    %v614 = vld [vmem:[#allocation4 + $0xf68] sm:$0xff]
    %v615 = vld [vmem:[#allocation4 + $0xf70] sm:$0xff]
    %v616 = vld [vmem:[#allocation4 + $0xf78] sm:$0xff]
    %v617 = vld [vmem:[#allocation4 + $0xf80] sm:$0xff]
    %v618 = vld [vmem:[#allocation4 + $0xf88] sm:$0xff]
    %v619 = vld [vmem:[#allocation4 + $0xf90] sm:$0xff]
    %v620 = vld [vmem:[#allocation4 + $0xf98] sm:$0xff]
    %v621 = vld [vmem:[#allocation4 + $0xfa0] sm:$0xff]
    %v622 = vld [vmem:[#allocation4 + $0xfa8] sm:$0xff]
    %v623 = vld [vmem:[#allocation4 + $0xfb0] sm:$0xff]
    %v624 = vld [vmem:[#allocation4 + $0xfb8] sm:$0xff]
    %v625 = vld [vmem:[#allocation4 + $0xfc0] sm:$0xff]
    %v626 = vld [vmem:[#allocation4 + $0xfc8] sm:$0xff]
    %v627 = vld [vmem:[#allocation4 + $0xfd0] sm:$0xff]
    %v628 = vld [vmem:[#allocation4 + $0xfd8] sm:$0xff]
    %v629 = vld [vmem:[#allocation4 + $0xfe0] sm:$0xff]
    %v630 = vld [vmem:[#allocation4 + $0xfe8] sm:$0xff]
    %v631 = vld [vmem:[#allocation4 + $0xff0] sm:$0xff]
    %v632 = vld [vmem:[#allocation4 + $0xff8] sm:$0xff]
    %v633 = vld [vmem:[#allocation4 + $0x1000] sm:$0xff]
    %v634 = vld [vmem:[#allocation4 + $0x1008] sm:$0xff]
    %v635 = vld [vmem:[#allocation4 + $0x1010] sm:$0xff]
    %v636 = vld [vmem:[#allocation4 + $0x1018] sm:$0xff]
    %v637 = vld [vmem:[#allocation4 + $0x1020] sm:$0xff]
    %v638 = vld [vmem:[#allocation4 + $0x1028] sm:$0xff]
    %v639 = vld [vmem:[#allocation4 + $0x1030] sm:$0xff]
    %v640 = vld [vmem:[#allocation4 + $0x1038] sm:$0xff]
    %v641 = vld [vmem:[#allocation4 + $0x1040] sm:$0xff]
    %v642 = vld [vmem:[#allocation4 + $0x1048] sm:$0xff]
    %v643 = vld [vmem:[#allocation4 + $0x1050] sm:$0xff]
    %v644 = vld [vmem:[#allocation4 + $0x1058] sm:$0xff]
    %v645 = vld [vmem:[#allocation4 + $0x1060] sm:$0xff]
    %v646 = vld [vmem:[#allocation4 + $0x1068] sm:$0xff]
    %v647 = vld [vmem:[#allocation4 + $0x1070] sm:$0xff]
    %v648 = vld [vmem:[#allocation4 + $0x1078] sm:$0xff]
    %v649 = vld [vmem:[#allocation4 + $0x1080] sm:$0xff]
    %v650 = vld [vmem:[#allocation4 + $0x1088] sm:$0xff]
    %v651 = vld [vmem:[#allocation4 + $0x1090] sm:$0xff]
    %v652 = vld [vmem:[#allocation4 + $0x1098] sm:$0xff]
    %v653 = vld [vmem:[#allocation4 + $0x10a0] sm:$0xff]
    %v654 = vld [vmem:[#allocation4 + $0x10a8] sm:$0xff]
    %v655 = vld [vmem:[#allocation4 + $0x10b0] sm:$0xff]
    %v656 = vld [vmem:[#allocation4 + $0x10b8] sm:$0xff]
    %v657 = vld [vmem:[#allocation4 + $0x10c0] sm:$0xff]
    %v658 = vld [vmem:[#allocation4 + $0x10c8] sm:$0xff]
    %v659 = vld [vmem:[#allocation4 + $0x10d0] sm:$0xff]
    %v660 = vld [vmem:[#allocation4 + $0x10d8] sm:$0xff]
    %v661 = vld [vmem:[#allocation4 + $0x10e0] sm:$0xff]
    %v662 = vld [vmem:[#allocation4 + $0x10e8] sm:$0xff]
    %v663 = vld [vmem:[#allocation4 + $0x10f0] sm:$0xff]
    %v664 = vld [vmem:[#allocation4 + $0x10f8] sm:$0xff]
    %v665 = vld [vmem:[#allocation4 + $0x1100] sm:$0xff]
    %v666 = vld [vmem:[#allocation4 + $0x1108] sm:$0xff]
    %v667 = vld [vmem:[#allocation4 + $0x1110] sm:$0xff]
    %v668 = vld [vmem:[#allocation4 + $0x1118] sm:$0xff]
    %v669 = vld [vmem:[#allocation4 + $0x1120] sm:$0xff]
    %v670 = vld [vmem:[#allocation4 + $0x1128] sm:$0xff]
    %v671 = vld [vmem:[#allocation4 + $0x1130] sm:$0xff]
    %v672 = vld [vmem:[#allocation4 + $0x1138] sm:$0xff]
    %v673 = vld [vmem:[#allocation4 + $0x1140] sm:$0xff]
    %v674 = vld [vmem:[#allocation4 + $0x1148] sm:$0xff]
    %v675 = vld [vmem:[#allocation4 + $0x1150] sm:$0xff]
    %v676 = vld [vmem:[#allocation4 + $0x1158] sm:$0xff]
    %v677 = vld [vmem:[#allocation4 + $0x1160] sm:$0xff]
    %v678 = vld [vmem:[#allocation4 + $0x1168] sm:$0xff]
    %v679 = vld [vmem:[#allocation4 + $0x1170] sm:$0xff]
    %v680 = vld [vmem:[#allocation4 + $0x1178] sm:$0xff]
    %v681 = vld [vmem:[#allocation4 + $0x1180] sm:$0xff]
    %v682 = vld [vmem:[#allocation4 + $0x1188] sm:$0xff]
    %v683 = vld [vmem:[#allocation4 + $0x1190] sm:$0xff]
    %v684 = vld [vmem:[#allocation4 + $0x1198] sm:$0xff]
    %v685 = vld [vmem:[#allocation4 + $0x11a0] sm:$0xff]
    %v686 = vld [vmem:[#allocation4 + $0x11a8] sm:$0xff]
    %v687 = vld [vmem:[#allocation4 + $0x11b0] sm:$0xff]
    %v688 = vld [vmem:[#allocation4 + $0x11b8] sm:$0xff]
    %v689 = vld [vmem:[#allocation4 + $0x11c0] sm:$0xff]
    %v690 = vld [vmem:[#allocation4 + $0x11c8] sm:$0xff]
    %v691 = vld [vmem:[#allocation4 + $0x11d0] sm:$0xff]
    %v692 = vld [vmem:[#allocation4 + $0x11d8] sm:$0xff]
    %v693 = vld [vmem:[#allocation4 + $0x11e0] sm:$0xff]
    %v694 = vld [vmem:[#allocation4 + $0x11e8] sm:$0xff]
    %v695 = vld [vmem:[#allocation4 + $0x11f0] sm:$0xff]
    %v696 = vld [vmem:[#allocation4 + $0x11f8] sm:$0xff]
    %v697 = vld [vmem:[#allocation4 + $0x1200] sm:$0xff]
    %v698 = vld [vmem:[#allocation4 + $0x1208] sm:$0xff]
    %v699 = vld [vmem:[#allocation4 + $0x1210] sm:$0xff]
    %v700 = vld [vmem:[#allocation4 + $0x1218] sm:$0xff]
    %v701 = vld [vmem:[#allocation4 + $0x1220] sm:$0xff]
    %v702 = vld [vmem:[#allocation4 + $0x1228] sm:$0xff]
    %v703 = vld [vmem:[#allocation4 + $0x1230] sm:$0xff]
    %v704 = vld [vmem:[#allocation4 + $0x1238] sm:$0xff]
    %v705 = vld [vmem:[#allocation4 + $0x1240] sm:$0xff]
    %v706 = vld [vmem:[#allocation4 + $0x1248] sm:$0xff]
    %v707 = vld [vmem:[#allocation4 + $0x1250] sm:$0xff]
    %v708 = vld [vmem:[#allocation4 + $0x1258] sm:$0xff]
    %v709 = vld [vmem:[#allocation4 + $0x1260] sm:$0xff]
    %v710 = vld [vmem:[#allocation4 + $0x1268] sm:$0xff]
    %v711 = vld [vmem:[#allocation4 + $0x1270] sm:$0xff]
    %v712 = vld [vmem:[#allocation4 + $0x1278] sm:$0xff]
    %v713 = vld [vmem:[#allocation4 + $0x1280] sm:$0xff]
    %v714 = vld [vmem:[#allocation4 + $0x1288] sm:$0xff]
    %v715 = vld [vmem:[#allocation4 + $0x1290] sm:$0xff]
    %v716 = vld [vmem:[#allocation4 + $0x1298] sm:$0xff]
    %v717 = vld [vmem:[#allocation4 + $0x12a0] sm:$0xff]
    %v718 = vld [vmem:[#allocation4 + $0x12a8] sm:$0xff]
    %v719 = vld [vmem:[#allocation4 + $0x12b0] sm:$0xff]
    %v720 = vld [vmem:[#allocation4 + $0x12b8] sm:$0xff]
    %v721 = vld [vmem:[#allocation4 + $0x12c0] sm:$0xff]
    %v722 = vld [vmem:[#allocation4 + $0x12c8] sm:$0xff]
    %v723 = vld [vmem:[#allocation4 + $0x12d0] sm:$0xff]
    %v724 = vld [vmem:[#allocation4 + $0x12d8] sm:$0xff]
    %v725 = vld [vmem:[#allocation4 + $0x12e0] sm:$0xff]
    %v726 = vld [vmem:[#allocation4 + $0x12e8] sm:$0xff]
    %v727 = vld [vmem:[#allocation4 + $0x12f0] sm:$0xff]
    %v728 = vld [vmem:[#allocation4 + $0x12f8] sm:$0xff]
    %v729 = vld [vmem:[#allocation4 + $0x1300] sm:$0xff]
    %v730 = vld [vmem:[#allocation4 + $0x1308] sm:$0xff]
    %v731 = vld [vmem:[#allocation4 + $0x1310] sm:$0xff]
    %v732 = vld [vmem:[#allocation4 + $0x1318] sm:$0xff]
    %v733 = vld [vmem:[#allocation4 + $0x1320] sm:$0xff]
    %v734 = vld [vmem:[#allocation4 + $0x1328] sm:$0xff]
    %v735 = vld [vmem:[#allocation4 + $0x1330] sm:$0xff]
    %v736 = vld [vmem:[#allocation4 + $0x1338] sm:$0xff]
    %v737 = vld [vmem:[#allocation4 + $0x1340] sm:$0xff]
    %v738 = vld [vmem:[#allocation4 + $0x1348] sm:$0xff]
    %v739 = vld [vmem:[#allocation4 + $0x1350] sm:$0xff]
    %v740 = vld [vmem:[#allocation4 + $0x1358] sm:$0xff]
    %v741 = vld [vmem:[#allocation4 + $0x1360] sm:$0xff]
    %v742 = vld [vmem:[#allocation4 + $0x1368] sm:$0xff]
    %v743 = vld [vmem:[#allocation4 + $0x1370] sm:$0xff]
    %v744 = vld [vmem:[#allocation4 + $0x1378] sm:$0xff]
    %v745 = vld [vmem:[#allocation4 + $0x1380] sm:$0xff]
    %v746 = vld [vmem:[#allocation4 + $0x1388] sm:$0xff]
    %v747 = vld [vmem:[#allocation4 + $0x1390] sm:$0xff]
    %v748 = vld [vmem:[#allocation4 + $0x1398] sm:$0xff]
    %v749 = vld [vmem:[#allocation4 + $0x13a0] sm:$0xff]
    %v750 = vld [vmem:[#allocation4 + $0x13a8] sm:$0xff]
    %v751 = vld [vmem:[#allocation4 + $0x13b0] sm:$0xff]
    %v752 = vld [vmem:[#allocation4 + $0x13b8] sm:$0xff]
    %v753 = vld [vmem:[#allocation4 + $0x13c0] sm:$0xff]
    %v754 = vld [vmem:[#allocation4 + $0x13c8] sm:$0xff]
    %v755 = vld [vmem:[#allocation4 + $0x13d0] sm:$0xff]
    %v756 = vld [vmem:[#allocation4 + $0x13d8] sm:$0xff]
    %v757 = vld [vmem:[#allocation4 + $0x13e0] sm:$0xff]
    %v758 = vld [vmem:[#allocation4 + $0x13e8] sm:$0xff]
    %v759 = vld [vmem:[#allocation4 + $0x13f0] sm:$0xff]
    %v760 = vld [vmem:[#allocation4 + $0x13f8] sm:$0xff]
    %v761 = vld [vmem:[#allocation4 + $0x1400] sm:$0xff]
    %v762 = vld [vmem:[#allocation4 + $0x1408] sm:$0xff]
    %v763 = vld [vmem:[#allocation4 + $0x1410] sm:$0xff]
    %v764 = vld [vmem:[#allocation4 + $0x1418] sm:$0xff]
    %v765 = vld [vmem:[#allocation4 + $0x1420] sm:$0xff]
    %v766 = vld [vmem:[#allocation4 + $0x1428] sm:$0xff]
    %v767 = vld [vmem:[#allocation4 + $0x1430] sm:$0xff]
    %v768 = vld [vmem:[#allocation4 + $0x1438] sm:$0xff]
    %v769 = vld [vmem:[#allocation4 + $0x1440] sm:$0xff]
    %v770 = vld [vmem:[#allocation4 + $0x1448] sm:$0xff]
    %v771 = vld [vmem:[#allocation4 + $0x1450] sm:$0xff]
    %v772 = vld [vmem:[#allocation4 + $0x1458] sm:$0xff]
    %v773 = vld [vmem:[#allocation4 + $0x1460] sm:$0xff]
    %v774 = vld [vmem:[#allocation4 + $0x1468] sm:$0xff]
    %v775 = vld [vmem:[#allocation4 + $0x1470] sm:$0xff]
    %v776 = vld [vmem:[#allocation4 + $0x1478] sm:$0xff]
    %v777 = vld [vmem:[#allocation4 + $0x1480] sm:$0xff]
    %v778 = vld [vmem:[#allocation4 + $0x1488] sm:$0xff]
    %v779 = vld [vmem:[#allocation4 + $0x1490] sm:$0xff]
    %v780 = vld [vmem:[#allocation4 + $0x1498] sm:$0xff]
    %v781 = vld [vmem:[#allocation4 + $0x14a0] sm:$0xff]
    %v782 = vld [vmem:[#allocation4 + $0x14a8] sm:$0xff]
    %v783 = vld [vmem:[#allocation4 + $0x14b0] sm:$0xff]
    %v784 = vld [vmem:[#allocation4 + $0x14b8] sm:$0xff]
    %v785 = vld [vmem:[#allocation4 + $0x14c0] sm:$0xff]
    %v786 = vld [vmem:[#allocation4 + $0x14c8] sm:$0xff]
    %v787 = vld [vmem:[#allocation4 + $0x14d0] sm:$0xff]
    %v788 = vld [vmem:[#allocation4 + $0x14d8] sm:$0xff]
    %v789 = vld [vmem:[#allocation4 + $0x14e0] sm:$0xff]
    %v790 = vld [vmem:[#allocation4 + $0x14e8] sm:$0xff]
    %v791 = vld [vmem:[#allocation4 + $0x14f0] sm:$0xff]
    %v792 = vld [vmem:[#allocation4 + $0x14f8] sm:$0xff]
    %v793 = vld [vmem:[#allocation4 + $0x1500] sm:$0xff]
    %v794 = vld [vmem:[#allocation4 + $0x1508] sm:$0xff]
    %v795 = vld [vmem:[#allocation4 + $0x1510] sm:$0xff]
    %v796 = vld [vmem:[#allocation4 + $0x1518] sm:$0xff]
    %v797 = vld [vmem:[#allocation4 + $0x1520] sm:$0xff]
    %v798 = vld [vmem:[#allocation4 + $0x1528] sm:$0xff]
    %v799 = vld [vmem:[#allocation4 + $0x1530] sm:$0xff]
    %v800 = vld [vmem:[#allocation4 + $0x1538] sm:$0xff]
    %v801 = vld [vmem:[#allocation4 + $0x1540] sm:$0xff]
    %v802 = vld [vmem:[#allocation4 + $0x1548] sm:$0xff]
    %v803 = vld [vmem:[#allocation4 + $0x1550] sm:$0xff]
    %v804 = vld [vmem:[#allocation4 + $0x1558] sm:$0xff]
    %v805 = vld [vmem:[#allocation4 + $0x1560] sm:$0xff]
    %v806 = vld [vmem:[#allocation4 + $0x1568] sm:$0xff]
    %v807 = vld [vmem:[#allocation4 + $0x1570] sm:$0xff]
    %v808 = vld [vmem:[#allocation4 + $0x1578] sm:$0xff]
    %v809 = vld [vmem:[#allocation4 + $0x1580] sm:$0xff]
    %v810 = vld [vmem:[#allocation4 + $0x1588] sm:$0xff]
    %v811 = vld [vmem:[#allocation4 + $0x1590] sm:$0xff]
    %v812 = vld [vmem:[#allocation4 + $0x1598] sm:$0xff]
    %v813 = vld [vmem:[#allocation4 + $0x15a0] sm:$0xff]
    %v814 = vld [vmem:[#allocation4 + $0x15a8] sm:$0xff]
    %v815 = vld [vmem:[#allocation4 + $0x15b0] sm:$0xff]
    %v816 = vld [vmem:[#allocation4 + $0x15b8] sm:$0xff]
    %v817 = vld [vmem:[#allocation4 + $0x15c0] sm:$0xff]
    %v818 = vld [vmem:[#allocation4 + $0x15c8] sm:$0xff]
    %v819 = vld [vmem:[#allocation4 + $0x15d0] sm:$0xff]
    %v820 = vld [vmem:[#allocation4 + $0x15d8] sm:$0xff]
    %v821 = vld [vmem:[#allocation4 + $0x15e0] sm:$0xff]
    %v822 = vld [vmem:[#allocation4 + $0x15e8] sm:$0xff]
    %v823 = vld [vmem:[#allocation4 + $0x15f0] sm:$0xff]
    %v824 = vld [vmem:[#allocation4 + $0x15f8] sm:$0xff]
    %v825 = vld [vmem:[#allocation4 + $0x1600] sm:$0xff]
    %v826 = vld [vmem:[#allocation4 + $0x1608] sm:$0xff]
    %v827 = vld [vmem:[#allocation4 + $0x1610] sm:$0xff]
    %v828 = vld [vmem:[#allocation4 + $0x1618] sm:$0xff]
    %v829 = vld [vmem:[#allocation4 + $0x1620] sm:$0xff]
    %v830 = vld [vmem:[#allocation4 + $0x1628] sm:$0xff]
    %v831 = vld [vmem:[#allocation4 + $0x1630] sm:$0xff]
    %v832 = vld [vmem:[#allocation4 + $0x1638] sm:$0xff]
    %v833 = vld [vmem:[#allocation4 + $0x1640] sm:$0xff]
    %v834 = vld [vmem:[#allocation4 + $0x1648] sm:$0xff]
    %v835 = vld [vmem:[#allocation4 + $0x1650] sm:$0xff]
    %v836 = vld [vmem:[#allocation4 + $0x1658] sm:$0xff]
    %v837 = vld [vmem:[#allocation4 + $0x1660] sm:$0xff]
    %v838 = vld [vmem:[#allocation4 + $0x1668] sm:$0xff]
    %v839 = vld [vmem:[#allocation4 + $0x1670] sm:$0xff]
    %v840 = vld [vmem:[#allocation4 + $0x1678] sm:$0xff]
    %v841 = vld [vmem:[#allocation4 + $0x1680] sm:$0xff]
    %v842 = vld [vmem:[#allocation4 + $0x1688] sm:$0xff]
    %v843 = vld [vmem:[#allocation4 + $0x1690] sm:$0xff]
    %v844 = vld [vmem:[#allocation4 + $0x1698] sm:$0xff]
    %v845 = vld [vmem:[#allocation4 + $0x16a0] sm:$0xff]
    %v846 = vld [vmem:[#allocation4 + $0x16a8] sm:$0xff]
    %v847 = vld [vmem:[#allocation4 + $0x16b0] sm:$0xff]
    %v848 = vld [vmem:[#allocation4 + $0x16b8] sm:$0xff]
    %v849 = vld [vmem:[#allocation4 + $0x16c0] sm:$0xff]
    %v850 = vld [vmem:[#allocation4 + $0x16c8] sm:$0xff]
    %v851 = vld [vmem:[#allocation4 + $0x16d0] sm:$0xff]
    %v852 = vld [vmem:[#allocation4 + $0x16d8] sm:$0xff]
    %v853 = vld [vmem:[#allocation4 + $0x16e0] sm:$0xff]
    %v854 = vld [vmem:[#allocation4 + $0x16e8] sm:$0xff]
    %v855 = vld [vmem:[#allocation4 + $0x16f0] sm:$0xff]
    %v856 = vld [vmem:[#allocation4 + $0x16f8] sm:$0xff]
    %v857 = vld [vmem:[#allocation4 + $0x1700] sm:$0xff]
    %v858 = vld [vmem:[#allocation4 + $0x1708] sm:$0xff]
    %v859 = vld [vmem:[#allocation4 + $0x1710] sm:$0xff]
    %v860 = vld [vmem:[#allocation4 + $0x1718] sm:$0xff]
    %v861 = vld [vmem:[#allocation4 + $0x1720] sm:$0xff]
    %v862 = vld [vmem:[#allocation4 + $0x1728] sm:$0xff]
    %v863 = vld [vmem:[#allocation4 + $0x1730] sm:$0xff]
    %v864 = vld [vmem:[#allocation4 + $0x1738] sm:$0xff]
    %v865 = vld [vmem:[#allocation4 + $0x1740] sm:$0xff]
    %v866 = vld [vmem:[#allocation4 + $0x1748] sm:$0xff]
    %v867 = vld [vmem:[#allocation4 + $0x1750] sm:$0xff]
    %v868 = vld [vmem:[#allocation4 + $0x1758] sm:$0xff]
    %v869 = vld [vmem:[#allocation4 + $0x1760] sm:$0xff]
    %v870 = vld [vmem:[#allocation4 + $0x1768] sm:$0xff]
    %v871 = vld [vmem:[#allocation4 + $0x1770] sm:$0xff]
    %v872 = vld [vmem:[#allocation4 + $0x1778] sm:$0xff]
    %v873 = vld [vmem:[#allocation4 + $0x1780] sm:$0xff]
    %v874 = vld [vmem:[#allocation4 + $0x1788] sm:$0xff]
    %v875 = vld [vmem:[#allocation4 + $0x1790] sm:$0xff]
    %v876 = vld [vmem:[#allocation4 + $0x1798] sm:$0xff]
    %v877 = vld [vmem:[#allocation4 + $0x17a0] sm:$0xff]
    %v878 = vld [vmem:[#allocation4 + $0x17a8] sm:$0xff]
    %v879 = vld [vmem:[#allocation4 + $0x17b0] sm:$0xff]
    %v880 = vld [vmem:[#allocation4 + $0x17b8] sm:$0xff]
    %v881 = vld [vmem:[#allocation4 + $0x17c0] sm:$0xff]
    %v882 = vld [vmem:[#allocation4 + $0x17c8] sm:$0xff]
    %v883 = vld [vmem:[#allocation4 + $0x17d0] sm:$0xff]
    %v884 = vld [vmem:[#allocation4 + $0x17d8] sm:$0xff]
    %v885 = vld [vmem:[#allocation4 + $0x17e0] sm:$0xff]
    %v886 = vld [vmem:[#allocation4 + $0x17e8] sm:$0xff]
    %v887 = vld [vmem:[#allocation4 + $0x17f0] sm:$0xff]
    %v888 = vld [vmem:[#allocation4 + $0x17f8] sm:$0xff]
    %v889 = vld [vmem:[#allocation4 + $0x1800] sm:$0xff]
    %v890 = vld [vmem:[#allocation4 + $0x1808] sm:$0xff]
    %v891 = vld [vmem:[#allocation4 + $0x1810] sm:$0xff]
    %v892 = vld [vmem:[#allocation4 + $0x1818] sm:$0xff]
    %v893 = vld [vmem:[#allocation4 + $0x1820] sm:$0xff]
    %v894 = vld [vmem:[#allocation4 + $0x1828] sm:$0xff]
    %v895 = vld [vmem:[#allocation4 + $0x1830] sm:$0xff]
    %v896 = vld [vmem:[#allocation4 + $0x1838] sm:$0xff]
    %v897 = vld [vmem:[#allocation4 + $0x1840] sm:$0xff]
    %v898 = vld [vmem:[#allocation4 + $0x1848] sm:$0xff]
    %v899 = vld [vmem:[#allocation4 + $0x1850] sm:$0xff]
    %v900 = vld [vmem:[#allocation4 + $0x1858] sm:$0xff]
    %v901 = vld [vmem:[#allocation4 + $0x1860] sm:$0xff]
    %v902 = vld [vmem:[#allocation4 + $0x1868] sm:$0xff]
    %v903 = vld [vmem:[#allocation4 + $0x1870] sm:$0xff]
    %v904 = vld [vmem:[#allocation4 + $0x1878] sm:$0xff]
    %v905 = vld [vmem:[#allocation4 + $0x1880] sm:$0xff]
    %v906 = vld [vmem:[#allocation4 + $0x1888] sm:$0xff]
    %v907 = vld [vmem:[#allocation4 + $0x1890] sm:$0xff]
    %v908 = vld [vmem:[#allocation4 + $0x1898] sm:$0xff]
    %v909 = vld [vmem:[#allocation4 + $0x18a0] sm:$0xff]
    %v910 = vld [vmem:[#allocation4 + $0x18a8] sm:$0xff]
    %v911 = vld [vmem:[#allocation4 + $0x18b0] sm:$0xff]
    %v912 = vld [vmem:[#allocation4 + $0x18b8] sm:$0xff]
    %v913 = vld [vmem:[#allocation4 + $0x18c0] sm:$0xff]
    %v914 = vld [vmem:[#allocation4 + $0x18c8] sm:$0xff]
    %v915 = vld [vmem:[#allocation4 + $0x18d0] sm:$0xff]
    %v916 = vld [vmem:[#allocation4 + $0x18d8] sm:$0xff]
    %v917 = vld [vmem:[#allocation4 + $0x18e0] sm:$0xff]
    %v918 = vld [vmem:[#allocation4 + $0x18e8] sm:$0xff]
    %v919 = vld [vmem:[#allocation4 + $0x18f0] sm:$0xff]
    %v920 = vld [vmem:[#allocation4 + $0x18f8] sm:$0xff]
    %v921 = vld [vmem:[#allocation4 + $0x1900] sm:$0xff]
    %v922 = vld [vmem:[#allocation4 + $0x1908] sm:$0xff]
    %v923 = vld [vmem:[#allocation4 + $0x1910] sm:$0xff]
    %v924 = vld [vmem:[#allocation4 + $0x1918] sm:$0xff]
    %v925 = vld [vmem:[#allocation4 + $0x1920] sm:$0xff]
    %v926 = vld [vmem:[#allocation4 + $0x1928] sm:$0xff]
    %v927 = vld [vmem:[#allocation4 + $0x1930] sm:$0xff]
    %v928 = vld [vmem:[#allocation4 + $0x1938] sm:$0xff]
    %v929 = vld [vmem:[#allocation4 + $0x1940] sm:$0xff]
    %v930 = vld [vmem:[#allocation4 + $0x1948] sm:$0xff]
    %v931 = vld [vmem:[#allocation4 + $0x1950] sm:$0xff]
    %v932 = vld [vmem:[#allocation4 + $0x1958] sm:$0xff]
    %v933 = vld [vmem:[#allocation4 + $0x1960] sm:$0xff]
    %v934 = vld [vmem:[#allocation4 + $0x1968] sm:$0xff]
    %v935 = vld [vmem:[#allocation4 + $0x1970] sm:$0xff]
    %v936 = vld [vmem:[#allocation4 + $0x1978] sm:$0xff]
    %v937 = vld [vmem:[#allocation4 + $0x1980] sm:$0xff]
    %v938 = vld [vmem:[#allocation4 + $0x1988] sm:$0xff]
    %v939 = vld [vmem:[#allocation4 + $0x1990] sm:$0xff]
    %v940 = vld [vmem:[#allocation4 + $0x1998] sm:$0xff]
    %v941 = vld [vmem:[#allocation4 + $0x19a0] sm:$0xff]
    %v942 = vld [vmem:[#allocation4 + $0x19a8] sm:$0xff]
    %v943 = vld [vmem:[#allocation4 + $0x19b0] sm:$0xff]
    %v944 = vld [vmem:[#allocation4 + $0x19b8] sm:$0xff]
    %v945 = vld [vmem:[#allocation4 + $0x19c0] sm:$0xff]
    %v946 = vld [vmem:[#allocation4 + $0x19c8] sm:$0xff]
    %v947 = vld [vmem:[#allocation4 + $0x19d0] sm:$0xff]
    %v948 = vld [vmem:[#allocation4 + $0x19d8] sm:$0xff]
    %v949 = vld [vmem:[#allocation4 + $0x19e0] sm:$0xff]
    %v950 = vld [vmem:[#allocation4 + $0x19e8] sm:$0xff]
    %v951 = vld [vmem:[#allocation4 + $0x19f0] sm:$0xff]
    %v952 = vld [vmem:[#allocation4 + $0x19f8] sm:$0xff]
    %v953 = vld [vmem:[#allocation4 + $0x1a00] sm:$0xff]
    %v954 = vld [vmem:[#allocation4 + $0x1a08] sm:$0xff]
    %v955 = vld [vmem:[#allocation4 + $0x1a10] sm:$0xff]
    %v956 = vld [vmem:[#allocation4 + $0x1a18] sm:$0xff]
    %v957 = vld [vmem:[#allocation4 + $0x1a20] sm:$0xff]
    %v958 = vld [vmem:[#allocation4 + $0x1a28] sm:$0xff]
    %v959 = vld [vmem:[#allocation4 + $0x1a30] sm:$0xff]
    %v960 = vld [vmem:[#allocation4 + $0x1a38] sm:$0xff]
    %v961 = vld [vmem:[#allocation4 + $0x1a40] sm:$0xff]
    %v962 = vld [vmem:[#allocation4 + $0x1a48] sm:$0xff]
    %v963 = vld [vmem:[#allocation4 + $0x1a50] sm:$0xff]
    %v964 = vld [vmem:[#allocation4 + $0x1a58] sm:$0xff]
    %v965 = vld [vmem:[#allocation4 + $0x1a60] sm:$0xff]
    %v966 = vld [vmem:[#allocation4 + $0x1a68] sm:$0xff]
    %v967 = vld [vmem:[#allocation4 + $0x1a70] sm:$0xff]
    %v968 = vld [vmem:[#allocation4 + $0x1a78] sm:$0xff]
    %v969 = vld [vmem:[#allocation4 + $0x1a80] sm:$0xff]
    %v970 = vld [vmem:[#allocation4 + $0x1a88] sm:$0xff]
    %v971 = vld [vmem:[#allocation4 + $0x1a90] sm:$0xff]
    %v972 = vld [vmem:[#allocation4 + $0x1a98] sm:$0xff]
    %v973 = vld [vmem:[#allocation4 + $0x1aa0] sm:$0xff]
    %v974 = vld [vmem:[#allocation4 + $0x1aa8] sm:$0xff]
    %v975 = vld [vmem:[#allocation4 + $0x1ab0] sm:$0xff]
    %v976 = vld [vmem:[#allocation4 + $0x1ab8] sm:$0xff]
    %v977 = vld [vmem:[#allocation4 + $0x1ac0] sm:$0xff]
    %v978 = vld [vmem:[#allocation4 + $0x1ac8] sm:$0xff]
    %v979 = vld [vmem:[#allocation4 + $0x1ad0] sm:$0xff]
    %v980 = vld [vmem:[#allocation4 + $0x1ad8] sm:$0xff]
    %v981 = vld [vmem:[#allocation4 + $0x1ae0] sm:$0xff]
    %v982 = vld [vmem:[#allocation4 + $0x1ae8] sm:$0xff]
    %v983 = vld [vmem:[#allocation4 + $0x1af0] sm:$0xff]
    %v984 = vld [vmem:[#allocation4 + $0x1af8] sm:$0xff]
    %v985 = vld [vmem:[#allocation4 + $0x1b00] sm:$0xff]
    %v986 = vld [vmem:[#allocation4 + $0x1b08] sm:$0xff]
    %v987 = vld [vmem:[#allocation4 + $0x1b10] sm:$0xff]
    %v988 = vld [vmem:[#allocation4 + $0x1b18] sm:$0xff]
    %v989 = vld [vmem:[#allocation4 + $0x1b20] sm:$0xff]
    %v990 = vld [vmem:[#allocation4 + $0x1b28] sm:$0xff]
    %v991 = vld [vmem:[#allocation4 + $0x1b30] sm:$0xff]
    %v992 = vld [vmem:[#allocation4 + $0x1b38] sm:$0xff]
    %v993 = vld [vmem:[#allocation4 + $0x1b40] sm:$0xff]
    %v994 = vld [vmem:[#allocation4 + $0x1b48] sm:$0xff]
    %v995 = vld [vmem:[#allocation4 + $0x1b50] sm:$0xff]
    %v996 = vld [vmem:[#allocation4 + $0x1b58] sm:$0xff]
    %v997 = vld [vmem:[#allocation4 + $0x1b60] sm:$0xff]
    %v998 = vld [vmem:[#allocation4 + $0x1b68] sm:$0xff]
    %v999 = vld [vmem:[#allocation4 + $0x1b70] sm:$0xff]
    %v1000 = vld [vmem:[#allocation4 + $0x1b78] sm:$0xff]
    %v1001 = vld [vmem:[#allocation4 + $0x1b80] sm:$0xff]
    %v1002 = vld [vmem:[#allocation4 + $0x1b88] sm:$0xff]
    %v1003 = vld [vmem:[#allocation4 + $0x1b90] sm:$0xff]
    %v1004 = vld [vmem:[#allocation4 + $0x1b98] sm:$0xff]
    %v1005 = vld [vmem:[#allocation4 + $0x1ba0] sm:$0xff]
    %v1006 = vld [vmem:[#allocation4 + $0x1ba8] sm:$0xff]
    %v1007 = vld [vmem:[#allocation4 + $0x1bb0] sm:$0xff]
    %v1008 = vld [vmem:[#allocation4 + $0x1bb8] sm:$0xff]
    %v1009 = vld [vmem:[#allocation4 + $0x1bc0] sm:$0xff]
    %v1010 = vld [vmem:[#allocation4 + $0x1bc8] sm:$0xff]
    %v1011 = vld [vmem:[#allocation4 + $0x1bd0] sm:$0xff]
    %v1012 = vld [vmem:[#allocation4 + $0x1bd8] sm:$0xff]
    %v1013 = vld [vmem:[#allocation4 + $0x1be0] sm:$0xff]
    %v1014 = vld [vmem:[#allocation4 + $0x1be8] sm:$0xff]
    %v1015 = vld [vmem:[#allocation4 + $0x1bf0] sm:$0xff]
    %v1016 = vld [vmem:[#allocation4 + $0x1bf8] sm:$0xff]
    %v1017 = vld [vmem:[#allocation4 + $0x1c00] sm:$0xff]
    %v1018 = vld [vmem:[#allocation4 + $0x1c08] sm:$0xff]
    %v1019 = vld [vmem:[#allocation4 + $0x1c10] sm:$0xff]
    %v1020 = vld [vmem:[#allocation4 + $0x1c18] sm:$0xff]
    %v1021 = vld [vmem:[#allocation4 + $0x1c20] sm:$0xff]
    %v1022 = vld [vmem:[#allocation4 + $0x1c28] sm:$0xff]
    %v1023 = vld [vmem:[#allocation4 + $0x1c30] sm:$0xff]
    %v1024 = vld [vmem:[#allocation4 + $0x1c38] sm:$0xff]
    %v1025 = vld [vmem:[#allocation4 + $0x1c40] sm:$0xff]
    %v1026 = vld [vmem:[#allocation4 + $0x1c48] sm:$0xff]
    %v1027 = vld [vmem:[#allocation4 + $0x1c50] sm:$0xff]
    %v1028 = vld [vmem:[#allocation4 + $0x1c58] sm:$0xff]
    %v1029 = vld [vmem:[#allocation4 + $0x1c60] sm:$0xff]
    %v1030 = vld [vmem:[#allocation4 + $0x1c68] sm:$0xff]
    %v1031 = vld [vmem:[#allocation4 + $0x1c70] sm:$0xff]
    %v1032 = vld [vmem:[#allocation4 + $0x1c78] sm:$0xff]
    %v1033 = vld [vmem:[#allocation4 + $0x1c80] sm:$0xff]
    %v1034 = vld [vmem:[#allocation4 + $0x1c88] sm:$0xff]
    %v1035 = vld [vmem:[#allocation4 + $0x1c90] sm:$0xff]
    %v1036 = vld [vmem:[#allocation4 + $0x1c98] sm:$0xff]
    %v1037 = vld [vmem:[#allocation4 + $0x1ca0] sm:$0xff]
    %v1038 = vld [vmem:[#allocation4 + $0x1ca8] sm:$0xff]
    %v1039 = vld [vmem:[#allocation4 + $0x1cb0] sm:$0xff]
    %v1040 = vld [vmem:[#allocation4 + $0x1cb8] sm:$0xff]
    %v1041 = vld [vmem:[#allocation4 + $0x1cc0] sm:$0xff]
    %v1042 = vld [vmem:[#allocation4 + $0x1cc8] sm:$0xff]
    %v1043 = vld [vmem:[#allocation4 + $0x1cd0] sm:$0xff]
    %v1044 = vld [vmem:[#allocation4 + $0x1cd8] sm:$0xff]
    %v1045 = vld [vmem:[#allocation4 + $0x1ce0] sm:$0xff]
    %v1046 = vld [vmem:[#allocation4 + $0x1ce8] sm:$0xff]
    %v1047 = vld [vmem:[#allocation4 + $0x1cf0] sm:$0xff]
    %v1048 = vld [vmem:[#allocation4 + $0x1cf8] sm:$0xff]
    %v1049 = vld [vmem:[#allocation4 + $0x1d00] sm:$0xff]
    %v1050 = vld [vmem:[#allocation4 + $0x1d08] sm:$0xff]
    %v1051 = vld [vmem:[#allocation4 + $0x1d10] sm:$0xff]
    %v1052 = vld [vmem:[#allocation4 + $0x1d18] sm:$0xff]
    %v1053 = vld [vmem:[#allocation4 + $0x1d20] sm:$0xff]
    %v1054 = vld [vmem:[#allocation4 + $0x1d28] sm:$0xff]
    %v1055 = vld [vmem:[#allocation4 + $0x1d30] sm:$0xff]
    %v1056 = vld [vmem:[#allocation4 + $0x1d38] sm:$0xff]
    %v1057 = vld [vmem:[#allocation4 + $0x1d40] sm:$0xff]
    %v1058 = vld [vmem:[#allocation4 + $0x1d48] sm:$0xff]
    %v1059 = vld [vmem:[#allocation4 + $0x1d50] sm:$0xff]
    %v1060 = vld [vmem:[#allocation4 + $0x1d58] sm:$0xff]
    %v1061 = vld [vmem:[#allocation4 + $0x1d60] sm:$0xff]
    %v1062 = vld [vmem:[#allocation4 + $0x1d68] sm:$0xff]
    %v1063 = vld [vmem:[#allocation4 + $0x1d70] sm:$0xff]
    %v1064 = vld [vmem:[#allocation4 + $0x1d78] sm:$0xff]
    %v1065 = vld [vmem:[#allocation4 + $0x1d80] sm:$0xff]
    %v1066 = vld [vmem:[#allocation4 + $0x1d88] sm:$0xff]
    %v1067 = vld [vmem:[#allocation4 + $0x1d90] sm:$0xff]
    %v1068 = vld [vmem:[#allocation4 + $0x1d98] sm:$0xff]
    %v1069 = vld [vmem:[#allocation4 + $0x1da0] sm:$0xff]
    %v1070 = vld [vmem:[#allocation4 + $0x1da8] sm:$0xff]
    %v1071 = vld [vmem:[#allocation4 + $0x1db0] sm:$0xff]
    %v1072 = vld [vmem:[#allocation4 + $0x1db8] sm:$0xff]
    %v1073 = vld [vmem:[#allocation4 + $0x1dc0] sm:$0xff]
    %v1074 = vld [vmem:[#allocation4 + $0x1dc8] sm:$0xff]
    %v1075 = vld [vmem:[#allocation4 + $0x1dd0] sm:$0xff]
    %v1076 = vld [vmem:[#allocation4 + $0x1dd8] sm:$0xff]
    %v1077 = vld [vmem:[#allocation4 + $0x1de0] sm:$0xff]
    %v1078 = vld [vmem:[#allocation4 + $0x1de8] sm:$0xff]
    %v1079 = vld [vmem:[#allocation4 + $0x1df0] sm:$0xff]
    %v1080 = vld [vmem:[#allocation4 + $0x1df8] sm:$0xff]
    %v1081 = vld [vmem:[#allocation4 + $0x1e00] sm:$0xff]
    %v1082 = vld [vmem:[#allocation4 + $0x1e08] sm:$0xff]
    %v1083 = vld [vmem:[#allocation4 + $0x1e10] sm:$0xff]
    %v1084 = vld [vmem:[#allocation4 + $0x1e18] sm:$0xff]
    %v1085 = vld [vmem:[#allocation4 + $0x1e20] sm:$0xff]
    %v1086 = vld [vmem:[#allocation4 + $0x1e28] sm:$0xff]
    %v1087 = vld [vmem:[#allocation4 + $0x1e30] sm:$0xff]
    %v1088 = vld [vmem:[#allocation4 + $0x1e38] sm:$0xff]
    %v1089 = vld [vmem:[#allocation4 + $0x1e40] sm:$0xff]
    %v1090 = vld [vmem:[#allocation4 + $0x1e48] sm:$0xff]
    %v1091 = vld [vmem:[#allocation4 + $0x1e50] sm:$0xff]
    %v1092 = vld [vmem:[#allocation4 + $0x1e58] sm:$0xff]
    %v1093 = vld [vmem:[#allocation4 + $0x1e60] sm:$0xff]
    %v1094 = vld [vmem:[#allocation4 + $0x1e68] sm:$0xff]
    %v1095 = vld [vmem:[#allocation4 + $0x1e70] sm:$0xff]
    %v1096 = vld [vmem:[#allocation4 + $0x1e78] sm:$0xff]
    %v1097 = vld [vmem:[#allocation4 + $0x1e80] sm:$0xff]
    %v1098 = vld [vmem:[#allocation4 + $0x1e88] sm:$0xff]
    %v1099 = vld [vmem:[#allocation4 + $0x1e90] sm:$0xff]
    %v1100 = vld [vmem:[#allocation4 + $0x1e98] sm:$0xff]
    %v1101 = vld [vmem:[#allocation4 + $0x1ea0] sm:$0xff]
    %v1102 = vld [vmem:[#allocation4 + $0x1ea8] sm:$0xff]
    %v1103 = vld [vmem:[#allocation4 + $0x1eb0] sm:$0xff]
    %v1104 = vld [vmem:[#allocation4 + $0x1eb8] sm:$0xff]
    %v1105 = vld [vmem:[#allocation4 + $0x1ec0] sm:$0xff]
    %v1106 = vld [vmem:[#allocation4 + $0x1ec8] sm:$0xff]
    %v1107 = vld [vmem:[#allocation4 + $0x1ed0] sm:$0xff]
    %v1108 = vld [vmem:[#allocation4 + $0x1ed8] sm:$0xff]
    %v1109 = vld [vmem:[#allocation4 + $0x1ee0] sm:$0xff]
    %v1110 = vld [vmem:[#allocation4 + $0x1ee8] sm:$0xff]
    %v1111 = vld [vmem:[#allocation4 + $0x1ef0] sm:$0xff]
    %v1112 = vld [vmem:[#allocation4 + $0x1ef8] sm:$0xff]
    %v1113 = vld [vmem:[#allocation4 + $0x1f00] sm:$0xff]
    %v1114 = vld [vmem:[#allocation4 + $0x1f08] sm:$0xff]
    %v1115 = vld [vmem:[#allocation4 + $0x1f10] sm:$0xff]
    %v1116 = vld [vmem:[#allocation4 + $0x1f18] sm:$0xff]
    %v1117 = vld [vmem:[#allocation4 + $0x1f20] sm:$0xff]
    %v1118 = vld [vmem:[#allocation4 + $0x1f28] sm:$0xff]
    %v1119 = vld [vmem:[#allocation4 + $0x1f30] sm:$0xff]
    %v1120 = vld [vmem:[#allocation4 + $0x1f38] sm:$0xff]
    %v1121 = vld [vmem:[#allocation4 + $0x1f40] sm:$0xff]
    %v1122 = vld [vmem:[#allocation4 + $0x1f48] sm:$0xff]
    %v1123 = vld [vmem:[#allocation4 + $0x1f50] sm:$0xff]
    %v1124 = vld [vmem:[#allocation4 + $0x1f58] sm:$0xff]
    %v1125 = vld [vmem:[#allocation4 + $0x1f60] sm:$0xff]
    %v1126 = vld [vmem:[#allocation4 + $0x1f68] sm:$0xff]
    %v1127 = vld [vmem:[#allocation4 + $0x1f70] sm:$0xff]
    %v1128 = vld [vmem:[#allocation4 + $0x1f78] sm:$0xff]
    %v1129 = vld [vmem:[#allocation4 + $0x1f80] sm:$0xff]
    %v1130 = vld [vmem:[#allocation4 + $0x1f88] sm:$0xff]
    %v1131 = vld [vmem:[#allocation4 + $0x1f90] sm:$0xff]
    %v1132 = vld [vmem:[#allocation4 + $0x1f98] sm:$0xff]
    %v1133 = vld [vmem:[#allocation4 + $0x1fa0] sm:$0xff]
    %v1134 = vld [vmem:[#allocation4 + $0x1fa8] sm:$0xff]
    %v1135 = vld [vmem:[#allocation4 + $0x1fb0] sm:$0xff]
    %v1136 = vld [vmem:[#allocation4 + $0x1fb8] sm:$0xff]
    %v1137 = vld [vmem:[#allocation4 + $0x1fc0] sm:$0xff]
    %v1138 = vld [vmem:[#allocation4 + $0x1fc8] sm:$0xff]
    %v1139 = vld [vmem:[#allocation4 + $0x1fd0] sm:$0xff]
    %v1140 = vld [vmem:[#allocation4 + $0x1fd8] sm:$0xff]
    %v1141 = vld [vmem:[#allocation4 + $0x1fe0] sm:$0xff]
    %v1142 = vld [vmem:[#allocation4 + $0x1fe8] sm:$0xff]
    %v1143 = vld [vmem:[#allocation4 + $0x1ff0] sm:$0xff]
    %v1144 = vld [vmem:[#allocation4 + $0x1ff8] sm:$0xff]
    %v1145 = vld [vmem:[#allocation6] sm:$0x1]
    %v1147 = vperm.slane %v1145, 0
    %1149 = vmatpush.msra.mxu0 %v136
    %1150 = vmatpush.msra.mxu0 %v135
    %1151 = vmatpush.msra.mxu0 %v134
    %1152 = vmatpush.msra.mxu0 %v133
    %1153 = vmatpush.msra.mxu0 %v132
    %1154 = vmatpush.msra.mxu0 %v131
    %1155 = vmatpush.msra.mxu0 %v130
    %1156 = vmatpush.msra.mxu0 %v129
    %1157 = vmatpush.msra.mxu0 %v128
    %1158 = vmatpush.msra.mxu0 %v127
    %1159 = vmatpush.msra.mxu0 %v126
    %1160 = vmatpush.msra.mxu0 %v125
    %1161 = vmatpush.msra.mxu0 %v124
    %1162 = vmatpush.msra.mxu0 %v123
    %1163 = vmatpush.msra.mxu0 %v122
    %1164 = vmatpush.msra.mxu0 %v121
    %1165 = vmatmul.f32.gmra.mxu0 %v57
    %v1166 = vpop.f32.mrf.mxu0
    %v1167 = vadd.f32 %v1147, %v1166
    %1168 = vdwg.mxu0
    %1169 = vmatpush.msra.mxu0 %v152
    %1170 = vmatpush.msra.mxu0 %v151
    %1171 = vmatpush.msra.mxu0 %v150
    %1172 = vmatpush.msra.mxu0 %v149
    %1173 = vmatpush.msra.mxu0 %v148
    %1174 = vmatpush.msra.mxu0 %v147
    %1175 = vmatpush.msra.mxu0 %v146
    %1176 = vmatpush.msra.mxu0 %v145
    %1177 = vmatpush.msra.mxu0 %v144
    %1178 = vmatpush.msra.mxu0 %v143
    %1179 = vmatpush.msra.mxu0 %v142
    %1180 = vmatpush.msra.mxu0 %v141
    %1181 = vmatpush.msra.mxu0 %v140
    %1182 = vmatpush.msra.mxu0 %v139
    %1183 = vmatpush.msra.mxu0 %v138
    %1184 = vmatpush.msra.mxu0 %v137
    %1185 = vmatmul.f32.gmra.mxu0 %v58
    %v1186 = vpop.f32.mrf.mxu0
    %v1187 = vadd.f32 %v1167, %v1186
    %1188 = vdwg.mxu0
    %1189 = vmatpush.msra.mxu0 %v168
    %1190 = vmatpush.msra.mxu0 %v167
    %1191 = vmatpush.msra.mxu0 %v166
    %1192 = vmatpush.msra.mxu0 %v165
    %1193 = vmatpush.msra.mxu0 %v164
    %1194 = vmatpush.msra.mxu0 %v163
    %1195 = vmatpush.msra.mxu0 %v162
    %1196 = vmatpush.msra.mxu0 %v161
    %1197 = vmatpush.msra.mxu0 %v160
    %1198 = vmatpush.msra.mxu0 %v159
    %1199 = vmatpush.msra.mxu0 %v158
    %1200 = vmatpush.msra.mxu0 %v157
    %1201 = vmatpush.msra.mxu0 %v156
    %1202 = vmatpush.msra.mxu0 %v155
    %1203 = vmatpush.msra.mxu0 %v154
    %1204 = vmatpush.msra.mxu0 %v153
    %1205 = vmatmul.f32.gmra.mxu0 %v59
    %v1206 = vpop.f32.mrf.mxu0
    %v1207 = vadd.f32 %v1187, %v1206
    %1208 = vdwg.mxu0
    %1209 = vmatpush.msra.mxu0 %v184
    %1210 = vmatpush.msra.mxu0 %v183
    %1211 = vmatpush.msra.mxu0 %v182
    %1212 = vmatpush.msra.mxu0 %v181
    %1213 = vmatpush.msra.mxu0 %v180
    %1214 = vmatpush.msra.mxu0 %v179
    %1215 = vmatpush.msra.mxu0 %v178
    %1216 = vmatpush.msra.mxu0 %v177
    %1217 = vmatpush.msra.mxu0 %v176
    %1218 = vmatpush.msra.mxu0 %v175
    %1219 = vmatpush.msra.mxu0 %v174
    %1220 = vmatpush.msra.mxu0 %v173
    %1221 = vmatpush.msra.mxu0 %v172
    %1222 = vmatpush.msra.mxu0 %v171
    %1223 = vmatpush.msra.mxu0 %v170
    %1224 = vmatpush.msra.mxu0 %v169
    %1225 = vmatmul.f32.gmra.mxu0 %v60
    %v1226 = vpop.f32.mrf.mxu0
    %v1227 = vadd.f32 %v1207, %v1226
    %1228 = vdwg.mxu0
    %1229 = vmatpush.msra.mxu0 %v200
    %1230 = vmatpush.msra.mxu0 %v199
    %1231 = vmatpush.msra.mxu0 %v198
    %1232 = vmatpush.msra.mxu0 %v197
    %1233 = vmatpush.msra.mxu0 %v196
    %1234 = vmatpush.msra.mxu0 %v195
    %1235 = vmatpush.msra.mxu0 %v194
    %1236 = vmatpush.msra.mxu0 %v193
    %1237 = vmatpush.msra.mxu0 %v192
    %1238 = vmatpush.msra.mxu0 %v191
    %1239 = vmatpush.msra.mxu0 %v190
    %1240 = vmatpush.msra.mxu0 %v189
    %1241 = vmatpush.msra.mxu0 %v188
    %1242 = vmatpush.msra.mxu0 %v187
    %1243 = vmatpush.msra.mxu0 %v186
    %1244 = vmatpush.msra.mxu0 %v185
    %1245 = vmatmul.f32.gmra.mxu0 %v61
    %v1246 = vpop.f32.mrf.mxu0
    %v1247 = vadd.f32 %v1227, %v1246
    %1248 = vdwg.mxu0
    %1249 = vmatpush.msra.mxu0 %v216
    %1250 = vmatpush.msra.mxu0 %v215
    %1251 = vmatpush.msra.mxu0 %v214
    %1252 = vmatpush.msra.mxu0 %v213
    %1253 = vmatpush.msra.mxu0 %v212
    %1254 = vmatpush.msra.mxu0 %v211
    %1255 = vmatpush.msra.mxu0 %v210
    %1256 = vmatpush.msra.mxu0 %v209
    %1257 = vmatpush.msra.mxu0 %v208
    %1258 = vmatpush.msra.mxu0 %v207
    %1259 = vmatpush.msra.mxu0 %v206
    %1260 = vmatpush.msra.mxu0 %v205
    %1261 = vmatpush.msra.mxu0 %v204
    %1262 = vmatpush.msra.mxu0 %v203
    %1263 = vmatpush.msra.mxu0 %v202
    %1264 = vmatpush.msra.mxu0 %v201
    %1265 = vmatmul.f32.gmra.mxu0 %v62
    %v1266 = vpop.f32.mrf.mxu0
    %v1267 = vadd.f32 %v1247, %v1266
    %1268 = vdwg.mxu0
    %1269 = vmatpush.msra.mxu0 %v232
    %1270 = vmatpush.msra.mxu0 %v231
    %1271 = vmatpush.msra.mxu0 %v230
    %1272 = vmatpush.msra.mxu0 %v229
    %1273 = vmatpush.msra.mxu0 %v228
    %1274 = vmatpush.msra.mxu0 %v227
    %1275 = vmatpush.msra.mxu0 %v226
    %1276 = vmatpush.msra.mxu0 %v225
    %1277 = vmatpush.msra.mxu0 %v224
    %1278 = vmatpush.msra.mxu0 %v223
    %1279 = vmatpush.msra.mxu0 %v222
    %1280 = vmatpush.msra.mxu0 %v221
    %1281 = vmatpush.msra.mxu0 %v220
    %1282 = vmatpush.msra.mxu0 %v219
    %1283 = vmatpush.msra.mxu0 %v218
    %1284 = vmatpush.msra.mxu0 %v217
    %1285 = vmatmul.f32.gmra.mxu0 %v63
    %v1286 = vpop.f32.mrf.mxu0
    %v1287 = vadd.f32 %v1267, %v1286
    %1288 = vdwg.mxu0
    %1289 = vmatpush.msra.mxu0 %v248
    %1290 = vmatpush.msra.mxu0 %v247
    %1291 = vmatpush.msra.mxu0 %v246
    %1292 = vmatpush.msra.mxu0 %v245
    %1293 = vmatpush.msra.mxu0 %v244
    %1294 = vmatpush.msra.mxu0 %v243
    %1295 = vmatpush.msra.mxu0 %v242
    %1296 = vmatpush.msra.mxu0 %v241
    %1297 = vmatpush.msra.mxu0 %v240
    %1298 = vmatpush.msra.mxu0 %v239
    %1299 = vmatpush.msra.mxu0 %v238
    %1300 = vmatpush.msra.mxu0 %v237
    %1301 = vmatpush.msra.mxu0 %v236
    %1302 = vmatpush.msra.mxu0 %v235
    %1303 = vmatpush.msra.mxu0 %v234
    %1304 = vmatpush.msra.mxu0 %v233
    %1305 = vmatmul.f32.gmra.mxu0 %v64
    %v1306 = vpop.f32.mrf.mxu0
    %v1307 = vadd.f32 %v1287, %v1306
    %1308 = vdwg.mxu0
    %1309 = vmatpush.msra.mxu0 %v264
    %1310 = vmatpush.msra.mxu0 %v263
    %1311 = vmatpush.msra.mxu0 %v262
    %1312 = vmatpush.msra.mxu0 %v261
    %1313 = vmatpush.msra.mxu0 %v260
    %1314 = vmatpush.msra.mxu0 %v259
    %1315 = vmatpush.msra.mxu0 %v258
    %1316 = vmatpush.msra.mxu0 %v257
    %1317 = vmatpush.msra.mxu0 %v256
    %1318 = vmatpush.msra.mxu0 %v255
    %1319 = vmatpush.msra.mxu0 %v254
    %1320 = vmatpush.msra.mxu0 %v253
    %1321 = vmatpush.msra.mxu0 %v252
    %1322 = vmatpush.msra.mxu0 %v251
    %1323 = vmatpush.msra.mxu0 %v250
    %1324 = vmatpush.msra.mxu0 %v249
    %1325 = vmatmul.f32.gmra.mxu0 %v65
    %v1326 = vpop.f32.mrf.mxu0
    %v1327 = vadd.f32 %v1307, %v1326
    %1328 = vdwg.mxu0
    %1329 = vmatpush.msra.mxu0 %v280
    %1330 = vmatpush.msra.mxu0 %v279
    %1331 = vmatpush.msra.mxu0 %v278
    %1332 = vmatpush.msra.mxu0 %v277
    %1333 = vmatpush.msra.mxu0 %v276
    %1334 = vmatpush.msra.mxu0 %v275
    %1335 = vmatpush.msra.mxu0 %v274
    %1336 = vmatpush.msra.mxu0 %v273
    %1337 = vmatpush.msra.mxu0 %v272
    %1338 = vmatpush.msra.mxu0 %v271
    %1339 = vmatpush.msra.mxu0 %v270
    %1340 = vmatpush.msra.mxu0 %v269
    %1341 = vmatpush.msra.mxu0 %v268
    %1342 = vmatpush.msra.mxu0 %v267
    %1343 = vmatpush.msra.mxu0 %v266
    %1344 = vmatpush.msra.mxu0 %v265
    %1345 = vmatmul.f32.gmra.mxu0 %v66
    %v1346 = vpop.f32.mrf.mxu0
    %v1347 = vadd.f32 %v1327, %v1346
    %1348 = vdwg.mxu0
    %1349 = vmatpush.msra.mxu0 %v296
    %1350 = vmatpush.msra.mxu0 %v295
    %1351 = vmatpush.msra.mxu0 %v294
    %1352 = vmatpush.msra.mxu0 %v293
    %1353 = vmatpush.msra.mxu0 %v292
    %1354 = vmatpush.msra.mxu0 %v291
    %1355 = vmatpush.msra.mxu0 %v290
    %1356 = vmatpush.msra.mxu0 %v289
    %1357 = vmatpush.msra.mxu0 %v288
    %1358 = vmatpush.msra.mxu0 %v287
    %1359 = vmatpush.msra.mxu0 %v286
    %1360 = vmatpush.msra.mxu0 %v285
    %1361 = vmatpush.msra.mxu0 %v284
    %1362 = vmatpush.msra.mxu0 %v283
    %1363 = vmatpush.msra.mxu0 %v282
    %1364 = vmatpush.msra.mxu0 %v281
    %1365 = vmatmul.f32.gmra.mxu0 %v67
    %v1366 = vpop.f32.mrf.mxu0
    %v1367 = vadd.f32 %v1347, %v1366
    %1368 = vdwg.mxu0
    %1369 = vmatpush.msra.mxu0 %v312
    %1370 = vmatpush.msra.mxu0 %v311
    %1371 = vmatpush.msra.mxu0 %v310
    %1372 = vmatpush.msra.mxu0 %v309
    %1373 = vmatpush.msra.mxu0 %v308
    %1374 = vmatpush.msra.mxu0 %v307
    %1375 = vmatpush.msra.mxu0 %v306
    %1376 = vmatpush.msra.mxu0 %v305
    %1377 = vmatpush.msra.mxu0 %v304
    %1378 = vmatpush.msra.mxu0 %v303
    %1379 = vmatpush.msra.mxu0 %v302
    %1380 = vmatpush.msra.mxu0 %v301
    %1381 = vmatpush.msra.mxu0 %v300
    %1382 = vmatpush.msra.mxu0 %v299
    %1383 = vmatpush.msra.mxu0 %v298
    %1384 = vmatpush.msra.mxu0 %v297
    %1385 = vmatmul.f32.gmra.mxu0 %v68
    %v1386 = vpop.f32.mrf.mxu0
    %v1387 = vadd.f32 %v1367, %v1386
    %1388 = vdwg.mxu0
    %1389 = vmatpush.msra.mxu0 %v328
    %1390 = vmatpush.msra.mxu0 %v327
    %1391 = vmatpush.msra.mxu0 %v326
    %1392 = vmatpush.msra.mxu0 %v325
    %1393 = vmatpush.msra.mxu0 %v324
    %1394 = vmatpush.msra.mxu0 %v323
    %1395 = vmatpush.msra.mxu0 %v322
    %1396 = vmatpush.msra.mxu0 %v321
    %1397 = vmatpush.msra.mxu0 %v320
    %1398 = vmatpush.msra.mxu0 %v319
    %1399 = vmatpush.msra.mxu0 %v318
    %1400 = vmatpush.msra.mxu0 %v317
    %1401 = vmatpush.msra.mxu0 %v316
    %1402 = vmatpush.msra.mxu0 %v315
    %1403 = vmatpush.msra.mxu0 %v314
    %1404 = vmatpush.msra.mxu0 %v313
    %1405 = vmatmul.f32.gmra.mxu0 %v69
    %v1406 = vpop.f32.mrf.mxu0
    %v1407 = vadd.f32 %v1387, %v1406
    %1408 = vdwg.mxu0
    %1409 = vmatpush.msra.mxu0 %v344
    %1410 = vmatpush.msra.mxu0 %v343
    %1411 = vmatpush.msra.mxu0 %v342
    %1412 = vmatpush.msra.mxu0 %v341
    %1413 = vmatpush.msra.mxu0 %v340
    %1414 = vmatpush.msra.mxu0 %v339
    %1415 = vmatpush.msra.mxu0 %v338
    %1416 = vmatpush.msra.mxu0 %v337
    %1417 = vmatpush.msra.mxu0 %v336
    %1418 = vmatpush.msra.mxu0 %v335
    %1419 = vmatpush.msra.mxu0 %v334
    %1420 = vmatpush.msra.mxu0 %v333
    %1421 = vmatpush.msra.mxu0 %v332
    %1422 = vmatpush.msra.mxu0 %v331
    %1423 = vmatpush.msra.mxu0 %v330
    %1424 = vmatpush.msra.mxu0 %v329
    %1425 = vmatmul.f32.gmra.mxu0 %v70
    %v1426 = vpop.f32.mrf.mxu0
    %v1427 = vadd.f32 %v1407, %v1426
    %1428 = vdwg.mxu0
    %1429 = vmatpush.msra.mxu0 %v360
    %1430 = vmatpush.msra.mxu0 %v359
    %1431 = vmatpush.msra.mxu0 %v358
    %1432 = vmatpush.msra.mxu0 %v357
    %1433 = vmatpush.msra.mxu0 %v356
    %1434 = vmatpush.msra.mxu0 %v355
    %1435 = vmatpush.msra.mxu0 %v354
    %1436 = vmatpush.msra.mxu0 %v353
    %1437 = vmatpush.msra.mxu0 %v352
    %1438 = vmatpush.msra.mxu0 %v351
    %1439 = vmatpush.msra.mxu0 %v350
    %1440 = vmatpush.msra.mxu0 %v349
    %1441 = vmatpush.msra.mxu0 %v348
    %1442 = vmatpush.msra.mxu0 %v347
    %1443 = vmatpush.msra.mxu0 %v346
    %1444 = vmatpush.msra.mxu0 %v345
    %1445 = vmatmul.f32.gmra.mxu0 %v71
    %v1446 = vpop.f32.mrf.mxu0
    %v1447 = vadd.f32 %v1427, %v1446
    %1448 = vdwg.mxu0
    %1449 = vmatpush.msra.mxu0 %v376
    %1450 = vmatpush.msra.mxu0 %v375
    %1451 = vmatpush.msra.mxu0 %v374
    %1452 = vmatpush.msra.mxu0 %v373
    %1453 = vmatpush.msra.mxu0 %v372
    %1454 = vmatpush.msra.mxu0 %v371
    %1455 = vmatpush.msra.mxu0 %v370
    %1456 = vmatpush.msra.mxu0 %v369
    %1457 = vmatpush.msra.mxu0 %v368
    %1458 = vmatpush.msra.mxu0 %v367
    %1459 = vmatpush.msra.mxu0 %v366
    %1460 = vmatpush.msra.mxu0 %v365
    %1461 = vmatpush.msra.mxu0 %v364
    %1462 = vmatpush.msra.mxu0 %v363
    %1463 = vmatpush.msra.mxu0 %v362
    %1464 = vmatpush.msra.mxu0 %v361
    %1465 = vmatmul.f32.gmra.mxu0 %v72
    %v1466 = vpop.f32.mrf.mxu0
    %v1467 = vadd.f32 %v1447, %v1466
    %1468 = vdwg.mxu0
    %1469 = vmatpush.msra.mxu0 %v392
    %1470 = vmatpush.msra.mxu0 %v391
    %1471 = vmatpush.msra.mxu0 %v390
    %1472 = vmatpush.msra.mxu0 %v389
    %1473 = vmatpush.msra.mxu0 %v388
    %1474 = vmatpush.msra.mxu0 %v387
    %1475 = vmatpush.msra.mxu0 %v386
    %1476 = vmatpush.msra.mxu0 %v385
    %1477 = vmatpush.msra.mxu0 %v384
    %1478 = vmatpush.msra.mxu0 %v383
    %1479 = vmatpush.msra.mxu0 %v382
    %1480 = vmatpush.msra.mxu0 %v381
    %1481 = vmatpush.msra.mxu0 %v380
    %1482 = vmatpush.msra.mxu0 %v379
    %1483 = vmatpush.msra.mxu0 %v378
    %1484 = vmatpush.msra.mxu0 %v377
    %1485 = vmatmul.f32.gmra.mxu0 %v73
    %v1486 = vpop.f32.mrf.mxu0
    %v1487 = vadd.f32 %v1467, %v1486
    %1488 = vdwg.mxu0
    %1489 = vmatpush.msra.mxu0 %v408
    %1490 = vmatpush.msra.mxu0 %v407
    %1491 = vmatpush.msra.mxu0 %v406
    %1492 = vmatpush.msra.mxu0 %v405
    %1493 = vmatpush.msra.mxu0 %v404
    %1494 = vmatpush.msra.mxu0 %v403
    %1495 = vmatpush.msra.mxu0 %v402
    %1496 = vmatpush.msra.mxu0 %v401
    %1497 = vmatpush.msra.mxu0 %v400
    %1498 = vmatpush.msra.mxu0 %v399
    %1499 = vmatpush.msra.mxu0 %v398
    %1500 = vmatpush.msra.mxu0 %v397
    %1501 = vmatpush.msra.mxu0 %v396
    %1502 = vmatpush.msra.mxu0 %v395
    %1503 = vmatpush.msra.mxu0 %v394
    %1504 = vmatpush.msra.mxu0 %v393
    %1505 = vmatmul.f32.gmra.mxu0 %v74
    %v1506 = vpop.f32.mrf.mxu0
    %v1507 = vadd.f32 %v1487, %v1506
    %1508 = vdwg.mxu0
    %1509 = vmatpush.msra.mxu0 %v424
    %1510 = vmatpush.msra.mxu0 %v423
    %1511 = vmatpush.msra.mxu0 %v422
    %1512 = vmatpush.msra.mxu0 %v421
    %1513 = vmatpush.msra.mxu0 %v420
    %1514 = vmatpush.msra.mxu0 %v419
    %1515 = vmatpush.msra.mxu0 %v418
    %1516 = vmatpush.msra.mxu0 %v417
    %1517 = vmatpush.msra.mxu0 %v416
    %1518 = vmatpush.msra.mxu0 %v415
    %1519 = vmatpush.msra.mxu0 %v414
    %1520 = vmatpush.msra.mxu0 %v413
    %1521 = vmatpush.msra.mxu0 %v412
    %1522 = vmatpush.msra.mxu0 %v411
    %1523 = vmatpush.msra.mxu0 %v410
    %1524 = vmatpush.msra.mxu0 %v409
    %1525 = vmatmul.f32.gmra.mxu0 %v75
    %v1526 = vpop.f32.mrf.mxu0
    %v1527 = vadd.f32 %v1507, %v1526
    %1528 = vdwg.mxu0
    %1529 = vmatpush.msra.mxu0 %v440
    %1530 = vmatpush.msra.mxu0 %v439
    %1531 = vmatpush.msra.mxu0 %v438
    %1532 = vmatpush.msra.mxu0 %v437
    %1533 = vmatpush.msra.mxu0 %v436
    %1534 = vmatpush.msra.mxu0 %v435
    %1535 = vmatpush.msra.mxu0 %v434
    %1536 = vmatpush.msra.mxu0 %v433
    %1537 = vmatpush.msra.mxu0 %v432
    %1538 = vmatpush.msra.mxu0 %v431
    %1539 = vmatpush.msra.mxu0 %v430
    %1540 = vmatpush.msra.mxu0 %v429
    %1541 = vmatpush.msra.mxu0 %v428
    %1542 = vmatpush.msra.mxu0 %v427
    %1543 = vmatpush.msra.mxu0 %v426
    %1544 = vmatpush.msra.mxu0 %v425
    %1545 = vmatmul.f32.gmra.mxu0 %v76
    %v1546 = vpop.f32.mrf.mxu0
    %v1547 = vadd.f32 %v1527, %v1546
    %1548 = vdwg.mxu0
    %1549 = vmatpush.msra.mxu0 %v456
    %1550 = vmatpush.msra.mxu0 %v455
    %1551 = vmatpush.msra.mxu0 %v454
    %1552 = vmatpush.msra.mxu0 %v453
    %1553 = vmatpush.msra.mxu0 %v452
    %1554 = vmatpush.msra.mxu0 %v451
    %1555 = vmatpush.msra.mxu0 %v450
    %1556 = vmatpush.msra.mxu0 %v449
    %1557 = vmatpush.msra.mxu0 %v448
    %1558 = vmatpush.msra.mxu0 %v447
    %1559 = vmatpush.msra.mxu0 %v446
    %1560 = vmatpush.msra.mxu0 %v445
    %1561 = vmatpush.msra.mxu0 %v444
    %1562 = vmatpush.msra.mxu0 %v443
    %1563 = vmatpush.msra.mxu0 %v442
    %1564 = vmatpush.msra.mxu0 %v441
    %1565 = vmatmul.f32.gmra.mxu0 %v77
    %v1566 = vpop.f32.mrf.mxu0
    %v1567 = vadd.f32 %v1547, %v1566
    %1568 = vdwg.mxu0
    %1569 = vmatpush.msra.mxu0 %v472
    %1570 = vmatpush.msra.mxu0 %v471
    %1571 = vmatpush.msra.mxu0 %v470
    %1572 = vmatpush.msra.mxu0 %v469
    %1573 = vmatpush.msra.mxu0 %v468
    %1574 = vmatpush.msra.mxu0 %v467
    %1575 = vmatpush.msra.mxu0 %v466
    %1576 = vmatpush.msra.mxu0 %v465
    %1577 = vmatpush.msra.mxu0 %v464
    %1578 = vmatpush.msra.mxu0 %v463
    %1579 = vmatpush.msra.mxu0 %v462
    %1580 = vmatpush.msra.mxu0 %v461
    %1581 = vmatpush.msra.mxu0 %v460
    %1582 = vmatpush.msra.mxu0 %v459
    %1583 = vmatpush.msra.mxu0 %v458
    %1584 = vmatpush.msra.mxu0 %v457
    %1585 = vmatmul.f32.gmra.mxu0 %v78
    %v1586 = vpop.f32.mrf.mxu0
    %v1587 = vadd.f32 %v1567, %v1586
    %1588 = vdwg.mxu0
    %1589 = vmatpush.msra.mxu0 %v488
    %1590 = vmatpush.msra.mxu0 %v487
    %1591 = vmatpush.msra.mxu0 %v486
    %1592 = vmatpush.msra.mxu0 %v485
    %1593 = vmatpush.msra.mxu0 %v484
    %1594 = vmatpush.msra.mxu0 %v483
    %1595 = vmatpush.msra.mxu0 %v482
    %1596 = vmatpush.msra.mxu0 %v481
    %1597 = vmatpush.msra.mxu0 %v480
    %1598 = vmatpush.msra.mxu0 %v479
    %1599 = vmatpush.msra.mxu0 %v478
    %1600 = vmatpush.msra.mxu0 %v477
    %1601 = vmatpush.msra.mxu0 %v476
    %1602 = vmatpush.msra.mxu0 %v475
    %1603 = vmatpush.msra.mxu0 %v474
    %1604 = vmatpush.msra.mxu0 %v473
    %1605 = vmatmul.f32.gmra.mxu0 %v79
    %v1606 = vpop.f32.mrf.mxu0
    %v1607 = vadd.f32 %v1587, %v1606
    %1608 = vdwg.mxu0
    %1609 = vmatpush.msra.mxu0 %v504
    %1610 = vmatpush.msra.mxu0 %v503
    %1611 = vmatpush.msra.mxu0 %v502
    %1612 = vmatpush.msra.mxu0 %v501
    %1613 = vmatpush.msra.mxu0 %v500
    %1614 = vmatpush.msra.mxu0 %v499
    %1615 = vmatpush.msra.mxu0 %v498
    %1616 = vmatpush.msra.mxu0 %v497
    %1617 = vmatpush.msra.mxu0 %v496
    %1618 = vmatpush.msra.mxu0 %v495
    %1619 = vmatpush.msra.mxu0 %v494
    %1620 = vmatpush.msra.mxu0 %v493
    %1621 = vmatpush.msra.mxu0 %v492
    %1622 = vmatpush.msra.mxu0 %v491
    %1623 = vmatpush.msra.mxu0 %v490
    %1624 = vmatpush.msra.mxu0 %v489
    %1625 = vmatmul.f32.gmra.mxu0 %v80
    %v1626 = vpop.f32.mrf.mxu0
    %v1627 = vadd.f32 %v1607, %v1626
    %1628 = vdwg.mxu0
    %1629 = vmatpush.msra.mxu0 %v520
    %1630 = vmatpush.msra.mxu0 %v519
    %1631 = vmatpush.msra.mxu0 %v518
    %1632 = vmatpush.msra.mxu0 %v517
    %1633 = vmatpush.msra.mxu0 %v516
    %1634 = vmatpush.msra.mxu0 %v515
    %1635 = vmatpush.msra.mxu0 %v514
    %1636 = vmatpush.msra.mxu0 %v513
    %1637 = vmatpush.msra.mxu0 %v512
    %1638 = vmatpush.msra.mxu0 %v511
    %1639 = vmatpush.msra.mxu0 %v510
    %1640 = vmatpush.msra.mxu0 %v509
    %1641 = vmatpush.msra.mxu0 %v508
    %1642 = vmatpush.msra.mxu0 %v507
    %1643 = vmatpush.msra.mxu0 %v506
    %1644 = vmatpush.msra.mxu0 %v505
    %1645 = vmatmul.f32.gmra.mxu0 %v81
    %v1646 = vpop.f32.mrf.mxu0
    %v1647 = vadd.f32 %v1627, %v1646
    %1648 = vdwg.mxu0
    %1649 = vmatpush.msra.mxu0 %v536
    %1650 = vmatpush.msra.mxu0 %v535
    %1651 = vmatpush.msra.mxu0 %v534
    %1652 = vmatpush.msra.mxu0 %v533
    %1653 = vmatpush.msra.mxu0 %v532
    %1654 = vmatpush.msra.mxu0 %v531
    %1655 = vmatpush.msra.mxu0 %v530
    %1656 = vmatpush.msra.mxu0 %v529
    %1657 = vmatpush.msra.mxu0 %v528
    %1658 = vmatpush.msra.mxu0 %v527
    %1659 = vmatpush.msra.mxu0 %v526
    %1660 = vmatpush.msra.mxu0 %v525
    %1661 = vmatpush.msra.mxu0 %v524
    %1662 = vmatpush.msra.mxu0 %v523
    %1663 = vmatpush.msra.mxu0 %v522
    %1664 = vmatpush.msra.mxu0 %v521
    %1665 = vmatmul.f32.gmra.mxu0 %v82
    %v1666 = vpop.f32.mrf.mxu0
    %v1667 = vadd.f32 %v1647, %v1666
    %1668 = vdwg.mxu0
    %1669 = vmatpush.msra.mxu0 %v552
    %1670 = vmatpush.msra.mxu0 %v551
    %1671 = vmatpush.msra.mxu0 %v550
    %1672 = vmatpush.msra.mxu0 %v549
    %1673 = vmatpush.msra.mxu0 %v548
    %1674 = vmatpush.msra.mxu0 %v547
    %1675 = vmatpush.msra.mxu0 %v546
    %1676 = vmatpush.msra.mxu0 %v545
    %1677 = vmatpush.msra.mxu0 %v544
    %1678 = vmatpush.msra.mxu0 %v543
    %1679 = vmatpush.msra.mxu0 %v542
    %1680 = vmatpush.msra.mxu0 %v541
    %1681 = vmatpush.msra.mxu0 %v540
    %1682 = vmatpush.msra.mxu0 %v539
    %1683 = vmatpush.msra.mxu0 %v538
    %1684 = vmatpush.msra.mxu0 %v537
    %1685 = vmatmul.f32.gmra.mxu0 %v83
    %v1686 = vpop.f32.mrf.mxu0
    %v1687 = vadd.f32 %v1667, %v1686
    %1688 = vdwg.mxu0
    %1689 = vmatpush.msra.mxu0 %v568
    %1690 = vmatpush.msra.mxu0 %v567
    %1691 = vmatpush.msra.mxu0 %v566
    %1692 = vmatpush.msra.mxu0 %v565
    %1693 = vmatpush.msra.mxu0 %v564
    %1694 = vmatpush.msra.mxu0 %v563
    %1695 = vmatpush.msra.mxu0 %v562
    %1696 = vmatpush.msra.mxu0 %v561
    %1697 = vmatpush.msra.mxu0 %v560
    %1698 = vmatpush.msra.mxu0 %v559
    %1699 = vmatpush.msra.mxu0 %v558
    %1700 = vmatpush.msra.mxu0 %v557
    %1701 = vmatpush.msra.mxu0 %v556
    %1702 = vmatpush.msra.mxu0 %v555
    %1703 = vmatpush.msra.mxu0 %v554
    %1704 = vmatpush.msra.mxu0 %v553
    %1705 = vmatmul.f32.gmra.mxu0 %v84
    %v1706 = vpop.f32.mrf.mxu0
    %v1707 = vadd.f32 %v1687, %v1706
    %1708 = vdwg.mxu0
    %1709 = vmatpush.msra.mxu0 %v584
    %1710 = vmatpush.msra.mxu0 %v583
    %1711 = vmatpush.msra.mxu0 %v582
    %1712 = vmatpush.msra.mxu0 %v581
    %1713 = vmatpush.msra.mxu0 %v580
    %1714 = vmatpush.msra.mxu0 %v579
    %1715 = vmatpush.msra.mxu0 %v578
    %1716 = vmatpush.msra.mxu0 %v577
    %1717 = vmatpush.msra.mxu0 %v576
    %1718 = vmatpush.msra.mxu0 %v575
    %1719 = vmatpush.msra.mxu0 %v574
    %1720 = vmatpush.msra.mxu0 %v573
    %1721 = vmatpush.msra.mxu0 %v572
    %1722 = vmatpush.msra.mxu0 %v571
    %1723 = vmatpush.msra.mxu0 %v570
    %1724 = vmatpush.msra.mxu0 %v569
    %1725 = vmatmul.f32.gmra.mxu0 %v85
    %v1726 = vpop.f32.mrf.mxu0
    %v1727 = vadd.f32 %v1707, %v1726
    %1728 = vdwg.mxu0
    %1729 = vmatpush.msra.mxu0 %v600
    %1730 = vmatpush.msra.mxu0 %v599
    %1731 = vmatpush.msra.mxu0 %v598
    %1732 = vmatpush.msra.mxu0 %v597
    %1733 = vmatpush.msra.mxu0 %v596
    %1734 = vmatpush.msra.mxu0 %v595
    %1735 = vmatpush.msra.mxu0 %v594
    %1736 = vmatpush.msra.mxu0 %v593
    %1737 = vmatpush.msra.mxu0 %v592
    %1738 = vmatpush.msra.mxu0 %v591
    %1739 = vmatpush.msra.mxu0 %v590
    %1740 = vmatpush.msra.mxu0 %v589
    %1741 = vmatpush.msra.mxu0 %v588
    %1742 = vmatpush.msra.mxu0 %v587
    %1743 = vmatpush.msra.mxu0 %v586
    %1744 = vmatpush.msra.mxu0 %v585
    %1745 = vmatmul.f32.gmra.mxu0 %v86
    %v1746 = vpop.f32.mrf.mxu0
    %v1747 = vadd.f32 %v1727, %v1746
    %1748 = vdwg.mxu0
    %1749 = vmatpush.msra.mxu0 %v616
    %1750 = vmatpush.msra.mxu0 %v615
    %1751 = vmatpush.msra.mxu0 %v614
    %1752 = vmatpush.msra.mxu0 %v613
    %1753 = vmatpush.msra.mxu0 %v612
    %1754 = vmatpush.msra.mxu0 %v611
    %1755 = vmatpush.msra.mxu0 %v610
    %1756 = vmatpush.msra.mxu0 %v609
    %1757 = vmatpush.msra.mxu0 %v608
    %1758 = vmatpush.msra.mxu0 %v607
    %1759 = vmatpush.msra.mxu0 %v606
    %1760 = vmatpush.msra.mxu0 %v605
    %1761 = vmatpush.msra.mxu0 %v604
    %1762 = vmatpush.msra.mxu0 %v603
    %1763 = vmatpush.msra.mxu0 %v602
    %1764 = vmatpush.msra.mxu0 %v601
    %1765 = vmatmul.f32.gmra.mxu0 %v87
    %v1766 = vpop.f32.mrf.mxu0
    %v1767 = vadd.f32 %v1747, %v1766
    %1768 = vdwg.mxu0
    %1769 = vmatpush.msra.mxu0 %v632
    %1770 = vmatpush.msra.mxu0 %v631
    %1771 = vmatpush.msra.mxu0 %v630
    %1772 = vmatpush.msra.mxu0 %v629
    %1773 = vmatpush.msra.mxu0 %v628
    %1774 = vmatpush.msra.mxu0 %v627
    %1775 = vmatpush.msra.mxu0 %v626
    %1776 = vmatpush.msra.mxu0 %v625
    %1777 = vmatpush.msra.mxu0 %v624
    %1778 = vmatpush.msra.mxu0 %v623
    %1779 = vmatpush.msra.mxu0 %v622
    %1780 = vmatpush.msra.mxu0 %v621
    %1781 = vmatpush.msra.mxu0 %v620
    %1782 = vmatpush.msra.mxu0 %v619
    %1783 = vmatpush.msra.mxu0 %v618
    %1784 = vmatpush.msra.mxu0 %v617
    %1785 = vmatmul.f32.gmra.mxu0 %v88
    %v1786 = vpop.f32.mrf.mxu0
    %v1787 = vadd.f32 %v1767, %v1786
    %1788 = vdwg.mxu0
    %1789 = vmatpush.msra.mxu0 %v648
    %1790 = vmatpush.msra.mxu0 %v647
    %1791 = vmatpush.msra.mxu0 %v646
    %1792 = vmatpush.msra.mxu0 %v645
    %1793 = vmatpush.msra.mxu0 %v644
    %1794 = vmatpush.msra.mxu0 %v643
    %1795 = vmatpush.msra.mxu0 %v642
    %1796 = vmatpush.msra.mxu0 %v641
    %1797 = vmatpush.msra.mxu0 %v640
    %1798 = vmatpush.msra.mxu0 %v639
    %1799 = vmatpush.msra.mxu0 %v638
    %1800 = vmatpush.msra.mxu0 %v637
    %1801 = vmatpush.msra.mxu0 %v636
    %1802 = vmatpush.msra.mxu0 %v635
    %1803 = vmatpush.msra.mxu0 %v634
    %1804 = vmatpush.msra.mxu0 %v633
    %1805 = vmatmul.f32.gmra.mxu0 %v89
    %v1806 = vpop.f32.mrf.mxu0
    %v1807 = vadd.f32 %v1787, %v1806
    %1808 = vdwg.mxu0
    %1809 = vmatpush.msra.mxu0 %v664
    %1810 = vmatpush.msra.mxu0 %v663
    %1811 = vmatpush.msra.mxu0 %v662
    %1812 = vmatpush.msra.mxu0 %v661
    %1813 = vmatpush.msra.mxu0 %v660
    %1814 = vmatpush.msra.mxu0 %v659
    %1815 = vmatpush.msra.mxu0 %v658
    %1816 = vmatpush.msra.mxu0 %v657
    %1817 = vmatpush.msra.mxu0 %v656
    %1818 = vmatpush.msra.mxu0 %v655
    %1819 = vmatpush.msra.mxu0 %v654
    %1820 = vmatpush.msra.mxu0 %v653
    %1821 = vmatpush.msra.mxu0 %v652
    %1822 = vmatpush.msra.mxu0 %v651
    %1823 = vmatpush.msra.mxu0 %v650
    %1824 = vmatpush.msra.mxu0 %v649
    %1825 = vmatmul.f32.gmra.mxu0 %v90
    %v1826 = vpop.f32.mrf.mxu0
    %v1827 = vadd.f32 %v1807, %v1826
    %1828 = vdwg.mxu0
    %1829 = vmatpush.msra.mxu0 %v680
    %1830 = vmatpush.msra.mxu0 %v679
    %1831 = vmatpush.msra.mxu0 %v678
    %1832 = vmatpush.msra.mxu0 %v677
    %1833 = vmatpush.msra.mxu0 %v676
    %1834 = vmatpush.msra.mxu0 %v675
    %1835 = vmatpush.msra.mxu0 %v674
    %1836 = vmatpush.msra.mxu0 %v673
    %1837 = vmatpush.msra.mxu0 %v672
    %1838 = vmatpush.msra.mxu0 %v671
    %1839 = vmatpush.msra.mxu0 %v670
    %1840 = vmatpush.msra.mxu0 %v669
    %1841 = vmatpush.msra.mxu0 %v668
    %1842 = vmatpush.msra.mxu0 %v667
    %1843 = vmatpush.msra.mxu0 %v666
    %1844 = vmatpush.msra.mxu0 %v665
    %1845 = vmatmul.f32.gmra.mxu0 %v91
    %v1846 = vpop.f32.mrf.mxu0
    %v1847 = vadd.f32 %v1827, %v1846
    %1848 = vdwg.mxu0
    %1849 = vmatpush.msra.mxu0 %v696
    %1850 = vmatpush.msra.mxu0 %v695
    %1851 = vmatpush.msra.mxu0 %v694
    %1852 = vmatpush.msra.mxu0 %v693
    %1853 = vmatpush.msra.mxu0 %v692
    %1854 = vmatpush.msra.mxu0 %v691
    %1855 = vmatpush.msra.mxu0 %v690
    %1856 = vmatpush.msra.mxu0 %v689
    %1857 = vmatpush.msra.mxu0 %v688
    %1858 = vmatpush.msra.mxu0 %v687
    %1859 = vmatpush.msra.mxu0 %v686
    %1860 = vmatpush.msra.mxu0 %v685
    %1861 = vmatpush.msra.mxu0 %v684
    %1862 = vmatpush.msra.mxu0 %v683
    %1863 = vmatpush.msra.mxu0 %v682
    %1864 = vmatpush.msra.mxu0 %v681
    %1865 = vmatmul.f32.gmra.mxu0 %v92
    %v1866 = vpop.f32.mrf.mxu0
    %v1867 = vadd.f32 %v1847, %v1866
    %1868 = vdwg.mxu0
    %1869 = vmatpush.msra.mxu0 %v712
    %1870 = vmatpush.msra.mxu0 %v711
    %1871 = vmatpush.msra.mxu0 %v710
    %1872 = vmatpush.msra.mxu0 %v709
    %1873 = vmatpush.msra.mxu0 %v708
    %1874 = vmatpush.msra.mxu0 %v707
    %1875 = vmatpush.msra.mxu0 %v706
    %1876 = vmatpush.msra.mxu0 %v705
    %1877 = vmatpush.msra.mxu0 %v704
    %1878 = vmatpush.msra.mxu0 %v703
    %1879 = vmatpush.msra.mxu0 %v702
    %1880 = vmatpush.msra.mxu0 %v701
    %1881 = vmatpush.msra.mxu0 %v700
    %1882 = vmatpush.msra.mxu0 %v699
    %1883 = vmatpush.msra.mxu0 %v698
    %1884 = vmatpush.msra.mxu0 %v697
    %1885 = vmatmul.f32.gmra.mxu0 %v93
    %v1886 = vpop.f32.mrf.mxu0
    %v1887 = vadd.f32 %v1867, %v1886
    %1888 = vdwg.mxu0
    %1889 = vmatpush.msra.mxu0 %v728
    %1890 = vmatpush.msra.mxu0 %v727
    %1891 = vmatpush.msra.mxu0 %v726
    %1892 = vmatpush.msra.mxu0 %v725
    %1893 = vmatpush.msra.mxu0 %v724
    %1894 = vmatpush.msra.mxu0 %v723
    %1895 = vmatpush.msra.mxu0 %v722
    %1896 = vmatpush.msra.mxu0 %v721
    %1897 = vmatpush.msra.mxu0 %v720
    %1898 = vmatpush.msra.mxu0 %v719
    %1899 = vmatpush.msra.mxu0 %v718
    %1900 = vmatpush.msra.mxu0 %v717
    %1901 = vmatpush.msra.mxu0 %v716
    %1902 = vmatpush.msra.mxu0 %v715
    %1903 = vmatpush.msra.mxu0 %v714
    %1904 = vmatpush.msra.mxu0 %v713
    %1905 = vmatmul.f32.gmra.mxu0 %v94
    %v1906 = vpop.f32.mrf.mxu0
    %v1907 = vadd.f32 %v1887, %v1906
    %1908 = vdwg.mxu0
    %1909 = vmatpush.msra.mxu0 %v744
    %1910 = vmatpush.msra.mxu0 %v743
    %1911 = vmatpush.msra.mxu0 %v742
    %1912 = vmatpush.msra.mxu0 %v741
    %1913 = vmatpush.msra.mxu0 %v740
    %1914 = vmatpush.msra.mxu0 %v739
    %1915 = vmatpush.msra.mxu0 %v738
    %1916 = vmatpush.msra.mxu0 %v737
    %1917 = vmatpush.msra.mxu0 %v736
    %1918 = vmatpush.msra.mxu0 %v735
    %1919 = vmatpush.msra.mxu0 %v734
    %1920 = vmatpush.msra.mxu0 %v733
    %1921 = vmatpush.msra.mxu0 %v732
    %1922 = vmatpush.msra.mxu0 %v731
    %1923 = vmatpush.msra.mxu0 %v730
    %1924 = vmatpush.msra.mxu0 %v729
    %1925 = vmatmul.f32.gmra.mxu0 %v95
    %v1926 = vpop.f32.mrf.mxu0
    %v1927 = vadd.f32 %v1907, %v1926
    %1928 = vdwg.mxu0
    %1929 = vmatpush.msra.mxu0 %v760
    %1930 = vmatpush.msra.mxu0 %v759
    %1931 = vmatpush.msra.mxu0 %v758
    %1932 = vmatpush.msra.mxu0 %v757
    %1933 = vmatpush.msra.mxu0 %v756
    %1934 = vmatpush.msra.mxu0 %v755
    %1935 = vmatpush.msra.mxu0 %v754
    %1936 = vmatpush.msra.mxu0 %v753
    %1937 = vmatpush.msra.mxu0 %v752
    %1938 = vmatpush.msra.mxu0 %v751
    %1939 = vmatpush.msra.mxu0 %v750
    %1940 = vmatpush.msra.mxu0 %v749
    %1941 = vmatpush.msra.mxu0 %v748
    %1942 = vmatpush.msra.mxu0 %v747
    %1943 = vmatpush.msra.mxu0 %v746
    %1944 = vmatpush.msra.mxu0 %v745
    %1945 = vmatmul.f32.gmra.mxu0 %v96
    %v1946 = vpop.f32.mrf.mxu0
    %v1947 = vadd.f32 %v1927, %v1946
    %1948 = vdwg.mxu0
    %1949 = vmatpush.msra.mxu0 %v776
    %1950 = vmatpush.msra.mxu0 %v775
    %1951 = vmatpush.msra.mxu0 %v774
    %1952 = vmatpush.msra.mxu0 %v773
    %1953 = vmatpush.msra.mxu0 %v772
    %1954 = vmatpush.msra.mxu0 %v771
    %1955 = vmatpush.msra.mxu0 %v770
    %1956 = vmatpush.msra.mxu0 %v769
    %1957 = vmatpush.msra.mxu0 %v768
    %1958 = vmatpush.msra.mxu0 %v767
    %1959 = vmatpush.msra.mxu0 %v766
    %1960 = vmatpush.msra.mxu0 %v765
    %1961 = vmatpush.msra.mxu0 %v764
    %1962 = vmatpush.msra.mxu0 %v763
    %1963 = vmatpush.msra.mxu0 %v762
    %1964 = vmatpush.msra.mxu0 %v761
    %1965 = vmatmul.f32.gmra.mxu0 %v97
    %v1966 = vpop.f32.mrf.mxu0
    %v1967 = vadd.f32 %v1947, %v1966
    %1968 = vdwg.mxu0
    %1969 = vmatpush.msra.mxu0 %v792
    %1970 = vmatpush.msra.mxu0 %v791
    %1971 = vmatpush.msra.mxu0 %v790
    %1972 = vmatpush.msra.mxu0 %v789
    %1973 = vmatpush.msra.mxu0 %v788
    %1974 = vmatpush.msra.mxu0 %v787
    %1975 = vmatpush.msra.mxu0 %v786
    %1976 = vmatpush.msra.mxu0 %v785
    %1977 = vmatpush.msra.mxu0 %v784
    %1978 = vmatpush.msra.mxu0 %v783
    %1979 = vmatpush.msra.mxu0 %v782
    %1980 = vmatpush.msra.mxu0 %v781
    %1981 = vmatpush.msra.mxu0 %v780
    %1982 = vmatpush.msra.mxu0 %v779
    %1983 = vmatpush.msra.mxu0 %v778
    %1984 = vmatpush.msra.mxu0 %v777
    %1985 = vmatmul.f32.gmra.mxu0 %v98
    %v1986 = vpop.f32.mrf.mxu0
    %v1987 = vadd.f32 %v1967, %v1986
    %1988 = vdwg.mxu0
    %1989 = vmatpush.msra.mxu0 %v808
    %1990 = vmatpush.msra.mxu0 %v807
    %1991 = vmatpush.msra.mxu0 %v806
    %1992 = vmatpush.msra.mxu0 %v805
    %1993 = vmatpush.msra.mxu0 %v804
    %1994 = vmatpush.msra.mxu0 %v803
    %1995 = vmatpush.msra.mxu0 %v802
    %1996 = vmatpush.msra.mxu0 %v801
    %1997 = vmatpush.msra.mxu0 %v800
    %1998 = vmatpush.msra.mxu0 %v799
    %1999 = vmatpush.msra.mxu0 %v798
    %2000 = vmatpush.msra.mxu0 %v797
    %2001 = vmatpush.msra.mxu0 %v796
    %2002 = vmatpush.msra.mxu0 %v795
    %2003 = vmatpush.msra.mxu0 %v794
    %2004 = vmatpush.msra.mxu0 %v793
    %2005 = vmatmul.f32.gmra.mxu0 %v99
    %v2006 = vpop.f32.mrf.mxu0
    %v2007 = vadd.f32 %v1987, %v2006
    %2008 = vdwg.mxu0
    %2009 = vmatpush.msra.mxu0 %v824
    %2010 = vmatpush.msra.mxu0 %v823
    %2011 = vmatpush.msra.mxu0 %v822
    %2012 = vmatpush.msra.mxu0 %v821
    %2013 = vmatpush.msra.mxu0 %v820
    %2014 = vmatpush.msra.mxu0 %v819
    %2015 = vmatpush.msra.mxu0 %v818
    %2016 = vmatpush.msra.mxu0 %v817
    %2017 = vmatpush.msra.mxu0 %v816
    %2018 = vmatpush.msra.mxu0 %v815
    %2019 = vmatpush.msra.mxu0 %v814
    %2020 = vmatpush.msra.mxu0 %v813
    %2021 = vmatpush.msra.mxu0 %v812
    %2022 = vmatpush.msra.mxu0 %v811
    %2023 = vmatpush.msra.mxu0 %v810
    %2024 = vmatpush.msra.mxu0 %v809
    %2025 = vmatmul.f32.gmra.mxu0 %v100
    %v2026 = vpop.f32.mrf.mxu0
    %v2027 = vadd.f32 %v2007, %v2026
    %2028 = vdwg.mxu0
    %2029 = vmatpush.msra.mxu0 %v840
    %2030 = vmatpush.msra.mxu0 %v839
    %2031 = vmatpush.msra.mxu0 %v838
    %2032 = vmatpush.msra.mxu0 %v837
    %2033 = vmatpush.msra.mxu0 %v836
    %2034 = vmatpush.msra.mxu0 %v835
    %2035 = vmatpush.msra.mxu0 %v834
    %2036 = vmatpush.msra.mxu0 %v833
    %2037 = vmatpush.msra.mxu0 %v832
    %2038 = vmatpush.msra.mxu0 %v831
    %2039 = vmatpush.msra.mxu0 %v830
    %2040 = vmatpush.msra.mxu0 %v829
    %2041 = vmatpush.msra.mxu0 %v828
    %2042 = vmatpush.msra.mxu0 %v827
    %2043 = vmatpush.msra.mxu0 %v826
    %2044 = vmatpush.msra.mxu0 %v825
    %2045 = vmatmul.f32.gmra.mxu0 %v101
    %v2046 = vpop.f32.mrf.mxu0
    %v2047 = vadd.f32 %v2027, %v2046
    %2048 = vdwg.mxu0
    %2049 = vmatpush.msra.mxu0 %v856
    %2050 = vmatpush.msra.mxu0 %v855
    %2051 = vmatpush.msra.mxu0 %v854
    %2052 = vmatpush.msra.mxu0 %v853
    %2053 = vmatpush.msra.mxu0 %v852
    %2054 = vmatpush.msra.mxu0 %v851
    %2055 = vmatpush.msra.mxu0 %v850
    %2056 = vmatpush.msra.mxu0 %v849
    %2057 = vmatpush.msra.mxu0 %v848
    %2058 = vmatpush.msra.mxu0 %v847
    %2059 = vmatpush.msra.mxu0 %v846
    %2060 = vmatpush.msra.mxu0 %v845
    %2061 = vmatpush.msra.mxu0 %v844
    %2062 = vmatpush.msra.mxu0 %v843
    %2063 = vmatpush.msra.mxu0 %v842
    %2064 = vmatpush.msra.mxu0 %v841
    %2065 = vmatmul.f32.gmra.mxu0 %v102
    %v2066 = vpop.f32.mrf.mxu0
    %v2067 = vadd.f32 %v2047, %v2066
    %2068 = vdwg.mxu0
    %2069 = vmatpush.msra.mxu0 %v872
    %2070 = vmatpush.msra.mxu0 %v871
    %2071 = vmatpush.msra.mxu0 %v870
    %2072 = vmatpush.msra.mxu0 %v869
    %2073 = vmatpush.msra.mxu0 %v868
    %2074 = vmatpush.msra.mxu0 %v867
    %2075 = vmatpush.msra.mxu0 %v866
    %2076 = vmatpush.msra.mxu0 %v865
    %2077 = vmatpush.msra.mxu0 %v864
    %2078 = vmatpush.msra.mxu0 %v863
    %2079 = vmatpush.msra.mxu0 %v862
    %2080 = vmatpush.msra.mxu0 %v861
    %2081 = vmatpush.msra.mxu0 %v860
    %2082 = vmatpush.msra.mxu0 %v859
    %2083 = vmatpush.msra.mxu0 %v858
    %2084 = vmatpush.msra.mxu0 %v857
    %2085 = vmatmul.f32.gmra.mxu0 %v103
    %v2086 = vpop.f32.mrf.mxu0
    %v2087 = vadd.f32 %v2067, %v2086
    %2088 = vdwg.mxu0
    %2089 = vmatpush.msra.mxu0 %v888
    %2090 = vmatpush.msra.mxu0 %v887
    %2091 = vmatpush.msra.mxu0 %v886
    %2092 = vmatpush.msra.mxu0 %v885
    %2093 = vmatpush.msra.mxu0 %v884
    %2094 = vmatpush.msra.mxu0 %v883
    %2095 = vmatpush.msra.mxu0 %v882
    %2096 = vmatpush.msra.mxu0 %v881
    %2097 = vmatpush.msra.mxu0 %v880
    %2098 = vmatpush.msra.mxu0 %v879
    %2099 = vmatpush.msra.mxu0 %v878
    %2100 = vmatpush.msra.mxu0 %v877
    %2101 = vmatpush.msra.mxu0 %v876
    %2102 = vmatpush.msra.mxu0 %v875
    %2103 = vmatpush.msra.mxu0 %v874
    %2104 = vmatpush.msra.mxu0 %v873
    %2105 = vmatmul.f32.gmra.mxu0 %v104
    %v2106 = vpop.f32.mrf.mxu0
    %v2107 = vadd.f32 %v2087, %v2106
    %2108 = vdwg.mxu0
    %2109 = vmatpush.msra.mxu0 %v904
    %2110 = vmatpush.msra.mxu0 %v903
    %2111 = vmatpush.msra.mxu0 %v902
    %2112 = vmatpush.msra.mxu0 %v901
    %2113 = vmatpush.msra.mxu0 %v900
    %2114 = vmatpush.msra.mxu0 %v899
    %2115 = vmatpush.msra.mxu0 %v898
    %2116 = vmatpush.msra.mxu0 %v897
    %2117 = vmatpush.msra.mxu0 %v896
    %2118 = vmatpush.msra.mxu0 %v895
    %2119 = vmatpush.msra.mxu0 %v894
    %2120 = vmatpush.msra.mxu0 %v893
    %2121 = vmatpush.msra.mxu0 %v892
    %2122 = vmatpush.msra.mxu0 %v891
    %2123 = vmatpush.msra.mxu0 %v890
    %2124 = vmatpush.msra.mxu0 %v889
    %2125 = vmatmul.f32.gmra.mxu0 %v105
    %v2126 = vpop.f32.mrf.mxu0
    %v2127 = vadd.f32 %v2107, %v2126
    %2128 = vdwg.mxu0
    %2129 = vmatpush.msra.mxu0 %v920
    %2130 = vmatpush.msra.mxu0 %v919
    %2131 = vmatpush.msra.mxu0 %v918
    %2132 = vmatpush.msra.mxu0 %v917
    %2133 = vmatpush.msra.mxu0 %v916
    %2134 = vmatpush.msra.mxu0 %v915
    %2135 = vmatpush.msra.mxu0 %v914
    %2136 = vmatpush.msra.mxu0 %v913
    %2137 = vmatpush.msra.mxu0 %v912
    %2138 = vmatpush.msra.mxu0 %v911
    %2139 = vmatpush.msra.mxu0 %v910
    %2140 = vmatpush.msra.mxu0 %v909
    %2141 = vmatpush.msra.mxu0 %v908
    %2142 = vmatpush.msra.mxu0 %v907
    %2143 = vmatpush.msra.mxu0 %v906
    %2144 = vmatpush.msra.mxu0 %v905
    %2145 = vmatmul.f32.gmra.mxu0 %v106
    %v2146 = vpop.f32.mrf.mxu0
    %v2147 = vadd.f32 %v2127, %v2146
    %2148 = vdwg.mxu0
    %2149 = vmatpush.msra.mxu0 %v936
    %2150 = vmatpush.msra.mxu0 %v935
    %2151 = vmatpush.msra.mxu0 %v934
    %2152 = vmatpush.msra.mxu0 %v933
    %2153 = vmatpush.msra.mxu0 %v932
    %2154 = vmatpush.msra.mxu0 %v931
    %2155 = vmatpush.msra.mxu0 %v930
    %2156 = vmatpush.msra.mxu0 %v929
    %2157 = vmatpush.msra.mxu0 %v928
    %2158 = vmatpush.msra.mxu0 %v927
    %2159 = vmatpush.msra.mxu0 %v926
    %2160 = vmatpush.msra.mxu0 %v925
    %2161 = vmatpush.msra.mxu0 %v924
    %2162 = vmatpush.msra.mxu0 %v923
    %2163 = vmatpush.msra.mxu0 %v922
    %2164 = vmatpush.msra.mxu0 %v921
    %2165 = vmatmul.f32.gmra.mxu0 %v107
    %v2166 = vpop.f32.mrf.mxu0
    %v2167 = vadd.f32 %v2147, %v2166
    %2168 = vdwg.mxu0
    %2169 = vmatpush.msra.mxu0 %v952
    %2170 = vmatpush.msra.mxu0 %v951
    %2171 = vmatpush.msra.mxu0 %v950
    %2172 = vmatpush.msra.mxu0 %v949
    %2173 = vmatpush.msra.mxu0 %v948
    %2174 = vmatpush.msra.mxu0 %v947
    %2175 = vmatpush.msra.mxu0 %v946
    %2176 = vmatpush.msra.mxu0 %v945
    %2177 = vmatpush.msra.mxu0 %v944
    %2178 = vmatpush.msra.mxu0 %v943
    %2179 = vmatpush.msra.mxu0 %v942
    %2180 = vmatpush.msra.mxu0 %v941
    %2181 = vmatpush.msra.mxu0 %v940
    %2182 = vmatpush.msra.mxu0 %v939
    %2183 = vmatpush.msra.mxu0 %v938
    %2184 = vmatpush.msra.mxu0 %v937
    %2185 = vmatmul.f32.gmra.mxu0 %v108
    %v2186 = vpop.f32.mrf.mxu0
    %v2187 = vadd.f32 %v2167, %v2186
    %2188 = vdwg.mxu0
    %2189 = vmatpush.msra.mxu0 %v968
    %2190 = vmatpush.msra.mxu0 %v967
    %2191 = vmatpush.msra.mxu0 %v966
    %2192 = vmatpush.msra.mxu0 %v965
    %2193 = vmatpush.msra.mxu0 %v964
    %2194 = vmatpush.msra.mxu0 %v963
    %2195 = vmatpush.msra.mxu0 %v962
    %2196 = vmatpush.msra.mxu0 %v961
    %2197 = vmatpush.msra.mxu0 %v960
    %2198 = vmatpush.msra.mxu0 %v959
    %2199 = vmatpush.msra.mxu0 %v958
    %2200 = vmatpush.msra.mxu0 %v957
    %2201 = vmatpush.msra.mxu0 %v956
    %2202 = vmatpush.msra.mxu0 %v955
    %2203 = vmatpush.msra.mxu0 %v954
    %2204 = vmatpush.msra.mxu0 %v953
    %2205 = vmatmul.f32.gmra.mxu0 %v109
    %v2206 = vpop.f32.mrf.mxu0
    %v2207 = vadd.f32 %v2187, %v2206
    %2208 = vdwg.mxu0
    %2209 = vmatpush.msra.mxu0 %v984
    %2210 = vmatpush.msra.mxu0 %v983
    %2211 = vmatpush.msra.mxu0 %v982
    %2212 = vmatpush.msra.mxu0 %v981
    %2213 = vmatpush.msra.mxu0 %v980
    %2214 = vmatpush.msra.mxu0 %v979
    %2215 = vmatpush.msra.mxu0 %v978
    %2216 = vmatpush.msra.mxu0 %v977
    %2217 = vmatpush.msra.mxu0 %v976
    %2218 = vmatpush.msra.mxu0 %v975
    %2219 = vmatpush.msra.mxu0 %v974
    %2220 = vmatpush.msra.mxu0 %v973
    %2221 = vmatpush.msra.mxu0 %v972
    %2222 = vmatpush.msra.mxu0 %v971
    %2223 = vmatpush.msra.mxu0 %v970
    %2224 = vmatpush.msra.mxu0 %v969
    %2225 = vmatmul.f32.gmra.mxu0 %v110
    %v2226 = vpop.f32.mrf.mxu0
    %v2227 = vadd.f32 %v2207, %v2226
    %2228 = vdwg.mxu0
    %2229 = vmatpush.msra.mxu0 %v1000
    %2230 = vmatpush.msra.mxu0 %v999
    %2231 = vmatpush.msra.mxu0 %v998
    %2232 = vmatpush.msra.mxu0 %v997
    %2233 = vmatpush.msra.mxu0 %v996
    %2234 = vmatpush.msra.mxu0 %v995
    %2235 = vmatpush.msra.mxu0 %v994
    %2236 = vmatpush.msra.mxu0 %v993
    %2237 = vmatpush.msra.mxu0 %v992
    %2238 = vmatpush.msra.mxu0 %v991
    %2239 = vmatpush.msra.mxu0 %v990
    %2240 = vmatpush.msra.mxu0 %v989
    %2241 = vmatpush.msra.mxu0 %v988
    %2242 = vmatpush.msra.mxu0 %v987
    %2243 = vmatpush.msra.mxu0 %v986
    %2244 = vmatpush.msra.mxu0 %v985
    %2245 = vmatmul.f32.gmra.mxu0 %v111
    %v2246 = vpop.f32.mrf.mxu0
    %v2247 = vadd.f32 %v2227, %v2246
    %2248 = vdwg.mxu0
    %2249 = vmatpush.msra.mxu0 %v1016
    %2250 = vmatpush.msra.mxu0 %v1015
    %2251 = vmatpush.msra.mxu0 %v1014
    %2252 = vmatpush.msra.mxu0 %v1013
    %2253 = vmatpush.msra.mxu0 %v1012
    %2254 = vmatpush.msra.mxu0 %v1011
    %2255 = vmatpush.msra.mxu0 %v1010
    %2256 = vmatpush.msra.mxu0 %v1009
    %2257 = vmatpush.msra.mxu0 %v1008
    %2258 = vmatpush.msra.mxu0 %v1007
    %2259 = vmatpush.msra.mxu0 %v1006
    %2260 = vmatpush.msra.mxu0 %v1005
    %2261 = vmatpush.msra.mxu0 %v1004
    %2262 = vmatpush.msra.mxu0 %v1003
    %2263 = vmatpush.msra.mxu0 %v1002
    %2264 = vmatpush.msra.mxu0 %v1001
    %2265 = vmatmul.f32.gmra.mxu0 %v112
    %v2266 = vpop.f32.mrf.mxu0
    %v2267 = vadd.f32 %v2247, %v2266
    %2268 = vdwg.mxu0
    %2269 = vmatpush.msra.mxu0 %v1032
    %2270 = vmatpush.msra.mxu0 %v1031
    %2271 = vmatpush.msra.mxu0 %v1030
    %2272 = vmatpush.msra.mxu0 %v1029
    %2273 = vmatpush.msra.mxu0 %v1028
    %2274 = vmatpush.msra.mxu0 %v1027
    %2275 = vmatpush.msra.mxu0 %v1026
    %2276 = vmatpush.msra.mxu0 %v1025
    %2277 = vmatpush.msra.mxu0 %v1024
    %2278 = vmatpush.msra.mxu0 %v1023
    %2279 = vmatpush.msra.mxu0 %v1022
    %2280 = vmatpush.msra.mxu0 %v1021
    %2281 = vmatpush.msra.mxu0 %v1020
    %2282 = vmatpush.msra.mxu0 %v1019
    %2283 = vmatpush.msra.mxu0 %v1018
    %2284 = vmatpush.msra.mxu0 %v1017
    %2285 = vmatmul.f32.gmra.mxu0 %v113
    %v2286 = vpop.f32.mrf.mxu0
    %v2287 = vadd.f32 %v2267, %v2286
    %2288 = vdwg.mxu0
    %2289 = vmatpush.msra.mxu0 %v1048
    %2290 = vmatpush.msra.mxu0 %v1047
    %2291 = vmatpush.msra.mxu0 %v1046
    %2292 = vmatpush.msra.mxu0 %v1045
    %2293 = vmatpush.msra.mxu0 %v1044
    %2294 = vmatpush.msra.mxu0 %v1043
    %2295 = vmatpush.msra.mxu0 %v1042
    %2296 = vmatpush.msra.mxu0 %v1041
    %2297 = vmatpush.msra.mxu0 %v1040
    %2298 = vmatpush.msra.mxu0 %v1039
    %2299 = vmatpush.msra.mxu0 %v1038
    %2300 = vmatpush.msra.mxu0 %v1037
    %2301 = vmatpush.msra.mxu0 %v1036
    %2302 = vmatpush.msra.mxu0 %v1035
    %2303 = vmatpush.msra.mxu0 %v1034
    %2304 = vmatpush.msra.mxu0 %v1033
    %2305 = vmatmul.f32.gmra.mxu0 %v114
    %v2306 = vpop.f32.mrf.mxu0
    %v2307 = vadd.f32 %v2287, %v2306
    %2308 = vdwg.mxu0
    %2309 = vmatpush.msra.mxu0 %v1064
    %2310 = vmatpush.msra.mxu0 %v1063
    %2311 = vmatpush.msra.mxu0 %v1062
    %2312 = vmatpush.msra.mxu0 %v1061
    %2313 = vmatpush.msra.mxu0 %v1060
    %2314 = vmatpush.msra.mxu0 %v1059
    %2315 = vmatpush.msra.mxu0 %v1058
    %2316 = vmatpush.msra.mxu0 %v1057
    %2317 = vmatpush.msra.mxu0 %v1056
    %2318 = vmatpush.msra.mxu0 %v1055
    %2319 = vmatpush.msra.mxu0 %v1054
    %2320 = vmatpush.msra.mxu0 %v1053
    %2321 = vmatpush.msra.mxu0 %v1052
    %2322 = vmatpush.msra.mxu0 %v1051
    %2323 = vmatpush.msra.mxu0 %v1050
    %2324 = vmatpush.msra.mxu0 %v1049
    %2325 = vmatmul.f32.gmra.mxu0 %v115
    %v2326 = vpop.f32.mrf.mxu0
    %v2327 = vadd.f32 %v2307, %v2326
    %2328 = vdwg.mxu0
    %2329 = vmatpush.msra.mxu0 %v1080
    %2330 = vmatpush.msra.mxu0 %v1079
    %2331 = vmatpush.msra.mxu0 %v1078
    %2332 = vmatpush.msra.mxu0 %v1077
    %2333 = vmatpush.msra.mxu0 %v1076
    %2334 = vmatpush.msra.mxu0 %v1075
    %2335 = vmatpush.msra.mxu0 %v1074
    %2336 = vmatpush.msra.mxu0 %v1073
    %2337 = vmatpush.msra.mxu0 %v1072
    %2338 = vmatpush.msra.mxu0 %v1071
    %2339 = vmatpush.msra.mxu0 %v1070
    %2340 = vmatpush.msra.mxu0 %v1069
    %2341 = vmatpush.msra.mxu0 %v1068
    %2342 = vmatpush.msra.mxu0 %v1067
    %2343 = vmatpush.msra.mxu0 %v1066
    %2344 = vmatpush.msra.mxu0 %v1065
    %2345 = vmatmul.f32.gmra.mxu0 %v116
    %v2346 = vpop.f32.mrf.mxu0
    %v2347 = vadd.f32 %v2327, %v2346
    %2348 = vdwg.mxu0
    %2349 = vmatpush.msra.mxu0 %v1096
    %2350 = vmatpush.msra.mxu0 %v1095
    %2351 = vmatpush.msra.mxu0 %v1094
    %2352 = vmatpush.msra.mxu0 %v1093
    %2353 = vmatpush.msra.mxu0 %v1092
    %2354 = vmatpush.msra.mxu0 %v1091
    %2355 = vmatpush.msra.mxu0 %v1090
    %2356 = vmatpush.msra.mxu0 %v1089
    %2357 = vmatpush.msra.mxu0 %v1088
    %2358 = vmatpush.msra.mxu0 %v1087
    %2359 = vmatpush.msra.mxu0 %v1086
    %2360 = vmatpush.msra.mxu0 %v1085
    %2361 = vmatpush.msra.mxu0 %v1084
    %2362 = vmatpush.msra.mxu0 %v1083
    %2363 = vmatpush.msra.mxu0 %v1082
    %2364 = vmatpush.msra.mxu0 %v1081
    %2365 = vmatmul.f32.gmra.mxu0 %v117
    %v2366 = vpop.f32.mrf.mxu0
    %v2367 = vadd.f32 %v2347, %v2366
    %2368 = vdwg.mxu0
    %2369 = vmatpush.msra.mxu0 %v1112
    %2370 = vmatpush.msra.mxu0 %v1111
    %2371 = vmatpush.msra.mxu0 %v1110
    %2372 = vmatpush.msra.mxu0 %v1109
    %2373 = vmatpush.msra.mxu0 %v1108
    %2374 = vmatpush.msra.mxu0 %v1107
    %2375 = vmatpush.msra.mxu0 %v1106
    %2376 = vmatpush.msra.mxu0 %v1105
    %2377 = vmatpush.msra.mxu0 %v1104
    %2378 = vmatpush.msra.mxu0 %v1103
    %2379 = vmatpush.msra.mxu0 %v1102
    %2380 = vmatpush.msra.mxu0 %v1101
    %2381 = vmatpush.msra.mxu0 %v1100
    %2382 = vmatpush.msra.mxu0 %v1099
    %2383 = vmatpush.msra.mxu0 %v1098
    %2384 = vmatpush.msra.mxu0 %v1097
    %2385 = vmatmul.f32.gmra.mxu0 %v118
    %v2386 = vpop.f32.mrf.mxu0
    %v2387 = vadd.f32 %v2367, %v2386
    %2388 = vdwg.mxu0
    %2389 = vmatpush.msra.mxu0 %v1128
    %2390 = vmatpush.msra.mxu0 %v1127
    %2391 = vmatpush.msra.mxu0 %v1126
    %2392 = vmatpush.msra.mxu0 %v1125
    %2393 = vmatpush.msra.mxu0 %v1124
    %2394 = vmatpush.msra.mxu0 %v1123
    %2395 = vmatpush.msra.mxu0 %v1122
    %2396 = vmatpush.msra.mxu0 %v1121
    %2397 = vmatpush.msra.mxu0 %v1120
    %2398 = vmatpush.msra.mxu0 %v1119
    %2399 = vmatpush.msra.mxu0 %v1118
    %2400 = vmatpush.msra.mxu0 %v1117
    %2401 = vmatpush.msra.mxu0 %v1116
    %2402 = vmatpush.msra.mxu0 %v1115
    %2403 = vmatpush.msra.mxu0 %v1114
    %2404 = vmatpush.msra.mxu0 %v1113
    %2405 = vmatmul.f32.gmra.mxu0 %v119
    %v2406 = vpop.f32.mrf.mxu0
    %v2407 = vadd.f32 %v2387, %v2406
    %2408 = vdwg.mxu0
    %2409 = vmatpush.msra.mxu0 %v1144
    %2410 = vmatpush.msra.mxu0 %v1143
    %2411 = vmatpush.msra.mxu0 %v1142
    %2412 = vmatpush.msra.mxu0 %v1141
    %2413 = vmatpush.msra.mxu0 %v1140
    %2414 = vmatpush.msra.mxu0 %v1139
    %2415 = vmatpush.msra.mxu0 %v1138
    %2416 = vmatpush.msra.mxu0 %v1137
    %2417 = vmatpush.msra.mxu0 %v1136
    %2418 = vmatpush.msra.mxu0 %v1135
    %2419 = vmatpush.msra.mxu0 %v1134
    %2420 = vmatpush.msra.mxu0 %v1133
    %2421 = vmatpush.msra.mxu0 %v1132
    %2422 = vmatpush.msra.mxu0 %v1131
    %2423 = vmatpush.msra.mxu0 %v1130
    %2424 = vmatpush.msra.mxu0 %v1129
    %2425 = vmatmul.f32.gmra.mxu0 %v120
    %v2426 = vpop.f32.mrf.mxu0
    %v2427 = vadd.f32 %v2407, %v2426
    %2428 = vdwg.mxu0
    %v2429 = vtanh.pop %v2427
    %2430 = vst [vmem:[%s3] sm:$0xff] %v2429
    // Predicated region
    $region26: #{hopfield_xavier_forward.2} parent=1 // pred_check
      _
    $region27: #{hopfield_xavier_forward.2} parent=1 // pred_check_branch
      %2432 = sbr.rel (0) target = $region29
    $region28: #{hopfield_xavier_forward.2} parent=1 // pred_region
      _
    $region29: #{hopfield_xavier_forward.2} parent=1 // pred_fallthru
      _
    // Predicated region
    $region30: #{hopfield_xavier_forward.2} parent=1 // pred_check
      _
    $region31: #{hopfield_xavier_forward.2} parent=1 // pred_check_branch
      %2434 = sbr.rel (0) target = $region33
    $region32: #{hopfield_xavier_forward.2} parent=1 // pred_region
      _
    $region33: #{hopfield_xavier_forward.2} parent=1 // pred_fallthru
      _
    %2435 = vsyncpa [#allocation3], 1
    %2436 = vsyncpa [#allocation5], 1

// kernel: hopfield_xavier_forward.3
$region0: #{hopfield_xavier_forward.3}
  #allocation0 [shape = 'u32[]', space=smem, size = 0x4, offset = 0x4, fixed_abs, tag = 'smem constant byte address 0x4 - core index']
  #allocation1 [shape = 'u32[72,128]{1,0:T(1,128)}', space=vmem, size = 0x9000, scoped, tag = 'internal scratch']
  %s0 = inlined_call_operand.hbm [shape: f32[8,8192], index: 0, kind: input, shape index: {}]
  %s1 = inlined_call_operand.hbm [shape: f32[8192,8192], index: 1, kind: input, shape index: {}]
  %s2 = inlined_call_operand.hbm [shape: f32[1,8192], index: 2, kind: input, shape index: {}]
  %s3 = inlined_call_operand.vmem [shape: f32[8,128], index: 3, kind: input, shape index: {}]
  %s4 = inlined_call_operand.hbm [shape: f32[128,8192], index: 4, kind: input, shape index: {}]
  %s5 = inlined_call_operand.hbm [shape: f32[1,8192], index: 5, kind: input, shape index: {}]
  %s6 = inlined_call_operand.hbm [shape: f32[8,8192], index: 6, kind: output, shape index: {}]
  %s7 = sld [smem:[#allocation0]]
  $region85: #{hopfield_xavier_forward.3} parent=0
    _
  %s9 = ssub.s32 1, %s7
  %s10 = scalar_select 0, %s9, %s7
  $region1: #{hopfield_xavier_forward.3} parent=0
    #allocation2 [shape = 'u8[131072]{0}', space=vmem, size = 0x20000, scoped, tag = 'input window, operand 0']
    #allocation3 [shape = 's32[2]{0}', space=sflag, size = 0x8, scoped, tag = 'scoped memory for hopfield_xavier_forward.3']
    #allocation4 [shape = 's32[2]{0}', space=sflag, size = 0x8, scoped, tag = 'scoped memory for hopfield_xavier_forward.3']
    #allocation5 [shape = 'u8[16777216]{0}', space=vmem, size = 0x1000000, scoped, tag = 'input window, operand 1']
    #allocation6 [shape = 's32[2]{0}', space=sflag, size = 0x8, scoped, tag = 'scoped memory for hopfield_xavier_forward.3']
    #allocation7 [shape = 'u8[8192]{0}', space=vmem, size = 0x2000, scoped, tag = 'input window, operand 2']
    #allocation8 [shape = 'u8[1048576]{0}', space=vmem, size = 0x100000, scoped, tag = 'input window, operand 4']
    #allocation9 [shape = 's32[2]{0}', space=sflag, size = 0x8, scoped, tag = 'scoped memory for hopfield_xavier_forward.3']
    #allocation10 [shape = 'u8[8192]{0}', space=vmem, size = 0x2000, scoped, tag = 'input window, operand 5']
    #allocation11 [shape = 'u8[65536]{0}', space=vmem, size = 0x10000, scoped, tag = 'output window, operand 0']
    %11 = vsyncpa [#allocation3], 0
    %s12 = scalar_lea.sflag [#allocation3], 1
    %13 = vsyncpa %s12, 0
    %14 = vsyncpa [#allocation6], 0
    %s15 = scalar_lea.sflag [#allocation6], 1
    %16 = vsyncpa %s15, 0
    %17 = vsyncpa [#allocation9], 0
    %s18 = scalar_lea.sflag [#allocation9], 1
    %19 = vsyncpa %s18, 0
    %20 = vsyncpa [#allocation4], 0
    %s21 = scalar_lea.sflag [#allocation4], 1
    %22 = vsyncpa %s21, 0
    loop: start=0, step=1, limit=34
    $region2: #{hopfield_xavier_forward.3} parent=1 // loop_pre_header
      _
    $region3: #{hopfield_xavier_forward.3} parent=1 // loop_header
      %s24 = sphi 0, %s28
      %p25 = scmp.ge.s32.totalorder %s24, 34
      %s31 = sphi 0, %s43
      %s32 = sphi 0, %s39
      %s33 = sphi 0, %s31
      %s34 = sphi 0, %s32
      %s35 = sphi 0, %s33
      %s36 = sphi 0, %s34
      %s46 = sphi 0, %s48
      %s49 = sphi 0, %s46
      %s50 = sphi 0, %s49
      %s66 = sphi 0, %s50
      %s74 = sphi 0, %s76
      %s77 = sphi 0, %s74
      %s78 = sphi 0, %s77
      %s94 = sphi 0, %s78
      %s100 = sphi 0, %s102
      %s103 = sphi 0, %s100
      %s104 = sphi 0, %s103
      %s120 = sphi 0, %s104
      %s124 = sphi 0, %s124
      %s126 = sphi 0, %s124
      %s127 = sphi 0, %s126
      %s141 = sphi 0, %s127
      %s147 = sphi 0, %s149
      %s150 = sphi 0, %s147
      %s151 = sphi 0, %s150
      %s167 = sphi 0, %s151
      %s173 = sphi 0, %s175
      %s176 = sphi 0, %s173
      %s177 = sphi 0, %s176
      %s193 = sphi 0, %s177
      %s199 = sphi 0, %s201
      %s202 = sphi 0, %s199
      %s203 = sphi 0, %s202
      %s219 = sphi 0, %s203
    $region4: #{hopfield_xavier_forward.3} parent=1 // loop_header_branch
      %27 = sbr.rel (%p25) target = $region8
    $region5: #{hopfield_xavier_forward.3} parent=1 // loop_body
      %s29 = ssub.s32 %s24, 1
      %s30 = ssub.s32 %s24, 2
      %s37 = sadd.s32 1, %s32
      %p38 = scmp.ge.s32.totalorder %s37, 4
      %s39 = scalar_select %p38, 0, %s37
      %s40 = sadd.s32 1, %s31
      %s41 = scalar_select %p38, %s40, %s31
      %p42 = scmp.ge.s32.totalorder %s41, 8
      %s43 = scalar_select %p42, 0, %s41
      %s44 = ssub.s32 %s32, %s39
      %p45 = scmp.eq.s32.totalorder %s44, 0
      %s47 = sadd.s32 %s46, 1
      %s48 = scalar_select %p45, %s46, %s47
      %p51 = pneg %p45
      %p52 = scmp.eq.s32.totalorder %s24, 31
      %p53 = por %p51, %p52
      %p54 = scmp.ne.s32.totalorder %s46, %s49
      %p55 = scmp.eq.s32.totalorder %s24, 0
      %p56 = por %p54, %p55
      %p57 = scmp.ne.s32.totalorder %s46, %s49
      %p58 = scmp.eq.s32.totalorder %s29, 31
      %p59 = por %p57, %p58
      %p60 = scmp.ne.s32.totalorder %s49, %s50
      %p61 = scmp.eq.s32.totalorder %s29, 0
      %p62 = por %p60, %p61
      %p63 = scmp.ne.s32.totalorder %s49, %s50
      %p64 = scmp.eq.s32.totalorder %s30, 31
      %p65 = por %p63, %p64
      %p67 = scmp.ne.s32.totalorder %s50, %s66
      %p68 = scmp.eq.s32.totalorder %s30, 0
      %p69 = por %p67, %p68
      %s70 = ssub.s32 %s32, %s39
      %s71 = ssub.s32 %s31, %s43
      %s72 = sor.u32 %s70, %s71
      %p73 = scmp.eq.s32.totalorder %s72, 0
      %s75 = sadd.s32 %s74, 1
      %s76 = scalar_select %p73, %s74, %s75
      %p79 = pneg %p73
      %p80 = scmp.eq.s32.totalorder %s24, 31
      %p81 = por %p79, %p80
      %p82 = scmp.ne.s32.totalorder %s74, %s77
      %p83 = scmp.eq.s32.totalorder %s24, 0
      %p84 = por %p82, %p83
      %p85 = scmp.ne.s32.totalorder %s74, %s77
      %p86 = scmp.eq.s32.totalorder %s29, 31
      %p87 = por %p85, %p86
      %p88 = scmp.ne.s32.totalorder %s77, %s78
      %p89 = scmp.eq.s32.totalorder %s29, 0
      %p90 = por %p88, %p89
      %p91 = scmp.ne.s32.totalorder %s77, %s78
      %p92 = scmp.eq.s32.totalorder %s30, 31
      %p93 = por %p91, %p92
      %p95 = scmp.ne.s32.totalorder %s78, %s94
      %p96 = scmp.eq.s32.totalorder %s30, 0
      %p97 = por %p95, %p96
      %s98 = ssub.s32 %s31, %s43
      %p99 = scmp.eq.s32.totalorder %s98, 0
      %s101 = sadd.s32 %s100, 1
      %s102 = scalar_select %p99, %s100, %s101
      %p105 = pneg %p99
      %p106 = scmp.eq.s32.totalorder %s24, 31
      %p107 = por %p105, %p106
      %p108 = scmp.ne.s32.totalorder %s100, %s103
      %p109 = scmp.eq.s32.totalorder %s24, 0
      %p110 = por %p108, %p109
      %p111 = scmp.ne.s32.totalorder %s100, %s103
      %p112 = scmp.eq.s32.totalorder %s29, 31
      %p113 = por %p111, %p112
      %p114 = scmp.ne.s32.totalorder %s103, %s104
      %p115 = scmp.eq.s32.totalorder %s29, 0
      %p116 = por %p114, %p115
      %p117 = scmp.ne.s32.totalorder %s103, %s104
      %p118 = scmp.eq.s32.totalorder %s30, 31
      %p119 = por %p117, %p118
      %p121 = scmp.ne.s32.totalorder %s104, %s120
      %p122 = scmp.eq.s32.totalorder %s30, 0
      %p123 = por %p121, %p122
      %s125 = sadd.s32 %s124, 1
      %p128 = scmp.eq.s32.totalorder %s24, 31
      %p129 = scmp.ne.s32.totalorder %s124, %s126
      %p130 = scmp.eq.s32.totalorder %s24, 0
      %p131 = por %p129, %p130
      %p132 = scmp.ne.s32.totalorder %s124, %s126
      %p133 = scmp.eq.s32.totalorder %s29, 31
      %p134 = por %p132, %p133
      %p135 = scmp.ne.s32.totalorder %s126, %s127
      %p136 = scmp.eq.s32.totalorder %s29, 0
      %p137 = por %p135, %p136
      %p138 = scmp.ne.s32.totalorder %s126, %s127
      %p139 = scmp.eq.s32.totalorder %s30, 31
      %p140 = por %p138, %p139
      %p142 = scmp.ne.s32.totalorder %s127, %s141
      %p143 = scmp.eq.s32.totalorder %s30, 0
      %p144 = por %p142, %p143
      %s145 = ssub.s32 %s31, %s43
      %p146 = scmp.eq.s32.totalorder %s145, 0
      %s148 = sadd.s32 %s147, 1
      %s149 = scalar_select %p146, %s147, %s148
      %p152 = pneg %p146
      %p153 = scmp.eq.s32.totalorder %s24, 31
      %p154 = por %p152, %p153
      %p155 = scmp.ne.s32.totalorder %s147, %s150
      %p156 = scmp.eq.s32.totalorder %s24, 0
      %p157 = por %p155, %p156
      %p158 = scmp.ne.s32.totalorder %s147, %s150
      %p159 = scmp.eq.s32.totalorder %s29, 31
      %p160 = por %p158, %p159
      %p161 = scmp.ne.s32.totalorder %s150, %s151
      %p162 = scmp.eq.s32.totalorder %s29, 0
      %p163 = por %p161, %p162
      %p164 = scmp.ne.s32.totalorder %s150, %s151
      %p165 = scmp.eq.s32.totalorder %s30, 31
      %p166 = por %p164, %p165
      %p168 = scmp.ne.s32.totalorder %s151, %s167
      %p169 = scmp.eq.s32.totalorder %s30, 0
      %p170 = por %p168, %p169
      %s171 = ssub.s32 %s31, %s43
      %p172 = scmp.eq.s32.totalorder %s171, 0
      %s174 = sadd.s32 %s173, 1
      %s175 = scalar_select %p172, %s173, %s174
      %p178 = pneg %p172
      %p179 = scmp.eq.s32.totalorder %s24, 31
      %p180 = por %p178, %p179
      %p181 = scmp.ne.s32.totalorder %s173, %s176
      %p182 = scmp.eq.s32.totalorder %s24, 0
      %p183 = por %p181, %p182
      %p184 = scmp.ne.s32.totalorder %s173, %s176
      %p185 = scmp.eq.s32.totalorder %s29, 31
      %p186 = por %p184, %p185
      %p187 = scmp.ne.s32.totalorder %s176, %s177
      %p188 = scmp.eq.s32.totalorder %s29, 0
      %p189 = por %p187, %p188
      %p190 = scmp.ne.s32.totalorder %s176, %s177
      %p191 = scmp.eq.s32.totalorder %s30, 31
      %p192 = por %p190, %p191
      %p194 = scmp.ne.s32.totalorder %s177, %s193
      %p195 = scmp.eq.s32.totalorder %s30, 0
      %p196 = por %p194, %p195
      %s197 = ssub.s32 %s31, %s43
      %p198 = scmp.eq.s32.totalorder %s197, 0
      %s200 = sadd.s32 %s199, 1
      %s201 = scalar_select %p198, %s199, %s200
      %p204 = pneg %p198
      %p205 = scmp.eq.s32.totalorder %s24, 31
      %p206 = por %p204, %p205
      %p207 = scmp.ne.s32.totalorder %s199, %s202
      %p208 = scmp.eq.s32.totalorder %s24, 0
      %p209 = por %p207, %p208
      %p210 = scmp.ne.s32.totalorder %s199, %s202
      %p211 = scmp.eq.s32.totalorder %s29, 31
      %p212 = por %p210, %p211
      %p213 = scmp.ne.s32.totalorder %s202, %s203
      %p214 = scmp.eq.s32.totalorder %s29, 0
      %p215 = por %p213, %p214
      %p216 = scmp.ne.s32.totalorder %s202, %s203
      %p217 = scmp.eq.s32.totalorder %s30, 31
      %p218 = por %p216, %p217
      %p220 = scmp.ne.s32.totalorder %s203, %s219
      %p221 = scmp.eq.s32.totalorder %s30, 0
      %p222 = por %p220, %p221
      %p223 = scmp.le.s32.totalorder 1, %s24
      %p224 = scmp.lt.s32.totalorder %s24, 33
      %p225 = pnand %p223, %p224
      %p226 = pneg %p225
      // Predicated region
      $region9: #{hopfield_xavier_forward.3} parent=5 // pred_check
        _
      $region10: #{hopfield_xavier_forward.3} parent=5 // pred_check_branch
        %228 = sbr.rel (%p225) target = $region12
      $region11: #{hopfield_xavier_forward.3} parent=5 // pred_region
        %s229 = ssub.s32 %s24, 1
        // Predicated region
        $region13: #{hopfield_xavier_forward.3} parent=11 // pred_check
          %p230 = pneg %p137
        $region14: #{hopfield_xavier_forward.3} parent=11 // pred_check_branch
          %232 = sbr.rel (%p230) target = $region16
        $region15: #{hopfield_xavier_forward.3} parent=11 // pred_region
          _
        $region16: #{hopfield_xavier_forward.3} parent=11 // pred_fallthru
          _
      $region12: #{hopfield_xavier_forward.3} parent=5 // pred_fallthru
        _
      %p233 = scmp.lt.s32.totalorder %s24, 32
      // Predicated region
      $region17: #{hopfield_xavier_forward.3} parent=5 // pred_check
        %p234 = pneg %p233
      $region18: #{hopfield_xavier_forward.3} parent=5 // pred_check_branch
        %236 = sbr.rel (%p234) target = $region20
      $region19: #{hopfield_xavier_forward.3} parent=5 // pred_region
        // Predicated region
        $region21: #{hopfield_xavier_forward.3} parent=19 // pred_check
          %p237 = pneg %p56
        $region22: #{hopfield_xavier_forward.3} parent=19 // pred_check_branch
          %239 = sbr.rel (%p237) target = $region24
        $region23: #{hopfield_xavier_forward.3} parent=19 // pred_region
          %s240 = sand.u32 %s46, 1
          %s241 = scalar_lea.sflag [#allocation3], %s240
          %s242 = sand.u32 %s46, 1
          %s243 = smul.addr %s242, 128
          %s244 = scalar_lea.vmem [#allocation2], %s243
          %s245 = smul.u32 16, %s32
          %247 = vsyncadd %s241, 0
          %s248 = smul.addr %s245, 8
          %s249 = scalar_lea.hbm %s0, %s248
          %s251 = sshll.u32 %s249, 4
          %s252 = int_to_ptr.hbm [resolvable:$true] %s251
          %s253 = sshll.u32 %s244, 4
          %s254 = int_to_ptr.vmem [resolvable:$true] %s253
          %256 = dma.hbm_to_vmem [thread:$0]  %s252, 2048, %s254, %s241
        $region24: #{hopfield_xavier_forward.3} parent=19 // pred_fallthru
          _
        // Predicated region
        $region25: #{hopfield_xavier_forward.3} parent=19 // pred_check
          %p257 = pneg %p84
        $region26: #{hopfield_xavier_forward.3} parent=19 // pred_check_branch
          %259 = sbr.rel (%p257) target = $region28
        $region27: #{hopfield_xavier_forward.3} parent=19 // pred_region
          %s260 = sand.u32 %s24, 1
          %s261 = scalar_lea.sflag [#allocation6], %s260
          %s262 = sand.u32 %s74, 1
          %s263 = smul.addr %s262, 16384
          %s264 = scalar_lea.vmem [#allocation5], %s263
          %s265 = smul.u32 256, %s32
          %s266 = smul.u32 8, %s31
          %268 = vsyncadd %s261, 0
          %s269 = smul.addr %s265, 64
          %s270 = sadd.s32 %s266, %s269
          %s271 = smul.addr %s270, 8
          %s272 = scalar_lea.hbm %s1, %s271
          %s273 = sshll.u32 %s272, 4
          %s274 = int_to_ptr.hbm [resolvable:$true] %s273
          %s275 = sshll.u32 %s264, 4
          %s276 = int_to_ptr.vmem [resolvable:$true] %s275
          %281 = dma.hbm_to_vmem [thread:$0]  %s274, 262144, %s276, %s261, 8192, 1024, 64
        $region28: #{hopfield_xavier_forward.3} parent=19 // pred_fallthru
          _
        // Predicated region
        $region29: #{hopfield_xavier_forward.3} parent=19 // pred_check
          %p282 = pneg %p110
        $region30: #{hopfield_xavier_forward.3} parent=19 // pred_check_branch
          %284 = sbr.rel (%p282) target = $region32
        $region31: #{hopfield_xavier_forward.3} parent=19 // pred_region
          %s285 = sand.u32 %s24, 1
          %s286 = scalar_lea.sflag [#allocation6], %s285
          %s287 = sand.u32 %s100, 1
          %s288 = smul.addr %s287, 8
          %s289 = scalar_lea.vmem [#allocation7], %s288
          %s290 = smul.u32 8, %s31
          %292 = vsyncadd %s286, 0
          %s293 = scalar_lea.hbm %s2, %s290
          %s295 = sshll.u32 %s293, 4
          %s296 = int_to_ptr.hbm [resolvable:$true] %s295
          %s297 = sshll.u32 %s289, 4
          %s298 = int_to_ptr.vmem [resolvable:$true] %s297
          %300 = dma.hbm_to_vmem [thread:$0]  %s296, 128, %s298, %s286
        $region32: #{hopfield_xavier_forward.3} parent=19 // pred_fallthru
          _
        // Predicated region
        $region33: #{hopfield_xavier_forward.3} parent=19 // pred_check
          %p301 = pneg %p157
        $region34: #{hopfield_xavier_forward.3} parent=19 // pred_check_branch
          %303 = sbr.rel (%p301) target = $region36
        $region35: #{hopfield_xavier_forward.3} parent=19 // pred_region
          %s304 = sand.u32 %s24, 1
          %s305 = scalar_lea.sflag [#allocation9], %s304
          %s306 = sand.u32 %s147, 1
          %s307 = smul.addr %s306, 1024
          %s308 = scalar_lea.vmem [#allocation8], %s307
          %s309 = smul.u32 8, %s31
          %311 = vsyncadd %s305, 0
          %s312 = smul.addr %s309, 8
          %s313 = scalar_lea.hbm %s4, %s312
          %s314 = sshll.u32 %s313, 4
          %s315 = int_to_ptr.hbm [resolvable:$true] %s314
          %s316 = sshll.u32 %s308, 4
          %s317 = int_to_ptr.vmem [resolvable:$true] %s316
          %322 = dma.hbm_to_vmem [thread:$0]  %s315, 16384, %s317, %s305, 8192, 1024, 64
        $region36: #{hopfield_xavier_forward.3} parent=19 // pred_fallthru
          _
        // Predicated region
        $region37: #{hopfield_xavier_forward.3} parent=19 // pred_check
          %p323 = pneg %p183
        $region38: #{hopfield_xavier_forward.3} parent=19 // pred_check_branch
          %325 = sbr.rel (%p323) target = $region40
        $region39: #{hopfield_xavier_forward.3} parent=19 // pred_region
          %s326 = sand.u32 %s24, 1
          %s327 = scalar_lea.sflag [#allocation9], %s326
          %s328 = sand.u32 %s173, 1
          %s329 = smul.addr %s328, 8
          %s330 = scalar_lea.vmem [#allocation10], %s329
          %s331 = smul.u32 8, %s31
          %333 = vsyncadd %s327, 0
          %s334 = scalar_lea.hbm %s5, %s331
          %s336 = sshll.u32 %s334, 4
          %s337 = int_to_ptr.hbm [resolvable:$true] %s336
          %s338 = sshll.u32 %s330, 4
          %s339 = int_to_ptr.vmem [resolvable:$true] %s338
          %341 = dma.hbm_to_vmem [thread:$0]  %s337, 128, %s339, %s327
        $region40: #{hopfield_xavier_forward.3} parent=19 // pred_fallthru
          _
      $region20: #{hopfield_xavier_forward.3} parent=5 // pred_fallthru
        _
      %p342 = scmp.le.s32.totalorder 1, %s24
      %p343 = scmp.lt.s32.totalorder %s24, 33
      %p344 = pnand %p342, %p343
      %p345 = pneg %p344
      // Predicated region
      $region41: #{hopfield_xavier_forward.3} parent=5 // pred_check
        _
      $region42: #{hopfield_xavier_forward.3} parent=5 // pred_check_branch
        %347 = sbr.rel (%p344) target = $region44
      $region43: #{hopfield_xavier_forward.3} parent=5 // pred_region
        %s348 = ssub.s32 %s24, 1
        %s349 = sand.u32 %s49, 1
        %s350 = scalar_lea.sflag [#allocation3], %s349
        %s351 = sand.u32 %s49, 1
        %s352 = smul.addr %s351, 128
        %s353 = scalar_lea.vmem [#allocation2], %s352
        // Predicated region
        $region45: #{hopfield_xavier_forward.3} parent=43 // pred_check
          %p354 = pneg %p62
        $region46: #{hopfield_xavier_forward.3} parent=43 // pred_check_branch
          %356 = sbr.rel (%p354) target = $region48
        $region47: #{hopfield_xavier_forward.3} parent=43 // pred_region
          %358 = dma.done %s350, 2048
        $region48: #{hopfield_xavier_forward.3} parent=43 // pred_fallthru
          _
        %s359 = sand.u32 %s29, 1
        %s360 = scalar_lea.sflag [#allocation6], %s359
        %s361 = sand.u32 %s77, 1
        %s362 = smul.addr %s361, 16384
        %s363 = scalar_lea.vmem [#allocation5], %s362
        // Predicated region
        $region49: #{hopfield_xavier_forward.3} parent=43 // pred_check
          %p364 = pneg %p90
        $region50: #{hopfield_xavier_forward.3} parent=43 // pred_check_branch
          %366 = sbr.rel (%p364) target = $region52
        $region51: #{hopfield_xavier_forward.3} parent=43 // pred_region
          %368 = dma.done %s360, 262144
        $region52: #{hopfield_xavier_forward.3} parent=43 // pred_fallthru
          _
        %s369 = sand.u32 %s29, 1
        %s370 = scalar_lea.sflag [#allocation6], %s369
        %s371 = sand.u32 %s103, 1
        %s372 = smul.addr %s371, 8
        %s373 = scalar_lea.vmem [#allocation7], %s372
        // Predicated region
        $region53: #{hopfield_xavier_forward.3} parent=43 // pred_check
          %p374 = pneg %p116
        $region54: #{hopfield_xavier_forward.3} parent=43 // pred_check_branch
          %376 = sbr.rel (%p374) target = $region56
        $region55: #{hopfield_xavier_forward.3} parent=43 // pred_region
          %378 = dma.done %s370, 128
        $region56: #{hopfield_xavier_forward.3} parent=43 // pred_fallthru
          _
        %s379 = sand.u32 %s29, 1
        %s380 = scalar_lea.sflag [#allocation9], %s379
        %s381 = sand.u32 %s150, 1
        %s382 = smul.addr %s381, 1024
        %s383 = scalar_lea.vmem [#allocation8], %s382
        // Predicated region
        $region57: #{hopfield_xavier_forward.3} parent=43 // pred_check
          %p384 = pneg %p163
        $region58: #{hopfield_xavier_forward.3} parent=43 // pred_check_branch
          %386 = sbr.rel (%p384) target = $region60
        $region59: #{hopfield_xavier_forward.3} parent=43 // pred_region
          %388 = dma.done %s380, 16384
        $region60: #{hopfield_xavier_forward.3} parent=43 // pred_fallthru
          _
        %s389 = sand.u32 %s29, 1
        %s390 = scalar_lea.sflag [#allocation9], %s389
        %s391 = sand.u32 %s176, 1
        %s392 = smul.addr %s391, 8
        %s393 = scalar_lea.vmem [#allocation10], %s392
        // Predicated region
        $region61: #{hopfield_xavier_forward.3} parent=43 // pred_check
          %p394 = pneg %p189
        $region62: #{hopfield_xavier_forward.3} parent=43 // pred_check_branch
          %396 = sbr.rel (%p394) target = $region64
        $region63: #{hopfield_xavier_forward.3} parent=43 // pred_region
          %398 = dma.done %s390, 128
        $region64: #{hopfield_xavier_forward.3} parent=43 // pred_fallthru
          _
        %s399 = sand.u32 %s49, 1
        %s400 = scalar_lea.sflag [#allocation3], %s399
        %s401 = sand.u32 %s49, 1
        %s402 = smul.addr %s401, 128
        %s403 = scalar_lea.vmem [#allocation2], %s402
        %p404 = pneg %p62
        %p405 = pneg %p59
        %s406 = sand.u32 %s29, 1
        %s407 = scalar_lea.sflag [#allocation6], %s406
        %s408 = sand.u32 %s77, 1
        %s409 = smul.addr %s408, 16384
        %s410 = scalar_lea.vmem [#allocation5], %s409
        %p411 = pneg %p90
        %p412 = pneg %p87
        %s413 = sand.u32 %s29, 1
        %s414 = scalar_lea.sflag [#allocation6], %s413
        %s415 = sand.u32 %s103, 1
        %s416 = smul.addr %s415, 8
        %s417 = scalar_lea.vmem [#allocation7], %s416
        %p418 = pneg %p116
        %p419 = pneg %p113
        %p420 = pneg %p137
        %p421 = pneg %p134
        %s422 = sand.u32 %s29, 1
        %s423 = scalar_lea.sflag [#allocation9], %s422
        %s424 = sand.u32 %s150, 1
        %s425 = smul.addr %s424, 1024
        %s426 = scalar_lea.vmem [#allocation8], %s425
        %p427 = pneg %p163
        %p428 = pneg %p160
        %s429 = sand.u32 %s29, 1
        %s430 = scalar_lea.sflag [#allocation9], %s429
        %s431 = sand.u32 %s176, 1
        %s432 = smul.addr %s431, 8
        %s433 = scalar_lea.vmem [#allocation10], %s432
        %p434 = pneg %p189
        %p435 = pneg %p186
        %p436 = pneg %p215
        %p437 = pneg %p212
        %s438 = sand.u32 %s202, 1
        %s439 = scalar_lea.sflag [#allocation4], %s438
        %s440 = sand.u32 %s202, 1
        %s441 = smul.addr %s440, 64
        %s442 = scalar_lea.vmem [#allocation11], %s441
        %s443 = smul.u32 16, %s34
        %s444 = smul.u32 256, %s34
        %s445 = smul.u32 8, %s33
        %s446 = smul.u32 8, %s33
        %s447 = smul.u32 8, %s33
        %s448 = smul.u32 8, %s33
        %s449 = smul.u32 8, %s33
        %p450 = scmp.eq.s32.totalorder %s34, 0
        // Predicated region
        $region65: #{hopfield_xavier_forward.3} parent=43 // pred_check
          %p451 = pneg %p450
        $region66: #{hopfield_xavier_forward.3} parent=43 // pred_check_branch
          %453 = sbr.rel (%p451) target = $region68
        $region67: #{hopfield_xavier_forward.3} parent=43 // pred_region
          %v454 = vld [vmem:[%s373] sm:$0xff]
          %v456 = vperm.slane %v454, 0
          %v457 = vperm.slane %v454, 1
          %v458 = vperm.slane %v454, 2
          %v459 = vperm.slane %v454, 3
          %v460 = vperm.slane %v454, 4
          %v461 = vperm.slane %v454, 5
          %v462 = vperm.slane %v454, 6
          %v463 = vperm.slane %v454, 7
          %472 = vst [vmem:[%s442] sm:$0xff] %v456
          %473 = vst [vmem:[%s442 + $0x8] sm:$0xff] %v457
          %474 = vst [vmem:[%s442 + $0x10] sm:$0xff] %v458
          %475 = vst [vmem:[%s442 + $0x18] sm:$0xff] %v459
          %476 = vst [vmem:[%s442 + $0x20] sm:$0xff] %v460
          %477 = vst [vmem:[%s442 + $0x28] sm:$0xff] %v461
          %478 = vst [vmem:[%s442 + $0x30] sm:$0xff] %v462
          %479 = vst [vmem:[%s442 + $0x38] sm:$0xff] %v463
        $region68: #{hopfield_xavier_forward.3} parent=43 // pred_fallthru
          _
        %v480 = vld [vmem:[%s442] sm:$0xff]
        %v481 = vld [vmem:[%s442 + $0x8] sm:$0xff]
        %v482 = vld [vmem:[%s442 + $0x10] sm:$0xff]
        %v483 = vld [vmem:[%s442 + $0x18] sm:$0xff]
        %v484 = vld [vmem:[%s442 + $0x20] sm:$0xff]
        %v485 = vld [vmem:[%s442 + $0x28] sm:$0xff]
        %v486 = vld [vmem:[%s442 + $0x30] sm:$0xff]
        %v487 = vld [vmem:[%s442 + $0x38] sm:$0xff]
        %v488 = vld [vmem:[%s353] sm:$0xff]
        %v489 = vld [vmem:[%s353 + $0x8] sm:$0xff]
        %v490 = vld [vmem:[%s353 + $0x10] sm:$0xff]
        %v491 = vld [vmem:[%s353 + $0x18] sm:$0xff]
        %v492 = vld [vmem:[%s353 + $0x20] sm:$0xff]
        %v493 = vld [vmem:[%s353 + $0x28] sm:$0xff]
        %v494 = vld [vmem:[%s353 + $0x30] sm:$0xff]
        %v495 = vld [vmem:[%s353 + $0x38] sm:$0xff]
        %v496 = vld [vmem:[%s353 + $0x40] sm:$0xff]
        %v497 = vld [vmem:[%s353 + $0x48] sm:$0xff]
        %v498 = vld [vmem:[%s353 + $0x50] sm:$0xff]
        %v499 = vld [vmem:[%s353 + $0x58] sm:$0xff]
        %v500 = vld [vmem:[%s353 + $0x60] sm:$0xff]
        %v501 = vld [vmem:[%s353 + $0x68] sm:$0xff]
        %v502 = vld [vmem:[%s353 + $0x70] sm:$0xff]
        %v503 = vld [vmem:[%s353 + $0x78] sm:$0xff]
        %v504 = vld [vmem:[%s363] sm:$0xff]
        %v505 = vld [vmem:[%s363 + $0x8] sm:$0xff]
        %v506 = vld [vmem:[%s363 + $0x10] sm:$0xff]
        %v507 = vld [vmem:[%s363 + $0x18] sm:$0xff]
        %v508 = vld [vmem:[%s363 + $0x20] sm:$0xff]
        %v509 = vld [vmem:[%s363 + $0x28] sm:$0xff]
        %v510 = vld [vmem:[%s363 + $0x30] sm:$0xff]
        %v511 = vld [vmem:[%s363 + $0x38] sm:$0xff]
        %v512 = vld [vmem:[%s363 + $0x40] sm:$0xff]
        %v513 = vld [vmem:[%s363 + $0x48] sm:$0xff]
        %v514 = vld [vmem:[%s363 + $0x50] sm:$0xff]
        %v515 = vld [vmem:[%s363 + $0x58] sm:$0xff]
        %v516 = vld [vmem:[%s363 + $0x60] sm:$0xff]
        %v517 = vld [vmem:[%s363 + $0x68] sm:$0xff]
        %v518 = vld [vmem:[%s363 + $0x70] sm:$0xff]
        %v519 = vld [vmem:[%s363 + $0x78] sm:$0xff]
        %v520 = vld [vmem:[%s363 + $0x80] sm:$0xff]
        %v521 = vld [vmem:[%s363 + $0x88] sm:$0xff]
        %v522 = vld [vmem:[%s363 + $0x90] sm:$0xff]
        %v523 = vld [vmem:[%s363 + $0x98] sm:$0xff]
        %v524 = vld [vmem:[%s363 + $0xa0] sm:$0xff]
        %v525 = vld [vmem:[%s363 + $0xa8] sm:$0xff]
        %v526 = vld [vmem:[%s363 + $0xb0] sm:$0xff]
        %v527 = vld [vmem:[%s363 + $0xb8] sm:$0xff]
        %v528 = vld [vmem:[%s363 + $0xc0] sm:$0xff]
        %v529 = vld [vmem:[%s363 + $0xc8] sm:$0xff]
        %v530 = vld [vmem:[%s363 + $0xd0] sm:$0xff]
        %v531 = vld [vmem:[%s363 + $0xd8] sm:$0xff]
        %v532 = vld [vmem:[%s363 + $0xe0] sm:$0xff]
        %v533 = vld [vmem:[%s363 + $0xe8] sm:$0xff]
        %v534 = vld [vmem:[%s363 + $0xf0] sm:$0xff]
        %v535 = vld [vmem:[%s363 + $0xf8] sm:$0xff]
        %v536 = vld [vmem:[%s363 + $0x100] sm:$0xff]
        %v537 = vld [vmem:[%s363 + $0x108] sm:$0xff]
        %v538 = vld [vmem:[%s363 + $0x110] sm:$0xff]
        %v539 = vld [vmem:[%s363 + $0x118] sm:$0xff]
        %v540 = vld [vmem:[%s363 + $0x120] sm:$0xff]
        %v541 = vld [vmem:[%s363 + $0x128] sm:$0xff]
        %v542 = vld [vmem:[%s363 + $0x130] sm:$0xff]
        %v543 = vld [vmem:[%s363 + $0x138] sm:$0xff]
        %v544 = vld [vmem:[%s363 + $0x140] sm:$0xff]
        %v545 = vld [vmem:[%s363 + $0x148] sm:$0xff]
        %v546 = vld [vmem:[%s363 + $0x150] sm:$0xff]
        %v547 = vld [vmem:[%s363 + $0x158] sm:$0xff]
        %v548 = vld [vmem:[%s363 + $0x160] sm:$0xff]
        %v549 = vld [vmem:[%s363 + $0x168] sm:$0xff]
        %v550 = vld [vmem:[%s363 + $0x170] sm:$0xff]
        %v551 = vld [vmem:[%s363 + $0x178] sm:$0xff]
        %v552 = vld [vmem:[%s363 + $0x180] sm:$0xff]
        %v553 = vld [vmem:[%s363 + $0x188] sm:$0xff]
        %v554 = vld [vmem:[%s363 + $0x190] sm:$0xff]
        %v555 = vld [vmem:[%s363 + $0x198] sm:$0xff]
        %v556 = vld [vmem:[%s363 + $0x1a0] sm:$0xff]
        %v557 = vld [vmem:[%s363 + $0x1a8] sm:$0xff]
        %v558 = vld [vmem:[%s363 + $0x1b0] sm:$0xff]
        %v559 = vld [vmem:[%s363 + $0x1b8] sm:$0xff]
        %v560 = vld [vmem:[%s363 + $0x1c0] sm:$0xff]
        %v561 = vld [vmem:[%s363 + $0x1c8] sm:$0xff]
        %v562 = vld [vmem:[%s363 + $0x1d0] sm:$0xff]
        %v563 = vld [vmem:[%s363 + $0x1d8] sm:$0xff]
        %v564 = vld [vmem:[%s363 + $0x1e0] sm:$0xff]
        %v565 = vld [vmem:[%s363 + $0x1e8] sm:$0xff]
        %v566 = vld [vmem:[%s363 + $0x1f0] sm:$0xff]
        %v567 = vld [vmem:[%s363 + $0x1f8] sm:$0xff]
        %v568 = vld [vmem:[%s363 + $0x200] sm:$0xff]
        %v569 = vld [vmem:[%s363 + $0x208] sm:$0xff]
        %v570 = vld [vmem:[%s363 + $0x210] sm:$0xff]
        %v571 = vld [vmem:[%s363 + $0x218] sm:$0xff]
        %v572 = vld [vmem:[%s363 + $0x220] sm:$0xff]
        %v573 = vld [vmem:[%s363 + $0x228] sm:$0xff]
        %v574 = vld [vmem:[%s363 + $0x230] sm:$0xff]
        %v575 = vld [vmem:[%s363 + $0x238] sm:$0xff]
        %v576 = vld [vmem:[%s363 + $0x240] sm:$0xff]
        %v577 = vld [vmem:[%s363 + $0x248] sm:$0xff]
        %v578 = vld [vmem:[%s363 + $0x250] sm:$0xff]
        %v579 = vld [vmem:[%s363 + $0x258] sm:$0xff]
        %v580 = vld [vmem:[%s363 + $0x260] sm:$0xff]
        %v581 = vld [vmem:[%s363 + $0x268] sm:$0xff]
        %v582 = vld [vmem:[%s363 + $0x270] sm:$0xff]
        %v583 = vld [vmem:[%s363 + $0x278] sm:$0xff]
        %v584 = vld [vmem:[%s363 + $0x280] sm:$0xff]
        %v585 = vld [vmem:[%s363 + $0x288] sm:$0xff]
        %v586 = vld [vmem:[%s363 + $0x290] sm:$0xff]
        %v587 = vld [vmem:[%s363 + $0x298] sm:$0xff]
        %v588 = vld [vmem:[%s363 + $0x2a0] sm:$0xff]
        %v589 = vld [vmem:[%s363 + $0x2a8] sm:$0xff]
        %v590 = vld [vmem:[%s363 + $0x2b0] sm:$0xff]
        %v591 = vld [vmem:[%s363 + $0x2b8] sm:$0xff]
        %v592 = vld [vmem:[%s363 + $0x2c0] sm:$0xff]
        %v593 = vld [vmem:[%s363 + $0x2c8] sm:$0xff]
        %v594 = vld [vmem:[%s363 + $0x2d0] sm:$0xff]
        %v595 = vld [vmem:[%s363 + $0x2d8] sm:$0xff]
        %v596 = vld [vmem:[%s363 + $0x2e0] sm:$0xff]
        %v597 = vld [vmem:[%s363 + $0x2e8] sm:$0xff]
        %v598 = vld [vmem:[%s363 + $0x2f0] sm:$0xff]
        %v599 = vld [vmem:[%s363 + $0x2f8] sm:$0xff]
        %v600 = vld [vmem:[%s363 + $0x300] sm:$0xff]
        %v601 = vld [vmem:[%s363 + $0x308] sm:$0xff]
        %v602 = vld [vmem:[%s363 + $0x310] sm:$0xff]
        %v603 = vld [vmem:[%s363 + $0x318] sm:$0xff]
        %v604 = vld [vmem:[%s363 + $0x320] sm:$0xff]
        %v605 = vld [vmem:[%s363 + $0x328] sm:$0xff]
        %v606 = vld [vmem:[%s363 + $0x330] sm:$0xff]
        %v607 = vld [vmem:[%s363 + $0x338] sm:$0xff]
        %v608 = vld [vmem:[%s363 + $0x340] sm:$0xff]
        %v609 = vld [vmem:[%s363 + $0x348] sm:$0xff]
        %v610 = vld [vmem:[%s363 + $0x350] sm:$0xff]
        %v611 = vld [vmem:[%s363 + $0x358] sm:$0xff]
        %v612 = vld [vmem:[%s363 + $0x360] sm:$0xff]
        %v613 = vld [vmem:[%s363 + $0x368] sm:$0xff]
        %v614 = vld [vmem:[%s363 + $0x370] sm:$0xff]
        %v615 = vld [vmem:[%s363 + $0x378] sm:$0xff]
        %v616 = vld [vmem:[%s363 + $0x380] sm:$0xff]
        %v617 = vld [vmem:[%s363 + $0x388] sm:$0xff]
        %v618 = vld [vmem:[%s363 + $0x390] sm:$0xff]
        %v619 = vld [vmem:[%s363 + $0x398] sm:$0xff]
        %v620 = vld [vmem:[%s363 + $0x3a0] sm:$0xff]
        %v621 = vld [vmem:[%s363 + $0x3a8] sm:$0xff]
        %v622 = vld [vmem:[%s363 + $0x3b0] sm:$0xff]
        %v623 = vld [vmem:[%s363 + $0x3b8] sm:$0xff]
        %v624 = vld [vmem:[%s363 + $0x3c0] sm:$0xff]
        %v625 = vld [vmem:[%s363 + $0x3c8] sm:$0xff]
        %v626 = vld [vmem:[%s363 + $0x3d0] sm:$0xff]
        %v627 = vld [vmem:[%s363 + $0x3d8] sm:$0xff]
        %v628 = vld [vmem:[%s363 + $0x3e0] sm:$0xff]
        %v629 = vld [vmem:[%s363 + $0x3e8] sm:$0xff]
        %v630 = vld [vmem:[%s363 + $0x3f0] sm:$0xff]
        %v631 = vld [vmem:[%s363 + $0x3f8] sm:$0xff]
        %v632 = vld [vmem:[%s363 + $0x400] sm:$0xff]
        %v633 = vld [vmem:[%s363 + $0x408] sm:$0xff]
        %v634 = vld [vmem:[%s363 + $0x410] sm:$0xff]
        %v635 = vld [vmem:[%s363 + $0x418] sm:$0xff]
        %v636 = vld [vmem:[%s363 + $0x420] sm:$0xff]
        %v637 = vld [vmem:[%s363 + $0x428] sm:$0xff]
        %v638 = vld [vmem:[%s363 + $0x430] sm:$0xff]
        %v639 = vld [vmem:[%s363 + $0x438] sm:$0xff]
        %v640 = vld [vmem:[%s363 + $0x440] sm:$0xff]
        %v641 = vld [vmem:[%s363 + $0x448] sm:$0xff]
        %v642 = vld [vmem:[%s363 + $0x450] sm:$0xff]
        %v643 = vld [vmem:[%s363 + $0x458] sm:$0xff]
        %v644 = vld [vmem:[%s363 + $0x460] sm:$0xff]
        %v645 = vld [vmem:[%s363 + $0x468] sm:$0xff]
        %v646 = vld [vmem:[%s363 + $0x470] sm:$0xff]
        %v647 = vld [vmem:[%s363 + $0x478] sm:$0xff]
        %v648 = vld [vmem:[%s363 + $0x480] sm:$0xff]
        %v649 = vld [vmem:[%s363 + $0x488] sm:$0xff]
        %v650 = vld [vmem:[%s363 + $0x490] sm:$0xff]
        %v651 = vld [vmem:[%s363 + $0x498] sm:$0xff]
        %v652 = vld [vmem:[%s363 + $0x4a0] sm:$0xff]
        %v653 = vld [vmem:[%s363 + $0x4a8] sm:$0xff]
        %v654 = vld [vmem:[%s363 + $0x4b0] sm:$0xff]
        %v655 = vld [vmem:[%s363 + $0x4b8] sm:$0xff]
        %v656 = vld [vmem:[%s363 + $0x4c0] sm:$0xff]
        %v657 = vld [vmem:[%s363 + $0x4c8] sm:$0xff]
        %v658 = vld [vmem:[%s363 + $0x4d0] sm:$0xff]
        %v659 = vld [vmem:[%s363 + $0x4d8] sm:$0xff]
        %v660 = vld [vmem:[%s363 + $0x4e0] sm:$0xff]
        %v661 = vld [vmem:[%s363 + $0x4e8] sm:$0xff]
        %v662 = vld [vmem:[%s363 + $0x4f0] sm:$0xff]
        %v663 = vld [vmem:[%s363 + $0x4f8] sm:$0xff]
        %v664 = vld [vmem:[%s363 + $0x500] sm:$0xff]
        %v665 = vld [vmem:[%s363 + $0x508] sm:$0xff]
        %v666 = vld [vmem:[%s363 + $0x510] sm:$0xff]
        %v667 = vld [vmem:[%s363 + $0x518] sm:$0xff]
        %v668 = vld [vmem:[%s363 + $0x520] sm:$0xff]
        %v669 = vld [vmem:[%s363 + $0x528] sm:$0xff]
        %v670 = vld [vmem:[%s363 + $0x530] sm:$0xff]
        %v671 = vld [vmem:[%s363 + $0x538] sm:$0xff]
        %v672 = vld [vmem:[%s363 + $0x540] sm:$0xff]
        %v673 = vld [vmem:[%s363 + $0x548] sm:$0xff]
        %v674 = vld [vmem:[%s363 + $0x550] sm:$0xff]
        %v675 = vld [vmem:[%s363 + $0x558] sm:$0xff]
        %v676 = vld [vmem:[%s363 + $0x560] sm:$0xff]
        %v677 = vld [vmem:[%s363 + $0x568] sm:$0xff]
        %v678 = vld [vmem:[%s363 + $0x570] sm:$0xff]
        %v679 = vld [vmem:[%s363 + $0x578] sm:$0xff]
        %v680 = vld [vmem:[%s363 + $0x580] sm:$0xff]
        %v681 = vld [vmem:[%s363 + $0x588] sm:$0xff]
        %v682 = vld [vmem:[%s363 + $0x590] sm:$0xff]
        %v683 = vld [vmem:[%s363 + $0x598] sm:$0xff]
        %v684 = vld [vmem:[%s363 + $0x5a0] sm:$0xff]
        %v685 = vld [vmem:[%s363 + $0x5a8] sm:$0xff]
        %v686 = vld [vmem:[%s363 + $0x5b0] sm:$0xff]
        %v687 = vld [vmem:[%s363 + $0x5b8] sm:$0xff]
        %v688 = vld [vmem:[%s363 + $0x5c0] sm:$0xff]
        %v689 = vld [vmem:[%s363 + $0x5c8] sm:$0xff]
        %v690 = vld [vmem:[%s363 + $0x5d0] sm:$0xff]
        %v691 = vld [vmem:[%s363 + $0x5d8] sm:$0xff]
        %v692 = vld [vmem:[%s363 + $0x5e0] sm:$0xff]
        %v693 = vld [vmem:[%s363 + $0x5e8] sm:$0xff]
        %v694 = vld [vmem:[%s363 + $0x5f0] sm:$0xff]
        %v695 = vld [vmem:[%s363 + $0x5f8] sm:$0xff]
        %v696 = vld [vmem:[%s363 + $0x600] sm:$0xff]
        %v697 = vld [vmem:[%s363 + $0x608] sm:$0xff]
        %v698 = vld [vmem:[%s363 + $0x610] sm:$0xff]
        %v699 = vld [vmem:[%s363 + $0x618] sm:$0xff]
        %v700 = vld [vmem:[%s363 + $0x620] sm:$0xff]
        %v701 = vld [vmem:[%s363 + $0x628] sm:$0xff]
        %v702 = vld [vmem:[%s363 + $0x630] sm:$0xff]
        %v703 = vld [vmem:[%s363 + $0x638] sm:$0xff]
        %v704 = vld [vmem:[%s363 + $0x640] sm:$0xff]
        %v705 = vld [vmem:[%s363 + $0x648] sm:$0xff]
        %v706 = vld [vmem:[%s363 + $0x650] sm:$0xff]
        %v707 = vld [vmem:[%s363 + $0x658] sm:$0xff]
        %v708 = vld [vmem:[%s363 + $0x660] sm:$0xff]
        %v709 = vld [vmem:[%s363 + $0x668] sm:$0xff]
        %v710 = vld [vmem:[%s363 + $0x670] sm:$0xff]
        %v711 = vld [vmem:[%s363 + $0x678] sm:$0xff]
        %v712 = vld [vmem:[%s363 + $0x680] sm:$0xff]
        %v713 = vld [vmem:[%s363 + $0x688] sm:$0xff]
        %v714 = vld [vmem:[%s363 + $0x690] sm:$0xff]
        %v715 = vld [vmem:[%s363 + $0x698] sm:$0xff]
        %v716 = vld [vmem:[%s363 + $0x6a0] sm:$0xff]
        %v717 = vld [vmem:[%s363 + $0x6a8] sm:$0xff]
        %v718 = vld [vmem:[%s363 + $0x6b0] sm:$0xff]
        %v719 = vld [vmem:[%s363 + $0x6b8] sm:$0xff]
        %v720 = vld [vmem:[%s363 + $0x6c0] sm:$0xff]
        %v721 = vld [vmem:[%s363 + $0x6c8] sm:$0xff]
        %v722 = vld [vmem:[%s363 + $0x6d0] sm:$0xff]
        %v723 = vld [vmem:[%s363 + $0x6d8] sm:$0xff]
        %v724 = vld [vmem:[%s363 + $0x6e0] sm:$0xff]
        %v725 = vld [vmem:[%s363 + $0x6e8] sm:$0xff]
        %v726 = vld [vmem:[%s363 + $0x6f0] sm:$0xff]
        %v727 = vld [vmem:[%s363 + $0x6f8] sm:$0xff]
        %v728 = vld [vmem:[%s363 + $0x700] sm:$0xff]
        %v729 = vld [vmem:[%s363 + $0x708] sm:$0xff]
        %v730 = vld [vmem:[%s363 + $0x710] sm:$0xff]
        %v731 = vld [vmem:[%s363 + $0x718] sm:$0xff]
        %v732 = vld [vmem:[%s363 + $0x720] sm:$0xff]
        %v733 = vld [vmem:[%s363 + $0x728] sm:$0xff]
        %v734 = vld [vmem:[%s363 + $0x730] sm:$0xff]
        %v735 = vld [vmem:[%s363 + $0x738] sm:$0xff]
        %v736 = vld [vmem:[%s363 + $0x740] sm:$0xff]
        %v737 = vld [vmem:[%s363 + $0x748] sm:$0xff]
        %v738 = vld [vmem:[%s363 + $0x750] sm:$0xff]
        %v739 = vld [vmem:[%s363 + $0x758] sm:$0xff]
        %v740 = vld [vmem:[%s363 + $0x760] sm:$0xff]
        %v741 = vld [vmem:[%s363 + $0x768] sm:$0xff]
        %v742 = vld [vmem:[%s363 + $0x770] sm:$0xff]
        %v743 = vld [vmem:[%s363 + $0x778] sm:$0xff]
        %v744 = vld [vmem:[%s363 + $0x780] sm:$0xff]
        %v745 = vld [vmem:[%s363 + $0x788] sm:$0xff]
        %v746 = vld [vmem:[%s363 + $0x790] sm:$0xff]
        %v747 = vld [vmem:[%s363 + $0x798] sm:$0xff]
        %v748 = vld [vmem:[%s363 + $0x7a0] sm:$0xff]
        %v749 = vld [vmem:[%s363 + $0x7a8] sm:$0xff]
        %v750 = vld [vmem:[%s363 + $0x7b0] sm:$0xff]
        %v751 = vld [vmem:[%s363 + $0x7b8] sm:$0xff]
        %v752 = vld [vmem:[%s363 + $0x7c0] sm:$0xff]
        %v753 = vld [vmem:[%s363 + $0x7c8] sm:$0xff]
        %v754 = vld [vmem:[%s363 + $0x7d0] sm:$0xff]
        %v755 = vld [vmem:[%s363 + $0x7d8] sm:$0xff]
        %v756 = vld [vmem:[%s363 + $0x7e0] sm:$0xff]
        %v757 = vld [vmem:[%s363 + $0x7e8] sm:$0xff]
        %v758 = vld [vmem:[%s363 + $0x7f0] sm:$0xff]
        %v759 = vld [vmem:[%s363 + $0x7f8] sm:$0xff]
        %v760 = vld [vmem:[%s363 + $0x800] sm:$0xff]
        %v761 = vld [vmem:[%s363 + $0x808] sm:$0xff]
        %v762 = vld [vmem:[%s363 + $0x810] sm:$0xff]
        %v763 = vld [vmem:[%s363 + $0x818] sm:$0xff]
        %v764 = vld [vmem:[%s363 + $0x820] sm:$0xff]
        %v765 = vld [vmem:[%s363 + $0x828] sm:$0xff]
        %v766 = vld [vmem:[%s363 + $0x830] sm:$0xff]
        %v767 = vld [vmem:[%s363 + $0x838] sm:$0xff]
        %v768 = vld [vmem:[%s363 + $0x840] sm:$0xff]
        %v769 = vld [vmem:[%s363 + $0x848] sm:$0xff]
        %v770 = vld [vmem:[%s363 + $0x850] sm:$0xff]
        %v771 = vld [vmem:[%s363 + $0x858] sm:$0xff]
        %v772 = vld [vmem:[%s363 + $0x860] sm:$0xff]
        %v773 = vld [vmem:[%s363 + $0x868] sm:$0xff]
        %v774 = vld [vmem:[%s363 + $0x870] sm:$0xff]
        %v775 = vld [vmem:[%s363 + $0x878] sm:$0xff]
        %v776 = vld [vmem:[%s363 + $0x880] sm:$0xff]
        %v777 = vld [vmem:[%s363 + $0x888] sm:$0xff]
        %v778 = vld [vmem:[%s363 + $0x890] sm:$0xff]
        %v779 = vld [vmem:[%s363 + $0x898] sm:$0xff]
        %v780 = vld [vmem:[%s363 + $0x8a0] sm:$0xff]
        %v781 = vld [vmem:[%s363 + $0x8a8] sm:$0xff]
        %v782 = vld [vmem:[%s363 + $0x8b0] sm:$0xff]
        %v783 = vld [vmem:[%s363 + $0x8b8] sm:$0xff]
        %v784 = vld [vmem:[%s363 + $0x8c0] sm:$0xff]
        %v785 = vld [vmem:[%s363 + $0x8c8] sm:$0xff]
        %v786 = vld [vmem:[%s363 + $0x8d0] sm:$0xff]
        %v787 = vld [vmem:[%s363 + $0x8d8] sm:$0xff]
        %v788 = vld [vmem:[%s363 + $0x8e0] sm:$0xff]
        %v789 = vld [vmem:[%s363 + $0x8e8] sm:$0xff]
        %v790 = vld [vmem:[%s363 + $0x8f0] sm:$0xff]
        %v791 = vld [vmem:[%s363 + $0x8f8] sm:$0xff]
        %v792 = vld [vmem:[%s363 + $0x900] sm:$0xff]
        %v793 = vld [vmem:[%s363 + $0x908] sm:$0xff]
        %v794 = vld [vmem:[%s363 + $0x910] sm:$0xff]
        %v795 = vld [vmem:[%s363 + $0x918] sm:$0xff]
        %v796 = vld [vmem:[%s363 + $0x920] sm:$0xff]
        %v797 = vld [vmem:[%s363 + $0x928] sm:$0xff]
        %v798 = vld [vmem:[%s363 + $0x930] sm:$0xff]
        %v799 = vld [vmem:[%s363 + $0x938] sm:$0xff]
        %v800 = vld [vmem:[%s363 + $0x940] sm:$0xff]
        %v801 = vld [vmem:[%s363 + $0x948] sm:$0xff]
        %v802 = vld [vmem:[%s363 + $0x950] sm:$0xff]
        %v803 = vld [vmem:[%s363 + $0x958] sm:$0xff]
        %v804 = vld [vmem:[%s363 + $0x960] sm:$0xff]
        %v805 = vld [vmem:[%s363 + $0x968] sm:$0xff]
        %v806 = vld [vmem:[%s363 + $0x970] sm:$0xff]
        %v807 = vld [vmem:[%s363 + $0x978] sm:$0xff]
        %v808 = vld [vmem:[%s363 + $0x980] sm:$0xff]
        %v809 = vld [vmem:[%s363 + $0x988] sm:$0xff]
        %v810 = vld [vmem:[%s363 + $0x990] sm:$0xff]
        %v811 = vld [vmem:[%s363 + $0x998] sm:$0xff]
        %v812 = vld [vmem:[%s363 + $0x9a0] sm:$0xff]
        %v813 = vld [vmem:[%s363 + $0x9a8] sm:$0xff]
        %v814 = vld [vmem:[%s363 + $0x9b0] sm:$0xff]
        %v815 = vld [vmem:[%s363 + $0x9b8] sm:$0xff]
        %v816 = vld [vmem:[%s363 + $0x9c0] sm:$0xff]
        %v817 = vld [vmem:[%s363 + $0x9c8] sm:$0xff]
        %v818 = vld [vmem:[%s363 + $0x9d0] sm:$0xff]
        %v819 = vld [vmem:[%s363 + $0x9d8] sm:$0xff]
        %v820 = vld [vmem:[%s363 + $0x9e0] sm:$0xff]
        %v821 = vld [vmem:[%s363 + $0x9e8] sm:$0xff]
        %v822 = vld [vmem:[%s363 + $0x9f0] sm:$0xff]
        %v823 = vld [vmem:[%s363 + $0x9f8] sm:$0xff]
        %v824 = vld [vmem:[%s363 + $0xa00] sm:$0xff]
        %v825 = vld [vmem:[%s363 + $0xa08] sm:$0xff]
        %v826 = vld [vmem:[%s363 + $0xa10] sm:$0xff]
        %v827 = vld [vmem:[%s363 + $0xa18] sm:$0xff]
        %v828 = vld [vmem:[%s363 + $0xa20] sm:$0xff]
        %v829 = vld [vmem:[%s363 + $0xa28] sm:$0xff]
        %v830 = vld [vmem:[%s363 + $0xa30] sm:$0xff]
        %v831 = vld [vmem:[%s363 + $0xa38] sm:$0xff]
        %v832 = vld [vmem:[%s363 + $0xa40] sm:$0xff]
        %v833 = vld [vmem:[%s363 + $0xa48] sm:$0xff]
        %v834 = vld [vmem:[%s363 + $0xa50] sm:$0xff]
        %v835 = vld [vmem:[%s363 + $0xa58] sm:$0xff]
        %v836 = vld [vmem:[%s363 + $0xa60] sm:$0xff]
        %v837 = vld [vmem:[%s363 + $0xa68] sm:$0xff]
        %v838 = vld [vmem:[%s363 + $0xa70] sm:$0xff]
        %v839 = vld [vmem:[%s363 + $0xa78] sm:$0xff]
        %v840 = vld [vmem:[%s363 + $0xa80] sm:$0xff]
        %v841 = vld [vmem:[%s363 + $0xa88] sm:$0xff]
        %v842 = vld [vmem:[%s363 + $0xa90] sm:$0xff]
        %v843 = vld [vmem:[%s363 + $0xa98] sm:$0xff]
        %v844 = vld [vmem:[%s363 + $0xaa0] sm:$0xff]
        %v845 = vld [vmem:[%s363 + $0xaa8] sm:$0xff]
        %v846 = vld [vmem:[%s363 + $0xab0] sm:$0xff]
        %v847 = vld [vmem:[%s363 + $0xab8] sm:$0xff]
        %v848 = vld [vmem:[%s363 + $0xac0] sm:$0xff]
        %v849 = vld [vmem:[%s363 + $0xac8] sm:$0xff]
        %v850 = vld [vmem:[%s363 + $0xad0] sm:$0xff]
        %v851 = vld [vmem:[%s363 + $0xad8] sm:$0xff]
        %v852 = vld [vmem:[%s363 + $0xae0] sm:$0xff]
        %v853 = vld [vmem:[%s363 + $0xae8] sm:$0xff]
        %v854 = vld [vmem:[%s363 + $0xaf0] sm:$0xff]
        %v855 = vld [vmem:[%s363 + $0xaf8] sm:$0xff]
        %v856 = vld [vmem:[%s363 + $0xb00] sm:$0xff]
        %v857 = vld [vmem:[%s363 + $0xb08] sm:$0xff]
        %v858 = vld [vmem:[%s363 + $0xb10] sm:$0xff]
        %v859 = vld [vmem:[%s363 + $0xb18] sm:$0xff]
        %v860 = vld [vmem:[%s363 + $0xb20] sm:$0xff]
        %v861 = vld [vmem:[%s363 + $0xb28] sm:$0xff]
        %v862 = vld [vmem:[%s363 + $0xb30] sm:$0xff]
        %v863 = vld [vmem:[%s363 + $0xb38] sm:$0xff]
        %v864 = vld [vmem:[%s363 + $0xb40] sm:$0xff]
        %v865 = vld [vmem:[%s363 + $0xb48] sm:$0xff]
        %v866 = vld [vmem:[%s363 + $0xb50] sm:$0xff]
        %v867 = vld [vmem:[%s363 + $0xb58] sm:$0xff]
        %v868 = vld [vmem:[%s363 + $0xb60] sm:$0xff]
        %v869 = vld [vmem:[%s363 + $0xb68] sm:$0xff]
        %v870 = vld [vmem:[%s363 + $0xb70] sm:$0xff]
        %v871 = vld [vmem:[%s363 + $0xb78] sm:$0xff]
        %v872 = vld [vmem:[%s363 + $0xb80] sm:$0xff]
        %v873 = vld [vmem:[%s363 + $0xb88] sm:$0xff]
        %v874 = vld [vmem:[%s363 + $0xb90] sm:$0xff]
        %v875 = vld [vmem:[%s363 + $0xb98] sm:$0xff]
        %v876 = vld [vmem:[%s363 + $0xba0] sm:$0xff]
        %v877 = vld [vmem:[%s363 + $0xba8] sm:$0xff]
        %v878 = vld [vmem:[%s363 + $0xbb0] sm:$0xff]
        %v879 = vld [vmem:[%s363 + $0xbb8] sm:$0xff]
        %v880 = vld [vmem:[%s363 + $0xbc0] sm:$0xff]
        %v881 = vld [vmem:[%s363 + $0xbc8] sm:$0xff]
        %v882 = vld [vmem:[%s363 + $0xbd0] sm:$0xff]
        %v883 = vld [vmem:[%s363 + $0xbd8] sm:$0xff]
        %v884 = vld [vmem:[%s363 + $0xbe0] sm:$0xff]
        %v885 = vld [vmem:[%s363 + $0xbe8] sm:$0xff]
        %v886 = vld [vmem:[%s363 + $0xbf0] sm:$0xff]
        %v887 = vld [vmem:[%s363 + $0xbf8] sm:$0xff]
        %v888 = vld [vmem:[%s363 + $0xc00] sm:$0xff]
        %v889 = vld [vmem:[%s363 + $0xc08] sm:$0xff]
        %v890 = vld [vmem:[%s363 + $0xc10] sm:$0xff]
        %v891 = vld [vmem:[%s363 + $0xc18] sm:$0xff]
        %v892 = vld [vmem:[%s363 + $0xc20] sm:$0xff]
        %v893 = vld [vmem:[%s363 + $0xc28] sm:$0xff]
        %v894 = vld [vmem:[%s363 + $0xc30] sm:$0xff]
        %v895 = vld [vmem:[%s363 + $0xc38] sm:$0xff]
        %v896 = vld [vmem:[%s363 + $0xc40] sm:$0xff]
        %v897 = vld [vmem:[%s363 + $0xc48] sm:$0xff]
        %v898 = vld [vmem:[%s363 + $0xc50] sm:$0xff]
        %v899 = vld [vmem:[%s363 + $0xc58] sm:$0xff]
        %v900 = vld [vmem:[%s363 + $0xc60] sm:$0xff]
        %v901 = vld [vmem:[%s363 + $0xc68] sm:$0xff]
        %v902 = vld [vmem:[%s363 + $0xc70] sm:$0xff]
        %v903 = vld [vmem:[%s363 + $0xc78] sm:$0xff]
        %v904 = vld [vmem:[%s363 + $0xc80] sm:$0xff]
        %v905 = vld [vmem:[%s363 + $0xc88] sm:$0xff]
        %v906 = vld [vmem:[%s363 + $0xc90] sm:$0xff]
        %v907 = vld [vmem:[%s363 + $0xc98] sm:$0xff]
        %v908 = vld [vmem:[%s363 + $0xca0] sm:$0xff]
        %v909 = vld [vmem:[%s363 + $0xca8] sm:$0xff]
        %v910 = vld [vmem:[%s363 + $0xcb0] sm:$0xff]
        %v911 = vld [vmem:[%s363 + $0xcb8] sm:$0xff]
        %v912 = vld [vmem:[%s363 + $0xcc0] sm:$0xff]
        %v913 = vld [vmem:[%s363 + $0xcc8] sm:$0xff]
        %v914 = vld [vmem:[%s363 + $0xcd0] sm:$0xff]
        %v915 = vld [vmem:[%s363 + $0xcd8] sm:$0xff]
        %v916 = vld [vmem:[%s363 + $0xce0] sm:$0xff]
        %v917 = vld [vmem:[%s363 + $0xce8] sm:$0xff]
        %v918 = vld [vmem:[%s363 + $0xcf0] sm:$0xff]
        %v919 = vld [vmem:[%s363 + $0xcf8] sm:$0xff]
        %v920 = vld [vmem:[%s363 + $0xd00] sm:$0xff]
        %v921 = vld [vmem:[%s363 + $0xd08] sm:$0xff]
        %v922 = vld [vmem:[%s363 + $0xd10] sm:$0xff]
        %v923 = vld [vmem:[%s363 + $0xd18] sm:$0xff]
        %v924 = vld [vmem:[%s363 + $0xd20] sm:$0xff]
        %v925 = vld [vmem:[%s363 + $0xd28] sm:$0xff]
        %v926 = vld [vmem:[%s363 + $0xd30] sm:$0xff]
        %v927 = vld [vmem:[%s363 + $0xd38] sm:$0xff]
        %v928 = vld [vmem:[%s363 + $0xd40] sm:$0xff]
        %v929 = vld [vmem:[%s363 + $0xd48] sm:$0xff]
        %v930 = vld [vmem:[%s363 + $0xd50] sm:$0xff]
        %v931 = vld [vmem:[%s363 + $0xd58] sm:$0xff]
        %v932 = vld [vmem:[%s363 + $0xd60] sm:$0xff]
        %v933 = vld [vmem:[%s363 + $0xd68] sm:$0xff]
        %v934 = vld [vmem:[%s363 + $0xd70] sm:$0xff]
        %v935 = vld [vmem:[%s363 + $0xd78] sm:$0xff]
        %v936 = vld [vmem:[%s363 + $0xd80] sm:$0xff]
        %v937 = vld [vmem:[%s363 + $0xd88] sm:$0xff]
        %v938 = vld [vmem:[%s363 + $0xd90] sm:$0xff]
        %v939 = vld [vmem:[%s363 + $0xd98] sm:$0xff]
        %v940 = vld [vmem:[%s363 + $0xda0] sm:$0xff]
        %v941 = vld [vmem:[%s363 + $0xda8] sm:$0xff]
        %v942 = vld [vmem:[%s363 + $0xdb0] sm:$0xff]
        %v943 = vld [vmem:[%s363 + $0xdb8] sm:$0xff]
        %v944 = vld [vmem:[%s363 + $0xdc0] sm:$0xff]
        %v945 = vld [vmem:[%s363 + $0xdc8] sm:$0xff]
        %v946 = vld [vmem:[%s363 + $0xdd0] sm:$0xff]
        %v947 = vld [vmem:[%s363 + $0xdd8] sm:$0xff]
        %v948 = vld [vmem:[%s363 + $0xde0] sm:$0xff]
        %v949 = vld [vmem:[%s363 + $0xde8] sm:$0xff]
        %v950 = vld [vmem:[%s363 + $0xdf0] sm:$0xff]
        %v951 = vld [vmem:[%s363 + $0xdf8] sm:$0xff]
        %v952 = vld [vmem:[%s363 + $0xe00] sm:$0xff]
        %v953 = vld [vmem:[%s363 + $0xe08] sm:$0xff]
        %v954 = vld [vmem:[%s363 + $0xe10] sm:$0xff]
        %v955 = vld [vmem:[%s363 + $0xe18] sm:$0xff]
        %v956 = vld [vmem:[%s363 + $0xe20] sm:$0xff]
        %v957 = vld [vmem:[%s363 + $0xe28] sm:$0xff]
        %v958 = vld [vmem:[%s363 + $0xe30] sm:$0xff]
        %v959 = vld [vmem:[%s363 + $0xe38] sm:$0xff]
        %v960 = vld [vmem:[%s363 + $0xe40] sm:$0xff]
        %v961 = vld [vmem:[%s363 + $0xe48] sm:$0xff]
        %v962 = vld [vmem:[%s363 + $0xe50] sm:$0xff]
        %v963 = vld [vmem:[%s363 + $0xe58] sm:$0xff]
        %v964 = vld [vmem:[%s363 + $0xe60] sm:$0xff]
        %v965 = vld [vmem:[%s363 + $0xe68] sm:$0xff]
        %v966 = vld [vmem:[%s363 + $0xe70] sm:$0xff]
        %v967 = vld [vmem:[%s363 + $0xe78] sm:$0xff]
        %v968 = vld [vmem:[%s363 + $0xe80] sm:$0xff]
        %v969 = vld [vmem:[%s363 + $0xe88] sm:$0xff]
        %v970 = vld [vmem:[%s363 + $0xe90] sm:$0xff]
        %v971 = vld [vmem:[%s363 + $0xe98] sm:$0xff]
        %v972 = vld [vmem:[%s363 + $0xea0] sm:$0xff]
        %v973 = vld [vmem:[%s363 + $0xea8] sm:$0xff]
        %v974 = vld [vmem:[%s363 + $0xeb0] sm:$0xff]
        %v975 = vld [vmem:[%s363 + $0xeb8] sm:$0xff]
        %v976 = vld [vmem:[%s363 + $0xec0] sm:$0xff]
        %v977 = vld [vmem:[%s363 + $0xec8] sm:$0xff]
        %v978 = vld [vmem:[%s363 + $0xed0] sm:$0xff]
        %v979 = vld [vmem:[%s363 + $0xed8] sm:$0xff]
        %v980 = vld [vmem:[%s363 + $0xee0] sm:$0xff]
        %v981 = vld [vmem:[%s363 + $0xee8] sm:$0xff]
        %v982 = vld [vmem:[%s363 + $0xef0] sm:$0xff]
        %v983 = vld [vmem:[%s363 + $0xef8] sm:$0xff]
        %v984 = vld [vmem:[%s363 + $0xf00] sm:$0xff]
        %v985 = vld [vmem:[%s363 + $0xf08] sm:$0xff]
        %v986 = vld [vmem:[%s363 + $0xf10] sm:$0xff]
        %v987 = vld [vmem:[%s363 + $0xf18] sm:$0xff]
        %v988 = vld [vmem:[%s363 + $0xf20] sm:$0xff]
        %v989 = vld [vmem:[%s363 + $0xf28] sm:$0xff]
        %v990 = vld [vmem:[%s363 + $0xf30] sm:$0xff]
        %v991 = vld [vmem:[%s363 + $0xf38] sm:$0xff]
        %v992 = vld [vmem:[%s363 + $0xf40] sm:$0xff]
        %v993 = vld [vmem:[%s363 + $0xf48] sm:$0xff]
        %v994 = vld [vmem:[%s363 + $0xf50] sm:$0xff]
        %v995 = vld [vmem:[%s363 + $0xf58] sm:$0xff]
        %v996 = vld [vmem:[%s363 + $0xf60] sm:$0xff]
        %v997 = vld [vmem:[%s363 + $0xf68] sm:$0xff]
        %v998 = vld [vmem:[%s363 + $0xf70] sm:$0xff]
        %v999 = vld [vmem:[%s363 + $0xf78] sm:$0xff]
        %v1000 = vld [vmem:[%s363 + $0xf80] sm:$0xff]
        %v1001 = vld [vmem:[%s363 + $0xf88] sm:$0xff]
        %v1002 = vld [vmem:[%s363 + $0xf90] sm:$0xff]
        %v1003 = vld [vmem:[%s363 + $0xf98] sm:$0xff]
        %v1004 = vld [vmem:[%s363 + $0xfa0] sm:$0xff]
        %v1005 = vld [vmem:[%s363 + $0xfa8] sm:$0xff]
        %v1006 = vld [vmem:[%s363 + $0xfb0] sm:$0xff]
        %v1007 = vld [vmem:[%s363 + $0xfb8] sm:$0xff]
        %v1008 = vld [vmem:[%s363 + $0xfc0] sm:$0xff]
        %v1009 = vld [vmem:[%s363 + $0xfc8] sm:$0xff]
        %v1010 = vld [vmem:[%s363 + $0xfd0] sm:$0xff]
        %v1011 = vld [vmem:[%s363 + $0xfd8] sm:$0xff]
        %v1012 = vld [vmem:[%s363 + $0xfe0] sm:$0xff]
        %v1013 = vld [vmem:[%s363 + $0xfe8] sm:$0xff]
        %v1014 = vld [vmem:[%s363 + $0xff0] sm:$0xff]
        %v1015 = vld [vmem:[%s363 + $0xff8] sm:$0xff]
        %v1016 = vld [vmem:[%s363 + $0x1000] sm:$0xff]
        %v1017 = vld [vmem:[%s363 + $0x1008] sm:$0xff]
        %v1018 = vld [vmem:[%s363 + $0x1010] sm:$0xff]
        %v1019 = vld [vmem:[%s363 + $0x1018] sm:$0xff]
        %v1020 = vld [vmem:[%s363 + $0x1020] sm:$0xff]
        %v1021 = vld [vmem:[%s363 + $0x1028] sm:$0xff]
        %v1022 = vld [vmem:[%s363 + $0x1030] sm:$0xff]
        %v1023 = vld [vmem:[%s363 + $0x1038] sm:$0xff]
        %v1024 = vld [vmem:[%s363 + $0x1040] sm:$0xff]
        %v1025 = vld [vmem:[%s363 + $0x1048] sm:$0xff]
        %v1026 = vld [vmem:[%s363 + $0x1050] sm:$0xff]
        %v1027 = vld [vmem:[%s363 + $0x1058] sm:$0xff]
        %v1028 = vld [vmem:[%s363 + $0x1060] sm:$0xff]
        %v1029 = vld [vmem:[%s363 + $0x1068] sm:$0xff]
        %v1030 = vld [vmem:[%s363 + $0x1070] sm:$0xff]
        %v1031 = vld [vmem:[%s363 + $0x1078] sm:$0xff]
        %v1032 = vld [vmem:[%s363 + $0x1080] sm:$0xff]
        %v1033 = vld [vmem:[%s363 + $0x1088] sm:$0xff]
        %v1034 = vld [vmem:[%s363 + $0x1090] sm:$0xff]
        %v1035 = vld [vmem:[%s363 + $0x1098] sm:$0xff]
        %v1036 = vld [vmem:[%s363 + $0x10a0] sm:$0xff]
        %v1037 = vld [vmem:[%s363 + $0x10a8] sm:$0xff]
        %v1038 = vld [vmem:[%s363 + $0x10b0] sm:$0xff]
        %v1039 = vld [vmem:[%s363 + $0x10b8] sm:$0xff]
        %v1040 = vld [vmem:[%s363 + $0x10c0] sm:$0xff]
        %v1041 = vld [vmem:[%s363 + $0x10c8] sm:$0xff]
        %v1042 = vld [vmem:[%s363 + $0x10d0] sm:$0xff]
        %v1043 = vld [vmem:[%s363 + $0x10d8] sm:$0xff]
        %v1044 = vld [vmem:[%s363 + $0x10e0] sm:$0xff]
        %v1045 = vld [vmem:[%s363 + $0x10e8] sm:$0xff]
        %v1046 = vld [vmem:[%s363 + $0x10f0] sm:$0xff]
        %v1047 = vld [vmem:[%s363 + $0x10f8] sm:$0xff]
        %v1048 = vld [vmem:[%s363 + $0x1100] sm:$0xff]
        %v1049 = vld [vmem:[%s363 + $0x1108] sm:$0xff]
        %v1050 = vld [vmem:[%s363 + $0x1110] sm:$0xff]
        %v1051 = vld [vmem:[%s363 + $0x1118] sm:$0xff]
        %v1052 = vld [vmem:[%s363 + $0x1120] sm:$0xff]
        %v1053 = vld [vmem:[%s363 + $0x1128] sm:$0xff]
        %v1054 = vld [vmem:[%s363 + $0x1130] sm:$0xff]
        %v1055 = vld [vmem:[%s363 + $0x1138] sm:$0xff]
        %v1056 = vld [vmem:[%s363 + $0x1140] sm:$0xff]
        %v1057 = vld [vmem:[%s363 + $0x1148] sm:$0xff]
        %v1058 = vld [vmem:[%s363 + $0x1150] sm:$0xff]
        %v1059 = vld [vmem:[%s363 + $0x1158] sm:$0xff]
        %v1060 = vld [vmem:[%s363 + $0x1160] sm:$0xff]
        %v1061 = vld [vmem:[%s363 + $0x1168] sm:$0xff]
        %v1062 = vld [vmem:[%s363 + $0x1170] sm:$0xff]
        %v1063 = vld [vmem:[%s363 + $0x1178] sm:$0xff]
        %v1064 = vld [vmem:[%s363 + $0x1180] sm:$0xff]
        %v1065 = vld [vmem:[%s363 + $0x1188] sm:$0xff]
        %v1066 = vld [vmem:[%s363 + $0x1190] sm:$0xff]
        %v1067 = vld [vmem:[%s363 + $0x1198] sm:$0xff]
        %v1068 = vld [vmem:[%s363 + $0x11a0] sm:$0xff]
        %v1069 = vld [vmem:[%s363 + $0x11a8] sm:$0xff]
        %v1070 = vld [vmem:[%s363 + $0x11b0] sm:$0xff]
        %v1071 = vld [vmem:[%s363 + $0x11b8] sm:$0xff]
        %v1072 = vld [vmem:[%s363 + $0x11c0] sm:$0xff]
        %v1073 = vld [vmem:[%s363 + $0x11c8] sm:$0xff]
        %v1074 = vld [vmem:[%s363 + $0x11d0] sm:$0xff]
        %v1075 = vld [vmem:[%s363 + $0x11d8] sm:$0xff]
        %v1076 = vld [vmem:[%s363 + $0x11e0] sm:$0xff]
        %v1077 = vld [vmem:[%s363 + $0x11e8] sm:$0xff]
        %v1078 = vld [vmem:[%s363 + $0x11f0] sm:$0xff]
        %v1079 = vld [vmem:[%s363 + $0x11f8] sm:$0xff]
        %v1080 = vld [vmem:[%s363 + $0x1200] sm:$0xff]
        %v1081 = vld [vmem:[%s363 + $0x1208] sm:$0xff]
        %v1082 = vld [vmem:[%s363 + $0x1210] sm:$0xff]
        %v1083 = vld [vmem:[%s363 + $0x1218] sm:$0xff]
        %v1084 = vld [vmem:[%s363 + $0x1220] sm:$0xff]
        %v1085 = vld [vmem:[%s363 + $0x1228] sm:$0xff]
        %v1086 = vld [vmem:[%s363 + $0x1230] sm:$0xff]
        %v1087 = vld [vmem:[%s363 + $0x1238] sm:$0xff]
        %v1088 = vld [vmem:[%s363 + $0x1240] sm:$0xff]
        %v1089 = vld [vmem:[%s363 + $0x1248] sm:$0xff]
        %v1090 = vld [vmem:[%s363 + $0x1250] sm:$0xff]
        %v1091 = vld [vmem:[%s363 + $0x1258] sm:$0xff]
        %v1092 = vld [vmem:[%s363 + $0x1260] sm:$0xff]
        %v1093 = vld [vmem:[%s363 + $0x1268] sm:$0xff]
        %v1094 = vld [vmem:[%s363 + $0x1270] sm:$0xff]
        %v1095 = vld [vmem:[%s363 + $0x1278] sm:$0xff]
        %v1096 = vld [vmem:[%s363 + $0x1280] sm:$0xff]
        %v1097 = vld [vmem:[%s363 + $0x1288] sm:$0xff]
        %v1098 = vld [vmem:[%s363 + $0x1290] sm:$0xff]
        %v1099 = vld [vmem:[%s363 + $0x1298] sm:$0xff]
        %v1100 = vld [vmem:[%s363 + $0x12a0] sm:$0xff]
        %v1101 = vld [vmem:[%s363 + $0x12a8] sm:$0xff]
        %v1102 = vld [vmem:[%s363 + $0x12b0] sm:$0xff]
        %v1103 = vld [vmem:[%s363 + $0x12b8] sm:$0xff]
        %v1104 = vld [vmem:[%s363 + $0x12c0] sm:$0xff]
        %v1105 = vld [vmem:[%s363 + $0x12c8] sm:$0xff]
        %v1106 = vld [vmem:[%s363 + $0x12d0] sm:$0xff]
        %v1107 = vld [vmem:[%s363 + $0x12d8] sm:$0xff]
        %v1108 = vld [vmem:[%s363 + $0x12e0] sm:$0xff]
        %v1109 = vld [vmem:[%s363 + $0x12e8] sm:$0xff]
        %v1110 = vld [vmem:[%s363 + $0x12f0] sm:$0xff]
        %v1111 = vld [vmem:[%s363 + $0x12f8] sm:$0xff]
        %v1112 = vld [vmem:[%s363 + $0x1300] sm:$0xff]
        %v1113 = vld [vmem:[%s363 + $0x1308] sm:$0xff]
        %v1114 = vld [vmem:[%s363 + $0x1310] sm:$0xff]
        %v1115 = vld [vmem:[%s363 + $0x1318] sm:$0xff]
        %v1116 = vld [vmem:[%s363 + $0x1320] sm:$0xff]
        %v1117 = vld [vmem:[%s363 + $0x1328] sm:$0xff]
        %v1118 = vld [vmem:[%s363 + $0x1330] sm:$0xff]
        %v1119 = vld [vmem:[%s363 + $0x1338] sm:$0xff]
        %v1120 = vld [vmem:[%s363 + $0x1340] sm:$0xff]
        %v1121 = vld [vmem:[%s363 + $0x1348] sm:$0xff]
        %v1122 = vld [vmem:[%s363 + $0x1350] sm:$0xff]
        %v1123 = vld [vmem:[%s363 + $0x1358] sm:$0xff]
        %v1124 = vld [vmem:[%s363 + $0x1360] sm:$0xff]
        %v1125 = vld [vmem:[%s363 + $0x1368] sm:$0xff]
        %v1126 = vld [vmem:[%s363 + $0x1370] sm:$0xff]
        %v1127 = vld [vmem:[%s363 + $0x1378] sm:$0xff]
        %v1128 = vld [vmem:[%s363 + $0x1380] sm:$0xff]
        %v1129 = vld [vmem:[%s363 + $0x1388] sm:$0xff]
        %v1130 = vld [vmem:[%s363 + $0x1390] sm:$0xff]
        %v1131 = vld [vmem:[%s363 + $0x1398] sm:$0xff]
        %v1132 = vld [vmem:[%s363 + $0x13a0] sm:$0xff]
        %v1133 = vld [vmem:[%s363 + $0x13a8] sm:$0xff]
        %v1134 = vld [vmem:[%s363 + $0x13b0] sm:$0xff]
        %v1135 = vld [vmem:[%s363 + $0x13b8] sm:$0xff]
        %v1136 = vld [vmem:[%s363 + $0x13c0] sm:$0xff]
        %v1137 = vld [vmem:[%s363 + $0x13c8] sm:$0xff]
        %v1138 = vld [vmem:[%s363 + $0x13d0] sm:$0xff]
        %v1139 = vld [vmem:[%s363 + $0x13d8] sm:$0xff]
        %v1140 = vld [vmem:[%s363 + $0x13e0] sm:$0xff]
        %v1141 = vld [vmem:[%s363 + $0x13e8] sm:$0xff]
        %v1142 = vld [vmem:[%s363 + $0x13f0] sm:$0xff]
        %v1143 = vld [vmem:[%s363 + $0x13f8] sm:$0xff]
        %v1144 = vld [vmem:[%s363 + $0x1400] sm:$0xff]
        %v1145 = vld [vmem:[%s363 + $0x1408] sm:$0xff]
        %v1146 = vld [vmem:[%s363 + $0x1410] sm:$0xff]
        %v1147 = vld [vmem:[%s363 + $0x1418] sm:$0xff]
        %v1148 = vld [vmem:[%s363 + $0x1420] sm:$0xff]
        %v1149 = vld [vmem:[%s363 + $0x1428] sm:$0xff]
        %v1150 = vld [vmem:[%s363 + $0x1430] sm:$0xff]
        %v1151 = vld [vmem:[%s363 + $0x1438] sm:$0xff]
        %v1152 = vld [vmem:[%s363 + $0x1440] sm:$0xff]
        %v1153 = vld [vmem:[%s363 + $0x1448] sm:$0xff]
        %v1154 = vld [vmem:[%s363 + $0x1450] sm:$0xff]
        %v1155 = vld [vmem:[%s363 + $0x1458] sm:$0xff]
        %v1156 = vld [vmem:[%s363 + $0x1460] sm:$0xff]
        %v1157 = vld [vmem:[%s363 + $0x1468] sm:$0xff]
        %v1158 = vld [vmem:[%s363 + $0x1470] sm:$0xff]
        %v1159 = vld [vmem:[%s363 + $0x1478] sm:$0xff]
        %v1160 = vld [vmem:[%s363 + $0x1480] sm:$0xff]
        %v1161 = vld [vmem:[%s363 + $0x1488] sm:$0xff]
        %v1162 = vld [vmem:[%s363 + $0x1490] sm:$0xff]
        %v1163 = vld [vmem:[%s363 + $0x1498] sm:$0xff]
        %v1164 = vld [vmem:[%s363 + $0x14a0] sm:$0xff]
        %v1165 = vld [vmem:[%s363 + $0x14a8] sm:$0xff]
        %v1166 = vld [vmem:[%s363 + $0x14b0] sm:$0xff]
        %v1167 = vld [vmem:[%s363 + $0x14b8] sm:$0xff]
        %v1168 = vld [vmem:[%s363 + $0x14c0] sm:$0xff]
        %v1169 = vld [vmem:[%s363 + $0x14c8] sm:$0xff]
        %v1170 = vld [vmem:[%s363 + $0x14d0] sm:$0xff]
        %v1171 = vld [vmem:[%s363 + $0x14d8] sm:$0xff]
        %v1172 = vld [vmem:[%s363 + $0x14e0] sm:$0xff]
        %v1173 = vld [vmem:[%s363 + $0x14e8] sm:$0xff]
        %v1174 = vld [vmem:[%s363 + $0x14f0] sm:$0xff]
        %v1175 = vld [vmem:[%s363 + $0x14f8] sm:$0xff]
        %v1176 = vld [vmem:[%s363 + $0x1500] sm:$0xff]
        %v1177 = vld [vmem:[%s363 + $0x1508] sm:$0xff]
        %v1178 = vld [vmem:[%s363 + $0x1510] sm:$0xff]
        %v1179 = vld [vmem:[%s363 + $0x1518] sm:$0xff]
        %v1180 = vld [vmem:[%s363 + $0x1520] sm:$0xff]
        %v1181 = vld [vmem:[%s363 + $0x1528] sm:$0xff]
        %v1182 = vld [vmem:[%s363 + $0x1530] sm:$0xff]
        %v1183 = vld [vmem:[%s363 + $0x1538] sm:$0xff]
        %v1184 = vld [vmem:[%s363 + $0x1540] sm:$0xff]
        %v1185 = vld [vmem:[%s363 + $0x1548] sm:$0xff]
        %v1186 = vld [vmem:[%s363 + $0x1550] sm:$0xff]
        %v1187 = vld [vmem:[%s363 + $0x1558] sm:$0xff]
        %v1188 = vld [vmem:[%s363 + $0x1560] sm:$0xff]
        %v1189 = vld [vmem:[%s363 + $0x1568] sm:$0xff]
        %v1190 = vld [vmem:[%s363 + $0x1570] sm:$0xff]
        %v1191 = vld [vmem:[%s363 + $0x1578] sm:$0xff]
        %v1192 = vld [vmem:[%s363 + $0x1580] sm:$0xff]
        %v1193 = vld [vmem:[%s363 + $0x1588] sm:$0xff]
        %v1194 = vld [vmem:[%s363 + $0x1590] sm:$0xff]
        %v1195 = vld [vmem:[%s363 + $0x1598] sm:$0xff]
        %v1196 = vld [vmem:[%s363 + $0x15a0] sm:$0xff]
        %v1197 = vld [vmem:[%s363 + $0x15a8] sm:$0xff]
        %v1198 = vld [vmem:[%s363 + $0x15b0] sm:$0xff]
        %v1199 = vld [vmem:[%s363 + $0x15b8] sm:$0xff]
        %v1200 = vld [vmem:[%s363 + $0x15c0] sm:$0xff]
        %v1201 = vld [vmem:[%s363 + $0x15c8] sm:$0xff]
        %v1202 = vld [vmem:[%s363 + $0x15d0] sm:$0xff]
        %v1203 = vld [vmem:[%s363 + $0x15d8] sm:$0xff]
        %v1204 = vld [vmem:[%s363 + $0x15e0] sm:$0xff]
        %v1205 = vld [vmem:[%s363 + $0x15e8] sm:$0xff]
        %v1206 = vld [vmem:[%s363 + $0x15f0] sm:$0xff]
        %v1207 = vld [vmem:[%s363 + $0x15f8] sm:$0xff]
        %v1208 = vld [vmem:[%s363 + $0x1600] sm:$0xff]
        %v1209 = vld [vmem:[%s363 + $0x1608] sm:$0xff]
        %v1210 = vld [vmem:[%s363 + $0x1610] sm:$0xff]
        %v1211 = vld [vmem:[%s363 + $0x1618] sm:$0xff]
        %v1212 = vld [vmem:[%s363 + $0x1620] sm:$0xff]
        %v1213 = vld [vmem:[%s363 + $0x1628] sm:$0xff]
        %v1214 = vld [vmem:[%s363 + $0x1630] sm:$0xff]
        %v1215 = vld [vmem:[%s363 + $0x1638] sm:$0xff]
        %v1216 = vld [vmem:[%s363 + $0x1640] sm:$0xff]
        %v1217 = vld [vmem:[%s363 + $0x1648] sm:$0xff]
        %v1218 = vld [vmem:[%s363 + $0x1650] sm:$0xff]
        %v1219 = vld [vmem:[%s363 + $0x1658] sm:$0xff]
        %v1220 = vld [vmem:[%s363 + $0x1660] sm:$0xff]
        %v1221 = vld [vmem:[%s363 + $0x1668] sm:$0xff]
        %v1222 = vld [vmem:[%s363 + $0x1670] sm:$0xff]
        %v1223 = vld [vmem:[%s363 + $0x1678] sm:$0xff]
        %v1224 = vld [vmem:[%s363 + $0x1680] sm:$0xff]
        %v1225 = vld [vmem:[%s363 + $0x1688] sm:$0xff]
        %v1226 = vld [vmem:[%s363 + $0x1690] sm:$0xff]
        %v1227 = vld [vmem:[%s363 + $0x1698] sm:$0xff]
        %v1228 = vld [vmem:[%s363 + $0x16a0] sm:$0xff]
        %v1229 = vld [vmem:[%s363 + $0x16a8] sm:$0xff]
        %v1230 = vld [vmem:[%s363 + $0x16b0] sm:$0xff]
        %v1231 = vld [vmem:[%s363 + $0x16b8] sm:$0xff]
        %v1232 = vld [vmem:[%s363 + $0x16c0] sm:$0xff]
        %v1233 = vld [vmem:[%s363 + $0x16c8] sm:$0xff]
        %v1234 = vld [vmem:[%s363 + $0x16d0] sm:$0xff]
        %v1235 = vld [vmem:[%s363 + $0x16d8] sm:$0xff]
        %v1236 = vld [vmem:[%s363 + $0x16e0] sm:$0xff]
        %v1237 = vld [vmem:[%s363 + $0x16e8] sm:$0xff]
        %v1238 = vld [vmem:[%s363 + $0x16f0] sm:$0xff]
        %v1239 = vld [vmem:[%s363 + $0x16f8] sm:$0xff]
        %v1240 = vld [vmem:[%s363 + $0x1700] sm:$0xff]
        %v1241 = vld [vmem:[%s363 + $0x1708] sm:$0xff]
        %v1242 = vld [vmem:[%s363 + $0x1710] sm:$0xff]
        %v1243 = vld [vmem:[%s363 + $0x1718] sm:$0xff]
        %v1244 = vld [vmem:[%s363 + $0x1720] sm:$0xff]
        %v1245 = vld [vmem:[%s363 + $0x1728] sm:$0xff]
        %v1246 = vld [vmem:[%s363 + $0x1730] sm:$0xff]
        %v1247 = vld [vmem:[%s363 + $0x1738] sm:$0xff]
        %v1248 = vld [vmem:[%s363 + $0x1740] sm:$0xff]
        %v1249 = vld [vmem:[%s363 + $0x1748] sm:$0xff]
        %v1250 = vld [vmem:[%s363 + $0x1750] sm:$0xff]
        %v1251 = vld [vmem:[%s363 + $0x1758] sm:$0xff]
        %v1252 = vld [vmem:[%s363 + $0x1760] sm:$0xff]
        %v1253 = vld [vmem:[%s363 + $0x1768] sm:$0xff]
        %v1254 = vld [vmem:[%s363 + $0x1770] sm:$0xff]
        %v1255 = vld [vmem:[%s363 + $0x1778] sm:$0xff]
        %v1256 = vld [vmem:[%s363 + $0x1780] sm:$0xff]
        %v1257 = vld [vmem:[%s363 + $0x1788] sm:$0xff]
        %v1258 = vld [vmem:[%s363 + $0x1790] sm:$0xff]
        %v1259 = vld [vmem:[%s363 + $0x1798] sm:$0xff]
        %v1260 = vld [vmem:[%s363 + $0x17a0] sm:$0xff]
        %v1261 = vld [vmem:[%s363 + $0x17a8] sm:$0xff]
        %v1262 = vld [vmem:[%s363 + $0x17b0] sm:$0xff]
        %v1263 = vld [vmem:[%s363 + $0x17b8] sm:$0xff]
        %v1264 = vld [vmem:[%s363 + $0x17c0] sm:$0xff]
        %v1265 = vld [vmem:[%s363 + $0x17c8] sm:$0xff]
        %v1266 = vld [vmem:[%s363 + $0x17d0] sm:$0xff]
        %v1267 = vld [vmem:[%s363 + $0x17d8] sm:$0xff]
        %v1268 = vld [vmem:[%s363 + $0x17e0] sm:$0xff]
        %v1269 = vld [vmem:[%s363 + $0x17e8] sm:$0xff]
        %v1270 = vld [vmem:[%s363 + $0x17f0] sm:$0xff]
        %v1271 = vld [vmem:[%s363 + $0x17f8] sm:$0xff]
        %v1272 = vld [vmem:[%s363 + $0x1800] sm:$0xff]
        %v1273 = vld [vmem:[%s363 + $0x1808] sm:$0xff]
        %v1274 = vld [vmem:[%s363 + $0x1810] sm:$0xff]
        %v1275 = vld [vmem:[%s363 + $0x1818] sm:$0xff]
        %v1276 = vld [vmem:[%s363 + $0x1820] sm:$0xff]
        %v1277 = vld [vmem:[%s363 + $0x1828] sm:$0xff]
        %v1278 = vld [vmem:[%s363 + $0x1830] sm:$0xff]
        %v1279 = vld [vmem:[%s363 + $0x1838] sm:$0xff]
        %v1280 = vld [vmem:[%s363 + $0x1840] sm:$0xff]
        %v1281 = vld [vmem:[%s363 + $0x1848] sm:$0xff]
        %v1282 = vld [vmem:[%s363 + $0x1850] sm:$0xff]
        %v1283 = vld [vmem:[%s363 + $0x1858] sm:$0xff]
        %v1284 = vld [vmem:[%s363 + $0x1860] sm:$0xff]
        %v1285 = vld [vmem:[%s363 + $0x1868] sm:$0xff]
        %v1286 = vld [vmem:[%s363 + $0x1870] sm:$0xff]
        %v1287 = vld [vmem:[%s363 + $0x1878] sm:$0xff]
        %v1288 = vld [vmem:[%s363 + $0x1880] sm:$0xff]
        %v1289 = vld [vmem:[%s363 + $0x1888] sm:$0xff]
        %v1290 = vld [vmem:[%s363 + $0x1890] sm:$0xff]
        %v1291 = vld [vmem:[%s363 + $0x1898] sm:$0xff]
        %v1292 = vld [vmem:[%s363 + $0x18a0] sm:$0xff]
        %v1293 = vld [vmem:[%s363 + $0x18a8] sm:$0xff]
        %v1294 = vld [vmem:[%s363 + $0x18b0] sm:$0xff]
        %v1295 = vld [vmem:[%s363 + $0x18b8] sm:$0xff]
        %v1296 = vld [vmem:[%s363 + $0x18c0] sm:$0xff]
        %v1297 = vld [vmem:[%s363 + $0x18c8] sm:$0xff]
        %v1298 = vld [vmem:[%s363 + $0x18d0] sm:$0xff]
        %v1299 = vld [vmem:[%s363 + $0x18d8] sm:$0xff]
        %v1300 = vld [vmem:[%s363 + $0x18e0] sm:$0xff]
        %v1301 = vld [vmem:[%s363 + $0x18e8] sm:$0xff]
        %v1302 = vld [vmem:[%s363 + $0x18f0] sm:$0xff]
        %v1303 = vld [vmem:[%s363 + $0x18f8] sm:$0xff]
        %v1304 = vld [vmem:[%s363 + $0x1900] sm:$0xff]
        %v1305 = vld [vmem:[%s363 + $0x1908] sm:$0xff]
        %v1306 = vld [vmem:[%s363 + $0x1910] sm:$0xff]
        %v1307 = vld [vmem:[%s363 + $0x1918] sm:$0xff]
        %v1308 = vld [vmem:[%s363 + $0x1920] sm:$0xff]
        %v1309 = vld [vmem:[%s363 + $0x1928] sm:$0xff]
        %v1310 = vld [vmem:[%s363 + $0x1930] sm:$0xff]
        %v1311 = vld [vmem:[%s363 + $0x1938] sm:$0xff]
        %v1312 = vld [vmem:[%s363 + $0x1940] sm:$0xff]
        %v1313 = vld [vmem:[%s363 + $0x1948] sm:$0xff]
        %v1314 = vld [vmem:[%s363 + $0x1950] sm:$0xff]
        %v1315 = vld [vmem:[%s363 + $0x1958] sm:$0xff]
        %v1316 = vld [vmem:[%s363 + $0x1960] sm:$0xff]
        %v1317 = vld [vmem:[%s363 + $0x1968] sm:$0xff]
        %v1318 = vld [vmem:[%s363 + $0x1970] sm:$0xff]
        %v1319 = vld [vmem:[%s363 + $0x1978] sm:$0xff]
        %v1320 = vld [vmem:[%s363 + $0x1980] sm:$0xff]
        %v1321 = vld [vmem:[%s363 + $0x1988] sm:$0xff]
        %v1322 = vld [vmem:[%s363 + $0x1990] sm:$0xff]
        %v1323 = vld [vmem:[%s363 + $0x1998] sm:$0xff]
        %v1324 = vld [vmem:[%s363 + $0x19a0] sm:$0xff]
        %v1325 = vld [vmem:[%s363 + $0x19a8] sm:$0xff]
        %v1326 = vld [vmem:[%s363 + $0x19b0] sm:$0xff]
        %v1327 = vld [vmem:[%s363 + $0x19b8] sm:$0xff]
        %v1328 = vld [vmem:[%s363 + $0x19c0] sm:$0xff]
        %v1329 = vld [vmem:[%s363 + $0x19c8] sm:$0xff]
        %v1330 = vld [vmem:[%s363 + $0x19d0] sm:$0xff]
        %v1331 = vld [vmem:[%s363 + $0x19d8] sm:$0xff]
        %v1332 = vld [vmem:[%s363 + $0x19e0] sm:$0xff]
        %v1333 = vld [vmem:[%s363 + $0x19e8] sm:$0xff]
        %v1334 = vld [vmem:[%s363 + $0x19f0] sm:$0xff]
        %v1335 = vld [vmem:[%s363 + $0x19f8] sm:$0xff]
        %v1336 = vld [vmem:[%s363 + $0x1a00] sm:$0xff]
        %v1337 = vld [vmem:[%s363 + $0x1a08] sm:$0xff]
        %v1338 = vld [vmem:[%s363 + $0x1a10] sm:$0xff]
        %v1339 = vld [vmem:[%s363 + $0x1a18] sm:$0xff]
        %v1340 = vld [vmem:[%s363 + $0x1a20] sm:$0xff]
        %v1341 = vld [vmem:[%s363 + $0x1a28] sm:$0xff]
        %v1342 = vld [vmem:[%s363 + $0x1a30] sm:$0xff]
        %v1343 = vld [vmem:[%s363 + $0x1a38] sm:$0xff]
        %v1344 = vld [vmem:[%s363 + $0x1a40] sm:$0xff]
        %v1345 = vld [vmem:[%s363 + $0x1a48] sm:$0xff]
        %v1346 = vld [vmem:[%s363 + $0x1a50] sm:$0xff]
        %v1347 = vld [vmem:[%s363 + $0x1a58] sm:$0xff]
        %v1348 = vld [vmem:[%s363 + $0x1a60] sm:$0xff]
        %v1349 = vld [vmem:[%s363 + $0x1a68] sm:$0xff]
        %v1350 = vld [vmem:[%s363 + $0x1a70] sm:$0xff]
        %v1351 = vld [vmem:[%s363 + $0x1a78] sm:$0xff]
        %v1352 = vld [vmem:[%s363 + $0x1a80] sm:$0xff]
        %v1353 = vld [vmem:[%s363 + $0x1a88] sm:$0xff]
        %v1354 = vld [vmem:[%s363 + $0x1a90] sm:$0xff]
        %v1355 = vld [vmem:[%s363 + $0x1a98] sm:$0xff]
        %v1356 = vld [vmem:[%s363 + $0x1aa0] sm:$0xff]
        %v1357 = vld [vmem:[%s363 + $0x1aa8] sm:$0xff]
        %v1358 = vld [vmem:[%s363 + $0x1ab0] sm:$0xff]
        %v1359 = vld [vmem:[%s363 + $0x1ab8] sm:$0xff]
        %v1360 = vld [vmem:[%s363 + $0x1ac0] sm:$0xff]
        %v1361 = vld [vmem:[%s363 + $0x1ac8] sm:$0xff]
        %v1362 = vld [vmem:[%s363 + $0x1ad0] sm:$0xff]
        %v1363 = vld [vmem:[%s363 + $0x1ad8] sm:$0xff]
        %v1364 = vld [vmem:[%s363 + $0x1ae0] sm:$0xff]
        %v1365 = vld [vmem:[%s363 + $0x1ae8] sm:$0xff]
        %v1366 = vld [vmem:[%s363 + $0x1af0] sm:$0xff]
        %v1367 = vld [vmem:[%s363 + $0x1af8] sm:$0xff]
        %v1368 = vld [vmem:[%s363 + $0x1b00] sm:$0xff]
        %v1369 = vld [vmem:[%s363 + $0x1b08] sm:$0xff]
        %v1370 = vld [vmem:[%s363 + $0x1b10] sm:$0xff]
        %v1371 = vld [vmem:[%s363 + $0x1b18] sm:$0xff]
        %v1372 = vld [vmem:[%s363 + $0x1b20] sm:$0xff]
        %v1373 = vld [vmem:[%s363 + $0x1b28] sm:$0xff]
        %v1374 = vld [vmem:[%s363 + $0x1b30] sm:$0xff]
        %v1375 = vld [vmem:[%s363 + $0x1b38] sm:$0xff]
        %v1376 = vld [vmem:[%s363 + $0x1b40] sm:$0xff]
        %v1377 = vld [vmem:[%s363 + $0x1b48] sm:$0xff]
        %v1378 = vld [vmem:[%s363 + $0x1b50] sm:$0xff]
        %v1379 = vld [vmem:[%s363 + $0x1b58] sm:$0xff]
        %v1380 = vld [vmem:[%s363 + $0x1b60] sm:$0xff]
        %v1381 = vld [vmem:[%s363 + $0x1b68] sm:$0xff]
        %v1382 = vld [vmem:[%s363 + $0x1b70] sm:$0xff]
        %v1383 = vld [vmem:[%s363 + $0x1b78] sm:$0xff]
        %v1384 = vld [vmem:[%s363 + $0x1b80] sm:$0xff]
        %v1385 = vld [vmem:[%s363 + $0x1b88] sm:$0xff]
        %v1386 = vld [vmem:[%s363 + $0x1b90] sm:$0xff]
        %v1387 = vld [vmem:[%s363 + $0x1b98] sm:$0xff]
        %v1388 = vld [vmem:[%s363 + $0x1ba0] sm:$0xff]
        %v1389 = vld [vmem:[%s363 + $0x1ba8] sm:$0xff]
        %v1390 = vld [vmem:[%s363 + $0x1bb0] sm:$0xff]
        %v1391 = vld [vmem:[%s363 + $0x1bb8] sm:$0xff]
        %v1392 = vld [vmem:[%s363 + $0x1bc0] sm:$0xff]
        %v1393 = vld [vmem:[%s363 + $0x1bc8] sm:$0xff]
        %v1394 = vld [vmem:[%s363 + $0x1bd0] sm:$0xff]
        %v1395 = vld [vmem:[%s363 + $0x1bd8] sm:$0xff]
        %v1396 = vld [vmem:[%s363 + $0x1be0] sm:$0xff]
        %v1397 = vld [vmem:[%s363 + $0x1be8] sm:$0xff]
        %v1398 = vld [vmem:[%s363 + $0x1bf0] sm:$0xff]
        %v1399 = vld [vmem:[%s363 + $0x1bf8] sm:$0xff]
        %v1400 = vld [vmem:[%s363 + $0x1c00] sm:$0xff]
        %v1401 = vld [vmem:[%s363 + $0x1c08] sm:$0xff]
        %v1402 = vld [vmem:[%s363 + $0x1c10] sm:$0xff]
        %v1403 = vld [vmem:[%s363 + $0x1c18] sm:$0xff]
        %v1404 = vld [vmem:[%s363 + $0x1c20] sm:$0xff]
        %v1405 = vld [vmem:[%s363 + $0x1c28] sm:$0xff]
        %v1406 = vld [vmem:[%s363 + $0x1c30] sm:$0xff]
        %v1407 = vld [vmem:[%s363 + $0x1c38] sm:$0xff]
        %v1408 = vld [vmem:[%s363 + $0x1c40] sm:$0xff]
        %v1409 = vld [vmem:[%s363 + $0x1c48] sm:$0xff]
        %v1410 = vld [vmem:[%s363 + $0x1c50] sm:$0xff]
        %v1411 = vld [vmem:[%s363 + $0x1c58] sm:$0xff]
        %v1412 = vld [vmem:[%s363 + $0x1c60] sm:$0xff]
        %v1413 = vld [vmem:[%s363 + $0x1c68] sm:$0xff]
        %v1414 = vld [vmem:[%s363 + $0x1c70] sm:$0xff]
        %v1415 = vld [vmem:[%s363 + $0x1c78] sm:$0xff]
        %v1416 = vld [vmem:[%s363 + $0x1c80] sm:$0xff]
        %v1417 = vld [vmem:[%s363 + $0x1c88] sm:$0xff]
        %v1418 = vld [vmem:[%s363 + $0x1c90] sm:$0xff]
        %v1419 = vld [vmem:[%s363 + $0x1c98] sm:$0xff]
        %v1420 = vld [vmem:[%s363 + $0x1ca0] sm:$0xff]
        %v1421 = vld [vmem:[%s363 + $0x1ca8] sm:$0xff]
        %v1422 = vld [vmem:[%s363 + $0x1cb0] sm:$0xff]
        %v1423 = vld [vmem:[%s363 + $0x1cb8] sm:$0xff]
        %v1424 = vld [vmem:[%s363 + $0x1cc0] sm:$0xff]
        %v1425 = vld [vmem:[%s363 + $0x1cc8] sm:$0xff]
        %v1426 = vld [vmem:[%s363 + $0x1cd0] sm:$0xff]
        %v1427 = vld [vmem:[%s363 + $0x1cd8] sm:$0xff]
        %v1428 = vld [vmem:[%s363 + $0x1ce0] sm:$0xff]
        %v1429 = vld [vmem:[%s363 + $0x1ce8] sm:$0xff]
        %v1430 = vld [vmem:[%s363 + $0x1cf0] sm:$0xff]
        %v1431 = vld [vmem:[%s363 + $0x1cf8] sm:$0xff]
        %v1432 = vld [vmem:[%s363 + $0x1d00] sm:$0xff]
        %v1433 = vld [vmem:[%s363 + $0x1d08] sm:$0xff]
        %v1434 = vld [vmem:[%s363 + $0x1d10] sm:$0xff]
        %v1435 = vld [vmem:[%s363 + $0x1d18] sm:$0xff]
        %v1436 = vld [vmem:[%s363 + $0x1d20] sm:$0xff]
        %v1437 = vld [vmem:[%s363 + $0x1d28] sm:$0xff]
        %v1438 = vld [vmem:[%s363 + $0x1d30] sm:$0xff]
        %v1439 = vld [vmem:[%s363 + $0x1d38] sm:$0xff]
        %v1440 = vld [vmem:[%s363 + $0x1d40] sm:$0xff]
        %v1441 = vld [vmem:[%s363 + $0x1d48] sm:$0xff]
        %v1442 = vld [vmem:[%s363 + $0x1d50] sm:$0xff]
        %v1443 = vld [vmem:[%s363 + $0x1d58] sm:$0xff]
        %v1444 = vld [vmem:[%s363 + $0x1d60] sm:$0xff]
        %v1445 = vld [vmem:[%s363 + $0x1d68] sm:$0xff]
        %v1446 = vld [vmem:[%s363 + $0x1d70] sm:$0xff]
        %v1447 = vld [vmem:[%s363 + $0x1d78] sm:$0xff]
        %v1448 = vld [vmem:[%s363 + $0x1d80] sm:$0xff]
        %v1449 = vld [vmem:[%s363 + $0x1d88] sm:$0xff]
        %v1450 = vld [vmem:[%s363 + $0x1d90] sm:$0xff]
        %v1451 = vld [vmem:[%s363 + $0x1d98] sm:$0xff]
        %v1452 = vld [vmem:[%s363 + $0x1da0] sm:$0xff]
        %v1453 = vld [vmem:[%s363 + $0x1da8] sm:$0xff]
        %v1454 = vld [vmem:[%s363 + $0x1db0] sm:$0xff]
        %v1455 = vld [vmem:[%s363 + $0x1db8] sm:$0xff]
        %v1456 = vld [vmem:[%s363 + $0x1dc0] sm:$0xff]
        %v1457 = vld [vmem:[%s363 + $0x1dc8] sm:$0xff]
        %v1458 = vld [vmem:[%s363 + $0x1dd0] sm:$0xff]
        %v1459 = vld [vmem:[%s363 + $0x1dd8] sm:$0xff]
        %v1460 = vld [vmem:[%s363 + $0x1de0] sm:$0xff]
        %v1461 = vld [vmem:[%s363 + $0x1de8] sm:$0xff]
        %v1462 = vld [vmem:[%s363 + $0x1df0] sm:$0xff]
        %v1463 = vld [vmem:[%s363 + $0x1df8] sm:$0xff]
        %v1464 = vld [vmem:[%s363 + $0x1e00] sm:$0xff]
        %v1465 = vld [vmem:[%s363 + $0x1e08] sm:$0xff]
        %v1466 = vld [vmem:[%s363 + $0x1e10] sm:$0xff]
        %v1467 = vld [vmem:[%s363 + $0x1e18] sm:$0xff]
        %v1468 = vld [vmem:[%s363 + $0x1e20] sm:$0xff]
        %v1469 = vld [vmem:[%s363 + $0x1e28] sm:$0xff]
        %v1470 = vld [vmem:[%s363 + $0x1e30] sm:$0xff]
        %v1471 = vld [vmem:[%s363 + $0x1e38] sm:$0xff]
        %v1472 = vld [vmem:[%s363 + $0x1e40] sm:$0xff]
        %v1473 = vld [vmem:[%s363 + $0x1e48] sm:$0xff]
        %v1474 = vld [vmem:[%s363 + $0x1e50] sm:$0xff]
        %v1475 = vld [vmem:[%s363 + $0x1e58] sm:$0xff]
        %v1476 = vld [vmem:[%s363 + $0x1e60] sm:$0xff]
        %v1477 = vld [vmem:[%s363 + $0x1e68] sm:$0xff]
        %v1478 = vld [vmem:[%s363 + $0x1e70] sm:$0xff]
        %v1479 = vld [vmem:[%s363 + $0x1e78] sm:$0xff]
        %v1480 = vld [vmem:[%s363 + $0x1e80] sm:$0xff]
        %v1481 = vld [vmem:[%s363 + $0x1e88] sm:$0xff]
        %v1482 = vld [vmem:[%s363 + $0x1e90] sm:$0xff]
        %v1483 = vld [vmem:[%s363 + $0x1e98] sm:$0xff]
        %v1484 = vld [vmem:[%s363 + $0x1ea0] sm:$0xff]
        %v1485 = vld [vmem:[%s363 + $0x1ea8] sm:$0xff]
        %v1486 = vld [vmem:[%s363 + $0x1eb0] sm:$0xff]
        %v1487 = vld [vmem:[%s363 + $0x1eb8] sm:$0xff]
        %v1488 = vld [vmem:[%s363 + $0x1ec0] sm:$0xff]
        %v1489 = vld [vmem:[%s363 + $0x1ec8] sm:$0xff]
        %v1490 = vld [vmem:[%s363 + $0x1ed0] sm:$0xff]
        %v1491 = vld [vmem:[%s363 + $0x1ed8] sm:$0xff]
        %v1492 = vld [vmem:[%s363 + $0x1ee0] sm:$0xff]
        %v1493 = vld [vmem:[%s363 + $0x1ee8] sm:$0xff]
        %v1494 = vld [vmem:[%s363 + $0x1ef0] sm:$0xff]
        %v1495 = vld [vmem:[%s363 + $0x1ef8] sm:$0xff]
        %v1496 = vld [vmem:[%s363 + $0x1f00] sm:$0xff]
        %v1497 = vld [vmem:[%s363 + $0x1f08] sm:$0xff]
        %v1498 = vld [vmem:[%s363 + $0x1f10] sm:$0xff]
        %v1499 = vld [vmem:[%s363 + $0x1f18] sm:$0xff]
        %v1500 = vld [vmem:[%s363 + $0x1f20] sm:$0xff]
        %v1501 = vld [vmem:[%s363 + $0x1f28] sm:$0xff]
        %v1502 = vld [vmem:[%s363 + $0x1f30] sm:$0xff]
        %v1503 = vld [vmem:[%s363 + $0x1f38] sm:$0xff]
        %v1504 = vld [vmem:[%s363 + $0x1f40] sm:$0xff]
        %v1505 = vld [vmem:[%s363 + $0x1f48] sm:$0xff]
        %v1506 = vld [vmem:[%s363 + $0x1f50] sm:$0xff]
        %v1507 = vld [vmem:[%s363 + $0x1f58] sm:$0xff]
        %v1508 = vld [vmem:[%s363 + $0x1f60] sm:$0xff]
        %v1509 = vld [vmem:[%s363 + $0x1f68] sm:$0xff]
        %v1510 = vld [vmem:[%s363 + $0x1f70] sm:$0xff]
        %v1511 = vld [vmem:[%s363 + $0x1f78] sm:$0xff]
        %v1512 = vld [vmem:[%s363 + $0x1f80] sm:$0xff]
        %v1513 = vld [vmem:[%s363 + $0x1f88] sm:$0xff]
        %v1514 = vld [vmem:[%s363 + $0x1f90] sm:$0xff]
        %v1515 = vld [vmem:[%s363 + $0x1f98] sm:$0xff]
        %v1516 = vld [vmem:[%s363 + $0x1fa0] sm:$0xff]
        %v1517 = vld [vmem:[%s363 + $0x1fa8] sm:$0xff]
        %v1518 = vld [vmem:[%s363 + $0x1fb0] sm:$0xff]
        %v1519 = vld [vmem:[%s363 + $0x1fb8] sm:$0xff]
        %v1520 = vld [vmem:[%s363 + $0x1fc0] sm:$0xff]
        %v1521 = vld [vmem:[%s363 + $0x1fc8] sm:$0xff]
        %v1522 = vld [vmem:[%s363 + $0x1fd0] sm:$0xff]
        %v1523 = vld [vmem:[%s363 + $0x1fd8] sm:$0xff]
        %v1524 = vld [vmem:[%s363 + $0x1fe0] sm:$0xff]
        %v1525 = vld [vmem:[%s363 + $0x1fe8] sm:$0xff]
        %v1526 = vld [vmem:[%s363 + $0x1ff0] sm:$0xff]
        %v1527 = vld [vmem:[%s363 + $0x1ff8] sm:$0xff]
        %v1528 = vld [vmem:[%s363 + $0x2000] sm:$0xff]
        %v1529 = vld [vmem:[%s363 + $0x2008] sm:$0xff]
        %v1530 = vld [vmem:[%s363 + $0x2010] sm:$0xff]
        %v1531 = vld [vmem:[%s363 + $0x2018] sm:$0xff]
        %v1532 = vld [vmem:[%s363 + $0x2020] sm:$0xff]
        %v1533 = vld [vmem:[%s363 + $0x2028] sm:$0xff]
        %v1534 = vld [vmem:[%s363 + $0x2030] sm:$0xff]
        %v1535 = vld [vmem:[%s363 + $0x2038] sm:$0xff]
        %v1536 = vld [vmem:[%s363 + $0x2040] sm:$0xff]
        %v1537 = vld [vmem:[%s363 + $0x2048] sm:$0xff]
        %v1538 = vld [vmem:[%s363 + $0x2050] sm:$0xff]
        %v1539 = vld [vmem:[%s363 + $0x2058] sm:$0xff]
        %v1540 = vld [vmem:[%s363 + $0x2060] sm:$0xff]
        %v1541 = vld [vmem:[%s363 + $0x2068] sm:$0xff]
        %v1542 = vld [vmem:[%s363 + $0x2070] sm:$0xff]
        %v1543 = vld [vmem:[%s363 + $0x2078] sm:$0xff]
        %v1544 = vld [vmem:[%s363 + $0x2080] sm:$0xff]
        %v1545 = vld [vmem:[%s363 + $0x2088] sm:$0xff]
        %v1546 = vld [vmem:[%s363 + $0x2090] sm:$0xff]
        %v1547 = vld [vmem:[%s363 + $0x2098] sm:$0xff]
        %v1548 = vld [vmem:[%s363 + $0x20a0] sm:$0xff]
        %v1549 = vld [vmem:[%s363 + $0x20a8] sm:$0xff]
        %v1550 = vld [vmem:[%s363 + $0x20b0] sm:$0xff]
        %v1551 = vld [vmem:[%s363 + $0x20b8] sm:$0xff]
        %v1552 = vld [vmem:[%s363 + $0x20c0] sm:$0xff]
        %v1553 = vld [vmem:[%s363 + $0x20c8] sm:$0xff]
        %v1554 = vld [vmem:[%s363 + $0x20d0] sm:$0xff]
        %v1555 = vld [vmem:[%s363 + $0x20d8] sm:$0xff]
        %v1556 = vld [vmem:[%s363 + $0x20e0] sm:$0xff]
        %v1557 = vld [vmem:[%s363 + $0x20e8] sm:$0xff]
        %v1558 = vld [vmem:[%s363 + $0x20f0] sm:$0xff]
        %v1559 = vld [vmem:[%s363 + $0x20f8] sm:$0xff]
        %v1560 = vld [vmem:[%s363 + $0x2100] sm:$0xff]
        %v1561 = vld [vmem:[%s363 + $0x2108] sm:$0xff]
        %v1562 = vld [vmem:[%s363 + $0x2110] sm:$0xff]
        %v1563 = vld [vmem:[%s363 + $0x2118] sm:$0xff]
        %v1564 = vld [vmem:[%s363 + $0x2120] sm:$0xff]
        %v1565 = vld [vmem:[%s363 + $0x2128] sm:$0xff]
        %v1566 = vld [vmem:[%s363 + $0x2130] sm:$0xff]
        %v1567 = vld [vmem:[%s363 + $0x2138] sm:$0xff]
        %v1568 = vld [vmem:[%s363 + $0x2140] sm:$0xff]
        %v1569 = vld [vmem:[%s363 + $0x2148] sm:$0xff]
        %v1570 = vld [vmem:[%s363 + $0x2150] sm:$0xff]
        %v1571 = vld [vmem:[%s363 + $0x2158] sm:$0xff]
        %v1572 = vld [vmem:[%s363 + $0x2160] sm:$0xff]
        %v1573 = vld [vmem:[%s363 + $0x2168] sm:$0xff]
        %v1574 = vld [vmem:[%s363 + $0x2170] sm:$0xff]
        %v1575 = vld [vmem:[%s363 + $0x2178] sm:$0xff]
        %v1576 = vld [vmem:[%s363 + $0x2180] sm:$0xff]
        %v1577 = vld [vmem:[%s363 + $0x2188] sm:$0xff]
        %v1578 = vld [vmem:[%s363 + $0x2190] sm:$0xff]
        %v1579 = vld [vmem:[%s363 + $0x2198] sm:$0xff]
        %v1580 = vld [vmem:[%s363 + $0x21a0] sm:$0xff]
        %v1581 = vld [vmem:[%s363 + $0x21a8] sm:$0xff]
        %v1582 = vld [vmem:[%s363 + $0x21b0] sm:$0xff]
        %v1583 = vld [vmem:[%s363 + $0x21b8] sm:$0xff]
        %v1584 = vld [vmem:[%s363 + $0x21c0] sm:$0xff]
        %v1585 = vld [vmem:[%s363 + $0x21c8] sm:$0xff]
        %v1586 = vld [vmem:[%s363 + $0x21d0] sm:$0xff]
        %v1587 = vld [vmem:[%s363 + $0x21d8] sm:$0xff]
        %v1588 = vld [vmem:[%s363 + $0x21e0] sm:$0xff]
        %v1589 = vld [vmem:[%s363 + $0x21e8] sm:$0xff]
        %v1590 = vld [vmem:[%s363 + $0x21f0] sm:$0xff]
        %v1591 = vld [vmem:[%s363 + $0x21f8] sm:$0xff]
        %v1592 = vld [vmem:[%s363 + $0x2200] sm:$0xff]
        %v1593 = vld [vmem:[%s363 + $0x2208] sm:$0xff]
        %v1594 = vld [vmem:[%s363 + $0x2210] sm:$0xff]
        %v1595 = vld [vmem:[%s363 + $0x2218] sm:$0xff]
        %v1596 = vld [vmem:[%s363 + $0x2220] sm:$0xff]
        %v1597 = vld [vmem:[%s363 + $0x2228] sm:$0xff]
        %v1598 = vld [vmem:[%s363 + $0x2230] sm:$0xff]
        %v1599 = vld [vmem:[%s363 + $0x2238] sm:$0xff]
        %v1600 = vld [vmem:[%s363 + $0x2240] sm:$0xff]
        %v1601 = vld [vmem:[%s363 + $0x2248] sm:$0xff]
        %v1602 = vld [vmem:[%s363 + $0x2250] sm:$0xff]
        %v1603 = vld [vmem:[%s363 + $0x2258] sm:$0xff]
        %v1604 = vld [vmem:[%s363 + $0x2260] sm:$0xff]
        %v1605 = vld [vmem:[%s363 + $0x2268] sm:$0xff]
        %v1606 = vld [vmem:[%s363 + $0x2270] sm:$0xff]
        %v1607 = vld [vmem:[%s363 + $0x2278] sm:$0xff]
        %v1608 = vld [vmem:[%s363 + $0x2280] sm:$0xff]
        %v1609 = vld [vmem:[%s363 + $0x2288] sm:$0xff]
        %v1610 = vld [vmem:[%s363 + $0x2290] sm:$0xff]
        %v1611 = vld [vmem:[%s363 + $0x2298] sm:$0xff]
        %v1612 = vld [vmem:[%s363 + $0x22a0] sm:$0xff]
        %v1613 = vld [vmem:[%s363 + $0x22a8] sm:$0xff]
        %v1614 = vld [vmem:[%s363 + $0x22b0] sm:$0xff]
        %v1615 = vld [vmem:[%s363 + $0x22b8] sm:$0xff]
        %v1616 = vld [vmem:[%s363 + $0x22c0] sm:$0xff]
        %v1617 = vld [vmem:[%s363 + $0x22c8] sm:$0xff]
        %v1618 = vld [vmem:[%s363 + $0x22d0] sm:$0xff]
        %v1619 = vld [vmem:[%s363 + $0x22d8] sm:$0xff]
        %v1620 = vld [vmem:[%s363 + $0x22e0] sm:$0xff]
        %v1621 = vld [vmem:[%s363 + $0x22e8] sm:$0xff]
        %v1622 = vld [vmem:[%s363 + $0x22f0] sm:$0xff]
        %v1623 = vld [vmem:[%s363 + $0x22f8] sm:$0xff]
        %v1624 = vld [vmem:[%s363 + $0x2300] sm:$0xff]
        %v1625 = vld [vmem:[%s363 + $0x2308] sm:$0xff]
        %v1626 = vld [vmem:[%s363 + $0x2310] sm:$0xff]
        %v1627 = vld [vmem:[%s363 + $0x2318] sm:$0xff]
        %v1628 = vld [vmem:[%s363 + $0x2320] sm:$0xff]
        %v1629 = vld [vmem:[%s363 + $0x2328] sm:$0xff]
        %v1630 = vld [vmem:[%s363 + $0x2330] sm:$0xff]
        %v1631 = vld [vmem:[%s363 + $0x2338] sm:$0xff]
        %v1632 = vld [vmem:[%s363 + $0x2340] sm:$0xff]
        %v1633 = vld [vmem:[%s363 + $0x2348] sm:$0xff]
        %v1634 = vld [vmem:[%s363 + $0x2350] sm:$0xff]
        %v1635 = vld [vmem:[%s363 + $0x2358] sm:$0xff]
        %v1636 = vld [vmem:[%s363 + $0x2360] sm:$0xff]
        %v1637 = vld [vmem:[%s363 + $0x2368] sm:$0xff]
        %v1638 = vld [vmem:[%s363 + $0x2370] sm:$0xff]
        %v1639 = vld [vmem:[%s363 + $0x2378] sm:$0xff]
        %v1640 = vld [vmem:[%s363 + $0x2380] sm:$0xff]
        %v1641 = vld [vmem:[%s363 + $0x2388] sm:$0xff]
        %v1642 = vld [vmem:[%s363 + $0x2390] sm:$0xff]
        %v1643 = vld [vmem:[%s363 + $0x2398] sm:$0xff]
        %v1644 = vld [vmem:[%s363 + $0x23a0] sm:$0xff]
        %v1645 = vld [vmem:[%s363 + $0x23a8] sm:$0xff]
        %v1646 = vld [vmem:[%s363 + $0x23b0] sm:$0xff]
        %v1647 = vld [vmem:[%s363 + $0x23b8] sm:$0xff]
        %v1648 = vld [vmem:[%s363 + $0x23c0] sm:$0xff]
        %v1649 = vld [vmem:[%s363 + $0x23c8] sm:$0xff]
        %v1650 = vld [vmem:[%s363 + $0x23d0] sm:$0xff]
        %v1651 = vld [vmem:[%s363 + $0x23d8] sm:$0xff]
        %v1652 = vld [vmem:[%s363 + $0x23e0] sm:$0xff]
        %v1653 = vld [vmem:[%s363 + $0x23e8] sm:$0xff]
        %v1654 = vld [vmem:[%s363 + $0x23f0] sm:$0xff]
        %v1655 = vld [vmem:[%s363 + $0x23f8] sm:$0xff]
        %v1656 = vld [vmem:[%s363 + $0x2400] sm:$0xff]
        %v1657 = vld [vmem:[%s363 + $0x2408] sm:$0xff]
        %v1658 = vld [vmem:[%s363 + $0x2410] sm:$0xff]
        %v1659 = vld [vmem:[%s363 + $0x2418] sm:$0xff]
        %v1660 = vld [vmem:[%s363 + $0x2420] sm:$0xff]
        %v1661 = vld [vmem:[%s363 + $0x2428] sm:$0xff]
        %v1662 = vld [vmem:[%s363 + $0x2430] sm:$0xff]
        %v1663 = vld [vmem:[%s363 + $0x2438] sm:$0xff]
        %v1664 = vld [vmem:[%s363 + $0x2440] sm:$0xff]
        %v1665 = vld [vmem:[%s363 + $0x2448] sm:$0xff]
        %v1666 = vld [vmem:[%s363 + $0x2450] sm:$0xff]
        %v1667 = vld [vmem:[%s363 + $0x2458] sm:$0xff]
        %v1668 = vld [vmem:[%s363 + $0x2460] sm:$0xff]
        %v1669 = vld [vmem:[%s363 + $0x2468] sm:$0xff]
        %v1670 = vld [vmem:[%s363 + $0x2470] sm:$0xff]
        %v1671 = vld [vmem:[%s363 + $0x2478] sm:$0xff]
        %v1672 = vld [vmem:[%s363 + $0x2480] sm:$0xff]
        %v1673 = vld [vmem:[%s363 + $0x2488] sm:$0xff]
        %v1674 = vld [vmem:[%s363 + $0x2490] sm:$0xff]
        %v1675 = vld [vmem:[%s363 + $0x2498] sm:$0xff]
        %v1676 = vld [vmem:[%s363 + $0x24a0] sm:$0xff]
        %v1677 = vld [vmem:[%s363 + $0x24a8] sm:$0xff]
        %v1678 = vld [vmem:[%s363 + $0x24b0] sm:$0xff]
        %v1679 = vld [vmem:[%s363 + $0x24b8] sm:$0xff]
        %v1680 = vld [vmem:[%s363 + $0x24c0] sm:$0xff]
        %v1681 = vld [vmem:[%s363 + $0x24c8] sm:$0xff]
        %v1682 = vld [vmem:[%s363 + $0x24d0] sm:$0xff]
        %v1683 = vld [vmem:[%s363 + $0x24d8] sm:$0xff]
        %v1684 = vld [vmem:[%s363 + $0x24e0] sm:$0xff]
        %v1685 = vld [vmem:[%s363 + $0x24e8] sm:$0xff]
        %v1686 = vld [vmem:[%s363 + $0x24f0] sm:$0xff]
        %v1687 = vld [vmem:[%s363 + $0x24f8] sm:$0xff]
        %v1688 = vld [vmem:[%s363 + $0x2500] sm:$0xff]
        %v1689 = vld [vmem:[%s363 + $0x2508] sm:$0xff]
        %v1690 = vld [vmem:[%s363 + $0x2510] sm:$0xff]
        %v1691 = vld [vmem:[%s363 + $0x2518] sm:$0xff]
        %v1692 = vld [vmem:[%s363 + $0x2520] sm:$0xff]
        %v1693 = vld [vmem:[%s363 + $0x2528] sm:$0xff]
        %v1694 = vld [vmem:[%s363 + $0x2530] sm:$0xff]
        %v1695 = vld [vmem:[%s363 + $0x2538] sm:$0xff]
        %v1696 = vld [vmem:[%s363 + $0x2540] sm:$0xff]
        %v1697 = vld [vmem:[%s363 + $0x2548] sm:$0xff]
        %v1698 = vld [vmem:[%s363 + $0x2550] sm:$0xff]
        %v1699 = vld [vmem:[%s363 + $0x2558] sm:$0xff]
        %v1700 = vld [vmem:[%s363 + $0x2560] sm:$0xff]
        %v1701 = vld [vmem:[%s363 + $0x2568] sm:$0xff]
        %v1702 = vld [vmem:[%s363 + $0x2570] sm:$0xff]
        %v1703 = vld [vmem:[%s363 + $0x2578] sm:$0xff]
        %v1704 = vld [vmem:[%s363 + $0x2580] sm:$0xff]
        %v1705 = vld [vmem:[%s363 + $0x2588] sm:$0xff]
        %v1706 = vld [vmem:[%s363 + $0x2590] sm:$0xff]
        %v1707 = vld [vmem:[%s363 + $0x2598] sm:$0xff]
        %v1708 = vld [vmem:[%s363 + $0x25a0] sm:$0xff]
        %v1709 = vld [vmem:[%s363 + $0x25a8] sm:$0xff]
        %v1710 = vld [vmem:[%s363 + $0x25b0] sm:$0xff]
        %v1711 = vld [vmem:[%s363 + $0x25b8] sm:$0xff]
        %v1712 = vld [vmem:[%s363 + $0x25c0] sm:$0xff]
        %v1713 = vld [vmem:[%s363 + $0x25c8] sm:$0xff]
        %v1714 = vld [vmem:[%s363 + $0x25d0] sm:$0xff]
        %v1715 = vld [vmem:[%s363 + $0x25d8] sm:$0xff]
        %v1716 = vld [vmem:[%s363 + $0x25e0] sm:$0xff]
        %v1717 = vld [vmem:[%s363 + $0x25e8] sm:$0xff]
        %v1718 = vld [vmem:[%s363 + $0x25f0] sm:$0xff]
        %v1719 = vld [vmem:[%s363 + $0x25f8] sm:$0xff]
        %v1720 = vld [vmem:[%s363 + $0x2600] sm:$0xff]
        %v1721 = vld [vmem:[%s363 + $0x2608] sm:$0xff]
        %v1722 = vld [vmem:[%s363 + $0x2610] sm:$0xff]
        %v1723 = vld [vmem:[%s363 + $0x2618] sm:$0xff]
        %v1724 = vld [vmem:[%s363 + $0x2620] sm:$0xff]
        %v1725 = vld [vmem:[%s363 + $0x2628] sm:$0xff]
        %v1726 = vld [vmem:[%s363 + $0x2630] sm:$0xff]
        %v1727 = vld [vmem:[%s363 + $0x2638] sm:$0xff]
        %v1728 = vld [vmem:[%s363 + $0x2640] sm:$0xff]
        %v1729 = vld [vmem:[%s363 + $0x2648] sm:$0xff]
        %v1730 = vld [vmem:[%s363 + $0x2650] sm:$0xff]
        %v1731 = vld [vmem:[%s363 + $0x2658] sm:$0xff]
        %v1732 = vld [vmem:[%s363 + $0x2660] sm:$0xff]
        %v1733 = vld [vmem:[%s363 + $0x2668] sm:$0xff]
        %v1734 = vld [vmem:[%s363 + $0x2670] sm:$0xff]
        %v1735 = vld [vmem:[%s363 + $0x2678] sm:$0xff]
        %v1736 = vld [vmem:[%s363 + $0x2680] sm:$0xff]
        %v1737 = vld [vmem:[%s363 + $0x2688] sm:$0xff]
        %v1738 = vld [vmem:[%s363 + $0x2690] sm:$0xff]
        %v1739 = vld [vmem:[%s363 + $0x2698] sm:$0xff]
        %v1740 = vld [vmem:[%s363 + $0x26a0] sm:$0xff]
        %v1741 = vld [vmem:[%s363 + $0x26a8] sm:$0xff]
        %v1742 = vld [vmem:[%s363 + $0x26b0] sm:$0xff]
        %v1743 = vld [vmem:[%s363 + $0x26b8] sm:$0xff]
        %v1744 = vld [vmem:[%s363 + $0x26c0] sm:$0xff]
        %v1745 = vld [vmem:[%s363 + $0x26c8] sm:$0xff]
        %v1746 = vld [vmem:[%s363 + $0x26d0] sm:$0xff]
        %v1747 = vld [vmem:[%s363 + $0x26d8] sm:$0xff]
        %v1748 = vld [vmem:[%s363 + $0x26e0] sm:$0xff]
        %v1749 = vld [vmem:[%s363 + $0x26e8] sm:$0xff]
        %v1750 = vld [vmem:[%s363 + $0x26f0] sm:$0xff]
        %v1751 = vld [vmem:[%s363 + $0x26f8] sm:$0xff]
        %v1752 = vld [vmem:[%s363 + $0x2700] sm:$0xff]
        %v1753 = vld [vmem:[%s363 + $0x2708] sm:$0xff]
        %v1754 = vld [vmem:[%s363 + $0x2710] sm:$0xff]
        %v1755 = vld [vmem:[%s363 + $0x2718] sm:$0xff]
        %v1756 = vld [vmem:[%s363 + $0x2720] sm:$0xff]
        %v1757 = vld [vmem:[%s363 + $0x2728] sm:$0xff]
        %v1758 = vld [vmem:[%s363 + $0x2730] sm:$0xff]
        %v1759 = vld [vmem:[%s363 + $0x2738] sm:$0xff]
        %v1760 = vld [vmem:[%s363 + $0x2740] sm:$0xff]
        %v1761 = vld [vmem:[%s363 + $0x2748] sm:$0xff]
        %v1762 = vld [vmem:[%s363 + $0x2750] sm:$0xff]
        %v1763 = vld [vmem:[%s363 + $0x2758] sm:$0xff]
        %v1764 = vld [vmem:[%s363 + $0x2760] sm:$0xff]
        %v1765 = vld [vmem:[%s363 + $0x2768] sm:$0xff]
        %v1766 = vld [vmem:[%s363 + $0x2770] sm:$0xff]
        %v1767 = vld [vmem:[%s363 + $0x2778] sm:$0xff]
        %v1768 = vld [vmem:[%s363 + $0x2780] sm:$0xff]
        %v1769 = vld [vmem:[%s363 + $0x2788] sm:$0xff]
        %v1770 = vld [vmem:[%s363 + $0x2790] sm:$0xff]
        %v1771 = vld [vmem:[%s363 + $0x2798] sm:$0xff]
        %v1772 = vld [vmem:[%s363 + $0x27a0] sm:$0xff]
        %v1773 = vld [vmem:[%s363 + $0x27a8] sm:$0xff]
        %v1774 = vld [vmem:[%s363 + $0x27b0] sm:$0xff]
        %v1775 = vld [vmem:[%s363 + $0x27b8] sm:$0xff]
        %v1776 = vld [vmem:[%s363 + $0x27c0] sm:$0xff]
        %v1777 = vld [vmem:[%s363 + $0x27c8] sm:$0xff]
        %v1778 = vld [vmem:[%s363 + $0x27d0] sm:$0xff]
        %v1779 = vld [vmem:[%s363 + $0x27d8] sm:$0xff]
        %v1780 = vld [vmem:[%s363 + $0x27e0] sm:$0xff]
        %v1781 = vld [vmem:[%s363 + $0x27e8] sm:$0xff]
        %v1782 = vld [vmem:[%s363 + $0x27f0] sm:$0xff]
        %v1783 = vld [vmem:[%s363 + $0x27f8] sm:$0xff]
        %v1784 = vld [vmem:[%s363 + $0x2800] sm:$0xff]
        %v1785 = vld [vmem:[%s363 + $0x2808] sm:$0xff]
        %v1786 = vld [vmem:[%s363 + $0x2810] sm:$0xff]
        %v1787 = vld [vmem:[%s363 + $0x2818] sm:$0xff]
        %v1788 = vld [vmem:[%s363 + $0x2820] sm:$0xff]
        %v1789 = vld [vmem:[%s363 + $0x2828] sm:$0xff]
        %v1790 = vld [vmem:[%s363 + $0x2830] sm:$0xff]
        %v1791 = vld [vmem:[%s363 + $0x2838] sm:$0xff]
        %v1792 = vld [vmem:[%s363 + $0x2840] sm:$0xff]
        %v1793 = vld [vmem:[%s363 + $0x2848] sm:$0xff]
        %v1794 = vld [vmem:[%s363 + $0x2850] sm:$0xff]
        %v1795 = vld [vmem:[%s363 + $0x2858] sm:$0xff]
        %v1796 = vld [vmem:[%s363 + $0x2860] sm:$0xff]
        %v1797 = vld [vmem:[%s363 + $0x2868] sm:$0xff]
        %v1798 = vld [vmem:[%s363 + $0x2870] sm:$0xff]
        %v1799 = vld [vmem:[%s363 + $0x2878] sm:$0xff]
        %v1800 = vld [vmem:[%s363 + $0x2880] sm:$0xff]
        %v1801 = vld [vmem:[%s363 + $0x2888] sm:$0xff]
        %v1802 = vld [vmem:[%s363 + $0x2890] sm:$0xff]
        %v1803 = vld [vmem:[%s363 + $0x2898] sm:$0xff]
        %v1804 = vld [vmem:[%s363 + $0x28a0] sm:$0xff]
        %v1805 = vld [vmem:[%s363 + $0x28a8] sm:$0xff]
        %v1806 = vld [vmem:[%s363 + $0x28b0] sm:$0xff]
        %v1807 = vld [vmem:[%s363 + $0x28b8] sm:$0xff]
        %v1808 = vld [vmem:[%s363 + $0x28c0] sm:$0xff]
        %v1809 = vld [vmem:[%s363 + $0x28c8] sm:$0xff]
        %v1810 = vld [vmem:[%s363 + $0x28d0] sm:$0xff]
        %v1811 = vld [vmem:[%s363 + $0x28d8] sm:$0xff]
        %v1812 = vld [vmem:[%s363 + $0x28e0] sm:$0xff]
        %v1813 = vld [vmem:[%s363 + $0x28e8] sm:$0xff]
        %v1814 = vld [vmem:[%s363 + $0x28f0] sm:$0xff]
        %v1815 = vld [vmem:[%s363 + $0x28f8] sm:$0xff]
        %v1816 = vld [vmem:[%s363 + $0x2900] sm:$0xff]
        %v1817 = vld [vmem:[%s363 + $0x2908] sm:$0xff]
        %v1818 = vld [vmem:[%s363 + $0x2910] sm:$0xff]
        %v1819 = vld [vmem:[%s363 + $0x2918] sm:$0xff]
        %v1820 = vld [vmem:[%s363 + $0x2920] sm:$0xff]
        %v1821 = vld [vmem:[%s363 + $0x2928] sm:$0xff]
        %v1822 = vld [vmem:[%s363 + $0x2930] sm:$0xff]
        %v1823 = vld [vmem:[%s363 + $0x2938] sm:$0xff]
        %v1824 = vld [vmem:[%s363 + $0x2940] sm:$0xff]
        %v1825 = vld [vmem:[%s363 + $0x2948] sm:$0xff]
        %v1826 = vld [vmem:[%s363 + $0x2950] sm:$0xff]
        %v1827 = vld [vmem:[%s363 + $0x2958] sm:$0xff]
        %v1828 = vld [vmem:[%s363 + $0x2960] sm:$0xff]
        %v1829 = vld [vmem:[%s363 + $0x2968] sm:$0xff]
        %v1830 = vld [vmem:[%s363 + $0x2970] sm:$0xff]
        %v1831 = vld [vmem:[%s363 + $0x2978] sm:$0xff]
        %v1832 = vld [vmem:[%s363 + $0x2980] sm:$0xff]
        %v1833 = vld [vmem:[%s363 + $0x2988] sm:$0xff]
        %v1834 = vld [vmem:[%s363 + $0x2990] sm:$0xff]
        %v1835 = vld [vmem:[%s363 + $0x2998] sm:$0xff]
        %v1836 = vld [vmem:[%s363 + $0x29a0] sm:$0xff]
        %v1837 = vld [vmem:[%s363 + $0x29a8] sm:$0xff]
        %v1838 = vld [vmem:[%s363 + $0x29b0] sm:$0xff]
        %v1839 = vld [vmem:[%s363 + $0x29b8] sm:$0xff]
        %v1840 = vld [vmem:[%s363 + $0x29c0] sm:$0xff]
        %v1841 = vld [vmem:[%s363 + $0x29c8] sm:$0xff]
        %v1842 = vld [vmem:[%s363 + $0x29d0] sm:$0xff]
        %v1843 = vld [vmem:[%s363 + $0x29d8] sm:$0xff]
        %v1844 = vld [vmem:[%s363 + $0x29e0] sm:$0xff]
        %v1845 = vld [vmem:[%s363 + $0x29e8] sm:$0xff]
        %v1846 = vld [vmem:[%s363 + $0x29f0] sm:$0xff]
        %v1847 = vld [vmem:[%s363 + $0x29f8] sm:$0xff]
        %v1848 = vld [vmem:[%s363 + $0x2a00] sm:$0xff]
        %v1849 = vld [vmem:[%s363 + $0x2a08] sm:$0xff]
        %v1850 = vld [vmem:[%s363 + $0x2a10] sm:$0xff]
        %v1851 = vld [vmem:[%s363 + $0x2a18] sm:$0xff]
        %v1852 = vld [vmem:[%s363 + $0x2a20] sm:$0xff]
        %v1853 = vld [vmem:[%s363 + $0x2a28] sm:$0xff]
        %v1854 = vld [vmem:[%s363 + $0x2a30] sm:$0xff]
        %v1855 = vld [vmem:[%s363 + $0x2a38] sm:$0xff]
        %v1856 = vld [vmem:[%s363 + $0x2a40] sm:$0xff]
        %v1857 = vld [vmem:[%s363 + $0x2a48] sm:$0xff]
        %v1858 = vld [vmem:[%s363 + $0x2a50] sm:$0xff]
        %v1859 = vld [vmem:[%s363 + $0x2a58] sm:$0xff]
        %v1860 = vld [vmem:[%s363 + $0x2a60] sm:$0xff]
        %v1861 = vld [vmem:[%s363 + $0x2a68] sm:$0xff]
        %v1862 = vld [vmem:[%s363 + $0x2a70] sm:$0xff]
        %v1863 = vld [vmem:[%s363 + $0x2a78] sm:$0xff]
        %v1864 = vld [vmem:[%s363 + $0x2a80] sm:$0xff]
        %v1865 = vld [vmem:[%s363 + $0x2a88] sm:$0xff]
        %v1866 = vld [vmem:[%s363 + $0x2a90] sm:$0xff]
        %v1867 = vld [vmem:[%s363 + $0x2a98] sm:$0xff]
        %v1868 = vld [vmem:[%s363 + $0x2aa0] sm:$0xff]
        %v1869 = vld [vmem:[%s363 + $0x2aa8] sm:$0xff]
        %v1870 = vld [vmem:[%s363 + $0x2ab0] sm:$0xff]
        %v1871 = vld [vmem:[%s363 + $0x2ab8] sm:$0xff]
        %v1872 = vld [vmem:[%s363 + $0x2ac0] sm:$0xff]
        %v1873 = vld [vmem:[%s363 + $0x2ac8] sm:$0xff]
        %v1874 = vld [vmem:[%s363 + $0x2ad0] sm:$0xff]
        %v1875 = vld [vmem:[%s363 + $0x2ad8] sm:$0xff]
        %v1876 = vld [vmem:[%s363 + $0x2ae0] sm:$0xff]
        %v1877 = vld [vmem:[%s363 + $0x2ae8] sm:$0xff]
        %v1878 = vld [vmem:[%s363 + $0x2af0] sm:$0xff]
        %v1879 = vld [vmem:[%s363 + $0x2af8] sm:$0xff]
        %v1880 = vld [vmem:[%s363 + $0x2b00] sm:$0xff]
        %v1881 = vld [vmem:[%s363 + $0x2b08] sm:$0xff]
        %v1882 = vld [vmem:[%s363 + $0x2b10] sm:$0xff]
        %v1883 = vld [vmem:[%s363 + $0x2b18] sm:$0xff]
        %v1884 = vld [vmem:[%s363 + $0x2b20] sm:$0xff]
        %v1885 = vld [vmem:[%s363 + $0x2b28] sm:$0xff]
        %v1886 = vld [vmem:[%s363 + $0x2b30] sm:$0xff]
        %v1887 = vld [vmem:[%s363 + $0x2b38] sm:$0xff]
        %v1888 = vld [vmem:[%s363 + $0x2b40] sm:$0xff]
        %v1889 = vld [vmem:[%s363 + $0x2b48] sm:$0xff]
        %v1890 = vld [vmem:[%s363 + $0x2b50] sm:$0xff]
        %v1891 = vld [vmem:[%s363 + $0x2b58] sm:$0xff]
        %v1892 = vld [vmem:[%s363 + $0x2b60] sm:$0xff]
        %v1893 = vld [vmem:[%s363 + $0x2b68] sm:$0xff]
        %v1894 = vld [vmem:[%s363 + $0x2b70] sm:$0xff]
        %v1895 = vld [vmem:[%s363 + $0x2b78] sm:$0xff]
        %v1896 = vld [vmem:[%s363 + $0x2b80] sm:$0xff]
        %v1897 = vld [vmem:[%s363 + $0x2b88] sm:$0xff]
        %v1898 = vld [vmem:[%s363 + $0x2b90] sm:$0xff]
        %v1899 = vld [vmem:[%s363 + $0x2b98] sm:$0xff]
        %v1900 = vld [vmem:[%s363 + $0x2ba0] sm:$0xff]
        %v1901 = vld [vmem:[%s363 + $0x2ba8] sm:$0xff]
        %v1902 = vld [vmem:[%s363 + $0x2bb0] sm:$0xff]
        %v1903 = vld [vmem:[%s363 + $0x2bb8] sm:$0xff]
        %v1904 = vld [vmem:[%s363 + $0x2bc0] sm:$0xff]
        %v1905 = vld [vmem:[%s363 + $0x2bc8] sm:$0xff]
        %v1906 = vld [vmem:[%s363 + $0x2bd0] sm:$0xff]
        %v1907 = vld [vmem:[%s363 + $0x2bd8] sm:$0xff]
        %v1908 = vld [vmem:[%s363 + $0x2be0] sm:$0xff]
        %v1909 = vld [vmem:[%s363 + $0x2be8] sm:$0xff]
        %v1910 = vld [vmem:[%s363 + $0x2bf0] sm:$0xff]
        %v1911 = vld [vmem:[%s363 + $0x2bf8] sm:$0xff]
        %v1912 = vld [vmem:[%s363 + $0x2c00] sm:$0xff]
        %v1913 = vld [vmem:[%s363 + $0x2c08] sm:$0xff]
        %v1914 = vld [vmem:[%s363 + $0x2c10] sm:$0xff]
        %v1915 = vld [vmem:[%s363 + $0x2c18] sm:$0xff]
        %v1916 = vld [vmem:[%s363 + $0x2c20] sm:$0xff]
        %v1917 = vld [vmem:[%s363 + $0x2c28] sm:$0xff]
        %v1918 = vld [vmem:[%s363 + $0x2c30] sm:$0xff]
        %v1919 = vld [vmem:[%s363 + $0x2c38] sm:$0xff]
        %v1920 = vld [vmem:[%s363 + $0x2c40] sm:$0xff]
        %v1921 = vld [vmem:[%s363 + $0x2c48] sm:$0xff]
        %v1922 = vld [vmem:[%s363 + $0x2c50] sm:$0xff]
        %v1923 = vld [vmem:[%s363 + $0x2c58] sm:$0xff]
        %v1924 = vld [vmem:[%s363 + $0x2c60] sm:$0xff]
        %v1925 = vld [vmem:[%s363 + $0x2c68] sm:$0xff]
        %v1926 = vld [vmem:[%s363 + $0x2c70] sm:$0xff]
        %v1927 = vld [vmem:[%s363 + $0x2c78] sm:$0xff]
        %v1928 = vld [vmem:[%s363 + $0x2c80] sm:$0xff]
        %v1929 = vld [vmem:[%s363 + $0x2c88] sm:$0xff]
        %v1930 = vld [vmem:[%s363 + $0x2c90] sm:$0xff]
        %v1931 = vld [vmem:[%s363 + $0x2c98] sm:$0xff]
        %v1932 = vld [vmem:[%s363 + $0x2ca0] sm:$0xff]
        %v1933 = vld [vmem:[%s363 + $0x2ca8] sm:$0xff]
        %v1934 = vld [vmem:[%s363 + $0x2cb0] sm:$0xff]
        %v1935 = vld [vmem:[%s363 + $0x2cb8] sm:$0xff]
        %v1936 = vld [vmem:[%s363 + $0x2cc0] sm:$0xff]
        %v1937 = vld [vmem:[%s363 + $0x2cc8] sm:$0xff]
        %v1938 = vld [vmem:[%s363 + $0x2cd0] sm:$0xff]
        %v1939 = vld [vmem:[%s363 + $0x2cd8] sm:$0xff]
        %v1940 = vld [vmem:[%s363 + $0x2ce0] sm:$0xff]
        %v1941 = vld [vmem:[%s363 + $0x2ce8] sm:$0xff]
        %v1942 = vld [vmem:[%s363 + $0x2cf0] sm:$0xff]
        %v1943 = vld [vmem:[%s363 + $0x2cf8] sm:$0xff]
        %v1944 = vld [vmem:[%s363 + $0x2d00] sm:$0xff]
        %v1945 = vld [vmem:[%s363 + $0x2d08] sm:$0xff]
        %v1946 = vld [vmem:[%s363 + $0x2d10] sm:$0xff]
        %v1947 = vld [vmem:[%s363 + $0x2d18] sm:$0xff]
        %v1948 = vld [vmem:[%s363 + $0x2d20] sm:$0xff]
        %v1949 = vld [vmem:[%s363 + $0x2d28] sm:$0xff]
        %v1950 = vld [vmem:[%s363 + $0x2d30] sm:$0xff]
        %v1951 = vld [vmem:[%s363 + $0x2d38] sm:$0xff]
        %v1952 = vld [vmem:[%s363 + $0x2d40] sm:$0xff]
        %v1953 = vld [vmem:[%s363 + $0x2d48] sm:$0xff]
        %v1954 = vld [vmem:[%s363 + $0x2d50] sm:$0xff]
        %v1955 = vld [vmem:[%s363 + $0x2d58] sm:$0xff]
        %v1956 = vld [vmem:[%s363 + $0x2d60] sm:$0xff]
        %v1957 = vld [vmem:[%s363 + $0x2d68] sm:$0xff]
        %v1958 = vld [vmem:[%s363 + $0x2d70] sm:$0xff]
        %v1959 = vld [vmem:[%s363 + $0x2d78] sm:$0xff]
        %v1960 = vld [vmem:[%s363 + $0x2d80] sm:$0xff]
        %v1961 = vld [vmem:[%s363 + $0x2d88] sm:$0xff]
        %v1962 = vld [vmem:[%s363 + $0x2d90] sm:$0xff]
        %v1963 = vld [vmem:[%s363 + $0x2d98] sm:$0xff]
        %v1964 = vld [vmem:[%s363 + $0x2da0] sm:$0xff]
        %v1965 = vld [vmem:[%s363 + $0x2da8] sm:$0xff]
        %v1966 = vld [vmem:[%s363 + $0x2db0] sm:$0xff]
        %v1967 = vld [vmem:[%s363 + $0x2db8] sm:$0xff]
        %v1968 = vld [vmem:[%s363 + $0x2dc0] sm:$0xff]
        %v1969 = vld [vmem:[%s363 + $0x2dc8] sm:$0xff]
        %v1970 = vld [vmem:[%s363 + $0x2dd0] sm:$0xff]
        %v1971 = vld [vmem:[%s363 + $0x2dd8] sm:$0xff]
        %v1972 = vld [vmem:[%s363 + $0x2de0] sm:$0xff]
        %v1973 = vld [vmem:[%s363 + $0x2de8] sm:$0xff]
        %v1974 = vld [vmem:[%s363 + $0x2df0] sm:$0xff]
        %v1975 = vld [vmem:[%s363 + $0x2df8] sm:$0xff]
        %v1976 = vld [vmem:[%s363 + $0x2e00] sm:$0xff]
        %v1977 = vld [vmem:[%s363 + $0x2e08] sm:$0xff]
        %v1978 = vld [vmem:[%s363 + $0x2e10] sm:$0xff]
        %v1979 = vld [vmem:[%s363 + $0x2e18] sm:$0xff]
        %v1980 = vld [vmem:[%s363 + $0x2e20] sm:$0xff]
        %v1981 = vld [vmem:[%s363 + $0x2e28] sm:$0xff]
        %v1982 = vld [vmem:[%s363 + $0x2e30] sm:$0xff]
        %v1983 = vld [vmem:[%s363 + $0x2e38] sm:$0xff]
        %v1984 = vld [vmem:[%s363 + $0x2e40] sm:$0xff]
        %v1985 = vld [vmem:[%s363 + $0x2e48] sm:$0xff]
        %v1986 = vld [vmem:[%s363 + $0x2e50] sm:$0xff]
        %v1987 = vld [vmem:[%s363 + $0x2e58] sm:$0xff]
        %v1988 = vld [vmem:[%s363 + $0x2e60] sm:$0xff]
        %v1989 = vld [vmem:[%s363 + $0x2e68] sm:$0xff]
        %v1990 = vld [vmem:[%s363 + $0x2e70] sm:$0xff]
        %v1991 = vld [vmem:[%s363 + $0x2e78] sm:$0xff]
        %v1992 = vld [vmem:[%s363 + $0x2e80] sm:$0xff]
        %v1993 = vld [vmem:[%s363 + $0x2e88] sm:$0xff]
        %v1994 = vld [vmem:[%s363 + $0x2e90] sm:$0xff]
        %v1995 = vld [vmem:[%s363 + $0x2e98] sm:$0xff]
        %v1996 = vld [vmem:[%s363 + $0x2ea0] sm:$0xff]
        %v1997 = vld [vmem:[%s363 + $0x2ea8] sm:$0xff]
        %v1998 = vld [vmem:[%s363 + $0x2eb0] sm:$0xff]
        %v1999 = vld [vmem:[%s363 + $0x2eb8] sm:$0xff]
        %v2000 = vld [vmem:[%s363 + $0x2ec0] sm:$0xff]
        %v2001 = vld [vmem:[%s363 + $0x2ec8] sm:$0xff]
        %v2002 = vld [vmem:[%s363 + $0x2ed0] sm:$0xff]
        %v2003 = vld [vmem:[%s363 + $0x2ed8] sm:$0xff]
        %v2004 = vld [vmem:[%s363 + $0x2ee0] sm:$0xff]
        %v2005 = vld [vmem:[%s363 + $0x2ee8] sm:$0xff]
        %v2006 = vld [vmem:[%s363 + $0x2ef0] sm:$0xff]
        %v2007 = vld [vmem:[%s363 + $0x2ef8] sm:$0xff]
        %v2008 = vld [vmem:[%s363 + $0x2f00] sm:$0xff]
        %v2009 = vld [vmem:[%s363 + $0x2f08] sm:$0xff]
        %v2010 = vld [vmem:[%s363 + $0x2f10] sm:$0xff]
        %v2011 = vld [vmem:[%s363 + $0x2f18] sm:$0xff]
        %v2012 = vld [vmem:[%s363 + $0x2f20] sm:$0xff]
        %v2013 = vld [vmem:[%s363 + $0x2f28] sm:$0xff]
        %v2014 = vld [vmem:[%s363 + $0x2f30] sm:$0xff]
        %v2015 = vld [vmem:[%s363 + $0x2f38] sm:$0xff]
        %v2016 = vld [vmem:[%s363 + $0x2f40] sm:$0xff]
        %v2017 = vld [vmem:[%s363 + $0x2f48] sm:$0xff]
        %v2018 = vld [vmem:[%s363 + $0x2f50] sm:$0xff]
        %v2019 = vld [vmem:[%s363 + $0x2f58] sm:$0xff]
        %v2020 = vld [vmem:[%s363 + $0x2f60] sm:$0xff]
        %v2021 = vld [vmem:[%s363 + $0x2f68] sm:$0xff]
        %v2022 = vld [vmem:[%s363 + $0x2f70] sm:$0xff]
        %v2023 = vld [vmem:[%s363 + $0x2f78] sm:$0xff]
        %v2024 = vld [vmem:[%s363 + $0x2f80] sm:$0xff]
        %v2025 = vld [vmem:[%s363 + $0x2f88] sm:$0xff]
        %v2026 = vld [vmem:[%s363 + $0x2f90] sm:$0xff]
        %v2027 = vld [vmem:[%s363 + $0x2f98] sm:$0xff]
        %v2028 = vld [vmem:[%s363 + $0x2fa0] sm:$0xff]
        %v2029 = vld [vmem:[%s363 + $0x2fa8] sm:$0xff]
        %v2030 = vld [vmem:[%s363 + $0x2fb0] sm:$0xff]
        %v2031 = vld [vmem:[%s363 + $0x2fb8] sm:$0xff]
        %v2032 = vld [vmem:[%s363 + $0x2fc0] sm:$0xff]
        %v2033 = vld [vmem:[%s363 + $0x2fc8] sm:$0xff]
        %v2034 = vld [vmem:[%s363 + $0x2fd0] sm:$0xff]
        %v2035 = vld [vmem:[%s363 + $0x2fd8] sm:$0xff]
        %v2036 = vld [vmem:[%s363 + $0x2fe0] sm:$0xff]
        %v2037 = vld [vmem:[%s363 + $0x2fe8] sm:$0xff]
        %v2038 = vld [vmem:[%s363 + $0x2ff0] sm:$0xff]
        %v2039 = vld [vmem:[%s363 + $0x2ff8] sm:$0xff]
        %v2040 = vld [vmem:[%s363 + $0x3000] sm:$0xff]
        %v2041 = vld [vmem:[%s363 + $0x3008] sm:$0xff]
        %v2042 = vld [vmem:[%s363 + $0x3010] sm:$0xff]
        %v2043 = vld [vmem:[%s363 + $0x3018] sm:$0xff]
        %v2044 = vld [vmem:[%s363 + $0x3020] sm:$0xff]
        %v2045 = vld [vmem:[%s363 + $0x3028] sm:$0xff]
        %v2046 = vld [vmem:[%s363 + $0x3030] sm:$0xff]
        %v2047 = vld [vmem:[%s363 + $0x3038] sm:$0xff]
        %v2048 = vld [vmem:[%s363 + $0x3040] sm:$0xff]
        %v2049 = vld [vmem:[%s363 + $0x3048] sm:$0xff]
        %v2050 = vld [vmem:[%s363 + $0x3050] sm:$0xff]
        %v2051 = vld [vmem:[%s363 + $0x3058] sm:$0xff]
        %v2052 = vld [vmem:[%s363 + $0x3060] sm:$0xff]
        %v2053 = vld [vmem:[%s363 + $0x3068] sm:$0xff]
        %v2054 = vld [vmem:[%s363 + $0x3070] sm:$0xff]
        %v2055 = vld [vmem:[%s363 + $0x3078] sm:$0xff]
        %v2056 = vld [vmem:[%s363 + $0x3080] sm:$0xff]
        %v2057 = vld [vmem:[%s363 + $0x3088] sm:$0xff]
        %v2058 = vld [vmem:[%s363 + $0x3090] sm:$0xff]
        %v2059 = vld [vmem:[%s363 + $0x3098] sm:$0xff]
        %v2060 = vld [vmem:[%s363 + $0x30a0] sm:$0xff]
        %v2061 = vld [vmem:[%s363 + $0x30a8] sm:$0xff]
        %v2062 = vld [vmem:[%s363 + $0x30b0] sm:$0xff]
        %v2063 = vld [vmem:[%s363 + $0x30b8] sm:$0xff]
        %v2064 = vld [vmem:[%s363 + $0x30c0] sm:$0xff]
        %v2065 = vld [vmem:[%s363 + $0x30c8] sm:$0xff]
        %v2066 = vld [vmem:[%s363 + $0x30d0] sm:$0xff]
        %v2067 = vld [vmem:[%s363 + $0x30d8] sm:$0xff]
        %v2068 = vld [vmem:[%s363 + $0x30e0] sm:$0xff]
        %v2069 = vld [vmem:[%s363 + $0x30e8] sm:$0xff]
        %v2070 = vld [vmem:[%s363 + $0x30f0] sm:$0xff]
        %v2071 = vld [vmem:[%s363 + $0x30f8] sm:$0xff]
        %v2072 = vld [vmem:[%s363 + $0x3100] sm:$0xff]
        %v2073 = vld [vmem:[%s363 + $0x3108] sm:$0xff]
        %v2074 = vld [vmem:[%s363 + $0x3110] sm:$0xff]
        %v2075 = vld [vmem:[%s363 + $0x3118] sm:$0xff]
        %v2076 = vld [vmem:[%s363 + $0x3120] sm:$0xff]
        %v2077 = vld [vmem:[%s363 + $0x3128] sm:$0xff]
        %v2078 = vld [vmem:[%s363 + $0x3130] sm:$0xff]
        %v2079 = vld [vmem:[%s363 + $0x3138] sm:$0xff]
        %v2080 = vld [vmem:[%s363 + $0x3140] sm:$0xff]
        %v2081 = vld [vmem:[%s363 + $0x3148] sm:$0xff]
        %v2082 = vld [vmem:[%s363 + $0x3150] sm:$0xff]
        %v2083 = vld [vmem:[%s363 + $0x3158] sm:$0xff]
        %v2084 = vld [vmem:[%s363 + $0x3160] sm:$0xff]
        %v2085 = vld [vmem:[%s363 + $0x3168] sm:$0xff]
        %v2086 = vld [vmem:[%s363 + $0x3170] sm:$0xff]
        %v2087 = vld [vmem:[%s363 + $0x3178] sm:$0xff]
        %v2088 = vld [vmem:[%s363 + $0x3180] sm:$0xff]
        %v2089 = vld [vmem:[%s363 + $0x3188] sm:$0xff]
        %v2090 = vld [vmem:[%s363 + $0x3190] sm:$0xff]
        %v2091 = vld [vmem:[%s363 + $0x3198] sm:$0xff]
        %v2092 = vld [vmem:[%s363 + $0x31a0] sm:$0xff]
        %v2093 = vld [vmem:[%s363 + $0x31a8] sm:$0xff]
        %v2094 = vld [vmem:[%s363 + $0x31b0] sm:$0xff]
        %v2095 = vld [vmem:[%s363 + $0x31b8] sm:$0xff]
        %v2096 = vld [vmem:[%s363 + $0x31c0] sm:$0xff]
        %v2097 = vld [vmem:[%s363 + $0x31c8] sm:$0xff]
        %v2098 = vld [vmem:[%s363 + $0x31d0] sm:$0xff]
        %v2099 = vld [vmem:[%s363 + $0x31d8] sm:$0xff]
        %v2100 = vld [vmem:[%s363 + $0x31e0] sm:$0xff]
        %v2101 = vld [vmem:[%s363 + $0x31e8] sm:$0xff]
        %v2102 = vld [vmem:[%s363 + $0x31f0] sm:$0xff]
        %v2103 = vld [vmem:[%s363 + $0x31f8] sm:$0xff]
        %v2104 = vld [vmem:[%s363 + $0x3200] sm:$0xff]
        %v2105 = vld [vmem:[%s363 + $0x3208] sm:$0xff]
        %v2106 = vld [vmem:[%s363 + $0x3210] sm:$0xff]
        %v2107 = vld [vmem:[%s363 + $0x3218] sm:$0xff]
        %v2108 = vld [vmem:[%s363 + $0x3220] sm:$0xff]
        %v2109 = vld [vmem:[%s363 + $0x3228] sm:$0xff]
        %v2110 = vld [vmem:[%s363 + $0x3230] sm:$0xff]
        %v2111 = vld [vmem:[%s363 + $0x3238] sm:$0xff]
        %v2112 = vld [vmem:[%s363 + $0x3240] sm:$0xff]
        %v2113 = vld [vmem:[%s363 + $0x3248] sm:$0xff]
        %v2114 = vld [vmem:[%s363 + $0x3250] sm:$0xff]
        %v2115 = vld [vmem:[%s363 + $0x3258] sm:$0xff]
        %v2116 = vld [vmem:[%s363 + $0x3260] sm:$0xff]
        %v2117 = vld [vmem:[%s363 + $0x3268] sm:$0xff]
        %v2118 = vld [vmem:[%s363 + $0x3270] sm:$0xff]
        %v2119 = vld [vmem:[%s363 + $0x3278] sm:$0xff]
        %v2120 = vld [vmem:[%s363 + $0x3280] sm:$0xff]
        %v2121 = vld [vmem:[%s363 + $0x3288] sm:$0xff]
        %v2122 = vld [vmem:[%s363 + $0x3290] sm:$0xff]
        %v2123 = vld [vmem:[%s363 + $0x3298] sm:$0xff]
        %v2124 = vld [vmem:[%s363 + $0x32a0] sm:$0xff]
        %v2125 = vld [vmem:[%s363 + $0x32a8] sm:$0xff]
        %v2126 = vld [vmem:[%s363 + $0x32b0] sm:$0xff]
        %v2127 = vld [vmem:[%s363 + $0x32b8] sm:$0xff]
        %v2128 = vld [vmem:[%s363 + $0x32c0] sm:$0xff]
        %v2129 = vld [vmem:[%s363 + $0x32c8] sm:$0xff]
        %v2130 = vld [vmem:[%s363 + $0x32d0] sm:$0xff]
        %v2131 = vld [vmem:[%s363 + $0x32d8] sm:$0xff]
        %v2132 = vld [vmem:[%s363 + $0x32e0] sm:$0xff]
        %v2133 = vld [vmem:[%s363 + $0x32e8] sm:$0xff]
        %v2134 = vld [vmem:[%s363 + $0x32f0] sm:$0xff]
        %v2135 = vld [vmem:[%s363 + $0x32f8] sm:$0xff]
        %v2136 = vld [vmem:[%s363 + $0x3300] sm:$0xff]
        %v2137 = vld [vmem:[%s363 + $0x3308] sm:$0xff]
        %v2138 = vld [vmem:[%s363 + $0x3310] sm:$0xff]
        %v2139 = vld [vmem:[%s363 + $0x3318] sm:$0xff]
        %v2140 = vld [vmem:[%s363 + $0x3320] sm:$0xff]
        %v2141 = vld [vmem:[%s363 + $0x3328] sm:$0xff]
        %v2142 = vld [vmem:[%s363 + $0x3330] sm:$0xff]
        %v2143 = vld [vmem:[%s363 + $0x3338] sm:$0xff]
        %v2144 = vld [vmem:[%s363 + $0x3340] sm:$0xff]
        %v2145 = vld [vmem:[%s363 + $0x3348] sm:$0xff]
        %v2146 = vld [vmem:[%s363 + $0x3350] sm:$0xff]
        %v2147 = vld [vmem:[%s363 + $0x3358] sm:$0xff]
        %v2148 = vld [vmem:[%s363 + $0x3360] sm:$0xff]
        %v2149 = vld [vmem:[%s363 + $0x3368] sm:$0xff]
        %v2150 = vld [vmem:[%s363 + $0x3370] sm:$0xff]
        %v2151 = vld [vmem:[%s363 + $0x3378] sm:$0xff]
        %v2152 = vld [vmem:[%s363 + $0x3380] sm:$0xff]
        %v2153 = vld [vmem:[%s363 + $0x3388] sm:$0xff]
        %v2154 = vld [vmem:[%s363 + $0x3390] sm:$0xff]
        %v2155 = vld [vmem:[%s363 + $0x3398] sm:$0xff]
        %v2156 = vld [vmem:[%s363 + $0x33a0] sm:$0xff]
        %v2157 = vld [vmem:[%s363 + $0x33a8] sm:$0xff]
        %v2158 = vld [vmem:[%s363 + $0x33b0] sm:$0xff]
        %v2159 = vld [vmem:[%s363 + $0x33b8] sm:$0xff]
        %v2160 = vld [vmem:[%s363 + $0x33c0] sm:$0xff]
        %v2161 = vld [vmem:[%s363 + $0x33c8] sm:$0xff]
        %v2162 = vld [vmem:[%s363 + $0x33d0] sm:$0xff]
        %v2163 = vld [vmem:[%s363 + $0x33d8] sm:$0xff]
        %v2164 = vld [vmem:[%s363 + $0x33e0] sm:$0xff]
        %v2165 = vld [vmem:[%s363 + $0x33e8] sm:$0xff]
        %v2166 = vld [vmem:[%s363 + $0x33f0] sm:$0xff]
        %v2167 = vld [vmem:[%s363 + $0x33f8] sm:$0xff]
        %v2168 = vld [vmem:[%s363 + $0x3400] sm:$0xff]
        %v2169 = vld [vmem:[%s363 + $0x3408] sm:$0xff]
        %v2170 = vld [vmem:[%s363 + $0x3410] sm:$0xff]
        %v2171 = vld [vmem:[%s363 + $0x3418] sm:$0xff]
        %v2172 = vld [vmem:[%s363 + $0x3420] sm:$0xff]
        %v2173 = vld [vmem:[%s363 + $0x3428] sm:$0xff]
        %v2174 = vld [vmem:[%s363 + $0x3430] sm:$0xff]
        %v2175 = vld [vmem:[%s363 + $0x3438] sm:$0xff]
        %v2176 = vld [vmem:[%s363 + $0x3440] sm:$0xff]
        %v2177 = vld [vmem:[%s363 + $0x3448] sm:$0xff]
        %v2178 = vld [vmem:[%s363 + $0x3450] sm:$0xff]
        %v2179 = vld [vmem:[%s363 + $0x3458] sm:$0xff]
        %v2180 = vld [vmem:[%s363 + $0x3460] sm:$0xff]
        %v2181 = vld [vmem:[%s363 + $0x3468] sm:$0xff]
        %v2182 = vld [vmem:[%s363 + $0x3470] sm:$0xff]
        %v2183 = vld [vmem:[%s363 + $0x3478] sm:$0xff]
        %v2184 = vld [vmem:[%s363 + $0x3480] sm:$0xff]
        %v2185 = vld [vmem:[%s363 + $0x3488] sm:$0xff]
        %v2186 = vld [vmem:[%s363 + $0x3490] sm:$0xff]
        %v2187 = vld [vmem:[%s363 + $0x3498] sm:$0xff]
        %v2188 = vld [vmem:[%s363 + $0x34a0] sm:$0xff]
        %v2189 = vld [vmem:[%s363 + $0x34a8] sm:$0xff]
        %v2190 = vld [vmem:[%s363 + $0x34b0] sm:$0xff]
        %v2191 = vld [vmem:[%s363 + $0x34b8] sm:$0xff]
        %v2192 = vld [vmem:[%s363 + $0x34c0] sm:$0xff]
        %v2193 = vld [vmem:[%s363 + $0x34c8] sm:$0xff]
        %v2194 = vld [vmem:[%s363 + $0x34d0] sm:$0xff]
        %v2195 = vld [vmem:[%s363 + $0x34d8] sm:$0xff]
        %v2196 = vld [vmem:[%s363 + $0x34e0] sm:$0xff]
        %v2197 = vld [vmem:[%s363 + $0x34e8] sm:$0xff]
        %v2198 = vld [vmem:[%s363 + $0x34f0] sm:$0xff]
        %v2199 = vld [vmem:[%s363 + $0x34f8] sm:$0xff]
        %v2200 = vld [vmem:[%s363 + $0x3500] sm:$0xff]
        %v2201 = vld [vmem:[%s363 + $0x3508] sm:$0xff]
        %v2202 = vld [vmem:[%s363 + $0x3510] sm:$0xff]
        %v2203 = vld [vmem:[%s363 + $0x3518] sm:$0xff]
        %v2204 = vld [vmem:[%s363 + $0x3520] sm:$0xff]
        %v2205 = vld [vmem:[%s363 + $0x3528] sm:$0xff]
        %v2206 = vld [vmem:[%s363 + $0x3530] sm:$0xff]
        %v2207 = vld [vmem:[%s363 + $0x3538] sm:$0xff]
        %v2208 = vld [vmem:[%s363 + $0x3540] sm:$0xff]
        %v2209 = vld [vmem:[%s363 + $0x3548] sm:$0xff]
        %v2210 = vld [vmem:[%s363 + $0x3550] sm:$0xff]
        %v2211 = vld [vmem:[%s363 + $0x3558] sm:$0xff]
        %v2212 = vld [vmem:[%s363 + $0x3560] sm:$0xff]
        %v2213 = vld [vmem:[%s363 + $0x3568] sm:$0xff]
        %v2214 = vld [vmem:[%s363 + $0x3570] sm:$0xff]
        %v2215 = vld [vmem:[%s363 + $0x3578] sm:$0xff]
        %v2216 = vld [vmem:[%s363 + $0x3580] sm:$0xff]
        %v2217 = vld [vmem:[%s363 + $0x3588] sm:$0xff]
        %v2218 = vld [vmem:[%s363 + $0x3590] sm:$0xff]
        %v2219 = vld [vmem:[%s363 + $0x3598] sm:$0xff]
        %v2220 = vld [vmem:[%s363 + $0x35a0] sm:$0xff]
        %v2221 = vld [vmem:[%s363 + $0x35a8] sm:$0xff]
        %v2222 = vld [vmem:[%s363 + $0x35b0] sm:$0xff]
        %v2223 = vld [vmem:[%s363 + $0x35b8] sm:$0xff]
        %v2224 = vld [vmem:[%s363 + $0x35c0] sm:$0xff]
        %v2225 = vld [vmem:[%s363 + $0x35c8] sm:$0xff]
        %v2226 = vld [vmem:[%s363 + $0x35d0] sm:$0xff]
        %v2227 = vld [vmem:[%s363 + $0x35d8] sm:$0xff]
        %v2228 = vld [vmem:[%s363 + $0x35e0] sm:$0xff]
        %v2229 = vld [vmem:[%s363 + $0x35e8] sm:$0xff]
        %v2230 = vld [vmem:[%s363 + $0x35f0] sm:$0xff]
        %v2231 = vld [vmem:[%s363 + $0x35f8] sm:$0xff]
        %v2232 = vld [vmem:[%s363 + $0x3600] sm:$0xff]
        %v2233 = vld [vmem:[%s363 + $0x3608] sm:$0xff]
        %v2234 = vld [vmem:[%s363 + $0x3610] sm:$0xff]
        %v2235 = vld [vmem:[%s363 + $0x3618] sm:$0xff]
        %v2236 = vld [vmem:[%s363 + $0x3620] sm:$0xff]
        %v2237 = vld [vmem:[%s363 + $0x3628] sm:$0xff]
        %v2238 = vld [vmem:[%s363 + $0x3630] sm:$0xff]
        %v2239 = vld [vmem:[%s363 + $0x3638] sm:$0xff]
        %v2240 = vld [vmem:[%s363 + $0x3640] sm:$0xff]
        %v2241 = vld [vmem:[%s363 + $0x3648] sm:$0xff]
        %v2242 = vld [vmem:[%s363 + $0x3650] sm:$0xff]
        %v2243 = vld [vmem:[%s363 + $0x3658] sm:$0xff]
        %v2244 = vld [vmem:[%s363 + $0x3660] sm:$0xff]
        %v2245 = vld [vmem:[%s363 + $0x3668] sm:$0xff]
        %v2246 = vld [vmem:[%s363 + $0x3670] sm:$0xff]
        %v2247 = vld [vmem:[%s363 + $0x3678] sm:$0xff]
        %v2248 = vld [vmem:[%s363 + $0x3680] sm:$0xff]
        %v2249 = vld [vmem:[%s363 + $0x3688] sm:$0xff]
        %v2250 = vld [vmem:[%s363 + $0x3690] sm:$0xff]
        %v2251 = vld [vmem:[%s363 + $0x3698] sm:$0xff]
        %v2252 = vld [vmem:[%s363 + $0x36a0] sm:$0xff]
        %v2253 = vld [vmem:[%s363 + $0x36a8] sm:$0xff]
        %v2254 = vld [vmem:[%s363 + $0x36b0] sm:$0xff]
        %v2255 = vld [vmem:[%s363 + $0x36b8] sm:$0xff]
        %v2256 = vld [vmem:[%s363 + $0x36c0] sm:$0xff]
        %v2257 = vld [vmem:[%s363 + $0x36c8] sm:$0xff]
        %v2258 = vld [vmem:[%s363 + $0x36d0] sm:$0xff]
        %v2259 = vld [vmem:[%s363 + $0x36d8] sm:$0xff]
        %v2260 = vld [vmem:[%s363 + $0x36e0] sm:$0xff]
        %v2261 = vld [vmem:[%s363 + $0x36e8] sm:$0xff]
        %v2262 = vld [vmem:[%s363 + $0x36f0] sm:$0xff]
        %v2263 = vld [vmem:[%s363 + $0x36f8] sm:$0xff]
        %v2264 = vld [vmem:[%s363 + $0x3700] sm:$0xff]
        %v2265 = vld [vmem:[%s363 + $0x3708] sm:$0xff]
        %v2266 = vld [vmem:[%s363 + $0x3710] sm:$0xff]
        %v2267 = vld [vmem:[%s363 + $0x3718] sm:$0xff]
        %v2268 = vld [vmem:[%s363 + $0x3720] sm:$0xff]
        %v2269 = vld [vmem:[%s363 + $0x3728] sm:$0xff]
        %v2270 = vld [vmem:[%s363 + $0x3730] sm:$0xff]
        %v2271 = vld [vmem:[%s363 + $0x3738] sm:$0xff]
        %v2272 = vld [vmem:[%s363 + $0x3740] sm:$0xff]
        %v2273 = vld [vmem:[%s363 + $0x3748] sm:$0xff]
        %v2274 = vld [vmem:[%s363 + $0x3750] sm:$0xff]
        %v2275 = vld [vmem:[%s363 + $0x3758] sm:$0xff]
        %v2276 = vld [vmem:[%s363 + $0x3760] sm:$0xff]
        %v2277 = vld [vmem:[%s363 + $0x3768] sm:$0xff]
        %v2278 = vld [vmem:[%s363 + $0x3770] sm:$0xff]
        %v2279 = vld [vmem:[%s363 + $0x3778] sm:$0xff]
        %v2280 = vld [vmem:[%s363 + $0x3780] sm:$0xff]
        %v2281 = vld [vmem:[%s363 + $0x3788] sm:$0xff]
        %v2282 = vld [vmem:[%s363 + $0x3790] sm:$0xff]
        %v2283 = vld [vmem:[%s363 + $0x3798] sm:$0xff]
        %v2284 = vld [vmem:[%s363 + $0x37a0] sm:$0xff]
        %v2285 = vld [vmem:[%s363 + $0x37a8] sm:$0xff]
        %v2286 = vld [vmem:[%s363 + $0x37b0] sm:$0xff]
        %v2287 = vld [vmem:[%s363 + $0x37b8] sm:$0xff]
        %v2288 = vld [vmem:[%s363 + $0x37c0] sm:$0xff]
        %v2289 = vld [vmem:[%s363 + $0x37c8] sm:$0xff]
        %v2290 = vld [vmem:[%s363 + $0x37d0] sm:$0xff]
        %v2291 = vld [vmem:[%s363 + $0x37d8] sm:$0xff]
        %v2292 = vld [vmem:[%s363 + $0x37e0] sm:$0xff]
        %v2293 = vld [vmem:[%s363 + $0x37e8] sm:$0xff]
        %v2294 = vld [vmem:[%s363 + $0x37f0] sm:$0xff]
        %v2295 = vld [vmem:[%s363 + $0x37f8] sm:$0xff]
        %v2296 = vld [vmem:[%s363 + $0x3800] sm:$0xff]
        %v2297 = vld [vmem:[%s363 + $0x3808] sm:$0xff]
        %v2298 = vld [vmem:[%s363 + $0x3810] sm:$0xff]
        %v2299 = vld [vmem:[%s363 + $0x3818] sm:$0xff]
        %v2300 = vld [vmem:[%s363 + $0x3820] sm:$0xff]
        %v2301 = vld [vmem:[%s363 + $0x3828] sm:$0xff]
        %v2302 = vld [vmem:[%s363 + $0x3830] sm:$0xff]
        %v2303 = vld [vmem:[%s363 + $0x3838] sm:$0xff]
        %v2304 = vld [vmem:[%s363 + $0x3840] sm:$0xff]
        %v2305 = vld [vmem:[%s363 + $0x3848] sm:$0xff]
        %v2306 = vld [vmem:[%s363 + $0x3850] sm:$0xff]
        %v2307 = vld [vmem:[%s363 + $0x3858] sm:$0xff]
        %v2308 = vld [vmem:[%s363 + $0x3860] sm:$0xff]
        %v2309 = vld [vmem:[%s363 + $0x3868] sm:$0xff]
        %v2310 = vld [vmem:[%s363 + $0x3870] sm:$0xff]
        %v2311 = vld [vmem:[%s363 + $0x3878] sm:$0xff]
        %v2312 = vld [vmem:[%s363 + $0x3880] sm:$0xff]
        %v2313 = vld [vmem:[%s363 + $0x3888] sm:$0xff]
        %v2314 = vld [vmem:[%s363 + $0x3890] sm:$0xff]
        %v2315 = vld [vmem:[%s363 + $0x3898] sm:$0xff]
        %v2316 = vld [vmem:[%s363 + $0x38a0] sm:$0xff]
        %v2317 = vld [vmem:[%s363 + $0x38a8] sm:$0xff]
        %v2318 = vld [vmem:[%s363 + $0x38b0] sm:$0xff]
        %v2319 = vld [vmem:[%s363 + $0x38b8] sm:$0xff]
        %v2320 = vld [vmem:[%s363 + $0x38c0] sm:$0xff]
        %v2321 = vld [vmem:[%s363 + $0x38c8] sm:$0xff]
        %v2322 = vld [vmem:[%s363 + $0x38d0] sm:$0xff]
        %v2323 = vld [vmem:[%s363 + $0x38d8] sm:$0xff]
        %v2324 = vld [vmem:[%s363 + $0x38e0] sm:$0xff]
        %v2325 = vld [vmem:[%s363 + $0x38e8] sm:$0xff]
        %v2326 = vld [vmem:[%s363 + $0x38f0] sm:$0xff]
        %v2327 = vld [vmem:[%s363 + $0x38f8] sm:$0xff]
        %v2328 = vld [vmem:[%s363 + $0x3900] sm:$0xff]
        %v2329 = vld [vmem:[%s363 + $0x3908] sm:$0xff]
        %v2330 = vld [vmem:[%s363 + $0x3910] sm:$0xff]
        %v2331 = vld [vmem:[%s363 + $0x3918] sm:$0xff]
        %v2332 = vld [vmem:[%s363 + $0x3920] sm:$0xff]
        %v2333 = vld [vmem:[%s363 + $0x3928] sm:$0xff]
        %v2334 = vld [vmem:[%s363 + $0x3930] sm:$0xff]
        %v2335 = vld [vmem:[%s363 + $0x3938] sm:$0xff]
        %v2336 = vld [vmem:[%s363 + $0x3940] sm:$0xff]
        %v2337 = vld [vmem:[%s363 + $0x3948] sm:$0xff]
        %v2338 = vld [vmem:[%s363 + $0x3950] sm:$0xff]
        %v2339 = vld [vmem:[%s363 + $0x3958] sm:$0xff]
        %v2340 = vld [vmem:[%s363 + $0x3960] sm:$0xff]
        %v2341 = vld [vmem:[%s363 + $0x3968] sm:$0xff]
        %v2342 = vld [vmem:[%s363 + $0x3970] sm:$0xff]
        %v2343 = vld [vmem:[%s363 + $0x3978] sm:$0xff]
        %v2344 = vld [vmem:[%s363 + $0x3980] sm:$0xff]
        %v2345 = vld [vmem:[%s363 + $0x3988] sm:$0xff]
        %v2346 = vld [vmem:[%s363 + $0x3990] sm:$0xff]
        %v2347 = vld [vmem:[%s363 + $0x3998] sm:$0xff]
        %v2348 = vld [vmem:[%s363 + $0x39a0] sm:$0xff]
        %v2349 = vld [vmem:[%s363 + $0x39a8] sm:$0xff]
        %v2350 = vld [vmem:[%s363 + $0x39b0] sm:$0xff]
        %v2351 = vld [vmem:[%s363 + $0x39b8] sm:$0xff]
        %v2352 = vld [vmem:[%s363 + $0x39c0] sm:$0xff]
        %v2353 = vld [vmem:[%s363 + $0x39c8] sm:$0xff]
        %v2354 = vld [vmem:[%s363 + $0x39d0] sm:$0xff]
        %v2355 = vld [vmem:[%s363 + $0x39d8] sm:$0xff]
        %v2356 = vld [vmem:[%s363 + $0x39e0] sm:$0xff]
        %v2357 = vld [vmem:[%s363 + $0x39e8] sm:$0xff]
        %v2358 = vld [vmem:[%s363 + $0x39f0] sm:$0xff]
        %v2359 = vld [vmem:[%s363 + $0x39f8] sm:$0xff]
        %v2360 = vld [vmem:[%s363 + $0x3a00] sm:$0xff]
        %v2361 = vld [vmem:[%s363 + $0x3a08] sm:$0xff]
        %v2362 = vld [vmem:[%s363 + $0x3a10] sm:$0xff]
        %v2363 = vld [vmem:[%s363 + $0x3a18] sm:$0xff]
        %v2364 = vld [vmem:[%s363 + $0x3a20] sm:$0xff]
        %v2365 = vld [vmem:[%s363 + $0x3a28] sm:$0xff]
        %v2366 = vld [vmem:[%s363 + $0x3a30] sm:$0xff]
        %v2367 = vld [vmem:[%s363 + $0x3a38] sm:$0xff]
        %v2368 = vld [vmem:[%s363 + $0x3a40] sm:$0xff]
        %v2369 = vld [vmem:[%s363 + $0x3a48] sm:$0xff]
        %v2370 = vld [vmem:[%s363 + $0x3a50] sm:$0xff]
        %v2371 = vld [vmem:[%s363 + $0x3a58] sm:$0xff]
        %v2372 = vld [vmem:[%s363 + $0x3a60] sm:$0xff]
        %v2373 = vld [vmem:[%s363 + $0x3a68] sm:$0xff]
        %v2374 = vld [vmem:[%s363 + $0x3a70] sm:$0xff]
        %v2375 = vld [vmem:[%s363 + $0x3a78] sm:$0xff]
        %v2376 = vld [vmem:[%s363 + $0x3a80] sm:$0xff]
        %v2377 = vld [vmem:[%s363 + $0x3a88] sm:$0xff]
        %v2378 = vld [vmem:[%s363 + $0x3a90] sm:$0xff]
        %v2379 = vld [vmem:[%s363 + $0x3a98] sm:$0xff]
        %v2380 = vld [vmem:[%s363 + $0x3aa0] sm:$0xff]
        %v2381 = vld [vmem:[%s363 + $0x3aa8] sm:$0xff]
        %v2382 = vld [vmem:[%s363 + $0x3ab0] sm:$0xff]
        %v2383 = vld [vmem:[%s363 + $0x3ab8] sm:$0xff]
        %v2384 = vld [vmem:[%s363 + $0x3ac0] sm:$0xff]
        %v2385 = vld [vmem:[%s363 + $0x3ac8] sm:$0xff]
        %v2386 = vld [vmem:[%s363 + $0x3ad0] sm:$0xff]
        %v2387 = vld [vmem:[%s363 + $0x3ad8] sm:$0xff]
        %v2388 = vld [vmem:[%s363 + $0x3ae0] sm:$0xff]
        %v2389 = vld [vmem:[%s363 + $0x3ae8] sm:$0xff]
        %v2390 = vld [vmem:[%s363 + $0x3af0] sm:$0xff]
        %v2391 = vld [vmem:[%s363 + $0x3af8] sm:$0xff]
        %v2392 = vld [vmem:[%s363 + $0x3b00] sm:$0xff]
        %v2393 = vld [vmem:[%s363 + $0x3b08] sm:$0xff]
        %v2394 = vld [vmem:[%s363 + $0x3b10] sm:$0xff]
        %v2395 = vld [vmem:[%s363 + $0x3b18] sm:$0xff]
        %v2396 = vld [vmem:[%s363 + $0x3b20] sm:$0xff]
        %v2397 = vld [vmem:[%s363 + $0x3b28] sm:$0xff]
        %v2398 = vld [vmem:[%s363 + $0x3b30] sm:$0xff]
        %v2399 = vld [vmem:[%s363 + $0x3b38] sm:$0xff]
        %v2400 = vld [vmem:[%s363 + $0x3b40] sm:$0xff]
        %v2401 = vld [vmem:[%s363 + $0x3b48] sm:$0xff]
        %v2402 = vld [vmem:[%s363 + $0x3b50] sm:$0xff]
        %v2403 = vld [vmem:[%s363 + $0x3b58] sm:$0xff]
        %v2404 = vld [vmem:[%s363 + $0x3b60] sm:$0xff]
        %v2405 = vld [vmem:[%s363 + $0x3b68] sm:$0xff]
        %v2406 = vld [vmem:[%s363 + $0x3b70] sm:$0xff]
        %v2407 = vld [vmem:[%s363 + $0x3b78] sm:$0xff]
        %v2408 = vld [vmem:[%s363 + $0x3b80] sm:$0xff]
        %v2409 = vld [vmem:[%s363 + $0x3b88] sm:$0xff]
        %v2410 = vld [vmem:[%s363 + $0x3b90] sm:$0xff]
        %v2411 = vld [vmem:[%s363 + $0x3b98] sm:$0xff]
        %v2412 = vld [vmem:[%s363 + $0x3ba0] sm:$0xff]
        %v2413 = vld [vmem:[%s363 + $0x3ba8] sm:$0xff]
        %v2414 = vld [vmem:[%s363 + $0x3bb0] sm:$0xff]
        %v2415 = vld [vmem:[%s363 + $0x3bb8] sm:$0xff]
        %v2416 = vld [vmem:[%s363 + $0x3bc0] sm:$0xff]
        %v2417 = vld [vmem:[%s363 + $0x3bc8] sm:$0xff]
        %v2418 = vld [vmem:[%s363 + $0x3bd0] sm:$0xff]
        %v2419 = vld [vmem:[%s363 + $0x3bd8] sm:$0xff]
        %v2420 = vld [vmem:[%s363 + $0x3be0] sm:$0xff]
        %v2421 = vld [vmem:[%s363 + $0x3be8] sm:$0xff]
        %v2422 = vld [vmem:[%s363 + $0x3bf0] sm:$0xff]
        %v2423 = vld [vmem:[%s363 + $0x3bf8] sm:$0xff]
        %v2424 = vld [vmem:[%s363 + $0x3c00] sm:$0xff]
        %v2425 = vld [vmem:[%s363 + $0x3c08] sm:$0xff]
        %v2426 = vld [vmem:[%s363 + $0x3c10] sm:$0xff]
        %v2427 = vld [vmem:[%s363 + $0x3c18] sm:$0xff]
        %v2428 = vld [vmem:[%s363 + $0x3c20] sm:$0xff]
        %v2429 = vld [vmem:[%s363 + $0x3c28] sm:$0xff]
        %v2430 = vld [vmem:[%s363 + $0x3c30] sm:$0xff]
        %v2431 = vld [vmem:[%s363 + $0x3c38] sm:$0xff]
        %v2432 = vld [vmem:[%s363 + $0x3c40] sm:$0xff]
        %v2433 = vld [vmem:[%s363 + $0x3c48] sm:$0xff]
        %v2434 = vld [vmem:[%s363 + $0x3c50] sm:$0xff]
        %v2435 = vld [vmem:[%s363 + $0x3c58] sm:$0xff]
        %v2436 = vld [vmem:[%s363 + $0x3c60] sm:$0xff]
        %v2437 = vld [vmem:[%s363 + $0x3c68] sm:$0xff]
        %v2438 = vld [vmem:[%s363 + $0x3c70] sm:$0xff]
        %v2439 = vld [vmem:[%s363 + $0x3c78] sm:$0xff]
        %v2440 = vld [vmem:[%s363 + $0x3c80] sm:$0xff]
        %v2441 = vld [vmem:[%s363 + $0x3c88] sm:$0xff]
        %v2442 = vld [vmem:[%s363 + $0x3c90] sm:$0xff]
        %v2443 = vld [vmem:[%s363 + $0x3c98] sm:$0xff]
        %v2444 = vld [vmem:[%s363 + $0x3ca0] sm:$0xff]
        %v2445 = vld [vmem:[%s363 + $0x3ca8] sm:$0xff]
        %v2446 = vld [vmem:[%s363 + $0x3cb0] sm:$0xff]
        %v2447 = vld [vmem:[%s363 + $0x3cb8] sm:$0xff]
        %v2448 = vld [vmem:[%s363 + $0x3cc0] sm:$0xff]
        %v2449 = vld [vmem:[%s363 + $0x3cc8] sm:$0xff]
        %v2450 = vld [vmem:[%s363 + $0x3cd0] sm:$0xff]
        %v2451 = vld [vmem:[%s363 + $0x3cd8] sm:$0xff]
        %v2452 = vld [vmem:[%s363 + $0x3ce0] sm:$0xff]
        %v2453 = vld [vmem:[%s363 + $0x3ce8] sm:$0xff]
        %v2454 = vld [vmem:[%s363 + $0x3cf0] sm:$0xff]
        %v2455 = vld [vmem:[%s363 + $0x3cf8] sm:$0xff]
        %v2456 = vld [vmem:[%s363 + $0x3d00] sm:$0xff]
        %v2457 = vld [vmem:[%s363 + $0x3d08] sm:$0xff]
        %v2458 = vld [vmem:[%s363 + $0x3d10] sm:$0xff]
        %v2459 = vld [vmem:[%s363 + $0x3d18] sm:$0xff]
        %v2460 = vld [vmem:[%s363 + $0x3d20] sm:$0xff]
        %v2461 = vld [vmem:[%s363 + $0x3d28] sm:$0xff]
        %v2462 = vld [vmem:[%s363 + $0x3d30] sm:$0xff]
        %v2463 = vld [vmem:[%s363 + $0x3d38] sm:$0xff]
        %v2464 = vld [vmem:[%s363 + $0x3d40] sm:$0xff]
        %v2465 = vld [vmem:[%s363 + $0x3d48] sm:$0xff]
        %v2466 = vld [vmem:[%s363 + $0x3d50] sm:$0xff]
        %v2467 = vld [vmem:[%s363 + $0x3d58] sm:$0xff]
        %v2468 = vld [vmem:[%s363 + $0x3d60] sm:$0xff]
        %v2469 = vld [vmem:[%s363 + $0x3d68] sm:$0xff]
        %v2470 = vld [vmem:[%s363 + $0x3d70] sm:$0xff]
        %v2471 = vld [vmem:[%s363 + $0x3d78] sm:$0xff]
        %v2472 = vld [vmem:[%s363 + $0x3d80] sm:$0xff]
        %v2473 = vld [vmem:[%s363 + $0x3d88] sm:$0xff]
        %v2474 = vld [vmem:[%s363 + $0x3d90] sm:$0xff]
        %v2475 = vld [vmem:[%s363 + $0x3d98] sm:$0xff]
        %v2476 = vld [vmem:[%s363 + $0x3da0] sm:$0xff]
        %v2477 = vld [vmem:[%s363 + $0x3da8] sm:$0xff]
        %v2478 = vld [vmem:[%s363 + $0x3db0] sm:$0xff]
        %v2479 = vld [vmem:[%s363 + $0x3db8] sm:$0xff]
        %v2480 = vld [vmem:[%s363 + $0x3dc0] sm:$0xff]
        %v2481 = vld [vmem:[%s363 + $0x3dc8] sm:$0xff]
        %v2482 = vld [vmem:[%s363 + $0x3dd0] sm:$0xff]
        %v2483 = vld [vmem:[%s363 + $0x3dd8] sm:$0xff]
        %v2484 = vld [vmem:[%s363 + $0x3de0] sm:$0xff]
        %v2485 = vld [vmem:[%s363 + $0x3de8] sm:$0xff]
        %v2486 = vld [vmem:[%s363 + $0x3df0] sm:$0xff]
        %v2487 = vld [vmem:[%s363 + $0x3df8] sm:$0xff]
        %v2488 = vld [vmem:[%s363 + $0x3e00] sm:$0xff]
        %v2489 = vld [vmem:[%s363 + $0x3e08] sm:$0xff]
        %v2490 = vld [vmem:[%s363 + $0x3e10] sm:$0xff]
        %v2491 = vld [vmem:[%s363 + $0x3e18] sm:$0xff]
        %v2492 = vld [vmem:[%s363 + $0x3e20] sm:$0xff]
        %v2493 = vld [vmem:[%s363 + $0x3e28] sm:$0xff]
        %v2494 = vld [vmem:[%s363 + $0x3e30] sm:$0xff]
        %v2495 = vld [vmem:[%s363 + $0x3e38] sm:$0xff]
        %v2496 = vld [vmem:[%s363 + $0x3e40] sm:$0xff]
        %v2497 = vld [vmem:[%s363 + $0x3e48] sm:$0xff]
        %v2498 = vld [vmem:[%s363 + $0x3e50] sm:$0xff]
        %v2499 = vld [vmem:[%s363 + $0x3e58] sm:$0xff]
        %v2500 = vld [vmem:[%s363 + $0x3e60] sm:$0xff]
        %v2501 = vld [vmem:[%s363 + $0x3e68] sm:$0xff]
        %v2502 = vld [vmem:[%s363 + $0x3e70] sm:$0xff]
        %v2503 = vld [vmem:[%s363 + $0x3e78] sm:$0xff]
        %v2504 = vld [vmem:[%s363 + $0x3e80] sm:$0xff]
        %v2505 = vld [vmem:[%s363 + $0x3e88] sm:$0xff]
        %v2506 = vld [vmem:[%s363 + $0x3e90] sm:$0xff]
        %v2507 = vld [vmem:[%s363 + $0x3e98] sm:$0xff]
        %v2508 = vld [vmem:[%s363 + $0x3ea0] sm:$0xff]
        %v2509 = vld [vmem:[%s363 + $0x3ea8] sm:$0xff]
        %v2510 = vld [vmem:[%s363 + $0x3eb0] sm:$0xff]
        %v2511 = vld [vmem:[%s363 + $0x3eb8] sm:$0xff]
        %v2512 = vld [vmem:[%s363 + $0x3ec0] sm:$0xff]
        %v2513 = vld [vmem:[%s363 + $0x3ec8] sm:$0xff]
        %v2514 = vld [vmem:[%s363 + $0x3ed0] sm:$0xff]
        %v2515 = vld [vmem:[%s363 + $0x3ed8] sm:$0xff]
        %v2516 = vld [vmem:[%s363 + $0x3ee0] sm:$0xff]
        %v2517 = vld [vmem:[%s363 + $0x3ee8] sm:$0xff]
        %v2518 = vld [vmem:[%s363 + $0x3ef0] sm:$0xff]
        %v2519 = vld [vmem:[%s363 + $0x3ef8] sm:$0xff]
        %v2520 = vld [vmem:[%s363 + $0x3f00] sm:$0xff]
        %v2521 = vld [vmem:[%s363 + $0x3f08] sm:$0xff]
        %v2522 = vld [vmem:[%s363 + $0x3f10] sm:$0xff]
        %v2523 = vld [vmem:[%s363 + $0x3f18] sm:$0xff]
        %v2524 = vld [vmem:[%s363 + $0x3f20] sm:$0xff]
        %v2525 = vld [vmem:[%s363 + $0x3f28] sm:$0xff]
        %v2526 = vld [vmem:[%s363 + $0x3f30] sm:$0xff]
        %v2527 = vld [vmem:[%s363 + $0x3f38] sm:$0xff]
        %v2528 = vld [vmem:[%s363 + $0x3f40] sm:$0xff]
        %v2529 = vld [vmem:[%s363 + $0x3f48] sm:$0xff]
        %v2530 = vld [vmem:[%s363 + $0x3f50] sm:$0xff]
        %v2531 = vld [vmem:[%s363 + $0x3f58] sm:$0xff]
        %v2532 = vld [vmem:[%s363 + $0x3f60] sm:$0xff]
        %v2533 = vld [vmem:[%s363 + $0x3f68] sm:$0xff]
        %v2534 = vld [vmem:[%s363 + $0x3f70] sm:$0xff]
        %v2535 = vld [vmem:[%s363 + $0x3f78] sm:$0xff]
        %v2536 = vld [vmem:[%s363 + $0x3f80] sm:$0xff]
        %v2537 = vld [vmem:[%s363 + $0x3f88] sm:$0xff]
        %v2538 = vld [vmem:[%s363 + $0x3f90] sm:$0xff]
        %v2539 = vld [vmem:[%s363 + $0x3f98] sm:$0xff]
        %v2540 = vld [vmem:[%s363 + $0x3fa0] sm:$0xff]
        %v2541 = vld [vmem:[%s363 + $0x3fa8] sm:$0xff]
        %v2542 = vld [vmem:[%s363 + $0x3fb0] sm:$0xff]
        %v2543 = vld [vmem:[%s363 + $0x3fb8] sm:$0xff]
        %v2544 = vld [vmem:[%s363 + $0x3fc0] sm:$0xff]
        %v2545 = vld [vmem:[%s363 + $0x3fc8] sm:$0xff]
        %v2546 = vld [vmem:[%s363 + $0x3fd0] sm:$0xff]
        %v2547 = vld [vmem:[%s363 + $0x3fd8] sm:$0xff]
        %v2548 = vld [vmem:[%s363 + $0x3fe0] sm:$0xff]
        %v2549 = vld [vmem:[%s363 + $0x3fe8] sm:$0xff]
        %v2550 = vld [vmem:[%s363 + $0x3ff0] sm:$0xff]
        %v2551 = vld [vmem:[%s363 + $0x3ff8] sm:$0xff]
        %2552 = vmatpush.msra.mxu0 %v624
        %2553 = vmatpush.msra.mxu0 %v616
        %2554 = vmatpush.msra.mxu0 %v608
        %2555 = vmatpush.msra.mxu0 %v600
        %2556 = vmatpush.msra.mxu0 %v592
        %2557 = vmatpush.msra.mxu0 %v584
        %2558 = vmatpush.msra.mxu0 %v576
        %2559 = vmatpush.msra.mxu0 %v568
        %2560 = vmatpush.msra.mxu0 %v560
        %2561 = vmatpush.msra.mxu0 %v552
        %2562 = vmatpush.msra.mxu0 %v544
        %2563 = vmatpush.msra.mxu0 %v536
        %2564 = vmatpush.msra.mxu0 %v528
        %2565 = vmatpush.msra.mxu0 %v520
        %2566 = vmatpush.msra.mxu0 %v512
        %2567 = vmatpush.msra.mxu0 %v504
        %2568 = vmatmul.f32.gmra.mxu0 %v488
        %v2569 = vpop.f32.mrf.mxu0
        %v2570 = vadd.f32 0.0, %v2569
        %2571 = vdwg.mxu0
        %2572 = vmatpush.msra.mxu0 %v752
        %2573 = vmatpush.msra.mxu0 %v744
        %2574 = vmatpush.msra.mxu0 %v736
        %2575 = vmatpush.msra.mxu0 %v728
        %2576 = vmatpush.msra.mxu0 %v720
        %2577 = vmatpush.msra.mxu0 %v712
        %2578 = vmatpush.msra.mxu0 %v704
        %2579 = vmatpush.msra.mxu0 %v696
        %2580 = vmatpush.msra.mxu0 %v688
        %2581 = vmatpush.msra.mxu0 %v680
        %2582 = vmatpush.msra.mxu0 %v672
        %2583 = vmatpush.msra.mxu0 %v664
        %2584 = vmatpush.msra.mxu0 %v656
        %2585 = vmatpush.msra.mxu0 %v648
        %2586 = vmatpush.msra.mxu0 %v640
        %2587 = vmatpush.msra.mxu0 %v632
        %2588 = vmatmul.f32.gmra.mxu0 %v489
        %v2589 = vpop.f32.mrf.mxu0
        %v2590 = vadd.f32 %v2570, %v2589
        %2591 = vdwg.mxu0
        %2592 = vmatpush.msra.mxu0 %v880
        %2593 = vmatpush.msra.mxu0 %v872
        %2594 = vmatpush.msra.mxu0 %v864
        %2595 = vmatpush.msra.mxu0 %v856
        %2596 = vmatpush.msra.mxu0 %v848
        %2597 = vmatpush.msra.mxu0 %v840
        %2598 = vmatpush.msra.mxu0 %v832
        %2599 = vmatpush.msra.mxu0 %v824
        %2600 = vmatpush.msra.mxu0 %v816
        %2601 = vmatpush.msra.mxu0 %v808
        %2602 = vmatpush.msra.mxu0 %v800
        %2603 = vmatpush.msra.mxu0 %v792
        %2604 = vmatpush.msra.mxu0 %v784
        %2605 = vmatpush.msra.mxu0 %v776
        %2606 = vmatpush.msra.mxu0 %v768
        %2607 = vmatpush.msra.mxu0 %v760
        %2608 = vmatmul.f32.gmra.mxu0 %v490
        %v2609 = vpop.f32.mrf.mxu0
        %v2610 = vadd.f32 %v2590, %v2609
        %2611 = vdwg.mxu0
        %2612 = vmatpush.msra.mxu0 %v1008
        %2613 = vmatpush.msra.mxu0 %v1000
        %2614 = vmatpush.msra.mxu0 %v992
        %2615 = vmatpush.msra.mxu0 %v984
        %2616 = vmatpush.msra.mxu0 %v976
        %2617 = vmatpush.msra.mxu0 %v968
        %2618 = vmatpush.msra.mxu0 %v960
        %2619 = vmatpush.msra.mxu0 %v952
        %2620 = vmatpush.msra.mxu0 %v944
        %2621 = vmatpush.msra.mxu0 %v936
        %2622 = vmatpush.msra.mxu0 %v928
        %2623 = vmatpush.msra.mxu0 %v920
        %2624 = vmatpush.msra.mxu0 %v912
        %2625 = vmatpush.msra.mxu0 %v904
        %2626 = vmatpush.msra.mxu0 %v896
        %2627 = vmatpush.msra.mxu0 %v888
        %2628 = vmatmul.f32.gmra.mxu0 %v491
        %v2629 = vpop.f32.mrf.mxu0
        %v2630 = vadd.f32 %v2610, %v2629
        %2631 = vdwg.mxu0
        %2632 = vmatpush.msra.mxu0 %v1136
        %2633 = vmatpush.msra.mxu0 %v1128
        %2634 = vmatpush.msra.mxu0 %v1120
        %2635 = vmatpush.msra.mxu0 %v1112
        %2636 = vmatpush.msra.mxu0 %v1104
        %2637 = vmatpush.msra.mxu0 %v1096
        %2638 = vmatpush.msra.mxu0 %v1088
        %2639 = vmatpush.msra.mxu0 %v1080
        %2640 = vmatpush.msra.mxu0 %v1072
        %2641 = vmatpush.msra.mxu0 %v1064
        %2642 = vmatpush.msra.mxu0 %v1056
        %2643 = vmatpush.msra.mxu0 %v1048
        %2644 = vmatpush.msra.mxu0 %v1040
        %2645 = vmatpush.msra.mxu0 %v1032
        %2646 = vmatpush.msra.mxu0 %v1024
        %2647 = vmatpush.msra.mxu0 %v1016
        %2648 = vmatmul.f32.gmra.mxu0 %v492
        %v2649 = vpop.f32.mrf.mxu0
        %v2650 = vadd.f32 %v2630, %v2649
        %2651 = vdwg.mxu0
        %2652 = vmatpush.msra.mxu0 %v1264
        %2653 = vmatpush.msra.mxu0 %v1256
        %2654 = vmatpush.msra.mxu0 %v1248
        %2655 = vmatpush.msra.mxu0 %v1240
        %2656 = vmatpush.msra.mxu0 %v1232
        %2657 = vmatpush.msra.mxu0 %v1224
        %2658 = vmatpush.msra.mxu0 %v1216
        %2659 = vmatpush.msra.mxu0 %v1208
        %2660 = vmatpush.msra.mxu0 %v1200
        %2661 = vmatpush.msra.mxu0 %v1192
        %2662 = vmatpush.msra.mxu0 %v1184
        %2663 = vmatpush.msra.mxu0 %v1176
        %2664 = vmatpush.msra.mxu0 %v1168
        %2665 = vmatpush.msra.mxu0 %v1160
        %2666 = vmatpush.msra.mxu0 %v1152
        %2667 = vmatpush.msra.mxu0 %v1144
        %2668 = vmatmul.f32.gmra.mxu0 %v493
        %v2669 = vpop.f32.mrf.mxu0
        %v2670 = vadd.f32 %v2650, %v2669
        %2671 = vdwg.mxu0
        %2672 = vmatpush.msra.mxu0 %v1392
        %2673 = vmatpush.msra.mxu0 %v1384
        %2674 = vmatpush.msra.mxu0 %v1376
        %2675 = vmatpush.msra.mxu0 %v1368
        %2676 = vmatpush.msra.mxu0 %v1360
        %2677 = vmatpush.msra.mxu0 %v1352
        %2678 = vmatpush.msra.mxu0 %v1344
        %2679 = vmatpush.msra.mxu0 %v1336
        %2680 = vmatpush.msra.mxu0 %v1328
        %2681 = vmatpush.msra.mxu0 %v1320
        %2682 = vmatpush.msra.mxu0 %v1312
        %2683 = vmatpush.msra.mxu0 %v1304
        %2684 = vmatpush.msra.mxu0 %v1296
        %2685 = vmatpush.msra.mxu0 %v1288
        %2686 = vmatpush.msra.mxu0 %v1280
        %2687 = vmatpush.msra.mxu0 %v1272
        %2688 = vmatmul.f32.gmra.mxu0 %v494
        %v2689 = vpop.f32.mrf.mxu0
        %v2690 = vadd.f32 %v2670, %v2689
        %2691 = vdwg.mxu0
        %2692 = vmatpush.msra.mxu0 %v1520
        %2693 = vmatpush.msra.mxu0 %v1512
        %2694 = vmatpush.msra.mxu0 %v1504
        %2695 = vmatpush.msra.mxu0 %v1496
        %2696 = vmatpush.msra.mxu0 %v1488
        %2697 = vmatpush.msra.mxu0 %v1480
        %2698 = vmatpush.msra.mxu0 %v1472
        %2699 = vmatpush.msra.mxu0 %v1464
        %2700 = vmatpush.msra.mxu0 %v1456
        %2701 = vmatpush.msra.mxu0 %v1448
        %2702 = vmatpush.msra.mxu0 %v1440
        %2703 = vmatpush.msra.mxu0 %v1432
        %2704 = vmatpush.msra.mxu0 %v1424
        %2705 = vmatpush.msra.mxu0 %v1416
        %2706 = vmatpush.msra.mxu0 %v1408
        %2707 = vmatpush.msra.mxu0 %v1400
        %2708 = vmatmul.f32.gmra.mxu0 %v495
        %v2709 = vpop.f32.mrf.mxu0
        %v2710 = vadd.f32 %v2690, %v2709
        %2711 = vdwg.mxu0
        %2712 = vmatpush.msra.mxu0 %v1648
        %2713 = vmatpush.msra.mxu0 %v1640
        %2714 = vmatpush.msra.mxu0 %v1632
        %2715 = vmatpush.msra.mxu0 %v1624
        %2716 = vmatpush.msra.mxu0 %v1616
        %2717 = vmatpush.msra.mxu0 %v1608
        %2718 = vmatpush.msra.mxu0 %v1600
        %2719 = vmatpush.msra.mxu0 %v1592
        %2720 = vmatpush.msra.mxu0 %v1584
        %2721 = vmatpush.msra.mxu0 %v1576
        %2722 = vmatpush.msra.mxu0 %v1568
        %2723 = vmatpush.msra.mxu0 %v1560
        %2724 = vmatpush.msra.mxu0 %v1552
        %2725 = vmatpush.msra.mxu0 %v1544
        %2726 = vmatpush.msra.mxu0 %v1536
        %2727 = vmatpush.msra.mxu0 %v1528
        %2728 = vmatmul.f32.gmra.mxu0 %v496
        %v2729 = vpop.f32.mrf.mxu0
        %v2730 = vadd.f32 %v2710, %v2729
        %2731 = vdwg.mxu0
        %2732 = vmatpush.msra.mxu0 %v1776
        %2733 = vmatpush.msra.mxu0 %v1768
        %2734 = vmatpush.msra.mxu0 %v1760
        %2735 = vmatpush.msra.mxu0 %v1752
        %2736 = vmatpush.msra.mxu0 %v1744
        %2737 = vmatpush.msra.mxu0 %v1736
        %2738 = vmatpush.msra.mxu0 %v1728
        %2739 = vmatpush.msra.mxu0 %v1720
        %2740 = vmatpush.msra.mxu0 %v1712
        %2741 = vmatpush.msra.mxu0 %v1704
        %2742 = vmatpush.msra.mxu0 %v1696
        %2743 = vmatpush.msra.mxu0 %v1688
        %2744 = vmatpush.msra.mxu0 %v1680
        %2745 = vmatpush.msra.mxu0 %v1672
        %2746 = vmatpush.msra.mxu0 %v1664
        %2747 = vmatpush.msra.mxu0 %v1656
        %2748 = vmatmul.f32.gmra.mxu0 %v497
        %v2749 = vpop.f32.mrf.mxu0
        %v2750 = vadd.f32 %v2730, %v2749
        %2751 = vdwg.mxu0
        %2752 = vmatpush.msra.mxu0 %v1904
        %2753 = vmatpush.msra.mxu0 %v1896
        %2754 = vmatpush.msra.mxu0 %v1888
        %2755 = vmatpush.msra.mxu0 %v1880
        %2756 = vmatpush.msra.mxu0 %v1872
        %2757 = vmatpush.msra.mxu0 %v1864
        %2758 = vmatpush.msra.mxu0 %v1856
        %2759 = vmatpush.msra.mxu0 %v1848
        %2760 = vmatpush.msra.mxu0 %v1840
        %2761 = vmatpush.msra.mxu0 %v1832
        %2762 = vmatpush.msra.mxu0 %v1824
        %2763 = vmatpush.msra.mxu0 %v1816
        %2764 = vmatpush.msra.mxu0 %v1808
        %2765 = vmatpush.msra.mxu0 %v1800
        %2766 = vmatpush.msra.mxu0 %v1792
        %2767 = vmatpush.msra.mxu0 %v1784
        %2768 = vmatmul.f32.gmra.mxu0 %v498
        %v2769 = vpop.f32.mrf.mxu0
        %v2770 = vadd.f32 %v2750, %v2769
        %2771 = vdwg.mxu0
        %2772 = vmatpush.msra.mxu0 %v2032
        %2773 = vmatpush.msra.mxu0 %v2024
        %2774 = vmatpush.msra.mxu0 %v2016
        %2775 = vmatpush.msra.mxu0 %v2008
        %2776 = vmatpush.msra.mxu0 %v2000
        %2777 = vmatpush.msra.mxu0 %v1992
        %2778 = vmatpush.msra.mxu0 %v1984
        %2779 = vmatpush.msra.mxu0 %v1976
        %2780 = vmatpush.msra.mxu0 %v1968
        %2781 = vmatpush.msra.mxu0 %v1960
        %2782 = vmatpush.msra.mxu0 %v1952
        %2783 = vmatpush.msra.mxu0 %v1944
        %2784 = vmatpush.msra.mxu0 %v1936
        %2785 = vmatpush.msra.mxu0 %v1928
        %2786 = vmatpush.msra.mxu0 %v1920
        %2787 = vmatpush.msra.mxu0 %v1912
        %2788 = vmatmul.f32.gmra.mxu0 %v499
        %v2789 = vpop.f32.mrf.mxu0
        %v2790 = vadd.f32 %v2770, %v2789
        %2791 = vdwg.mxu0
        %2792 = vmatpush.msra.mxu0 %v2160
        %2793 = vmatpush.msra.mxu0 %v2152
        %2794 = vmatpush.msra.mxu0 %v2144
        %2795 = vmatpush.msra.mxu0 %v2136
        %2796 = vmatpush.msra.mxu0 %v2128
        %2797 = vmatpush.msra.mxu0 %v2120
        %2798 = vmatpush.msra.mxu0 %v2112
        %2799 = vmatpush.msra.mxu0 %v2104
        %2800 = vmatpush.msra.mxu0 %v2096
        %2801 = vmatpush.msra.mxu0 %v2088
        %2802 = vmatpush.msra.mxu0 %v2080
        %2803 = vmatpush.msra.mxu0 %v2072
        %2804 = vmatpush.msra.mxu0 %v2064
        %2805 = vmatpush.msra.mxu0 %v2056
        %2806 = vmatpush.msra.mxu0 %v2048
        %2807 = vmatpush.msra.mxu0 %v2040
        %2808 = vmatmul.f32.gmra.mxu0 %v500
        %v2809 = vpop.f32.mrf.mxu0
        %v2810 = vadd.f32 %v2790, %v2809
        %2811 = vdwg.mxu0
        %2812 = vmatpush.msra.mxu0 %v2288
        %2813 = vmatpush.msra.mxu0 %v2280
        %2814 = vmatpush.msra.mxu0 %v2272
        %2815 = vmatpush.msra.mxu0 %v2264
        %2816 = vmatpush.msra.mxu0 %v2256
        %2817 = vmatpush.msra.mxu0 %v2248
        %2818 = vmatpush.msra.mxu0 %v2240
        %2819 = vmatpush.msra.mxu0 %v2232
        %2820 = vmatpush.msra.mxu0 %v2224
        %2821 = vmatpush.msra.mxu0 %v2216
        %2822 = vmatpush.msra.mxu0 %v2208
        %2823 = vmatpush.msra.mxu0 %v2200
        %2824 = vmatpush.msra.mxu0 %v2192
        %2825 = vmatpush.msra.mxu0 %v2184
        %2826 = vmatpush.msra.mxu0 %v2176
        %2827 = vmatpush.msra.mxu0 %v2168
        %2828 = vmatmul.f32.gmra.mxu0 %v501
        %v2829 = vpop.f32.mrf.mxu0
        %v2830 = vadd.f32 %v2810, %v2829
        %2831 = vdwg.mxu0
        %2832 = vmatpush.msra.mxu0 %v2416
        %2833 = vmatpush.msra.mxu0 %v2408
        %2834 = vmatpush.msra.mxu0 %v2400
        %2835 = vmatpush.msra.mxu0 %v2392
        %2836 = vmatpush.msra.mxu0 %v2384
        %2837 = vmatpush.msra.mxu0 %v2376
        %2838 = vmatpush.msra.mxu0 %v2368
        %2839 = vmatpush.msra.mxu0 %v2360
        %2840 = vmatpush.msra.mxu0 %v2352
        %2841 = vmatpush.msra.mxu0 %v2344
        %2842 = vmatpush.msra.mxu0 %v2336
        %2843 = vmatpush.msra.mxu0 %v2328
        %2844 = vmatpush.msra.mxu0 %v2320
        %2845 = vmatpush.msra.mxu0 %v2312
        %2846 = vmatpush.msra.mxu0 %v2304
        %2847 = vmatpush.msra.mxu0 %v2296
        %2848 = vmatmul.f32.gmra.mxu0 %v502
        %v2849 = vpop.f32.mrf.mxu0
        %v2850 = vadd.f32 %v2830, %v2849
        %2851 = vdwg.mxu0
        %2852 = vmatpush.msra.mxu0 %v2544
        %2853 = vmatpush.msra.mxu0 %v2536
        %2854 = vmatpush.msra.mxu0 %v2528
        %2855 = vmatpush.msra.mxu0 %v2520
        %2856 = vmatpush.msra.mxu0 %v2512
        %2857 = vmatpush.msra.mxu0 %v2504
        %2858 = vmatpush.msra.mxu0 %v2496
        %2859 = vmatpush.msra.mxu0 %v2488
        %2860 = vmatpush.msra.mxu0 %v2480
        %2861 = vmatpush.msra.mxu0 %v2472
        %2862 = vmatpush.msra.mxu0 %v2464
        %2863 = vmatpush.msra.mxu0 %v2456
        %2864 = vmatpush.msra.mxu0 %v2448
        %2865 = vmatpush.msra.mxu0 %v2440
        %2866 = vmatpush.msra.mxu0 %v2432
        %2867 = vmatpush.msra.mxu0 %v2424
        %2868 = vmatmul.f32.gmra.mxu0 %v503
        %v2869 = vpop.f32.mrf.mxu0
        %v2870 = vadd.f32 %v2850, %v2869
        %2871 = vdwg.mxu0
        %2872 = vmatpush.msra.mxu0 %v625
        %2873 = vmatpush.msra.mxu0 %v617
        %2874 = vmatpush.msra.mxu0 %v609
        %2875 = vmatpush.msra.mxu0 %v601
        %2876 = vmatpush.msra.mxu0 %v593
        %2877 = vmatpush.msra.mxu0 %v585
        %2878 = vmatpush.msra.mxu0 %v577
        %2879 = vmatpush.msra.mxu0 %v569
        %2880 = vmatpush.msra.mxu0 %v561
        %2881 = vmatpush.msra.mxu0 %v553
        %2882 = vmatpush.msra.mxu0 %v545
        %2883 = vmatpush.msra.mxu0 %v537
        %2884 = vmatpush.msra.mxu0 %v529
        %2885 = vmatpush.msra.mxu0 %v521
        %2886 = vmatpush.msra.mxu0 %v513
        %2887 = vmatpush.msra.mxu0 %v505
        %2888 = vmatmul.f32.gmra.mxu0 %v488
        %v2889 = vpop.f32.mrf.mxu0
        %v2890 = vadd.f32 0.0, %v2889
        %2891 = vdwg.mxu0
        %2892 = vmatpush.msra.mxu0 %v753
        %2893 = vmatpush.msra.mxu0 %v745
        %2894 = vmatpush.msra.mxu0 %v737
        %2895 = vmatpush.msra.mxu0 %v729
        %2896 = vmatpush.msra.mxu0 %v721
        %2897 = vmatpush.msra.mxu0 %v713
        %2898 = vmatpush.msra.mxu0 %v705
        %2899 = vmatpush.msra.mxu0 %v697
        %2900 = vmatpush.msra.mxu0 %v689
        %2901 = vmatpush.msra.mxu0 %v681
        %2902 = vmatpush.msra.mxu0 %v673
        %2903 = vmatpush.msra.mxu0 %v665
        %2904 = vmatpush.msra.mxu0 %v657
        %2905 = vmatpush.msra.mxu0 %v649
        %2906 = vmatpush.msra.mxu0 %v641
        %2907 = vmatpush.msra.mxu0 %v633
        %2908 = vmatmul.f32.gmra.mxu0 %v489
        %v2909 = vpop.f32.mrf.mxu0
        %v2910 = vadd.f32 %v2890, %v2909
        %2911 = vdwg.mxu0
        %2912 = vmatpush.msra.mxu0 %v881
        %2913 = vmatpush.msra.mxu0 %v873
        %2914 = vmatpush.msra.mxu0 %v865
        %2915 = vmatpush.msra.mxu0 %v857
        %2916 = vmatpush.msra.mxu0 %v849
        %2917 = vmatpush.msra.mxu0 %v841
        %2918 = vmatpush.msra.mxu0 %v833
        %2919 = vmatpush.msra.mxu0 %v825
        %2920 = vmatpush.msra.mxu0 %v817
        %2921 = vmatpush.msra.mxu0 %v809
        %2922 = vmatpush.msra.mxu0 %v801
        %2923 = vmatpush.msra.mxu0 %v793
        %2924 = vmatpush.msra.mxu0 %v785
        %2925 = vmatpush.msra.mxu0 %v777
        %2926 = vmatpush.msra.mxu0 %v769
        %2927 = vmatpush.msra.mxu0 %v761
        %2928 = vmatmul.f32.gmra.mxu0 %v490
        %v2929 = vpop.f32.mrf.mxu0
        %v2930 = vadd.f32 %v2910, %v2929
        %2931 = vdwg.mxu0
        %2932 = vmatpush.msra.mxu0 %v1009
        %2933 = vmatpush.msra.mxu0 %v1001
        %2934 = vmatpush.msra.mxu0 %v993
        %2935 = vmatpush.msra.mxu0 %v985
        %2936 = vmatpush.msra.mxu0 %v977
        %2937 = vmatpush.msra.mxu0 %v969
        %2938 = vmatpush.msra.mxu0 %v961
        %2939 = vmatpush.msra.mxu0 %v953
        %2940 = vmatpush.msra.mxu0 %v945
        %2941 = vmatpush.msra.mxu0 %v937
        %2942 = vmatpush.msra.mxu0 %v929
        %2943 = vmatpush.msra.mxu0 %v921
        %2944 = vmatpush.msra.mxu0 %v913
        %2945 = vmatpush.msra.mxu0 %v905
        %2946 = vmatpush.msra.mxu0 %v897
        %2947 = vmatpush.msra.mxu0 %v889
        %2948 = vmatmul.f32.gmra.mxu0 %v491
        %v2949 = vpop.f32.mrf.mxu0
        %v2950 = vadd.f32 %v2930, %v2949
        %2951 = vdwg.mxu0
        %2952 = vmatpush.msra.mxu0 %v1137
        %2953 = vmatpush.msra.mxu0 %v1129
        %2954 = vmatpush.msra.mxu0 %v1121
        %2955 = vmatpush.msra.mxu0 %v1113
        %2956 = vmatpush.msra.mxu0 %v1105
        %2957 = vmatpush.msra.mxu0 %v1097
        %2958 = vmatpush.msra.mxu0 %v1089
        %2959 = vmatpush.msra.mxu0 %v1081
        %2960 = vmatpush.msra.mxu0 %v1073
        %2961 = vmatpush.msra.mxu0 %v1065
        %2962 = vmatpush.msra.mxu0 %v1057
        %2963 = vmatpush.msra.mxu0 %v1049
        %2964 = vmatpush.msra.mxu0 %v1041
        %2965 = vmatpush.msra.mxu0 %v1033
        %2966 = vmatpush.msra.mxu0 %v1025
        %2967 = vmatpush.msra.mxu0 %v1017
        %2968 = vmatmul.f32.gmra.mxu0 %v492
        %v2969 = vpop.f32.mrf.mxu0
        %v2970 = vadd.f32 %v2950, %v2969
        %2971 = vdwg.mxu0
        %2972 = vmatpush.msra.mxu0 %v1265
        %2973 = vmatpush.msra.mxu0 %v1257
        %2974 = vmatpush.msra.mxu0 %v1249
        %2975 = vmatpush.msra.mxu0 %v1241
        %2976 = vmatpush.msra.mxu0 %v1233
        %2977 = vmatpush.msra.mxu0 %v1225
        %2978 = vmatpush.msra.mxu0 %v1217
        %2979 = vmatpush.msra.mxu0 %v1209
        %2980 = vmatpush.msra.mxu0 %v1201
        %2981 = vmatpush.msra.mxu0 %v1193
        %2982 = vmatpush.msra.mxu0 %v1185
        %2983 = vmatpush.msra.mxu0 %v1177
        %2984 = vmatpush.msra.mxu0 %v1169
        %2985 = vmatpush.msra.mxu0 %v1161
        %2986 = vmatpush.msra.mxu0 %v1153
        %2987 = vmatpush.msra.mxu0 %v1145
        %2988 = vmatmul.f32.gmra.mxu0 %v493
        %v2989 = vpop.f32.mrf.mxu0
        %v2990 = vadd.f32 %v2970, %v2989
        %2991 = vdwg.mxu0
        %2992 = vmatpush.msra.mxu0 %v1393
        %2993 = vmatpush.msra.mxu0 %v1385
        %2994 = vmatpush.msra.mxu0 %v1377
        %2995 = vmatpush.msra.mxu0 %v1369
        %2996 = vmatpush.msra.mxu0 %v1361
        %2997 = vmatpush.msra.mxu0 %v1353
        %2998 = vmatpush.msra.mxu0 %v1345
        %2999 = vmatpush.msra.mxu0 %v1337
        %3000 = vmatpush.msra.mxu0 %v1329
        %3001 = vmatpush.msra.mxu0 %v1321
        %3002 = vmatpush.msra.mxu0 %v1313
        %3003 = vmatpush.msra.mxu0 %v1305
        %3004 = vmatpush.msra.mxu0 %v1297
        %3005 = vmatpush.msra.mxu0 %v1289
        %3006 = vmatpush.msra.mxu0 %v1281
        %3007 = vmatpush.msra.mxu0 %v1273
        %3008 = vmatmul.f32.gmra.mxu0 %v494
        %v3009 = vpop.f32.mrf.mxu0
        %v3010 = vadd.f32 %v2990, %v3009
        %3011 = vdwg.mxu0
        %3012 = vmatpush.msra.mxu0 %v1521
        %3013 = vmatpush.msra.mxu0 %v1513
        %3014 = vmatpush.msra.mxu0 %v1505
        %3015 = vmatpush.msra.mxu0 %v1497
        %3016 = vmatpush.msra.mxu0 %v1489
        %3017 = vmatpush.msra.mxu0 %v1481
        %3018 = vmatpush.msra.mxu0 %v1473
        %3019 = vmatpush.msra.mxu0 %v1465
        %3020 = vmatpush.msra.mxu0 %v1457
        %3021 = vmatpush.msra.mxu0 %v1449
        %3022 = vmatpush.msra.mxu0 %v1441
        %3023 = vmatpush.msra.mxu0 %v1433
        %3024 = vmatpush.msra.mxu0 %v1425
        %3025 = vmatpush.msra.mxu0 %v1417
        %3026 = vmatpush.msra.mxu0 %v1409
        %3027 = vmatpush.msra.mxu0 %v1401
        %3028 = vmatmul.f32.gmra.mxu0 %v495
        %v3029 = vpop.f32.mrf.mxu0
        %v3030 = vadd.f32 %v3010, %v3029
        %3031 = vdwg.mxu0
        %3032 = vmatpush.msra.mxu0 %v1649
        %3033 = vmatpush.msra.mxu0 %v1641
        %3034 = vmatpush.msra.mxu0 %v1633
        %3035 = vmatpush.msra.mxu0 %v1625
        %3036 = vmatpush.msra.mxu0 %v1617
        %3037 = vmatpush.msra.mxu0 %v1609
        %3038 = vmatpush.msra.mxu0 %v1601
        %3039 = vmatpush.msra.mxu0 %v1593
        %3040 = vmatpush.msra.mxu0 %v1585
        %3041 = vmatpush.msra.mxu0 %v1577
        %3042 = vmatpush.msra.mxu0 %v1569
        %3043 = vmatpush.msra.mxu0 %v1561
        %3044 = vmatpush.msra.mxu0 %v1553
        %3045 = vmatpush.msra.mxu0 %v1545
        %3046 = vmatpush.msra.mxu0 %v1537
        %3047 = vmatpush.msra.mxu0 %v1529
        %3048 = vmatmul.f32.gmra.mxu0 %v496
        %v3049 = vpop.f32.mrf.mxu0
        %v3050 = vadd.f32 %v3030, %v3049
        %3051 = vdwg.mxu0
        %3052 = vmatpush.msra.mxu0 %v1777
        %3053 = vmatpush.msra.mxu0 %v1769
        %3054 = vmatpush.msra.mxu0 %v1761
        %3055 = vmatpush.msra.mxu0 %v1753
        %3056 = vmatpush.msra.mxu0 %v1745
        %3057 = vmatpush.msra.mxu0 %v1737
        %3058 = vmatpush.msra.mxu0 %v1729
        %3059 = vmatpush.msra.mxu0 %v1721
        %3060 = vmatpush.msra.mxu0 %v1713
        %3061 = vmatpush.msra.mxu0 %v1705
        %3062 = vmatpush.msra.mxu0 %v1697
        %3063 = vmatpush.msra.mxu0 %v1689
        %3064 = vmatpush.msra.mxu0 %v1681
        %3065 = vmatpush.msra.mxu0 %v1673
        %3066 = vmatpush.msra.mxu0 %v1665
        %3067 = vmatpush.msra.mxu0 %v1657
        %3068 = vmatmul.f32.gmra.mxu0 %v497
        %v3069 = vpop.f32.mrf.mxu0
        %v3070 = vadd.f32 %v3050, %v3069
        %3071 = vdwg.mxu0
        %3072 = vmatpush.msra.mxu0 %v1905
        %3073 = vmatpush.msra.mxu0 %v1897
        %3074 = vmatpush.msra.mxu0 %v1889
        %3075 = vmatpush.msra.mxu0 %v1881
        %3076 = vmatpush.msra.mxu0 %v1873
        %3077 = vmatpush.msra.mxu0 %v1865
        %3078 = vmatpush.msra.mxu0 %v1857
        %3079 = vmatpush.msra.mxu0 %v1849
        %3080 = vmatpush.msra.mxu0 %v1841
        %3081 = vmatpush.msra.mxu0 %v1833
        %3082 = vmatpush.msra.mxu0 %v1825
        %3083 = vmatpush.msra.mxu0 %v1817
        %3084 = vmatpush.msra.mxu0 %v1809
        %3085 = vmatpush.msra.mxu0 %v1801
        %3086 = vmatpush.msra.mxu0 %v1793
        %3087 = vmatpush.msra.mxu0 %v1785
        %3088 = vmatmul.f32.gmra.mxu0 %v498
        %v3089 = vpop.f32.mrf.mxu0
        %v3090 = vadd.f32 %v3070, %v3089
        %3091 = vdwg.mxu0
        %3092 = vmatpush.msra.mxu0 %v2033
        %3093 = vmatpush.msra.mxu0 %v2025
        %3094 = vmatpush.msra.mxu0 %v2017
        %3095 = vmatpush.msra.mxu0 %v2009
        %3096 = vmatpush.msra.mxu0 %v2001
        %3097 = vmatpush.msra.mxu0 %v1993
        %3098 = vmatpush.msra.mxu0 %v1985
        %3099 = vmatpush.msra.mxu0 %v1977
        %3100 = vmatpush.msra.mxu0 %v1969
        %3101 = vmatpush.msra.mxu0 %v1961
        %3102 = vmatpush.msra.mxu0 %v1953
        %3103 = vmatpush.msra.mxu0 %v1945
        %3104 = vmatpush.msra.mxu0 %v1937
        %3105 = vmatpush.msra.mxu0 %v1929
        %3106 = vmatpush.msra.mxu0 %v1921
        %3107 = vmatpush.msra.mxu0 %v1913
        %3108 = vmatmul.f32.gmra.mxu0 %v499
        %v3109 = vpop.f32.mrf.mxu0
        %v3110 = vadd.f32 %v3090, %v3109
        %3111 = vdwg.mxu0
        %3112 = vmatpush.msra.mxu0 %v2161
        %3113 = vmatpush.msra.mxu0 %v2153
        %3114 = vmatpush.msra.mxu0 %v2145
        %3115 = vmatpush.msra.mxu0 %v2137
        %3116 = vmatpush.msra.mxu0 %v2129
        %3117 = vmatpush.msra.mxu0 %v2121
        %3118 = vmatpush.msra.mxu0 %v2113
        %3119 = vmatpush.msra.mxu0 %v2105
        %3120 = vmatpush.msra.mxu0 %v2097
        %3121 = vmatpush.msra.mxu0 %v2089
        %3122 = vmatpush.msra.mxu0 %v2081
        %3123 = vmatpush.msra.mxu0 %v2073
        %3124 = vmatpush.msra.mxu0 %v2065
        %3125 = vmatpush.msra.mxu0 %v2057
        %3126 = vmatpush.msra.mxu0 %v2049
        %3127 = vmatpush.msra.mxu0 %v2041
        %3128 = vmatmul.f32.gmra.mxu0 %v500
        %v3129 = vpop.f32.mrf.mxu0
        %v3130 = vadd.f32 %v3110, %v3129
        %3131 = vdwg.mxu0
        %3132 = vmatpush.msra.mxu0 %v2289
        %3133 = vmatpush.msra.mxu0 %v2281
        %3134 = vmatpush.msra.mxu0 %v2273
        %3135 = vmatpush.msra.mxu0 %v2265
        %3136 = vmatpush.msra.mxu0 %v2257
        %3137 = vmatpush.msra.mxu0 %v2249
        %3138 = vmatpush.msra.mxu0 %v2241
        %3139 = vmatpush.msra.mxu0 %v2233
        %3140 = vmatpush.msra.mxu0 %v2225
        %3141 = vmatpush.msra.mxu0 %v2217
        %3142 = vmatpush.msra.mxu0 %v2209
        %3143 = vmatpush.msra.mxu0 %v2201
        %3144 = vmatpush.msra.mxu0 %v2193
        %3145 = vmatpush.msra.mxu0 %v2185
        %3146 = vmatpush.msra.mxu0 %v2177
        %3147 = vmatpush.msra.mxu0 %v2169
        %3148 = vmatmul.f32.gmra.mxu0 %v501
        %v3149 = vpop.f32.mrf.mxu0
        %v3150 = vadd.f32 %v3130, %v3149
        %3151 = vdwg.mxu0
        %3152 = vmatpush.msra.mxu0 %v2417
        %3153 = vmatpush.msra.mxu0 %v2409
        %3154 = vmatpush.msra.mxu0 %v2401
        %3155 = vmatpush.msra.mxu0 %v2393
        %3156 = vmatpush.msra.mxu0 %v2385
        %3157 = vmatpush.msra.mxu0 %v2377
        %3158 = vmatpush.msra.mxu0 %v2369
        %3159 = vmatpush.msra.mxu0 %v2361
        %3160 = vmatpush.msra.mxu0 %v2353
        %3161 = vmatpush.msra.mxu0 %v2345
        %3162 = vmatpush.msra.mxu0 %v2337
        %3163 = vmatpush.msra.mxu0 %v2329
        %3164 = vmatpush.msra.mxu0 %v2321
        %3165 = vmatpush.msra.mxu0 %v2313
        %3166 = vmatpush.msra.mxu0 %v2305
        %3167 = vmatpush.msra.mxu0 %v2297
        %3168 = vmatmul.f32.gmra.mxu0 %v502
        %v3169 = vpop.f32.mrf.mxu0
        %v3170 = vadd.f32 %v3150, %v3169
        %3171 = vdwg.mxu0
        %3172 = vmatpush.msra.mxu0 %v2545
        %3173 = vmatpush.msra.mxu0 %v2537
        %3174 = vmatpush.msra.mxu0 %v2529
        %3175 = vmatpush.msra.mxu0 %v2521
        %3176 = vmatpush.msra.mxu0 %v2513
        %3177 = vmatpush.msra.mxu0 %v2505
        %3178 = vmatpush.msra.mxu0 %v2497
        %3179 = vmatpush.msra.mxu0 %v2489
        %3180 = vmatpush.msra.mxu0 %v2481
        %3181 = vmatpush.msra.mxu0 %v2473
        %3182 = vmatpush.msra.mxu0 %v2465
        %3183 = vmatpush.msra.mxu0 %v2457
        %3184 = vmatpush.msra.mxu0 %v2449
        %3185 = vmatpush.msra.mxu0 %v2441
        %3186 = vmatpush.msra.mxu0 %v2433
        %3187 = vmatpush.msra.mxu0 %v2425
        %3188 = vmatmul.f32.gmra.mxu0 %v503
        %v3189 = vpop.f32.mrf.mxu0
        %v3190 = vadd.f32 %v3170, %v3189
        %3191 = vdwg.mxu0
        %3192 = vmatpush.msra.mxu0 %v626
        %3193 = vmatpush.msra.mxu0 %v618
        %3194 = vmatpush.msra.mxu0 %v610
        %3195 = vmatpush.msra.mxu0 %v602
        %3196 = vmatpush.msra.mxu0 %v594
        %3197 = vmatpush.msra.mxu0 %v586
        %3198 = vmatpush.msra.mxu0 %v578
        %3199 = vmatpush.msra.mxu0 %v570
        %3200 = vmatpush.msra.mxu0 %v562
        %3201 = vmatpush.msra.mxu0 %v554
        %3202 = vmatpush.msra.mxu0 %v546
        %3203 = vmatpush.msra.mxu0 %v538
        %3204 = vmatpush.msra.mxu0 %v530
        %3205 = vmatpush.msra.mxu0 %v522
        %3206 = vmatpush.msra.mxu0 %v514
        %3207 = vmatpush.msra.mxu0 %v506
        %3208 = vmatmul.f32.gmra.mxu0 %v488
        %v3209 = vpop.f32.mrf.mxu0
        %v3210 = vadd.f32 0.0, %v3209
        %3211 = vdwg.mxu0
        %3212 = vmatpush.msra.mxu0 %v754
        %3213 = vmatpush.msra.mxu0 %v746
        %3214 = vmatpush.msra.mxu0 %v738
        %3215 = vmatpush.msra.mxu0 %v730
        %3216 = vmatpush.msra.mxu0 %v722
        %3217 = vmatpush.msra.mxu0 %v714
        %3218 = vmatpush.msra.mxu0 %v706
        %3219 = vmatpush.msra.mxu0 %v698
        %3220 = vmatpush.msra.mxu0 %v690
        %3221 = vmatpush.msra.mxu0 %v682
        %3222 = vmatpush.msra.mxu0 %v674
        %3223 = vmatpush.msra.mxu0 %v666
        %3224 = vmatpush.msra.mxu0 %v658
        %3225 = vmatpush.msra.mxu0 %v650
        %3226 = vmatpush.msra.mxu0 %v642
        %3227 = vmatpush.msra.mxu0 %v634
        %3228 = vmatmul.f32.gmra.mxu0 %v489
        %v3229 = vpop.f32.mrf.mxu0
        %v3230 = vadd.f32 %v3210, %v3229
        %3231 = vdwg.mxu0
        %3232 = vmatpush.msra.mxu0 %v882
        %3233 = vmatpush.msra.mxu0 %v874
        %3234 = vmatpush.msra.mxu0 %v866
        %3235 = vmatpush.msra.mxu0 %v858
        %3236 = vmatpush.msra.mxu0 %v850
        %3237 = vmatpush.msra.mxu0 %v842
        %3238 = vmatpush.msra.mxu0 %v834
        %3239 = vmatpush.msra.mxu0 %v826
        %3240 = vmatpush.msra.mxu0 %v818
        %3241 = vmatpush.msra.mxu0 %v810
        %3242 = vmatpush.msra.mxu0 %v802
        %3243 = vmatpush.msra.mxu0 %v794
        %3244 = vmatpush.msra.mxu0 %v786
        %3245 = vmatpush.msra.mxu0 %v778
        %3246 = vmatpush.msra.mxu0 %v770
        %3247 = vmatpush.msra.mxu0 %v762
        %3248 = vmatmul.f32.gmra.mxu0 %v490
        %v3249 = vpop.f32.mrf.mxu0
        %v3250 = vadd.f32 %v3230, %v3249
        %3251 = vdwg.mxu0
        %3252 = vmatpush.msra.mxu0 %v1010
        %3253 = vmatpush.msra.mxu0 %v1002
        %3254 = vmatpush.msra.mxu0 %v994
        %3255 = vmatpush.msra.mxu0 %v986
        %3256 = vmatpush.msra.mxu0 %v978
        %3257 = vmatpush.msra.mxu0 %v970
        %3258 = vmatpush.msra.mxu0 %v962
        %3259 = vmatpush.msra.mxu0 %v954
        %3260 = vmatpush.msra.mxu0 %v946
        %3261 = vmatpush.msra.mxu0 %v938
        %3262 = vmatpush.msra.mxu0 %v930
        %3263 = vmatpush.msra.mxu0 %v922
        %3264 = vmatpush.msra.mxu0 %v914
        %3265 = vmatpush.msra.mxu0 %v906
        %3266 = vmatpush.msra.mxu0 %v898
        %3267 = vmatpush.msra.mxu0 %v890
        %3268 = vmatmul.f32.gmra.mxu0 %v491
        %v3269 = vpop.f32.mrf.mxu0
        %v3270 = vadd.f32 %v3250, %v3269
        %3271 = vdwg.mxu0
        %3272 = vmatpush.msra.mxu0 %v1138
        %3273 = vmatpush.msra.mxu0 %v1130
        %3274 = vmatpush.msra.mxu0 %v1122
        %3275 = vmatpush.msra.mxu0 %v1114
        %3276 = vmatpush.msra.mxu0 %v1106
        %3277 = vmatpush.msra.mxu0 %v1098
        %3278 = vmatpush.msra.mxu0 %v1090
        %3279 = vmatpush.msra.mxu0 %v1082
        %3280 = vmatpush.msra.mxu0 %v1074
        %3281 = vmatpush.msra.mxu0 %v1066
        %3282 = vmatpush.msra.mxu0 %v1058
        %3283 = vmatpush.msra.mxu0 %v1050
        %3284 = vmatpush.msra.mxu0 %v1042
        %3285 = vmatpush.msra.mxu0 %v1034
        %3286 = vmatpush.msra.mxu0 %v1026
        %3287 = vmatpush.msra.mxu0 %v1018
        %3288 = vmatmul.f32.gmra.mxu0 %v492
        %v3289 = vpop.f32.mrf.mxu0
        %v3290 = vadd.f32 %v3270, %v3289
        %3291 = vdwg.mxu0
        %3292 = vmatpush.msra.mxu0 %v1266
        %3293 = vmatpush.msra.mxu0 %v1258
        %3294 = vmatpush.msra.mxu0 %v1250
        %3295 = vmatpush.msra.mxu0 %v1242
        %3296 = vmatpush.msra.mxu0 %v1234
        %3297 = vmatpush.msra.mxu0 %v1226
        %3298 = vmatpush.msra.mxu0 %v1218
        %3299 = vmatpush.msra.mxu0 %v1210
        %3300 = vmatpush.msra.mxu0 %v1202
        %3301 = vmatpush.msra.mxu0 %v1194
        %3302 = vmatpush.msra.mxu0 %v1186
        %3303 = vmatpush.msra.mxu0 %v1178
        %3304 = vmatpush.msra.mxu0 %v1170
        %3305 = vmatpush.msra.mxu0 %v1162
        %3306 = vmatpush.msra.mxu0 %v1154
        %3307 = vmatpush.msra.mxu0 %v1146
        %3308 = vmatmul.f32.gmra.mxu0 %v493
        %v3309 = vpop.f32.mrf.mxu0
        %v3310 = vadd.f32 %v3290, %v3309
        %3311 = vdwg.mxu0
        %3312 = vmatpush.msra.mxu0 %v1394
        %3313 = vmatpush.msra.mxu0 %v1386
        %3314 = vmatpush.msra.mxu0 %v1378
        %3315 = vmatpush.msra.mxu0 %v1370
        %3316 = vmatpush.msra.mxu0 %v1362
        %3317 = vmatpush.msra.mxu0 %v1354
        %3318 = vmatpush.msra.mxu0 %v1346
        %3319 = vmatpush.msra.mxu0 %v1338
        %3320 = vmatpush.msra.mxu0 %v1330
        %3321 = vmatpush.msra.mxu0 %v1322
        %3322 = vmatpush.msra.mxu0 %v1314
        %3323 = vmatpush.msra.mxu0 %v1306
        %3324 = vmatpush.msra.mxu0 %v1298
        %3325 = vmatpush.msra.mxu0 %v1290
        %3326 = vmatpush.msra.mxu0 %v1282
        %3327 = vmatpush.msra.mxu0 %v1274
        %3328 = vmatmul.f32.gmra.mxu0 %v494
        %v3329 = vpop.f32.mrf.mxu0
        %v3330 = vadd.f32 %v3310, %v3329
        %3331 = vdwg.mxu0
        %3332 = vmatpush.msra.mxu0 %v1522
        %3333 = vmatpush.msra.mxu0 %v1514
        %3334 = vmatpush.msra.mxu0 %v1506
        %3335 = vmatpush.msra.mxu0 %v1498
        %3336 = vmatpush.msra.mxu0 %v1490
        %3337 = vmatpush.msra.mxu0 %v1482
        %3338 = vmatpush.msra.mxu0 %v1474
        %3339 = vmatpush.msra.mxu0 %v1466
        %3340 = vmatpush.msra.mxu0 %v1458
        %3341 = vmatpush.msra.mxu0 %v1450
        %3342 = vmatpush.msra.mxu0 %v1442
        %3343 = vmatpush.msra.mxu0 %v1434
        %3344 = vmatpush.msra.mxu0 %v1426
        %3345 = vmatpush.msra.mxu0 %v1418
        %3346 = vmatpush.msra.mxu0 %v1410
        %3347 = vmatpush.msra.mxu0 %v1402
        %3348 = vmatmul.f32.gmra.mxu0 %v495
        %v3349 = vpop.f32.mrf.mxu0
        %v3350 = vadd.f32 %v3330, %v3349
        %3351 = vdwg.mxu0
        %3352 = vmatpush.msra.mxu0 %v1650
        %3353 = vmatpush.msra.mxu0 %v1642
        %3354 = vmatpush.msra.mxu0 %v1634
        %3355 = vmatpush.msra.mxu0 %v1626
        %3356 = vmatpush.msra.mxu0 %v1618
        %3357 = vmatpush.msra.mxu0 %v1610
        %3358 = vmatpush.msra.mxu0 %v1602
        %3359 = vmatpush.msra.mxu0 %v1594
        %3360 = vmatpush.msra.mxu0 %v1586
        %3361 = vmatpush.msra.mxu0 %v1578
        %3362 = vmatpush.msra.mxu0 %v1570
        %3363 = vmatpush.msra.mxu0 %v1562
        %3364 = vmatpush.msra.mxu0 %v1554
        %3365 = vmatpush.msra.mxu0 %v1546
        %3366 = vmatpush.msra.mxu0 %v1538
        %3367 = vmatpush.msra.mxu0 %v1530
        %3368 = vmatmul.f32.gmra.mxu0 %v496
        %v3369 = vpop.f32.mrf.mxu0
        %v3370 = vadd.f32 %v3350, %v3369
        %3371 = vdwg.mxu0
        %3372 = vmatpush.msra.mxu0 %v1778
        %3373 = vmatpush.msra.mxu0 %v1770
        %3374 = vmatpush.msra.mxu0 %v1762
        %3375 = vmatpush.msra.mxu0 %v1754
        %3376 = vmatpush.msra.mxu0 %v1746
        %3377 = vmatpush.msra.mxu0 %v1738
        %3378 = vmatpush.msra.mxu0 %v1730
        %3379 = vmatpush.msra.mxu0 %v1722
        %3380 = vmatpush.msra.mxu0 %v1714
        %3381 = vmatpush.msra.mxu0 %v1706
        %3382 = vmatpush.msra.mxu0 %v1698
        %3383 = vmatpush.msra.mxu0 %v1690
        %3384 = vmatpush.msra.mxu0 %v1682
        %3385 = vmatpush.msra.mxu0 %v1674
        %3386 = vmatpush.msra.mxu0 %v1666
        %3387 = vmatpush.msra.mxu0 %v1658
        %3388 = vmatmul.f32.gmra.mxu0 %v497
        %v3389 = vpop.f32.mrf.mxu0
        %v3390 = vadd.f32 %v3370, %v3389
        %3391 = vdwg.mxu0
        %3392 = vmatpush.msra.mxu0 %v1906
        %3393 = vmatpush.msra.mxu0 %v1898
        %3394 = vmatpush.msra.mxu0 %v1890
        %3395 = vmatpush.msra.mxu0 %v1882
        %3396 = vmatpush.msra.mxu0 %v1874
        %3397 = vmatpush.msra.mxu0 %v1866
        %3398 = vmatpush.msra.mxu0 %v1858
        %3399 = vmatpush.msra.mxu0 %v1850
        %3400 = vmatpush.msra.mxu0 %v1842
        %3401 = vmatpush.msra.mxu0 %v1834
        %3402 = vmatpush.msra.mxu0 %v1826
        %3403 = vmatpush.msra.mxu0 %v1818
        %3404 = vmatpush.msra.mxu0 %v1810
        %3405 = vmatpush.msra.mxu0 %v1802
        %3406 = vmatpush.msra.mxu0 %v1794
        %3407 = vmatpush.msra.mxu0 %v1786
        %3408 = vmatmul.f32.gmra.mxu0 %v498
        %v3409 = vpop.f32.mrf.mxu0
        %v3410 = vadd.f32 %v3390, %v3409
        %3411 = vdwg.mxu0
        %3412 = vmatpush.msra.mxu0 %v2034
        %3413 = vmatpush.msra.mxu0 %v2026
        %3414 = vmatpush.msra.mxu0 %v2018
        %3415 = vmatpush.msra.mxu0 %v2010
        %3416 = vmatpush.msra.mxu0 %v2002
        %3417 = vmatpush.msra.mxu0 %v1994
        %3418 = vmatpush.msra.mxu0 %v1986
        %3419 = vmatpush.msra.mxu0 %v1978
        %3420 = vmatpush.msra.mxu0 %v1970
        %3421 = vmatpush.msra.mxu0 %v1962
        %3422 = vmatpush.msra.mxu0 %v1954
        %3423 = vmatpush.msra.mxu0 %v1946
        %3424 = vmatpush.msra.mxu0 %v1938
        %3425 = vmatpush.msra.mxu0 %v1930
        %3426 = vmatpush.msra.mxu0 %v1922
        %3427 = vmatpush.msra.mxu0 %v1914
        %3428 = vmatmul.f32.gmra.mxu0 %v499
        %v3429 = vpop.f32.mrf.mxu0
        %v3430 = vadd.f32 %v3410, %v3429
        %3431 = vdwg.mxu0
        %3432 = vmatpush.msra.mxu0 %v2162
        %3433 = vmatpush.msra.mxu0 %v2154
        %3434 = vmatpush.msra.mxu0 %v2146
        %3435 = vmatpush.msra.mxu0 %v2138
        %3436 = vmatpush.msra.mxu0 %v2130
        %3437 = vmatpush.msra.mxu0 %v2122
        %3438 = vmatpush.msra.mxu0 %v2114
        %3439 = vmatpush.msra.mxu0 %v2106
        %3440 = vmatpush.msra.mxu0 %v2098
        %3441 = vmatpush.msra.mxu0 %v2090
        %3442 = vmatpush.msra.mxu0 %v2082
        %3443 = vmatpush.msra.mxu0 %v2074
        %3444 = vmatpush.msra.mxu0 %v2066
        %3445 = vmatpush.msra.mxu0 %v2058
        %3446 = vmatpush.msra.mxu0 %v2050
        %3447 = vmatpush.msra.mxu0 %v2042
        %3448 = vmatmul.f32.gmra.mxu0 %v500
        %v3449 = vpop.f32.mrf.mxu0
        %v3450 = vadd.f32 %v3430, %v3449
        %3451 = vdwg.mxu0
        %3452 = vmatpush.msra.mxu0 %v2290
        %3453 = vmatpush.msra.mxu0 %v2282
        %3454 = vmatpush.msra.mxu0 %v2274
        %3455 = vmatpush.msra.mxu0 %v2266
        %3456 = vmatpush.msra.mxu0 %v2258
        %3457 = vmatpush.msra.mxu0 %v2250
        %3458 = vmatpush.msra.mxu0 %v2242
        %3459 = vmatpush.msra.mxu0 %v2234
        %3460 = vmatpush.msra.mxu0 %v2226
        %3461 = vmatpush.msra.mxu0 %v2218
        %3462 = vmatpush.msra.mxu0 %v2210
        %3463 = vmatpush.msra.mxu0 %v2202
        %3464 = vmatpush.msra.mxu0 %v2194
        %3465 = vmatpush.msra.mxu0 %v2186
        %3466 = vmatpush.msra.mxu0 %v2178
        %3467 = vmatpush.msra.mxu0 %v2170
        %3468 = vmatmul.f32.gmra.mxu0 %v501
        %v3469 = vpop.f32.mrf.mxu0
        %v3470 = vadd.f32 %v3450, %v3469
        %3471 = vdwg.mxu0
        %3472 = vmatpush.msra.mxu0 %v2418
        %3473 = vmatpush.msra.mxu0 %v2410
        %3474 = vmatpush.msra.mxu0 %v2402
        %3475 = vmatpush.msra.mxu0 %v2394
        %3476 = vmatpush.msra.mxu0 %v2386
        %3477 = vmatpush.msra.mxu0 %v2378
        %3478 = vmatpush.msra.mxu0 %v2370
        %3479 = vmatpush.msra.mxu0 %v2362
        %3480 = vmatpush.msra.mxu0 %v2354
        %3481 = vmatpush.msra.mxu0 %v2346
        %3482 = vmatpush.msra.mxu0 %v2338
        %3483 = vmatpush.msra.mxu0 %v2330
        %3484 = vmatpush.msra.mxu0 %v2322
        %3485 = vmatpush.msra.mxu0 %v2314
        %3486 = vmatpush.msra.mxu0 %v2306
        %3487 = vmatpush.msra.mxu0 %v2298
        %3488 = vmatmul.f32.gmra.mxu0 %v502
        %v3489 = vpop.f32.mrf.mxu0
        %v3490 = vadd.f32 %v3470, %v3489
        %3491 = vdwg.mxu0
        %3492 = vmatpush.msra.mxu0 %v2546
        %3493 = vmatpush.msra.mxu0 %v2538
        %3494 = vmatpush.msra.mxu0 %v2530
        %3495 = vmatpush.msra.mxu0 %v2522
        %3496 = vmatpush.msra.mxu0 %v2514
        %3497 = vmatpush.msra.mxu0 %v2506
        %3498 = vmatpush.msra.mxu0 %v2498
        %3499 = vmatpush.msra.mxu0 %v2490
        %3500 = vmatpush.msra.mxu0 %v2482
        %3501 = vmatpush.msra.mxu0 %v2474
        %3502 = vmatpush.msra.mxu0 %v2466
        %3503 = vmatpush.msra.mxu0 %v2458
        %3504 = vmatpush.msra.mxu0 %v2450
        %3505 = vmatpush.msra.mxu0 %v2442
        %3506 = vmatpush.msra.mxu0 %v2434
        %3507 = vmatpush.msra.mxu0 %v2426
        %3508 = vmatmul.f32.gmra.mxu0 %v503
        %v3509 = vpop.f32.mrf.mxu0
        %v3510 = vadd.f32 %v3490, %v3509
        %3511 = vdwg.mxu0
        %3512 = vmatpush.msra.mxu0 %v627
        %3513 = vmatpush.msra.mxu0 %v619
        %3514 = vmatpush.msra.mxu0 %v611
        %3515 = vmatpush.msra.mxu0 %v603
        %3516 = vmatpush.msra.mxu0 %v595
        %3517 = vmatpush.msra.mxu0 %v587
        %3518 = vmatpush.msra.mxu0 %v579
        %3519 = vmatpush.msra.mxu0 %v571
        %3520 = vmatpush.msra.mxu0 %v563
        %3521 = vmatpush.msra.mxu0 %v555
        %3522 = vmatpush.msra.mxu0 %v547
        %3523 = vmatpush.msra.mxu0 %v539
        %3524 = vmatpush.msra.mxu0 %v531
        %3525 = vmatpush.msra.mxu0 %v523
        %3526 = vmatpush.msra.mxu0 %v515
        %3527 = vmatpush.msra.mxu0 %v507
        %3528 = vmatmul.f32.gmra.mxu0 %v488
        %v3529 = vpop.f32.mrf.mxu0
        %v3530 = vadd.f32 0.0, %v3529
        %3531 = vdwg.mxu0
        %3532 = vmatpush.msra.mxu0 %v755
        %3533 = vmatpush.msra.mxu0 %v747
        %3534 = vmatpush.msra.mxu0 %v739
        %3535 = vmatpush.msra.mxu0 %v731
        %3536 = vmatpush.msra.mxu0 %v723
        %3537 = vmatpush.msra.mxu0 %v715
        %3538 = vmatpush.msra.mxu0 %v707
        %3539 = vmatpush.msra.mxu0 %v699
        %3540 = vmatpush.msra.mxu0 %v691
        %3541 = vmatpush.msra.mxu0 %v683
        %3542 = vmatpush.msra.mxu0 %v675
        %3543 = vmatpush.msra.mxu0 %v667
        %3544 = vmatpush.msra.mxu0 %v659
        %3545 = vmatpush.msra.mxu0 %v651
        %3546 = vmatpush.msra.mxu0 %v643
        %3547 = vmatpush.msra.mxu0 %v635
        %3548 = vmatmul.f32.gmra.mxu0 %v489
        %v3549 = vpop.f32.mrf.mxu0
        %v3550 = vadd.f32 %v3530, %v3549
        %3551 = vdwg.mxu0
        %3552 = vmatpush.msra.mxu0 %v883
        %3553 = vmatpush.msra.mxu0 %v875
        %3554 = vmatpush.msra.mxu0 %v867
        %3555 = vmatpush.msra.mxu0 %v859
        %3556 = vmatpush.msra.mxu0 %v851
        %3557 = vmatpush.msra.mxu0 %v843
        %3558 = vmatpush.msra.mxu0 %v835
        %3559 = vmatpush.msra.mxu0 %v827
        %3560 = vmatpush.msra.mxu0 %v819
        %3561 = vmatpush.msra.mxu0 %v811
        %3562 = vmatpush.msra.mxu0 %v803
        %3563 = vmatpush.msra.mxu0 %v795
        %3564 = vmatpush.msra.mxu0 %v787
        %3565 = vmatpush.msra.mxu0 %v779
        %3566 = vmatpush.msra.mxu0 %v771
        %3567 = vmatpush.msra.mxu0 %v763
        %3568 = vmatmul.f32.gmra.mxu0 %v490
        %v3569 = vpop.f32.mrf.mxu0
        %v3570 = vadd.f32 %v3550, %v3569
        %3571 = vdwg.mxu0
        %3572 = vmatpush.msra.mxu0 %v1011
        %3573 = vmatpush.msra.mxu0 %v1003
        %3574 = vmatpush.msra.mxu0 %v995
        %3575 = vmatpush.msra.mxu0 %v987
        %3576 = vmatpush.msra.mxu0 %v979
        %3577 = vmatpush.msra.mxu0 %v971
        %3578 = vmatpush.msra.mxu0 %v963
        %3579 = vmatpush.msra.mxu0 %v955
        %3580 = vmatpush.msra.mxu0 %v947
        %3581 = vmatpush.msra.mxu0 %v939
        %3582 = vmatpush.msra.mxu0 %v931
        %3583 = vmatpush.msra.mxu0 %v923
        %3584 = vmatpush.msra.mxu0 %v915
        %3585 = vmatpush.msra.mxu0 %v907
        %3586 = vmatpush.msra.mxu0 %v899
        %3587 = vmatpush.msra.mxu0 %v891
        %3588 = vmatmul.f32.gmra.mxu0 %v491
        %v3589 = vpop.f32.mrf.mxu0
        %v3590 = vadd.f32 %v3570, %v3589
        %3591 = vdwg.mxu0
        %3592 = vmatpush.msra.mxu0 %v1139
        %3593 = vmatpush.msra.mxu0 %v1131
        %3594 = vmatpush.msra.mxu0 %v1123
        %3595 = vmatpush.msra.mxu0 %v1115
        %3596 = vmatpush.msra.mxu0 %v1107
        %3597 = vmatpush.msra.mxu0 %v1099
        %3598 = vmatpush.msra.mxu0 %v1091
        %3599 = vmatpush.msra.mxu0 %v1083
        %3600 = vmatpush.msra.mxu0 %v1075
        %3601 = vmatpush.msra.mxu0 %v1067
        %3602 = vmatpush.msra.mxu0 %v1059
        %3603 = vmatpush.msra.mxu0 %v1051
        %3604 = vmatpush.msra.mxu0 %v1043
        %3605 = vmatpush.msra.mxu0 %v1035
        %3606 = vmatpush.msra.mxu0 %v1027
        %3607 = vmatpush.msra.mxu0 %v1019
        %3608 = vmatmul.f32.gmra.mxu0 %v492
        %v3609 = vpop.f32.mrf.mxu0
        %v3610 = vadd.f32 %v3590, %v3609
        %3611 = vdwg.mxu0
        %3612 = vmatpush.msra.mxu0 %v1267
        %3613 = vmatpush.msra.mxu0 %v1259
        %3614 = vmatpush.msra.mxu0 %v1251
        %3615 = vmatpush.msra.mxu0 %v1243
        %3616 = vmatpush.msra.mxu0 %v1235
        %3617 = vmatpush.msra.mxu0 %v1227
        %3618 = vmatpush.msra.mxu0 %v1219
        %3619 = vmatpush.msra.mxu0 %v1211
        %3620 = vmatpush.msra.mxu0 %v1203
        %3621 = vmatpush.msra.mxu0 %v1195
        %3622 = vmatpush.msra.mxu0 %v1187
        %3623 = vmatpush.msra.mxu0 %v1179
        %3624 = vmatpush.msra.mxu0 %v1171
        %3625 = vmatpush.msra.mxu0 %v1163
        %3626 = vmatpush.msra.mxu0 %v1155
        %3627 = vmatpush.msra.mxu0 %v1147
        %3628 = vmatmul.f32.gmra.mxu0 %v493
        %v3629 = vpop.f32.mrf.mxu0
        %v3630 = vadd.f32 %v3610, %v3629
        %3631 = vdwg.mxu0
        %3632 = vmatpush.msra.mxu0 %v1395
        %3633 = vmatpush.msra.mxu0 %v1387
        %3634 = vmatpush.msra.mxu0 %v1379
        %3635 = vmatpush.msra.mxu0 %v1371
        %3636 = vmatpush.msra.mxu0 %v1363
        %3637 = vmatpush.msra.mxu0 %v1355
        %3638 = vmatpush.msra.mxu0 %v1347
        %3639 = vmatpush.msra.mxu0 %v1339
        %3640 = vmatpush.msra.mxu0 %v1331
        %3641 = vmatpush.msra.mxu0 %v1323
        %3642 = vmatpush.msra.mxu0 %v1315
        %3643 = vmatpush.msra.mxu0 %v1307
        %3644 = vmatpush.msra.mxu0 %v1299
        %3645 = vmatpush.msra.mxu0 %v1291
        %3646 = vmatpush.msra.mxu0 %v1283
        %3647 = vmatpush.msra.mxu0 %v1275
        %3648 = vmatmul.f32.gmra.mxu0 %v494
        %v3649 = vpop.f32.mrf.mxu0
        %v3650 = vadd.f32 %v3630, %v3649
        %3651 = vdwg.mxu0
        %3652 = vmatpush.msra.mxu0 %v1523
        %3653 = vmatpush.msra.mxu0 %v1515
        %3654 = vmatpush.msra.mxu0 %v1507
        %3655 = vmatpush.msra.mxu0 %v1499
        %3656 = vmatpush.msra.mxu0 %v1491
        %3657 = vmatpush.msra.mxu0 %v1483
        %3658 = vmatpush.msra.mxu0 %v1475
        %3659 = vmatpush.msra.mxu0 %v1467
        %3660 = vmatpush.msra.mxu0 %v1459
        %3661 = vmatpush.msra.mxu0 %v1451
        %3662 = vmatpush.msra.mxu0 %v1443
        %3663 = vmatpush.msra.mxu0 %v1435
        %3664 = vmatpush.msra.mxu0 %v1427
        %3665 = vmatpush.msra.mxu0 %v1419
        %3666 = vmatpush.msra.mxu0 %v1411
        %3667 = vmatpush.msra.mxu0 %v1403
        %3668 = vmatmul.f32.gmra.mxu0 %v495
        %v3669 = vpop.f32.mrf.mxu0
        %v3670 = vadd.f32 %v3650, %v3669
        %3671 = vdwg.mxu0
        %3672 = vmatpush.msra.mxu0 %v1651
        %3673 = vmatpush.msra.mxu0 %v1643
        %3674 = vmatpush.msra.mxu0 %v1635
        %3675 = vmatpush.msra.mxu0 %v1627
        %3676 = vmatpush.msra.mxu0 %v1619
        %3677 = vmatpush.msra.mxu0 %v1611
        %3678 = vmatpush.msra.mxu0 %v1603
        %3679 = vmatpush.msra.mxu0 %v1595
        %3680 = vmatpush.msra.mxu0 %v1587
        %3681 = vmatpush.msra.mxu0 %v1579
        %3682 = vmatpush.msra.mxu0 %v1571
        %3683 = vmatpush.msra.mxu0 %v1563
        %3684 = vmatpush.msra.mxu0 %v1555
        %3685 = vmatpush.msra.mxu0 %v1547
        %3686 = vmatpush.msra.mxu0 %v1539
        %3687 = vmatpush.msra.mxu0 %v1531
        %3688 = vmatmul.f32.gmra.mxu0 %v496
        %v3689 = vpop.f32.mrf.mxu0
        %v3690 = vadd.f32 %v3670, %v3689
        %3691 = vdwg.mxu0
        %3692 = vmatpush.msra.mxu0 %v1779
        %3693 = vmatpush.msra.mxu0 %v1771
        %3694 = vmatpush.msra.mxu0 %v1763
        %3695 = vmatpush.msra.mxu0 %v1755
        %3696 = vmatpush.msra.mxu0 %v1747
        %3697 = vmatpush.msra.mxu0 %v1739
        %3698 = vmatpush.msra.mxu0 %v1731
        %3699 = vmatpush.msra.mxu0 %v1723
        %3700 = vmatpush.msra.mxu0 %v1715
        %3701 = vmatpush.msra.mxu0 %v1707
        %3702 = vmatpush.msra.mxu0 %v1699
        %3703 = vmatpush.msra.mxu0 %v1691
        %3704 = vmatpush.msra.mxu0 %v1683
        %3705 = vmatpush.msra.mxu0 %v1675
        %3706 = vmatpush.msra.mxu0 %v1667
        %3707 = vmatpush.msra.mxu0 %v1659
        %3708 = vmatmul.f32.gmra.mxu0 %v497
        %v3709 = vpop.f32.mrf.mxu0
        %v3710 = vadd.f32 %v3690, %v3709
        %3711 = vdwg.mxu0
        %3712 = vmatpush.msra.mxu0 %v1907
        %3713 = vmatpush.msra.mxu0 %v1899
        %3714 = vmatpush.msra.mxu0 %v1891
        %3715 = vmatpush.msra.mxu0 %v1883
        %3716 = vmatpush.msra.mxu0 %v1875
        %3717 = vmatpush.msra.mxu0 %v1867
        %3718 = vmatpush.msra.mxu0 %v1859
        %3719 = vmatpush.msra.mxu0 %v1851
        %3720 = vmatpush.msra.mxu0 %v1843
        %3721 = vmatpush.msra.mxu0 %v1835
        %3722 = vmatpush.msra.mxu0 %v1827
        %3723 = vmatpush.msra.mxu0 %v1819
        %3724 = vmatpush.msra.mxu0 %v1811
        %3725 = vmatpush.msra.mxu0 %v1803
        %3726 = vmatpush.msra.mxu0 %v1795
        %3727 = vmatpush.msra.mxu0 %v1787
        %3728 = vmatmul.f32.gmra.mxu0 %v498
        %v3729 = vpop.f32.mrf.mxu0
        %v3730 = vadd.f32 %v3710, %v3729
        %3731 = vdwg.mxu0
        %3732 = vmatpush.msra.mxu0 %v2035
        %3733 = vmatpush.msra.mxu0 %v2027
        %3734 = vmatpush.msra.mxu0 %v2019
        %3735 = vmatpush.msra.mxu0 %v2011
        %3736 = vmatpush.msra.mxu0 %v2003
        %3737 = vmatpush.msra.mxu0 %v1995
        %3738 = vmatpush.msra.mxu0 %v1987
        %3739 = vmatpush.msra.mxu0 %v1979
        %3740 = vmatpush.msra.mxu0 %v1971
        %3741 = vmatpush.msra.mxu0 %v1963
        %3742 = vmatpush.msra.mxu0 %v1955
        %3743 = vmatpush.msra.mxu0 %v1947
        %3744 = vmatpush.msra.mxu0 %v1939
        %3745 = vmatpush.msra.mxu0 %v1931
        %3746 = vmatpush.msra.mxu0 %v1923
        %3747 = vmatpush.msra.mxu0 %v1915
        %3748 = vmatmul.f32.gmra.mxu0 %v499
        %v3749 = vpop.f32.mrf.mxu0
        %v3750 = vadd.f32 %v3730, %v3749
        %3751 = vdwg.mxu0
        %3752 = vmatpush.msra.mxu0 %v2163
        %3753 = vmatpush.msra.mxu0 %v2155
        %3754 = vmatpush.msra.mxu0 %v2147
        %3755 = vmatpush.msra.mxu0 %v2139
        %3756 = vmatpush.msra.mxu0 %v2131
        %3757 = vmatpush.msra.mxu0 %v2123
        %3758 = vmatpush.msra.mxu0 %v2115
        %3759 = vmatpush.msra.mxu0 %v2107
        %3760 = vmatpush.msra.mxu0 %v2099
        %3761 = vmatpush.msra.mxu0 %v2091
        %3762 = vmatpush.msra.mxu0 %v2083
        %3763 = vmatpush.msra.mxu0 %v2075
        %3764 = vmatpush.msra.mxu0 %v2067
        %3765 = vmatpush.msra.mxu0 %v2059
        %3766 = vmatpush.msra.mxu0 %v2051
        %3767 = vmatpush.msra.mxu0 %v2043
        %3768 = vmatmul.f32.gmra.mxu0 %v500
        %v3769 = vpop.f32.mrf.mxu0
        %v3770 = vadd.f32 %v3750, %v3769
        %3771 = vdwg.mxu0
        %3772 = vmatpush.msra.mxu0 %v2291
        %3773 = vmatpush.msra.mxu0 %v2283
        %3774 = vmatpush.msra.mxu0 %v2275
        %3775 = vmatpush.msra.mxu0 %v2267
        %3776 = vmatpush.msra.mxu0 %v2259
        %3777 = vmatpush.msra.mxu0 %v2251
        %3778 = vmatpush.msra.mxu0 %v2243
        %3779 = vmatpush.msra.mxu0 %v2235
        %3780 = vmatpush.msra.mxu0 %v2227
        %3781 = vmatpush.msra.mxu0 %v2219
        %3782 = vmatpush.msra.mxu0 %v2211
        %3783 = vmatpush.msra.mxu0 %v2203
        %3784 = vmatpush.msra.mxu0 %v2195
        %3785 = vmatpush.msra.mxu0 %v2187
        %3786 = vmatpush.msra.mxu0 %v2179
        %3787 = vmatpush.msra.mxu0 %v2171
        %3788 = vmatmul.f32.gmra.mxu0 %v501
        %v3789 = vpop.f32.mrf.mxu0
        %v3790 = vadd.f32 %v3770, %v3789
        %3791 = vdwg.mxu0
        %3792 = vmatpush.msra.mxu0 %v2419
        %3793 = vmatpush.msra.mxu0 %v2411
        %3794 = vmatpush.msra.mxu0 %v2403
        %3795 = vmatpush.msra.mxu0 %v2395
        %3796 = vmatpush.msra.mxu0 %v2387
        %3797 = vmatpush.msra.mxu0 %v2379
        %3798 = vmatpush.msra.mxu0 %v2371
        %3799 = vmatpush.msra.mxu0 %v2363
        %3800 = vmatpush.msra.mxu0 %v2355
        %3801 = vmatpush.msra.mxu0 %v2347
        %3802 = vmatpush.msra.mxu0 %v2339
        %3803 = vmatpush.msra.mxu0 %v2331
        %3804 = vmatpush.msra.mxu0 %v2323
        %3805 = vmatpush.msra.mxu0 %v2315
        %3806 = vmatpush.msra.mxu0 %v2307
        %3807 = vmatpush.msra.mxu0 %v2299
        %3808 = vmatmul.f32.gmra.mxu0 %v502
        %v3809 = vpop.f32.mrf.mxu0
        %v3810 = vadd.f32 %v3790, %v3809
        %3811 = vdwg.mxu0
        %3812 = vmatpush.msra.mxu0 %v2547
        %3813 = vmatpush.msra.mxu0 %v2539
        %3814 = vmatpush.msra.mxu0 %v2531
        %3815 = vmatpush.msra.mxu0 %v2523
        %3816 = vmatpush.msra.mxu0 %v2515
        %3817 = vmatpush.msra.mxu0 %v2507
        %3818 = vmatpush.msra.mxu0 %v2499
        %3819 = vmatpush.msra.mxu0 %v2491
        %3820 = vmatpush.msra.mxu0 %v2483
        %3821 = vmatpush.msra.mxu0 %v2475
        %3822 = vmatpush.msra.mxu0 %v2467
        %3823 = vmatpush.msra.mxu0 %v2459
        %3824 = vmatpush.msra.mxu0 %v2451
        %3825 = vmatpush.msra.mxu0 %v2443
        %3826 = vmatpush.msra.mxu0 %v2435
        %3827 = vmatpush.msra.mxu0 %v2427
        %3828 = vmatmul.f32.gmra.mxu0 %v503
        %v3829 = vpop.f32.mrf.mxu0
        %v3830 = vadd.f32 %v3810, %v3829
        %3831 = vdwg.mxu0
        %3832 = vmatpush.msra.mxu0 %v628
        %3833 = vmatpush.msra.mxu0 %v620
        %3834 = vmatpush.msra.mxu0 %v612
        %3835 = vmatpush.msra.mxu0 %v604
        %3836 = vmatpush.msra.mxu0 %v596
        %3837 = vmatpush.msra.mxu0 %v588
        %3838 = vmatpush.msra.mxu0 %v580
        %3839 = vmatpush.msra.mxu0 %v572
        %3840 = vmatpush.msra.mxu0 %v564
        %3841 = vmatpush.msra.mxu0 %v556
        %3842 = vmatpush.msra.mxu0 %v548
        %3843 = vmatpush.msra.mxu0 %v540
        %3844 = vmatpush.msra.mxu0 %v532
        %3845 = vmatpush.msra.mxu0 %v524
        %3846 = vmatpush.msra.mxu0 %v516
        %3847 = vmatpush.msra.mxu0 %v508
        %3848 = vmatmul.f32.gmra.mxu0 %v488
        %v3849 = vpop.f32.mrf.mxu0
        %v3850 = vadd.f32 0.0, %v3849
        %3851 = vdwg.mxu0
        %3852 = vmatpush.msra.mxu0 %v756
        %3853 = vmatpush.msra.mxu0 %v748
        %3854 = vmatpush.msra.mxu0 %v740
        %3855 = vmatpush.msra.mxu0 %v732
        %3856 = vmatpush.msra.mxu0 %v724
        %3857 = vmatpush.msra.mxu0 %v716
        %3858 = vmatpush.msra.mxu0 %v708
        %3859 = vmatpush.msra.mxu0 %v700
        %3860 = vmatpush.msra.mxu0 %v692
        %3861 = vmatpush.msra.mxu0 %v684
        %3862 = vmatpush.msra.mxu0 %v676
        %3863 = vmatpush.msra.mxu0 %v668
        %3864 = vmatpush.msra.mxu0 %v660
        %3865 = vmatpush.msra.mxu0 %v652
        %3866 = vmatpush.msra.mxu0 %v644
        %3867 = vmatpush.msra.mxu0 %v636
        %3868 = vmatmul.f32.gmra.mxu0 %v489
        %v3869 = vpop.f32.mrf.mxu0
        %v3870 = vadd.f32 %v3850, %v3869
        %3871 = vdwg.mxu0
        %3872 = vmatpush.msra.mxu0 %v884
        %3873 = vmatpush.msra.mxu0 %v876
        %3874 = vmatpush.msra.mxu0 %v868
        %3875 = vmatpush.msra.mxu0 %v860
        %3876 = vmatpush.msra.mxu0 %v852
        %3877 = vmatpush.msra.mxu0 %v844
        %3878 = vmatpush.msra.mxu0 %v836
        %3879 = vmatpush.msra.mxu0 %v828
        %3880 = vmatpush.msra.mxu0 %v820
        %3881 = vmatpush.msra.mxu0 %v812
        %3882 = vmatpush.msra.mxu0 %v804
        %3883 = vmatpush.msra.mxu0 %v796
        %3884 = vmatpush.msra.mxu0 %v788
        %3885 = vmatpush.msra.mxu0 %v780
        %3886 = vmatpush.msra.mxu0 %v772
        %3887 = vmatpush.msra.mxu0 %v764
        %3888 = vmatmul.f32.gmra.mxu0 %v490
        %v3889 = vpop.f32.mrf.mxu0
        %v3890 = vadd.f32 %v3870, %v3889
        %3891 = vdwg.mxu0
        %3892 = vmatpush.msra.mxu0 %v1012
        %3893 = vmatpush.msra.mxu0 %v1004
        %3894 = vmatpush.msra.mxu0 %v996
        %3895 = vmatpush.msra.mxu0 %v988
        %3896 = vmatpush.msra.mxu0 %v980
        %3897 = vmatpush.msra.mxu0 %v972
        %3898 = vmatpush.msra.mxu0 %v964
        %3899 = vmatpush.msra.mxu0 %v956
        %3900 = vmatpush.msra.mxu0 %v948
        %3901 = vmatpush.msra.mxu0 %v940
        %3902 = vmatpush.msra.mxu0 %v932
        %3903 = vmatpush.msra.mxu0 %v924
        %3904 = vmatpush.msra.mxu0 %v916
        %3905 = vmatpush.msra.mxu0 %v908
        %3906 = vmatpush.msra.mxu0 %v900
        %3907 = vmatpush.msra.mxu0 %v892
        %3908 = vmatmul.f32.gmra.mxu0 %v491
        %v3909 = vpop.f32.mrf.mxu0
        %v3910 = vadd.f32 %v3890, %v3909
        %3911 = vdwg.mxu0
        %3912 = vmatpush.msra.mxu0 %v1140
        %3913 = vmatpush.msra.mxu0 %v1132
        %3914 = vmatpush.msra.mxu0 %v1124
        %3915 = vmatpush.msra.mxu0 %v1116
        %3916 = vmatpush.msra.mxu0 %v1108
        %3917 = vmatpush.msra.mxu0 %v1100
        %3918 = vmatpush.msra.mxu0 %v1092
        %3919 = vmatpush.msra.mxu0 %v1084
        %3920 = vmatpush.msra.mxu0 %v1076
        %3921 = vmatpush.msra.mxu0 %v1068
        %3922 = vmatpush.msra.mxu0 %v1060
        %3923 = vmatpush.msra.mxu0 %v1052
        %3924 = vmatpush.msra.mxu0 %v1044
        %3925 = vmatpush.msra.mxu0 %v1036
        %3926 = vmatpush.msra.mxu0 %v1028
        %3927 = vmatpush.msra.mxu0 %v1020
        %3928 = vmatmul.f32.gmra.mxu0 %v492
        %v3929 = vpop.f32.mrf.mxu0
        %v3930 = vadd.f32 %v3910, %v3929
        %3931 = vdwg.mxu0
        %3932 = vmatpush.msra.mxu0 %v1268
        %3933 = vmatpush.msra.mxu0 %v1260
        %3934 = vmatpush.msra.mxu0 %v1252
        %3935 = vmatpush.msra.mxu0 %v1244
        %3936 = vmatpush.msra.mxu0 %v1236
        %3937 = vmatpush.msra.mxu0 %v1228
        %3938 = vmatpush.msra.mxu0 %v1220
        %3939 = vmatpush.msra.mxu0 %v1212
        %3940 = vmatpush.msra.mxu0 %v1204
        %3941 = vmatpush.msra.mxu0 %v1196
        %3942 = vmatpush.msra.mxu0 %v1188
        %3943 = vmatpush.msra.mxu0 %v1180
        %3944 = vmatpush.msra.mxu0 %v1172
        %3945 = vmatpush.msra.mxu0 %v1164
        %3946 = vmatpush.msra.mxu0 %v1156
        %3947 = vmatpush.msra.mxu0 %v1148
        %3948 = vmatmul.f32.gmra.mxu0 %v493
        %v3949 = vpop.f32.mrf.mxu0
        %v3950 = vadd.f32 %v3930, %v3949
        %3951 = vdwg.mxu0
        %3952 = vmatpush.msra.mxu0 %v1396
        %3953 = vmatpush.msra.mxu0 %v1388
        %3954 = vmatpush.msra.mxu0 %v1380
        %3955 = vmatpush.msra.mxu0 %v1372
        %3956 = vmatpush.msra.mxu0 %v1364
        %3957 = vmatpush.msra.mxu0 %v1356
        %3958 = vmatpush.msra.mxu0 %v1348
        %3959 = vmatpush.msra.mxu0 %v1340
        %3960 = vmatpush.msra.mxu0 %v1332
        %3961 = vmatpush.msra.mxu0 %v1324
        %3962 = vmatpush.msra.mxu0 %v1316
        %3963 = vmatpush.msra.mxu0 %v1308
        %3964 = vmatpush.msra.mxu0 %v1300
        %3965 = vmatpush.msra.mxu0 %v1292
        %3966 = vmatpush.msra.mxu0 %v1284
        %3967 = vmatpush.msra.mxu0 %v1276
        %3968 = vmatmul.f32.gmra.mxu0 %v494
        %v3969 = vpop.f32.mrf.mxu0
        %v3970 = vadd.f32 %v3950, %v3969
        %3971 = vdwg.mxu0
        %3972 = vmatpush.msra.mxu0 %v1524
        %3973 = vmatpush.msra.mxu0 %v1516
        %3974 = vmatpush.msra.mxu0 %v1508
        %3975 = vmatpush.msra.mxu0 %v1500
        %3976 = vmatpush.msra.mxu0 %v1492
        %3977 = vmatpush.msra.mxu0 %v1484
        %3978 = vmatpush.msra.mxu0 %v1476
        %3979 = vmatpush.msra.mxu0 %v1468
        %3980 = vmatpush.msra.mxu0 %v1460
        %3981 = vmatpush.msra.mxu0 %v1452
        %3982 = vmatpush.msra.mxu0 %v1444
        %3983 = vmatpush.msra.mxu0 %v1436
        %3984 = vmatpush.msra.mxu0 %v1428
        %3985 = vmatpush.msra.mxu0 %v1420
        %3986 = vmatpush.msra.mxu0 %v1412
        %3987 = vmatpush.msra.mxu0 %v1404
        %3988 = vmatmul.f32.gmra.mxu0 %v495
        %v3989 = vpop.f32.mrf.mxu0
        %v3990 = vadd.f32 %v3970, %v3989
        %3991 = vdwg.mxu0
        %3992 = vmatpush.msra.mxu0 %v1652
        %3993 = vmatpush.msra.mxu0 %v1644
        %3994 = vmatpush.msra.mxu0 %v1636
        %3995 = vmatpush.msra.mxu0 %v1628
        %3996 = vmatpush.msra.mxu0 %v1620
        %3997 = vmatpush.msra.mxu0 %v1612
        %3998 = vmatpush.msra.mxu0 %v1604
        %3999 = vmatpush.msra.mxu0 %v1596
        %4000 = vmatpush.msra.mxu0 %v1588
        %4001 = vmatpush.msra.mxu0 %v1580
        %4002 = vmatpush.msra.mxu0 %v1572
        %4003 = vmatpush.msra.mxu0 %v1564
        %4004 = vmatpush.msra.mxu0 %v1556
        %4005 = vmatpush.msra.mxu0 %v1548
        %4006 = vmatpush.msra.mxu0 %v1540
        %4007 = vmatpush.msra.mxu0 %v1532
        %4008 = vmatmul.f32.gmra.mxu0 %v496
        %v4009 = vpop.f32.mrf.mxu0
        %v4010 = vadd.f32 %v3990, %v4009
        %4011 = vdwg.mxu0
        %4012 = vmatpush.msra.mxu0 %v1780
        %4013 = vmatpush.msra.mxu0 %v1772
        %4014 = vmatpush.msra.mxu0 %v1764
        %4015 = vmatpush.msra.mxu0 %v1756
        %4016 = vmatpush.msra.mxu0 %v1748
        %4017 = vmatpush.msra.mxu0 %v1740
        %4018 = vmatpush.msra.mxu0 %v1732
        %4019 = vmatpush.msra.mxu0 %v1724
        %4020 = vmatpush.msra.mxu0 %v1716
        %4021 = vmatpush.msra.mxu0 %v1708
        %4022 = vmatpush.msra.mxu0 %v1700
        %4023 = vmatpush.msra.mxu0 %v1692
        %4024 = vmatpush.msra.mxu0 %v1684
        %4025 = vmatpush.msra.mxu0 %v1676
        %4026 = vmatpush.msra.mxu0 %v1668
        %4027 = vmatpush.msra.mxu0 %v1660
        %4028 = vmatmul.f32.gmra.mxu0 %v497
        %v4029 = vpop.f32.mrf.mxu0
        %v4030 = vadd.f32 %v4010, %v4029
        %4031 = vdwg.mxu0
        %4032 = vmatpush.msra.mxu0 %v1908
        %4033 = vmatpush.msra.mxu0 %v1900
        %4034 = vmatpush.msra.mxu0 %v1892
        %4035 = vmatpush.msra.mxu0 %v1884
        %4036 = vmatpush.msra.mxu0 %v1876
        %4037 = vmatpush.msra.mxu0 %v1868
        %4038 = vmatpush.msra.mxu0 %v1860
        %4039 = vmatpush.msra.mxu0 %v1852
        %4040 = vmatpush.msra.mxu0 %v1844
        %4041 = vmatpush.msra.mxu0 %v1836
        %4042 = vmatpush.msra.mxu0 %v1828
        %4043 = vmatpush.msra.mxu0 %v1820
        %4044 = vmatpush.msra.mxu0 %v1812
        %4045 = vmatpush.msra.mxu0 %v1804
        %4046 = vmatpush.msra.mxu0 %v1796
        %4047 = vmatpush.msra.mxu0 %v1788
        %4048 = vmatmul.f32.gmra.mxu0 %v498
        %v4049 = vpop.f32.mrf.mxu0
        %v4050 = vadd.f32 %v4030, %v4049
        %4051 = vdwg.mxu0
        %4052 = vmatpush.msra.mxu0 %v2036
        %4053 = vmatpush.msra.mxu0 %v2028
        %4054 = vmatpush.msra.mxu0 %v2020
        %4055 = vmatpush.msra.mxu0 %v2012
        %4056 = vmatpush.msra.mxu0 %v2004
        %4057 = vmatpush.msra.mxu0 %v1996
        %4058 = vmatpush.msra.mxu0 %v1988
        %4059 = vmatpush.msra.mxu0 %v1980
        %4060 = vmatpush.msra.mxu0 %v1972
        %4061 = vmatpush.msra.mxu0 %v1964
        %4062 = vmatpush.msra.mxu0 %v1956
        %4063 = vmatpush.msra.mxu0 %v1948
        %4064 = vmatpush.msra.mxu0 %v1940
        %4065 = vmatpush.msra.mxu0 %v1932
        %4066 = vmatpush.msra.mxu0 %v1924
        %4067 = vmatpush.msra.mxu0 %v1916
        %4068 = vmatmul.f32.gmra.mxu0 %v499
        %v4069 = vpop.f32.mrf.mxu0
        %v4070 = vadd.f32 %v4050, %v4069
        %4071 = vdwg.mxu0
        %4072 = vmatpush.msra.mxu0 %v2164
        %4073 = vmatpush.msra.mxu0 %v2156
        %4074 = vmatpush.msra.mxu0 %v2148
        %4075 = vmatpush.msra.mxu0 %v2140
        %4076 = vmatpush.msra.mxu0 %v2132
        %4077 = vmatpush.msra.mxu0 %v2124
        %4078 = vmatpush.msra.mxu0 %v2116
        %4079 = vmatpush.msra.mxu0 %v2108
        %4080 = vmatpush.msra.mxu0 %v2100
        %4081 = vmatpush.msra.mxu0 %v2092
        %4082 = vmatpush.msra.mxu0 %v2084
        %4083 = vmatpush.msra.mxu0 %v2076
        %4084 = vmatpush.msra.mxu0 %v2068
        %4085 = vmatpush.msra.mxu0 %v2060
        %4086 = vmatpush.msra.mxu0 %v2052
        %4087 = vmatpush.msra.mxu0 %v2044
        %4088 = vmatmul.f32.gmra.mxu0 %v500
        %v4089 = vpop.f32.mrf.mxu0
        %v4090 = vadd.f32 %v4070, %v4089
        %4091 = vdwg.mxu0
        %4092 = vmatpush.msra.mxu0 %v2292
        %4093 = vmatpush.msra.mxu0 %v2284
        %4094 = vmatpush.msra.mxu0 %v2276
        %4095 = vmatpush.msra.mxu0 %v2268
        %4096 = vmatpush.msra.mxu0 %v2260
        %4097 = vmatpush.msra.mxu0 %v2252
        %4098 = vmatpush.msra.mxu0 %v2244
        %4099 = vmatpush.msra.mxu0 %v2236
        %4100 = vmatpush.msra.mxu0 %v2228
        %4101 = vmatpush.msra.mxu0 %v2220
        %4102 = vmatpush.msra.mxu0 %v2212
        %4103 = vmatpush.msra.mxu0 %v2204
        %4104 = vmatpush.msra.mxu0 %v2196
        %4105 = vmatpush.msra.mxu0 %v2188
        %4106 = vmatpush.msra.mxu0 %v2180
        %4107 = vmatpush.msra.mxu0 %v2172
        %4108 = vmatmul.f32.gmra.mxu0 %v501
        %v4109 = vpop.f32.mrf.mxu0
        %v4110 = vadd.f32 %v4090, %v4109
        %4111 = vdwg.mxu0
        %4112 = vmatpush.msra.mxu0 %v2420
        %4113 = vmatpush.msra.mxu0 %v2412
        %4114 = vmatpush.msra.mxu0 %v2404
        %4115 = vmatpush.msra.mxu0 %v2396
        %4116 = vmatpush.msra.mxu0 %v2388
        %4117 = vmatpush.msra.mxu0 %v2380
        %4118 = vmatpush.msra.mxu0 %v2372
        %4119 = vmatpush.msra.mxu0 %v2364
        %4120 = vmatpush.msra.mxu0 %v2356
        %4121 = vmatpush.msra.mxu0 %v2348
        %4122 = vmatpush.msra.mxu0 %v2340
        %4123 = vmatpush.msra.mxu0 %v2332
        %4124 = vmatpush.msra.mxu0 %v2324
        %4125 = vmatpush.msra.mxu0 %v2316
        %4126 = vmatpush.msra.mxu0 %v2308
        %4127 = vmatpush.msra.mxu0 %v2300
        %4128 = vmatmul.f32.gmra.mxu0 %v502
        %v4129 = vpop.f32.mrf.mxu0
        %v4130 = vadd.f32 %v4110, %v4129
        %4131 = vdwg.mxu0
        %4132 = vmatpush.msra.mxu0 %v2548
        %4133 = vmatpush.msra.mxu0 %v2540
        %4134 = vmatpush.msra.mxu0 %v2532
        %4135 = vmatpush.msra.mxu0 %v2524
        %4136 = vmatpush.msra.mxu0 %v2516
        %4137 = vmatpush.msra.mxu0 %v2508
        %4138 = vmatpush.msra.mxu0 %v2500
        %4139 = vmatpush.msra.mxu0 %v2492
        %4140 = vmatpush.msra.mxu0 %v2484
        %4141 = vmatpush.msra.mxu0 %v2476
        %4142 = vmatpush.msra.mxu0 %v2468
        %4143 = vmatpush.msra.mxu0 %v2460
        %4144 = vmatpush.msra.mxu0 %v2452
        %4145 = vmatpush.msra.mxu0 %v2444
        %4146 = vmatpush.msra.mxu0 %v2436
        %4147 = vmatpush.msra.mxu0 %v2428
        %4148 = vmatmul.f32.gmra.mxu0 %v503
        %v4149 = vpop.f32.mrf.mxu0
        %v4150 = vadd.f32 %v4130, %v4149
        %4151 = vdwg.mxu0
        %4152 = vmatpush.msra.mxu0 %v629
        %4153 = vmatpush.msra.mxu0 %v621
        %4154 = vmatpush.msra.mxu0 %v613
        %4155 = vmatpush.msra.mxu0 %v605
        %4156 = vmatpush.msra.mxu0 %v597
        %4157 = vmatpush.msra.mxu0 %v589
        %4158 = vmatpush.msra.mxu0 %v581
        %4159 = vmatpush.msra.mxu0 %v573
        %4160 = vmatpush.msra.mxu0 %v565
        %4161 = vmatpush.msra.mxu0 %v557
        %4162 = vmatpush.msra.mxu0 %v549
        %4163 = vmatpush.msra.mxu0 %v541
        %4164 = vmatpush.msra.mxu0 %v533
        %4165 = vmatpush.msra.mxu0 %v525
        %4166 = vmatpush.msra.mxu0 %v517
        %4167 = vmatpush.msra.mxu0 %v509
        %4168 = vmatmul.f32.gmra.mxu0 %v488
        %v4169 = vpop.f32.mrf.mxu0
        %v4170 = vadd.f32 0.0, %v4169
        %4171 = vdwg.mxu0
        %4172 = vmatpush.msra.mxu0 %v757
        %4173 = vmatpush.msra.mxu0 %v749
        %4174 = vmatpush.msra.mxu0 %v741
        %4175 = vmatpush.msra.mxu0 %v733
        %4176 = vmatpush.msra.mxu0 %v725
        %4177 = vmatpush.msra.mxu0 %v717
        %4178 = vmatpush.msra.mxu0 %v709
        %4179 = vmatpush.msra.mxu0 %v701
        %4180 = vmatpush.msra.mxu0 %v693
        %4181 = vmatpush.msra.mxu0 %v685
        %4182 = vmatpush.msra.mxu0 %v677
        %4183 = vmatpush.msra.mxu0 %v669
        %4184 = vmatpush.msra.mxu0 %v661
        %4185 = vmatpush.msra.mxu0 %v653
        %4186 = vmatpush.msra.mxu0 %v645
        %4187 = vmatpush.msra.mxu0 %v637
        %4188 = vmatmul.f32.gmra.mxu0 %v489
        %v4189 = vpop.f32.mrf.mxu0
        %v4190 = vadd.f32 %v4170, %v4189
        %4191 = vdwg.mxu0
        %4192 = vmatpush.msra.mxu0 %v885
        %4193 = vmatpush.msra.mxu0 %v877
        %4194 = vmatpush.msra.mxu0 %v869
        %4195 = vmatpush.msra.mxu0 %v861
        %4196 = vmatpush.msra.mxu0 %v853
        %4197 = vmatpush.msra.mxu0 %v845
        %4198 = vmatpush.msra.mxu0 %v837
        %4199 = vmatpush.msra.mxu0 %v829
        %4200 = vmatpush.msra.mxu0 %v821
        %4201 = vmatpush.msra.mxu0 %v813
        %4202 = vmatpush.msra.mxu0 %v805
        %4203 = vmatpush.msra.mxu0 %v797
        %4204 = vmatpush.msra.mxu0 %v789
        %4205 = vmatpush.msra.mxu0 %v781
        %4206 = vmatpush.msra.mxu0 %v773
        %4207 = vmatpush.msra.mxu0 %v765
        %4208 = vmatmul.f32.gmra.mxu0 %v490
        %v4209 = vpop.f32.mrf.mxu0
        %v4210 = vadd.f32 %v4190, %v4209
        %4211 = vdwg.mxu0
        %4212 = vmatpush.msra.mxu0 %v1013
        %4213 = vmatpush.msra.mxu0 %v1005
        %4214 = vmatpush.msra.mxu0 %v997
        %4215 = vmatpush.msra.mxu0 %v989
        %4216 = vmatpush.msra.mxu0 %v981
        %4217 = vmatpush.msra.mxu0 %v973
        %4218 = vmatpush.msra.mxu0 %v965
        %4219 = vmatpush.msra.mxu0 %v957
        %4220 = vmatpush.msra.mxu0 %v949
        %4221 = vmatpush.msra.mxu0 %v941
        %4222 = vmatpush.msra.mxu0 %v933
        %4223 = vmatpush.msra.mxu0 %v925
        %4224 = vmatpush.msra.mxu0 %v917
        %4225 = vmatpush.msra.mxu0 %v909
        %4226 = vmatpush.msra.mxu0 %v901
        %4227 = vmatpush.msra.mxu0 %v893
        %4228 = vmatmul.f32.gmra.mxu0 %v491
        %v4229 = vpop.f32.mrf.mxu0
        %v4230 = vadd.f32 %v4210, %v4229
        %4231 = vdwg.mxu0
        %4232 = vmatpush.msra.mxu0 %v1141
        %4233 = vmatpush.msra.mxu0 %v1133
        %4234 = vmatpush.msra.mxu0 %v1125
        %4235 = vmatpush.msra.mxu0 %v1117
        %4236 = vmatpush.msra.mxu0 %v1109
        %4237 = vmatpush.msra.mxu0 %v1101
        %4238 = vmatpush.msra.mxu0 %v1093
        %4239 = vmatpush.msra.mxu0 %v1085
        %4240 = vmatpush.msra.mxu0 %v1077
        %4241 = vmatpush.msra.mxu0 %v1069
        %4242 = vmatpush.msra.mxu0 %v1061
        %4243 = vmatpush.msra.mxu0 %v1053
        %4244 = vmatpush.msra.mxu0 %v1045
        %4245 = vmatpush.msra.mxu0 %v1037
        %4246 = vmatpush.msra.mxu0 %v1029
        %4247 = vmatpush.msra.mxu0 %v1021
        %4248 = vmatmul.f32.gmra.mxu0 %v492
        %v4249 = vpop.f32.mrf.mxu0
        %v4250 = vadd.f32 %v4230, %v4249
        %4251 = vdwg.mxu0
        %4252 = vmatpush.msra.mxu0 %v1269
        %4253 = vmatpush.msra.mxu0 %v1261
        %4254 = vmatpush.msra.mxu0 %v1253
        %4255 = vmatpush.msra.mxu0 %v1245
        %4256 = vmatpush.msra.mxu0 %v1237
        %4257 = vmatpush.msra.mxu0 %v1229
        %4258 = vmatpush.msra.mxu0 %v1221
        %4259 = vmatpush.msra.mxu0 %v1213
        %4260 = vmatpush.msra.mxu0 %v1205
        %4261 = vmatpush.msra.mxu0 %v1197
        %4262 = vmatpush.msra.mxu0 %v1189
        %4263 = vmatpush.msra.mxu0 %v1181
        %4264 = vmatpush.msra.mxu0 %v1173
        %4265 = vmatpush.msra.mxu0 %v1165
        %4266 = vmatpush.msra.mxu0 %v1157
        %4267 = vmatpush.msra.mxu0 %v1149
        %4268 = vmatmul.f32.gmra.mxu0 %v493
        %v4269 = vpop.f32.mrf.mxu0
        %v4270 = vadd.f32 %v4250, %v4269
        %4271 = vdwg.mxu0
        %4272 = vmatpush.msra.mxu0 %v1397
        %4273 = vmatpush.msra.mxu0 %v1389
        %4274 = vmatpush.msra.mxu0 %v1381
        %4275 = vmatpush.msra.mxu0 %v1373
        %4276 = vmatpush.msra.mxu0 %v1365
        %4277 = vmatpush.msra.mxu0 %v1357
        %4278 = vmatpush.msra.mxu0 %v1349
        %4279 = vmatpush.msra.mxu0 %v1341
        %4280 = vmatpush.msra.mxu0 %v1333
        %4281 = vmatpush.msra.mxu0 %v1325
        %4282 = vmatpush.msra.mxu0 %v1317
        %4283 = vmatpush.msra.mxu0 %v1309
        %4284 = vmatpush.msra.mxu0 %v1301
        %4285 = vmatpush.msra.mxu0 %v1293
        %4286 = vmatpush.msra.mxu0 %v1285
        %4287 = vmatpush.msra.mxu0 %v1277
        %4288 = vmatmul.f32.gmra.mxu0 %v494
        %v4289 = vpop.f32.mrf.mxu0
        %v4290 = vadd.f32 %v4270, %v4289
        %4291 = vdwg.mxu0
        %4292 = vmatpush.msra.mxu0 %v1525
        %4293 = vmatpush.msra.mxu0 %v1517
        %4294 = vmatpush.msra.mxu0 %v1509
        %4295 = vmatpush.msra.mxu0 %v1501
        %4296 = vmatpush.msra.mxu0 %v1493
        %4297 = vmatpush.msra.mxu0 %v1485
        %4298 = vmatpush.msra.mxu0 %v1477
        %4299 = vmatpush.msra.mxu0 %v1469
        %4300 = vmatpush.msra.mxu0 %v1461
        %4301 = vmatpush.msra.mxu0 %v1453
        %4302 = vmatpush.msra.mxu0 %v1445
        %4303 = vmatpush.msra.mxu0 %v1437
        %4304 = vmatpush.msra.mxu0 %v1429
        %4305 = vmatpush.msra.mxu0 %v1421
        %4306 = vmatpush.msra.mxu0 %v1413
        %4307 = vmatpush.msra.mxu0 %v1405
        %4308 = vmatmul.f32.gmra.mxu0 %v495
        %v4309 = vpop.f32.mrf.mxu0
        %v4310 = vadd.f32 %v4290, %v4309
        %4311 = vdwg.mxu0
        %4312 = vmatpush.msra.mxu0 %v1653
        %4313 = vmatpush.msra.mxu0 %v1645
        %4314 = vmatpush.msra.mxu0 %v1637
        %4315 = vmatpush.msra.mxu0 %v1629
        %4316 = vmatpush.msra.mxu0 %v1621
        %4317 = vmatpush.msra.mxu0 %v1613
        %4318 = vmatpush.msra.mxu0 %v1605
        %4319 = vmatpush.msra.mxu0 %v1597
        %4320 = vmatpush.msra.mxu0 %v1589
        %4321 = vmatpush.msra.mxu0 %v1581
        %4322 = vmatpush.msra.mxu0 %v1573
        %4323 = vmatpush.msra.mxu0 %v1565
        %4324 = vmatpush.msra.mxu0 %v1557
        %4325 = vmatpush.msra.mxu0 %v1549
        %4326 = vmatpush.msra.mxu0 %v1541
        %4327 = vmatpush.msra.mxu0 %v1533
        %4328 = vmatmul.f32.gmra.mxu0 %v496
        %v4329 = vpop.f32.mrf.mxu0
        %v4330 = vadd.f32 %v4310, %v4329
        %4331 = vdwg.mxu0
        %4332 = vmatpush.msra.mxu0 %v1781
        %4333 = vmatpush.msra.mxu0 %v1773
        %4334 = vmatpush.msra.mxu0 %v1765
        %4335 = vmatpush.msra.mxu0 %v1757
        %4336 = vmatpush.msra.mxu0 %v1749
        %4337 = vmatpush.msra.mxu0 %v1741
        %4338 = vmatpush.msra.mxu0 %v1733
        %4339 = vmatpush.msra.mxu0 %v1725
        %4340 = vmatpush.msra.mxu0 %v1717
        %4341 = vmatpush.msra.mxu0 %v1709
        %4342 = vmatpush.msra.mxu0 %v1701
        %4343 = vmatpush.msra.mxu0 %v1693
        %4344 = vmatpush.msra.mxu0 %v1685
        %4345 = vmatpush.msra.mxu0 %v1677
        %4346 = vmatpush.msra.mxu0 %v1669
        %4347 = vmatpush.msra.mxu0 %v1661
        %4348 = vmatmul.f32.gmra.mxu0 %v497
        %v4349 = vpop.f32.mrf.mxu0
        %v4350 = vadd.f32 %v4330, %v4349
        %4351 = vdwg.mxu0
        %4352 = vmatpush.msra.mxu0 %v1909
        %4353 = vmatpush.msra.mxu0 %v1901
        %4354 = vmatpush.msra.mxu0 %v1893
        %4355 = vmatpush.msra.mxu0 %v1885
        %4356 = vmatpush.msra.mxu0 %v1877
        %4357 = vmatpush.msra.mxu0 %v1869
        %4358 = vmatpush.msra.mxu0 %v1861
        %4359 = vmatpush.msra.mxu0 %v1853
        %4360 = vmatpush.msra.mxu0 %v1845
        %4361 = vmatpush.msra.mxu0 %v1837
        %4362 = vmatpush.msra.mxu0 %v1829
        %4363 = vmatpush.msra.mxu0 %v1821
        %4364 = vmatpush.msra.mxu0 %v1813
        %4365 = vmatpush.msra.mxu0 %v1805
        %4366 = vmatpush.msra.mxu0 %v1797
        %4367 = vmatpush.msra.mxu0 %v1789
        %4368 = vmatmul.f32.gmra.mxu0 %v498
        %v4369 = vpop.f32.mrf.mxu0
        %v4370 = vadd.f32 %v4350, %v4369
        %4371 = vdwg.mxu0
        %4372 = vmatpush.msra.mxu0 %v2037
        %4373 = vmatpush.msra.mxu0 %v2029
        %4374 = vmatpush.msra.mxu0 %v2021
        %4375 = vmatpush.msra.mxu0 %v2013
        %4376 = vmatpush.msra.mxu0 %v2005
        %4377 = vmatpush.msra.mxu0 %v1997
        %4378 = vmatpush.msra.mxu0 %v1989
        %4379 = vmatpush.msra.mxu0 %v1981
        %4380 = vmatpush.msra.mxu0 %v1973
        %4381 = vmatpush.msra.mxu0 %v1965
        %4382 = vmatpush.msra.mxu0 %v1957
        %4383 = vmatpush.msra.mxu0 %v1949
        %4384 = vmatpush.msra.mxu0 %v1941
        %4385 = vmatpush.msra.mxu0 %v1933
        %4386 = vmatpush.msra.mxu0 %v1925
        %4387 = vmatpush.msra.mxu0 %v1917
        %4388 = vmatmul.f32.gmra.mxu0 %v499
        %v4389 = vpop.f32.mrf.mxu0
        %v4390 = vadd.f32 %v4370, %v4389
        %4391 = vdwg.mxu0
        %4392 = vmatpush.msra.mxu0 %v2165
        %4393 = vmatpush.msra.mxu0 %v2157
        %4394 = vmatpush.msra.mxu0 %v2149
        %4395 = vmatpush.msra.mxu0 %v2141
        %4396 = vmatpush.msra.mxu0 %v2133
        %4397 = vmatpush.msra.mxu0 %v2125
        %4398 = vmatpush.msra.mxu0 %v2117
        %4399 = vmatpush.msra.mxu0 %v2109
        %4400 = vmatpush.msra.mxu0 %v2101
        %4401 = vmatpush.msra.mxu0 %v2093
        %4402 = vmatpush.msra.mxu0 %v2085
        %4403 = vmatpush.msra.mxu0 %v2077
        %4404 = vmatpush.msra.mxu0 %v2069
        %4405 = vmatpush.msra.mxu0 %v2061
        %4406 = vmatpush.msra.mxu0 %v2053
        %4407 = vmatpush.msra.mxu0 %v2045
        %4408 = vmatmul.f32.gmra.mxu0 %v500
        %v4409 = vpop.f32.mrf.mxu0
        %v4410 = vadd.f32 %v4390, %v4409
        %4411 = vdwg.mxu0
        %4412 = vmatpush.msra.mxu0 %v2293
        %4413 = vmatpush.msra.mxu0 %v2285
        %4414 = vmatpush.msra.mxu0 %v2277
        %4415 = vmatpush.msra.mxu0 %v2269
        %4416 = vmatpush.msra.mxu0 %v2261
        %4417 = vmatpush.msra.mxu0 %v2253
        %4418 = vmatpush.msra.mxu0 %v2245
        %4419 = vmatpush.msra.mxu0 %v2237
        %4420 = vmatpush.msra.mxu0 %v2229
        %4421 = vmatpush.msra.mxu0 %v2221
        %4422 = vmatpush.msra.mxu0 %v2213
        %4423 = vmatpush.msra.mxu0 %v2205
        %4424 = vmatpush.msra.mxu0 %v2197
        %4425 = vmatpush.msra.mxu0 %v2189
        %4426 = vmatpush.msra.mxu0 %v2181
        %4427 = vmatpush.msra.mxu0 %v2173
        %4428 = vmatmul.f32.gmra.mxu0 %v501
        %v4429 = vpop.f32.mrf.mxu0
        %v4430 = vadd.f32 %v4410, %v4429
        %4431 = vdwg.mxu0
        %4432 = vmatpush.msra.mxu0 %v2421
        %4433 = vmatpush.msra.mxu0 %v2413
        %4434 = vmatpush.msra.mxu0 %v2405
        %4435 = vmatpush.msra.mxu0 %v2397
        %4436 = vmatpush.msra.mxu0 %v2389
        %4437 = vmatpush.msra.mxu0 %v2381
        %4438 = vmatpush.msra.mxu0 %v2373
        %4439 = vmatpush.msra.mxu0 %v2365
        %4440 = vmatpush.msra.mxu0 %v2357
        %4441 = vmatpush.msra.mxu0 %v2349
        %4442 = vmatpush.msra.mxu0 %v2341
        %4443 = vmatpush.msra.mxu0 %v2333
        %4444 = vmatpush.msra.mxu0 %v2325
        %4445 = vmatpush.msra.mxu0 %v2317
        %4446 = vmatpush.msra.mxu0 %v2309
        %4447 = vmatpush.msra.mxu0 %v2301
        %4448 = vmatmul.f32.gmra.mxu0 %v502
        %v4449 = vpop.f32.mrf.mxu0
        %v4450 = vadd.f32 %v4430, %v4449
        %4451 = vdwg.mxu0
        %4452 = vmatpush.msra.mxu0 %v2549
        %4453 = vmatpush.msra.mxu0 %v2541
        %4454 = vmatpush.msra.mxu0 %v2533
        %4455 = vmatpush.msra.mxu0 %v2525
        %4456 = vmatpush.msra.mxu0 %v2517
        %4457 = vmatpush.msra.mxu0 %v2509
        %4458 = vmatpush.msra.mxu0 %v2501
        %4459 = vmatpush.msra.mxu0 %v2493
        %4460 = vmatpush.msra.mxu0 %v2485
        %4461 = vmatpush.msra.mxu0 %v2477
        %4462 = vmatpush.msra.mxu0 %v2469
        %4463 = vmatpush.msra.mxu0 %v2461
        %4464 = vmatpush.msra.mxu0 %v2453
        %4465 = vmatpush.msra.mxu0 %v2445
        %4466 = vmatpush.msra.mxu0 %v2437
        %4467 = vmatpush.msra.mxu0 %v2429
        %4468 = vmatmul.f32.gmra.mxu0 %v503
        %v4469 = vpop.f32.mrf.mxu0
        %v4470 = vadd.f32 %v4450, %v4469
        %4471 = vdwg.mxu0
        %4472 = vmatpush.msra.mxu0 %v630
        %4473 = vmatpush.msra.mxu0 %v622
        %4474 = vmatpush.msra.mxu0 %v614
        %4475 = vmatpush.msra.mxu0 %v606
        %4476 = vmatpush.msra.mxu0 %v598
        %4477 = vmatpush.msra.mxu0 %v590
        %4478 = vmatpush.msra.mxu0 %v582
        %4479 = vmatpush.msra.mxu0 %v574
        %4480 = vmatpush.msra.mxu0 %v566
        %4481 = vmatpush.msra.mxu0 %v558
        %4482 = vmatpush.msra.mxu0 %v550
        %4483 = vmatpush.msra.mxu0 %v542
        %4484 = vmatpush.msra.mxu0 %v534
        %4485 = vmatpush.msra.mxu0 %v526
        %4486 = vmatpush.msra.mxu0 %v518
        %4487 = vmatpush.msra.mxu0 %v510
        %4488 = vmatmul.f32.gmra.mxu0 %v488
        %v4489 = vpop.f32.mrf.mxu0
        %v4490 = vadd.f32 0.0, %v4489
        %4491 = vdwg.mxu0
        %4492 = vmatpush.msra.mxu0 %v758
        %4493 = vmatpush.msra.mxu0 %v750
        %4494 = vmatpush.msra.mxu0 %v742
        %4495 = vmatpush.msra.mxu0 %v734
        %4496 = vmatpush.msra.mxu0 %v726
        %4497 = vmatpush.msra.mxu0 %v718
        %4498 = vmatpush.msra.mxu0 %v710
        %4499 = vmatpush.msra.mxu0 %v702
        %4500 = vmatpush.msra.mxu0 %v694
        %4501 = vmatpush.msra.mxu0 %v686
        %4502 = vmatpush.msra.mxu0 %v678
        %4503 = vmatpush.msra.mxu0 %v670
        %4504 = vmatpush.msra.mxu0 %v662
        %4505 = vmatpush.msra.mxu0 %v654
        %4506 = vmatpush.msra.mxu0 %v646
        %4507 = vmatpush.msra.mxu0 %v638
        %4508 = vmatmul.f32.gmra.mxu0 %v489
        %v4509 = vpop.f32.mrf.mxu0
        %v4510 = vadd.f32 %v4490, %v4509
        %4511 = vdwg.mxu0
        %4512 = vmatpush.msra.mxu0 %v886
        %4513 = vmatpush.msra.mxu0 %v878
        %4514 = vmatpush.msra.mxu0 %v870
        %4515 = vmatpush.msra.mxu0 %v862
        %4516 = vmatpush.msra.mxu0 %v854
        %4517 = vmatpush.msra.mxu0 %v846
        %4518 = vmatpush.msra.mxu0 %v838
        %4519 = vmatpush.msra.mxu0 %v830
        %4520 = vmatpush.msra.mxu0 %v822
        %4521 = vmatpush.msra.mxu0 %v814
        %4522 = vmatpush.msra.mxu0 %v806
        %4523 = vmatpush.msra.mxu0 %v798
        %4524 = vmatpush.msra.mxu0 %v790
        %4525 = vmatpush.msra.mxu0 %v782
        %4526 = vmatpush.msra.mxu0 %v774
        %4527 = vmatpush.msra.mxu0 %v766
        %4528 = vmatmul.f32.gmra.mxu0 %v490
        %v4529 = vpop.f32.mrf.mxu0
        %v4530 = vadd.f32 %v4510, %v4529
        %4531 = vdwg.mxu0
        %4532 = vmatpush.msra.mxu0 %v1014
        %4533 = vmatpush.msra.mxu0 %v1006
        %4534 = vmatpush.msra.mxu0 %v998
        %4535 = vmatpush.msra.mxu0 %v990
        %4536 = vmatpush.msra.mxu0 %v982
        %4537 = vmatpush.msra.mxu0 %v974
        %4538 = vmatpush.msra.mxu0 %v966
        %4539 = vmatpush.msra.mxu0 %v958
        %4540 = vmatpush.msra.mxu0 %v950
        %4541 = vmatpush.msra.mxu0 %v942
        %4542 = vmatpush.msra.mxu0 %v934
        %4543 = vmatpush.msra.mxu0 %v926
        %4544 = vmatpush.msra.mxu0 %v918
        %4545 = vmatpush.msra.mxu0 %v910
        %4546 = vmatpush.msra.mxu0 %v902
        %4547 = vmatpush.msra.mxu0 %v894
        %4548 = vmatmul.f32.gmra.mxu0 %v491
        %v4549 = vpop.f32.mrf.mxu0
        %v4550 = vadd.f32 %v4530, %v4549
        %4551 = vdwg.mxu0
        %4552 = vmatpush.msra.mxu0 %v1142
        %4553 = vmatpush.msra.mxu0 %v1134
        %4554 = vmatpush.msra.mxu0 %v1126
        %4555 = vmatpush.msra.mxu0 %v1118
        %4556 = vmatpush.msra.mxu0 %v1110
        %4557 = vmatpush.msra.mxu0 %v1102
        %4558 = vmatpush.msra.mxu0 %v1094
        %4559 = vmatpush.msra.mxu0 %v1086
        %4560 = vmatpush.msra.mxu0 %v1078
        %4561 = vmatpush.msra.mxu0 %v1070
        %4562 = vmatpush.msra.mxu0 %v1062
        %4563 = vmatpush.msra.mxu0 %v1054
        %4564 = vmatpush.msra.mxu0 %v1046
        %4565 = vmatpush.msra.mxu0 %v1038
        %4566 = vmatpush.msra.mxu0 %v1030
        %4567 = vmatpush.msra.mxu0 %v1022
        %4568 = vmatmul.f32.gmra.mxu0 %v492
        %v4569 = vpop.f32.mrf.mxu0
        %v4570 = vadd.f32 %v4550, %v4569
        %4571 = vdwg.mxu0
        %4572 = vmatpush.msra.mxu0 %v1270
        %4573 = vmatpush.msra.mxu0 %v1262
        %4574 = vmatpush.msra.mxu0 %v1254
        %4575 = vmatpush.msra.mxu0 %v1246
        %4576 = vmatpush.msra.mxu0 %v1238
        %4577 = vmatpush.msra.mxu0 %v1230
        %4578 = vmatpush.msra.mxu0 %v1222
        %4579 = vmatpush.msra.mxu0 %v1214
        %4580 = vmatpush.msra.mxu0 %v1206
        %4581 = vmatpush.msra.mxu0 %v1198
        %4582 = vmatpush.msra.mxu0 %v1190
        %4583 = vmatpush.msra.mxu0 %v1182
        %4584 = vmatpush.msra.mxu0 %v1174
        %4585 = vmatpush.msra.mxu0 %v1166
        %4586 = vmatpush.msra.mxu0 %v1158
        %4587 = vmatpush.msra.mxu0 %v1150
        %4588 = vmatmul.f32.gmra.mxu0 %v493
        %v4589 = vpop.f32.mrf.mxu0
        %v4590 = vadd.f32 %v4570, %v4589
        %4591 = vdwg.mxu0
        %4592 = vmatpush.msra.mxu0 %v1398
        %4593 = vmatpush.msra.mxu0 %v1390
        %4594 = vmatpush.msra.mxu0 %v1382
        %4595 = vmatpush.msra.mxu0 %v1374
        %4596 = vmatpush.msra.mxu0 %v1366
        %4597 = vmatpush.msra.mxu0 %v1358
        %4598 = vmatpush.msra.mxu0 %v1350
        %4599 = vmatpush.msra.mxu0 %v1342
        %4600 = vmatpush.msra.mxu0 %v1334
        %4601 = vmatpush.msra.mxu0 %v1326
        %4602 = vmatpush.msra.mxu0 %v1318
        %4603 = vmatpush.msra.mxu0 %v1310
        %4604 = vmatpush.msra.mxu0 %v1302
        %4605 = vmatpush.msra.mxu0 %v1294
        %4606 = vmatpush.msra.mxu0 %v1286
        %4607 = vmatpush.msra.mxu0 %v1278
        %4608 = vmatmul.f32.gmra.mxu0 %v494
        %v4609 = vpop.f32.mrf.mxu0
        %v4610 = vadd.f32 %v4590, %v4609
        %4611 = vdwg.mxu0
        %4612 = vmatpush.msra.mxu0 %v1526
        %4613 = vmatpush.msra.mxu0 %v1518
        %4614 = vmatpush.msra.mxu0 %v1510
        %4615 = vmatpush.msra.mxu0 %v1502
        %4616 = vmatpush.msra.mxu0 %v1494
        %4617 = vmatpush.msra.mxu0 %v1486
        %4618 = vmatpush.msra.mxu0 %v1478
        %4619 = vmatpush.msra.mxu0 %v1470
        %4620 = vmatpush.msra.mxu0 %v1462
        %4621 = vmatpush.msra.mxu0 %v1454
        %4622 = vmatpush.msra.mxu0 %v1446
        %4623 = vmatpush.msra.mxu0 %v1438
        %4624 = vmatpush.msra.mxu0 %v1430
        %4625 = vmatpush.msra.mxu0 %v1422
        %4626 = vmatpush.msra.mxu0 %v1414
        %4627 = vmatpush.msra.mxu0 %v1406
        %4628 = vmatmul.f32.gmra.mxu0 %v495
        %v4629 = vpop.f32.mrf.mxu0
        %v4630 = vadd.f32 %v4610, %v4629
        %4631 = vdwg.mxu0
        %4632 = vmatpush.msra.mxu0 %v1654
        %4633 = vmatpush.msra.mxu0 %v1646
        %4634 = vmatpush.msra.mxu0 %v1638
        %4635 = vmatpush.msra.mxu0 %v1630
        %4636 = vmatpush.msra.mxu0 %v1622
        %4637 = vmatpush.msra.mxu0 %v1614
        %4638 = vmatpush.msra.mxu0 %v1606
        %4639 = vmatpush.msra.mxu0 %v1598
        %4640 = vmatpush.msra.mxu0 %v1590
        %4641 = vmatpush.msra.mxu0 %v1582
        %4642 = vmatpush.msra.mxu0 %v1574
        %4643 = vmatpush.msra.mxu0 %v1566
        %4644 = vmatpush.msra.mxu0 %v1558
        %4645 = vmatpush.msra.mxu0 %v1550
        %4646 = vmatpush.msra.mxu0 %v1542
        %4647 = vmatpush.msra.mxu0 %v1534
        %4648 = vmatmul.f32.gmra.mxu0 %v496
        %v4649 = vpop.f32.mrf.mxu0
        %v4650 = vadd.f32 %v4630, %v4649
        %4651 = vdwg.mxu0
        %4652 = vmatpush.msra.mxu0 %v1782
        %4653 = vmatpush.msra.mxu0 %v1774
        %4654 = vmatpush.msra.mxu0 %v1766
        %4655 = vmatpush.msra.mxu0 %v1758
        %4656 = vmatpush.msra.mxu0 %v1750
        %4657 = vmatpush.msra.mxu0 %v1742
        %4658 = vmatpush.msra.mxu0 %v1734
        %4659 = vmatpush.msra.mxu0 %v1726
        %4660 = vmatpush.msra.mxu0 %v1718
        %4661 = vmatpush.msra.mxu0 %v1710
        %4662 = vmatpush.msra.mxu0 %v1702
        %4663 = vmatpush.msra.mxu0 %v1694
        %4664 = vmatpush.msra.mxu0 %v1686
        %4665 = vmatpush.msra.mxu0 %v1678
        %4666 = vmatpush.msra.mxu0 %v1670
        %4667 = vmatpush.msra.mxu0 %v1662
        %4668 = vmatmul.f32.gmra.mxu0 %v497
        %v4669 = vpop.f32.mrf.mxu0
        %v4670 = vadd.f32 %v4650, %v4669
        %4671 = vdwg.mxu0
        %4672 = vmatpush.msra.mxu0 %v1910
        %4673 = vmatpush.msra.mxu0 %v1902
        %4674 = vmatpush.msra.mxu0 %v1894
        %4675 = vmatpush.msra.mxu0 %v1886
        %4676 = vmatpush.msra.mxu0 %v1878
        %4677 = vmatpush.msra.mxu0 %v1870
        %4678 = vmatpush.msra.mxu0 %v1862
        %4679 = vmatpush.msra.mxu0 %v1854
        %4680 = vmatpush.msra.mxu0 %v1846
        %4681 = vmatpush.msra.mxu0 %v1838
        %4682 = vmatpush.msra.mxu0 %v1830
        %4683 = vmatpush.msra.mxu0 %v1822
        %4684 = vmatpush.msra.mxu0 %v1814
        %4685 = vmatpush.msra.mxu0 %v1806
        %4686 = vmatpush.msra.mxu0 %v1798
        %4687 = vmatpush.msra.mxu0 %v1790
        %4688 = vmatmul.f32.gmra.mxu0 %v498
        %v4689 = vpop.f32.mrf.mxu0
        %v4690 = vadd.f32 %v4670, %v4689
        %4691 = vdwg.mxu0
        %4692 = vmatpush.msra.mxu0 %v2038
        %4693 = vmatpush.msra.mxu0 %v2030
        %4694 = vmatpush.msra.mxu0 %v2022
        %4695 = vmatpush.msra.mxu0 %v2014
        %4696 = vmatpush.msra.mxu0 %v2006
        %4697 = vmatpush.msra.mxu0 %v1998
        %4698 = vmatpush.msra.mxu0 %v1990
        %4699 = vmatpush.msra.mxu0 %v1982
        %4700 = vmatpush.msra.mxu0 %v1974
        %4701 = vmatpush.msra.mxu0 %v1966
        %4702 = vmatpush.msra.mxu0 %v1958
        %4703 = vmatpush.msra.mxu0 %v1950
        %4704 = vmatpush.msra.mxu0 %v1942
        %4705 = vmatpush.msra.mxu0 %v1934
        %4706 = vmatpush.msra.mxu0 %v1926
        %4707 = vmatpush.msra.mxu0 %v1918
        %4708 = vmatmul.f32.gmra.mxu0 %v499
        %v4709 = vpop.f32.mrf.mxu0
        %v4710 = vadd.f32 %v4690, %v4709
        %4711 = vdwg.mxu0
        %4712 = vmatpush.msra.mxu0 %v2166
        %4713 = vmatpush.msra.mxu0 %v2158
        %4714 = vmatpush.msra.mxu0 %v2150
        %4715 = vmatpush.msra.mxu0 %v2142
        %4716 = vmatpush.msra.mxu0 %v2134
        %4717 = vmatpush.msra.mxu0 %v2126
        %4718 = vmatpush.msra.mxu0 %v2118
        %4719 = vmatpush.msra.mxu0 %v2110
        %4720 = vmatpush.msra.mxu0 %v2102
        %4721 = vmatpush.msra.mxu0 %v2094
        %4722 = vmatpush.msra.mxu0 %v2086
        %4723 = vmatpush.msra.mxu0 %v2078
        %4724 = vmatpush.msra.mxu0 %v2070
        %4725 = vmatpush.msra.mxu0 %v2062
        %4726 = vmatpush.msra.mxu0 %v2054
        %4727 = vmatpush.msra.mxu0 %v2046
        %4728 = vmatmul.f32.gmra.mxu0 %v500
        %v4729 = vpop.f32.mrf.mxu0
        %v4730 = vadd.f32 %v4710, %v4729
        %4731 = vdwg.mxu0
        %4732 = vmatpush.msra.mxu0 %v2294
        %4733 = vmatpush.msra.mxu0 %v2286
        %4734 = vmatpush.msra.mxu0 %v2278
        %4735 = vmatpush.msra.mxu0 %v2270
        %4736 = vmatpush.msra.mxu0 %v2262
        %4737 = vmatpush.msra.mxu0 %v2254
        %4738 = vmatpush.msra.mxu0 %v2246
        %4739 = vmatpush.msra.mxu0 %v2238
        %4740 = vmatpush.msra.mxu0 %v2230
        %4741 = vmatpush.msra.mxu0 %v2222
        %4742 = vmatpush.msra.mxu0 %v2214
        %4743 = vmatpush.msra.mxu0 %v2206
        %4744 = vmatpush.msra.mxu0 %v2198
        %4745 = vmatpush.msra.mxu0 %v2190
        %4746 = vmatpush.msra.mxu0 %v2182
        %4747 = vmatpush.msra.mxu0 %v2174
        %4748 = vmatmul.f32.gmra.mxu0 %v501
        %v4749 = vpop.f32.mrf.mxu0
        %v4750 = vadd.f32 %v4730, %v4749
        %4751 = vdwg.mxu0
        %4752 = vmatpush.msra.mxu0 %v2422
        %4753 = vmatpush.msra.mxu0 %v2414
        %4754 = vmatpush.msra.mxu0 %v2406
        %4755 = vmatpush.msra.mxu0 %v2398
        %4756 = vmatpush.msra.mxu0 %v2390
        %4757 = vmatpush.msra.mxu0 %v2382
        %4758 = vmatpush.msra.mxu0 %v2374
        %4759 = vmatpush.msra.mxu0 %v2366
        %4760 = vmatpush.msra.mxu0 %v2358
        %4761 = vmatpush.msra.mxu0 %v2350
        %4762 = vmatpush.msra.mxu0 %v2342
        %4763 = vmatpush.msra.mxu0 %v2334
        %4764 = vmatpush.msra.mxu0 %v2326
        %4765 = vmatpush.msra.mxu0 %v2318
        %4766 = vmatpush.msra.mxu0 %v2310
        %4767 = vmatpush.msra.mxu0 %v2302
        %4768 = vmatmul.f32.gmra.mxu0 %v502
        %v4769 = vpop.f32.mrf.mxu0
        %v4770 = vadd.f32 %v4750, %v4769
        %4771 = vdwg.mxu0
        %4772 = vmatpush.msra.mxu0 %v2550
        %4773 = vmatpush.msra.mxu0 %v2542
        %4774 = vmatpush.msra.mxu0 %v2534
        %4775 = vmatpush.msra.mxu0 %v2526
        %4776 = vmatpush.msra.mxu0 %v2518
        %4777 = vmatpush.msra.mxu0 %v2510
        %4778 = vmatpush.msra.mxu0 %v2502
        %4779 = vmatpush.msra.mxu0 %v2494
        %4780 = vmatpush.msra.mxu0 %v2486
        %4781 = vmatpush.msra.mxu0 %v2478
        %4782 = vmatpush.msra.mxu0 %v2470
        %4783 = vmatpush.msra.mxu0 %v2462
        %4784 = vmatpush.msra.mxu0 %v2454
        %4785 = vmatpush.msra.mxu0 %v2446
        %4786 = vmatpush.msra.mxu0 %v2438
        %4787 = vmatpush.msra.mxu0 %v2430
        %4788 = vmatmul.f32.gmra.mxu0 %v503
        %v4789 = vpop.f32.mrf.mxu0
        %v4790 = vadd.f32 %v4770, %v4789
        %4791 = vdwg.mxu0
        %4792 = vmatpush.msra.mxu0 %v631
        %4793 = vmatpush.msra.mxu0 %v623
        %4794 = vmatpush.msra.mxu0 %v615
        %4795 = vmatpush.msra.mxu0 %v607
        %4796 = vmatpush.msra.mxu0 %v599
        %4797 = vmatpush.msra.mxu0 %v591
        %4798 = vmatpush.msra.mxu0 %v583
        %4799 = vmatpush.msra.mxu0 %v575
        %4800 = vmatpush.msra.mxu0 %v567
        %4801 = vmatpush.msra.mxu0 %v559
        %4802 = vmatpush.msra.mxu0 %v551
        %4803 = vmatpush.msra.mxu0 %v543
        %4804 = vmatpush.msra.mxu0 %v535
        %4805 = vmatpush.msra.mxu0 %v527
        %4806 = vmatpush.msra.mxu0 %v519
        %4807 = vmatpush.msra.mxu0 %v511
        %4808 = vmatmul.f32.gmra.mxu0 %v488
        %v4809 = vpop.f32.mrf.mxu0
        %v4810 = vadd.f32 0.0, %v4809
        %4811 = vdwg.mxu0
        %4812 = vmatpush.msra.mxu0 %v759
        %4813 = vmatpush.msra.mxu0 %v751
        %4814 = vmatpush.msra.mxu0 %v743
        %4815 = vmatpush.msra.mxu0 %v735
        %4816 = vmatpush.msra.mxu0 %v727
        %4817 = vmatpush.msra.mxu0 %v719
        %4818 = vmatpush.msra.mxu0 %v711
        %4819 = vmatpush.msra.mxu0 %v703
        %4820 = vmatpush.msra.mxu0 %v695
        %4821 = vmatpush.msra.mxu0 %v687
        %4822 = vmatpush.msra.mxu0 %v679
        %4823 = vmatpush.msra.mxu0 %v671
        %4824 = vmatpush.msra.mxu0 %v663
        %4825 = vmatpush.msra.mxu0 %v655
        %4826 = vmatpush.msra.mxu0 %v647
        %4827 = vmatpush.msra.mxu0 %v639
        %4828 = vmatmul.f32.gmra.mxu0 %v489
        %v4829 = vpop.f32.mrf.mxu0
        %v4830 = vadd.f32 %v4810, %v4829
        %4831 = vdwg.mxu0
        %4832 = vmatpush.msra.mxu0 %v887
        %4833 = vmatpush.msra.mxu0 %v879
        %4834 = vmatpush.msra.mxu0 %v871
        %4835 = vmatpush.msra.mxu0 %v863
        %4836 = vmatpush.msra.mxu0 %v855
        %4837 = vmatpush.msra.mxu0 %v847
        %4838 = vmatpush.msra.mxu0 %v839
        %4839 = vmatpush.msra.mxu0 %v831
        %4840 = vmatpush.msra.mxu0 %v823
        %4841 = vmatpush.msra.mxu0 %v815
        %4842 = vmatpush.msra.mxu0 %v807
        %4843 = vmatpush.msra.mxu0 %v799
        %4844 = vmatpush.msra.mxu0 %v791
        %4845 = vmatpush.msra.mxu0 %v783
        %4846 = vmatpush.msra.mxu0 %v775
        %4847 = vmatpush.msra.mxu0 %v767
        %4848 = vmatmul.f32.gmra.mxu0 %v490
        %v4849 = vpop.f32.mrf.mxu0
        %v4850 = vadd.f32 %v4830, %v4849
        %4851 = vdwg.mxu0
        %4852 = vmatpush.msra.mxu0 %v1015
        %4853 = vmatpush.msra.mxu0 %v1007
        %4854 = vmatpush.msra.mxu0 %v999
        %4855 = vmatpush.msra.mxu0 %v991
        %4856 = vmatpush.msra.mxu0 %v983
        %4857 = vmatpush.msra.mxu0 %v975
        %4858 = vmatpush.msra.mxu0 %v967
        %4859 = vmatpush.msra.mxu0 %v959
        %4860 = vmatpush.msra.mxu0 %v951
        %4861 = vmatpush.msra.mxu0 %v943
        %4862 = vmatpush.msra.mxu0 %v935
        %4863 = vmatpush.msra.mxu0 %v927
        %4864 = vmatpush.msra.mxu0 %v919
        %4865 = vmatpush.msra.mxu0 %v911
        %4866 = vmatpush.msra.mxu0 %v903
        %4867 = vmatpush.msra.mxu0 %v895
        %4868 = vmatmul.f32.gmra.mxu0 %v491
        %v4869 = vpop.f32.mrf.mxu0
        %v4870 = vadd.f32 %v4850, %v4869
        %4871 = vdwg.mxu0
        %4872 = vmatpush.msra.mxu0 %v1143
        %4873 = vmatpush.msra.mxu0 %v1135
        %4874 = vmatpush.msra.mxu0 %v1127
        %4875 = vmatpush.msra.mxu0 %v1119
        %4876 = vmatpush.msra.mxu0 %v1111
        %4877 = vmatpush.msra.mxu0 %v1103
        %4878 = vmatpush.msra.mxu0 %v1095
        %4879 = vmatpush.msra.mxu0 %v1087
        %4880 = vmatpush.msra.mxu0 %v1079
        %4881 = vmatpush.msra.mxu0 %v1071
        %4882 = vmatpush.msra.mxu0 %v1063
        %4883 = vmatpush.msra.mxu0 %v1055
        %4884 = vmatpush.msra.mxu0 %v1047
        %4885 = vmatpush.msra.mxu0 %v1039
        %4886 = vmatpush.msra.mxu0 %v1031
        %4887 = vmatpush.msra.mxu0 %v1023
        %4888 = vmatmul.f32.gmra.mxu0 %v492
        %v4889 = vpop.f32.mrf.mxu0
        %v4890 = vadd.f32 %v4870, %v4889
        %4891 = vdwg.mxu0
        %4892 = vmatpush.msra.mxu0 %v1271
        %4893 = vmatpush.msra.mxu0 %v1263
        %4894 = vmatpush.msra.mxu0 %v1255
        %4895 = vmatpush.msra.mxu0 %v1247
        %4896 = vmatpush.msra.mxu0 %v1239
        %4897 = vmatpush.msra.mxu0 %v1231
        %4898 = vmatpush.msra.mxu0 %v1223
        %4899 = vmatpush.msra.mxu0 %v1215
        %4900 = vmatpush.msra.mxu0 %v1207
        %4901 = vmatpush.msra.mxu0 %v1199
        %4902 = vmatpush.msra.mxu0 %v1191
        %4903 = vmatpush.msra.mxu0 %v1183
        %4904 = vmatpush.msra.mxu0 %v1175
        %4905 = vmatpush.msra.mxu0 %v1167
        %4906 = vmatpush.msra.mxu0 %v1159
        %4907 = vmatpush.msra.mxu0 %v1151
        %4908 = vmatmul.f32.gmra.mxu0 %v493
        %v4909 = vpop.f32.mrf.mxu0
        %v4910 = vadd.f32 %v4890, %v4909
        %4911 = vdwg.mxu0
        %4912 = vmatpush.msra.mxu0 %v1399
        %4913 = vmatpush.msra.mxu0 %v1391
        %4914 = vmatpush.msra.mxu0 %v1383
        %4915 = vmatpush.msra.mxu0 %v1375
        %4916 = vmatpush.msra.mxu0 %v1367
        %4917 = vmatpush.msra.mxu0 %v1359
        %4918 = vmatpush.msra.mxu0 %v1351
        %4919 = vmatpush.msra.mxu0 %v1343
        %4920 = vmatpush.msra.mxu0 %v1335
        %4921 = vmatpush.msra.mxu0 %v1327
        %4922 = vmatpush.msra.mxu0 %v1319
        %4923 = vmatpush.msra.mxu0 %v1311
        %4924 = vmatpush.msra.mxu0 %v1303
        %4925 = vmatpush.msra.mxu0 %v1295
        %4926 = vmatpush.msra.mxu0 %v1287
        %4927 = vmatpush.msra.mxu0 %v1279
        %4928 = vmatmul.f32.gmra.mxu0 %v494
        %v4929 = vpop.f32.mrf.mxu0
        %v4930 = vadd.f32 %v4910, %v4929
        %4931 = vdwg.mxu0
        %4932 = vmatpush.msra.mxu0 %v1527
        %4933 = vmatpush.msra.mxu0 %v1519
        %4934 = vmatpush.msra.mxu0 %v1511
        %4935 = vmatpush.msra.mxu0 %v1503
        %4936 = vmatpush.msra.mxu0 %v1495
        %4937 = vmatpush.msra.mxu0 %v1487
        %4938 = vmatpush.msra.mxu0 %v1479
        %4939 = vmatpush.msra.mxu0 %v1471
        %4940 = vmatpush.msra.mxu0 %v1463
        %4941 = vmatpush.msra.mxu0 %v1455
        %4942 = vmatpush.msra.mxu0 %v1447
        %4943 = vmatpush.msra.mxu0 %v1439
        %4944 = vmatpush.msra.mxu0 %v1431
        %4945 = vmatpush.msra.mxu0 %v1423
        %4946 = vmatpush.msra.mxu0 %v1415
        %4947 = vmatpush.msra.mxu0 %v1407
        %4948 = vmatmul.f32.gmra.mxu0 %v495
        %v4949 = vpop.f32.mrf.mxu0
        %v4950 = vadd.f32 %v4930, %v4949
        %4951 = vdwg.mxu0
        %4952 = vmatpush.msra.mxu0 %v1655
        %4953 = vmatpush.msra.mxu0 %v1647
        %4954 = vmatpush.msra.mxu0 %v1639
        %4955 = vmatpush.msra.mxu0 %v1631
        %4956 = vmatpush.msra.mxu0 %v1623
        %4957 = vmatpush.msra.mxu0 %v1615
        %4958 = vmatpush.msra.mxu0 %v1607
        %4959 = vmatpush.msra.mxu0 %v1599
        %4960 = vmatpush.msra.mxu0 %v1591
        %4961 = vmatpush.msra.mxu0 %v1583
        %4962 = vmatpush.msra.mxu0 %v1575
        %4963 = vmatpush.msra.mxu0 %v1567
        %4964 = vmatpush.msra.mxu0 %v1559
        %4965 = vmatpush.msra.mxu0 %v1551
        %4966 = vmatpush.msra.mxu0 %v1543
        %4967 = vmatpush.msra.mxu0 %v1535
        %4968 = vmatmul.f32.gmra.mxu0 %v496
        %v4969 = vpop.f32.mrf.mxu0
        %v4970 = vadd.f32 %v4950, %v4969
        %4971 = vdwg.mxu0
        %4972 = vmatpush.msra.mxu0 %v1783
        %4973 = vmatpush.msra.mxu0 %v1775
        %4974 = vmatpush.msra.mxu0 %v1767
        %4975 = vmatpush.msra.mxu0 %v1759
        %4976 = vmatpush.msra.mxu0 %v1751
        %4977 = vmatpush.msra.mxu0 %v1743
        %4978 = vmatpush.msra.mxu0 %v1735
        %4979 = vmatpush.msra.mxu0 %v1727
        %4980 = vmatpush.msra.mxu0 %v1719
        %4981 = vmatpush.msra.mxu0 %v1711
        %4982 = vmatpush.msra.mxu0 %v1703
        %4983 = vmatpush.msra.mxu0 %v1695
        %4984 = vmatpush.msra.mxu0 %v1687
        %4985 = vmatpush.msra.mxu0 %v1679
        %4986 = vmatpush.msra.mxu0 %v1671
        %4987 = vmatpush.msra.mxu0 %v1663
        %4988 = vmatmul.f32.gmra.mxu0 %v497
        %v4989 = vpop.f32.mrf.mxu0
        %v4990 = vadd.f32 %v4970, %v4989
        %4991 = vdwg.mxu0
        %4992 = vmatpush.msra.mxu0 %v1911
        %4993 = vmatpush.msra.mxu0 %v1903
        %4994 = vmatpush.msra.mxu0 %v1895
        %4995 = vmatpush.msra.mxu0 %v1887
        %4996 = vmatpush.msra.mxu0 %v1879
        %4997 = vmatpush.msra.mxu0 %v1871
        %4998 = vmatpush.msra.mxu0 %v1863
        %4999 = vmatpush.msra.mxu0 %v1855
        %5000 = vmatpush.msra.mxu0 %v1847
        %5001 = vmatpush.msra.mxu0 %v1839
        %5002 = vmatpush.msra.mxu0 %v1831
        %5003 = vmatpush.msra.mxu0 %v1823
        %5004 = vmatpush.msra.mxu0 %v1815
        %5005 = vmatpush.msra.mxu0 %v1807
        %5006 = vmatpush.msra.mxu0 %v1799
        %5007 = vmatpush.msra.mxu0 %v1791
        %5008 = vmatmul.f32.gmra.mxu0 %v498
        %v5009 = vpop.f32.mrf.mxu0
        %v5010 = vadd.f32 %v4990, %v5009
        %5011 = vdwg.mxu0
        %5012 = vmatpush.msra.mxu0 %v2039
        %5013 = vmatpush.msra.mxu0 %v2031
        %5014 = vmatpush.msra.mxu0 %v2023
        %5015 = vmatpush.msra.mxu0 %v2015
        %5016 = vmatpush.msra.mxu0 %v2007
        %5017 = vmatpush.msra.mxu0 %v1999
        %5018 = vmatpush.msra.mxu0 %v1991
        %5019 = vmatpush.msra.mxu0 %v1983
        %5020 = vmatpush.msra.mxu0 %v1975
        %5021 = vmatpush.msra.mxu0 %v1967
        %5022 = vmatpush.msra.mxu0 %v1959
        %5023 = vmatpush.msra.mxu0 %v1951
        %5024 = vmatpush.msra.mxu0 %v1943
        %5025 = vmatpush.msra.mxu0 %v1935
        %5026 = vmatpush.msra.mxu0 %v1927
        %5027 = vmatpush.msra.mxu0 %v1919
        %5028 = vmatmul.f32.gmra.mxu0 %v499
        %v5029 = vpop.f32.mrf.mxu0
        %v5030 = vadd.f32 %v5010, %v5029
        %5031 = vdwg.mxu0
        %5032 = vmatpush.msra.mxu0 %v2167
        %5033 = vmatpush.msra.mxu0 %v2159
        %5034 = vmatpush.msra.mxu0 %v2151
        %5035 = vmatpush.msra.mxu0 %v2143
        %5036 = vmatpush.msra.mxu0 %v2135
        %5037 = vmatpush.msra.mxu0 %v2127
        %5038 = vmatpush.msra.mxu0 %v2119
        %5039 = vmatpush.msra.mxu0 %v2111
        %5040 = vmatpush.msra.mxu0 %v2103
        %5041 = vmatpush.msra.mxu0 %v2095
        %5042 = vmatpush.msra.mxu0 %v2087
        %5043 = vmatpush.msra.mxu0 %v2079
        %5044 = vmatpush.msra.mxu0 %v2071
        %5045 = vmatpush.msra.mxu0 %v2063
        %5046 = vmatpush.msra.mxu0 %v2055
        %5047 = vmatpush.msra.mxu0 %v2047
        %5048 = vmatmul.f32.gmra.mxu0 %v500
        %v5049 = vpop.f32.mrf.mxu0
        %v5050 = vadd.f32 %v5030, %v5049
        %5051 = vdwg.mxu0
        %5052 = vmatpush.msra.mxu0 %v2295
        %5053 = vmatpush.msra.mxu0 %v2287
        %5054 = vmatpush.msra.mxu0 %v2279
        %5055 = vmatpush.msra.mxu0 %v2271
        %5056 = vmatpush.msra.mxu0 %v2263
        %5057 = vmatpush.msra.mxu0 %v2255
        %5058 = vmatpush.msra.mxu0 %v2247
        %5059 = vmatpush.msra.mxu0 %v2239
        %5060 = vmatpush.msra.mxu0 %v2231
        %5061 = vmatpush.msra.mxu0 %v2223
        %5062 = vmatpush.msra.mxu0 %v2215
        %5063 = vmatpush.msra.mxu0 %v2207
        %5064 = vmatpush.msra.mxu0 %v2199
        %5065 = vmatpush.msra.mxu0 %v2191
        %5066 = vmatpush.msra.mxu0 %v2183
        %5067 = vmatpush.msra.mxu0 %v2175
        %5068 = vmatmul.f32.gmra.mxu0 %v501
        %v5069 = vpop.f32.mrf.mxu0
        %v5070 = vadd.f32 %v5050, %v5069
        %5071 = vdwg.mxu0
        %5072 = vmatpush.msra.mxu0 %v2423
        %5073 = vmatpush.msra.mxu0 %v2415
        %5074 = vmatpush.msra.mxu0 %v2407
        %5075 = vmatpush.msra.mxu0 %v2399
        %5076 = vmatpush.msra.mxu0 %v2391
        %5077 = vmatpush.msra.mxu0 %v2383
        %5078 = vmatpush.msra.mxu0 %v2375
        %5079 = vmatpush.msra.mxu0 %v2367
        %5080 = vmatpush.msra.mxu0 %v2359
        %5081 = vmatpush.msra.mxu0 %v2351
        %5082 = vmatpush.msra.mxu0 %v2343
        %5083 = vmatpush.msra.mxu0 %v2335
        %5084 = vmatpush.msra.mxu0 %v2327
        %5085 = vmatpush.msra.mxu0 %v2319
        %5086 = vmatpush.msra.mxu0 %v2311
        %5087 = vmatpush.msra.mxu0 %v2303
        %5088 = vmatmul.f32.gmra.mxu0 %v502
        %v5089 = vpop.f32.mrf.mxu0
        %v5090 = vadd.f32 %v5070, %v5089
        %5091 = vdwg.mxu0
        %5092 = vmatpush.msra.mxu0 %v2551
        %5093 = vmatpush.msra.mxu0 %v2543
        %5094 = vmatpush.msra.mxu0 %v2535
        %5095 = vmatpush.msra.mxu0 %v2527
        %5096 = vmatpush.msra.mxu0 %v2519
        %5097 = vmatpush.msra.mxu0 %v2511
        %5098 = vmatpush.msra.mxu0 %v2503
        %5099 = vmatpush.msra.mxu0 %v2495
        %5100 = vmatpush.msra.mxu0 %v2487
        %5101 = vmatpush.msra.mxu0 %v2479
        %5102 = vmatpush.msra.mxu0 %v2471
        %5103 = vmatpush.msra.mxu0 %v2463
        %5104 = vmatpush.msra.mxu0 %v2455
        %5105 = vmatpush.msra.mxu0 %v2447
        %5106 = vmatpush.msra.mxu0 %v2439
        %5107 = vmatpush.msra.mxu0 %v2431
        %5108 = vmatmul.f32.gmra.mxu0 %v503
        %v5109 = vpop.f32.mrf.mxu0
        %v5110 = vadd.f32 %v5090, %v5109
        %5111 = vdwg.mxu0
        %v5112 = vadd.f32 %v480, %v2870
        %v5113 = vadd.f32 %v481, %v3190
        %v5114 = vadd.f32 %v482, %v3510
        %v5115 = vadd.f32 %v483, %v3830
        %v5116 = vadd.f32 %v484, %v4150
        %v5117 = vadd.f32 %v485, %v4470
        %v5118 = vadd.f32 %v486, %v4790
        %v5119 = vadd.f32 %v487, %v5110
        %5120 = vst [vmem:[%s442] sm:$0xff] %v5112
        %5121 = vst [vmem:[%s442 + $0x8] sm:$0xff] %v5113
        %5122 = vst [vmem:[%s442 + $0x10] sm:$0xff] %v5114
        %5123 = vst [vmem:[%s442 + $0x18] sm:$0xff] %v5115
        %5124 = vst [vmem:[%s442 + $0x20] sm:$0xff] %v5116
        %5125 = vst [vmem:[%s442 + $0x28] sm:$0xff] %v5117
        %5126 = vst [vmem:[%s442 + $0x30] sm:$0xff] %v5118
        %5127 = vst [vmem:[%s442 + $0x38] sm:$0xff] %v5119
        %p5128 = scmp.eq.s32.totalorder %s34, 3
        // Predicated region
        $region69: #{hopfield_xavier_forward.3} parent=43 // pred_check
          %p5129 = pneg %p5128
        $region70: #{hopfield_xavier_forward.3} parent=43 // pred_check_branch
          %5131 = sbr.rel (%p5129) target = $region72
        $region71: #{hopfield_xavier_forward.3} parent=43 // pred_region
          %v5132 = vld [vmem:[%s3] sm:$0xff]
          %v5133 = vld [vmem:[%s383] sm:$0xff]
          %v5134 = vld [vmem:[%s383 + $0x8] sm:$0xff]
          %v5135 = vld [vmem:[%s383 + $0x10] sm:$0xff]
          %v5136 = vld [vmem:[%s383 + $0x18] sm:$0xff]
          %v5137 = vld [vmem:[%s383 + $0x20] sm:$0xff]
          %v5138 = vld [vmem:[%s383 + $0x28] sm:$0xff]
          %v5139 = vld [vmem:[%s383 + $0x30] sm:$0xff]
          %v5140 = vld [vmem:[%s383 + $0x38] sm:$0xff]
          %v5141 = vld [vmem:[%s383 + $0x40] sm:$0xff]
          %v5142 = vld [vmem:[%s383 + $0x48] sm:$0xff]
          %v5143 = vld [vmem:[%s383 + $0x50] sm:$0xff]
          %v5144 = vld [vmem:[%s383 + $0x58] sm:$0xff]
          %v5145 = vld [vmem:[%s383 + $0x60] sm:$0xff]
          %v5146 = vld [vmem:[%s383 + $0x68] sm:$0xff]
          %v5147 = vld [vmem:[%s383 + $0x70] sm:$0xff]
          %v5148 = vld [vmem:[%s383 + $0x78] sm:$0xff]
          %v5149 = vld [vmem:[%s383 + $0x80] sm:$0xff]
          %v5150 = vld [vmem:[%s383 + $0x88] sm:$0xff]
          %v5151 = vld [vmem:[%s383 + $0x90] sm:$0xff]
          %v5152 = vld [vmem:[%s383 + $0x98] sm:$0xff]
          %v5153 = vld [vmem:[%s383 + $0xa0] sm:$0xff]
          %v5154 = vld [vmem:[%s383 + $0xa8] sm:$0xff]
          %v5155 = vld [vmem:[%s383 + $0xb0] sm:$0xff]
          %v5156 = vld [vmem:[%s383 + $0xb8] sm:$0xff]
          %v5157 = vld [vmem:[%s383 + $0xc0] sm:$0xff]
          %v5158 = vld [vmem:[%s383 + $0xc8] sm:$0xff]
          %v5159 = vld [vmem:[%s383 + $0xd0] sm:$0xff]
          %v5160 = vld [vmem:[%s383 + $0xd8] sm:$0xff]
          %v5161 = vld [vmem:[%s383 + $0xe0] sm:$0xff]
          %v5162 = vld [vmem:[%s383 + $0xe8] sm:$0xff]
          %v5163 = vld [vmem:[%s383 + $0xf0] sm:$0xff]
          %v5164 = vld [vmem:[%s383 + $0xf8] sm:$0xff]
          %v5165 = vld [vmem:[%s383 + $0x100] sm:$0xff]
          %v5166 = vld [vmem:[%s383 + $0x108] sm:$0xff]
          %v5167 = vld [vmem:[%s383 + $0x110] sm:$0xff]
          %v5168 = vld [vmem:[%s383 + $0x118] sm:$0xff]
          %v5169 = vld [vmem:[%s383 + $0x120] sm:$0xff]
          %v5170 = vld [vmem:[%s383 + $0x128] sm:$0xff]
          %v5171 = vld [vmem:[%s383 + $0x130] sm:$0xff]
          %v5172 = vld [vmem:[%s383 + $0x138] sm:$0xff]
          %v5173 = vld [vmem:[%s383 + $0x140] sm:$0xff]
          %v5174 = vld [vmem:[%s383 + $0x148] sm:$0xff]
          %v5175 = vld [vmem:[%s383 + $0x150] sm:$0xff]
          %v5176 = vld [vmem:[%s383 + $0x158] sm:$0xff]
          %v5177 = vld [vmem:[%s383 + $0x160] sm:$0xff]
          %v5178 = vld [vmem:[%s383 + $0x168] sm:$0xff]
          %v5179 = vld [vmem:[%s383 + $0x170] sm:$0xff]
          %v5180 = vld [vmem:[%s383 + $0x178] sm:$0xff]
          %v5181 = vld [vmem:[%s383 + $0x180] sm:$0xff]
          %v5182 = vld [vmem:[%s383 + $0x188] sm:$0xff]
          %v5183 = vld [vmem:[%s383 + $0x190] sm:$0xff]
          %v5184 = vld [vmem:[%s383 + $0x198] sm:$0xff]
          %v5185 = vld [vmem:[%s383 + $0x1a0] sm:$0xff]
          %v5186 = vld [vmem:[%s383 + $0x1a8] sm:$0xff]
          %v5187 = vld [vmem:[%s383 + $0x1b0] sm:$0xff]
          %v5188 = vld [vmem:[%s383 + $0x1b8] sm:$0xff]
          %v5189 = vld [vmem:[%s383 + $0x1c0] sm:$0xff]
          %v5190 = vld [vmem:[%s383 + $0x1c8] sm:$0xff]
          %v5191 = vld [vmem:[%s383 + $0x1d0] sm:$0xff]
          %v5192 = vld [vmem:[%s383 + $0x1d8] sm:$0xff]
          %v5193 = vld [vmem:[%s383 + $0x1e0] sm:$0xff]
          %v5194 = vld [vmem:[%s383 + $0x1e8] sm:$0xff]
          %v5195 = vld [vmem:[%s383 + $0x1f0] sm:$0xff]
          %v5196 = vld [vmem:[%s383 + $0x1f8] sm:$0xff]
          %v5197 = vld [vmem:[%s383 + $0x200] sm:$0xff]
          %v5198 = vld [vmem:[%s383 + $0x208] sm:$0xff]
          %v5199 = vld [vmem:[%s383 + $0x210] sm:$0xff]
          %v5200 = vld [vmem:[%s383 + $0x218] sm:$0xff]
          %v5201 = vld [vmem:[%s383 + $0x220] sm:$0xff]
          %v5202 = vld [vmem:[%s383 + $0x228] sm:$0xff]
          %v5203 = vld [vmem:[%s383 + $0x230] sm:$0xff]
          %v5204 = vld [vmem:[%s383 + $0x238] sm:$0xff]
          %v5205 = vld [vmem:[%s383 + $0x240] sm:$0xff]
          %v5206 = vld [vmem:[%s383 + $0x248] sm:$0xff]
          %v5207 = vld [vmem:[%s383 + $0x250] sm:$0xff]
          %v5208 = vld [vmem:[%s383 + $0x258] sm:$0xff]
          %v5209 = vld [vmem:[%s383 + $0x260] sm:$0xff]
          %v5210 = vld [vmem:[%s383 + $0x268] sm:$0xff]
          %v5211 = vld [vmem:[%s383 + $0x270] sm:$0xff]
          %v5212 = vld [vmem:[%s383 + $0x278] sm:$0xff]
          %v5213 = vld [vmem:[%s383 + $0x280] sm:$0xff]
          %v5214 = vld [vmem:[%s383 + $0x288] sm:$0xff]
          %v5215 = vld [vmem:[%s383 + $0x290] sm:$0xff]
          %v5216 = vld [vmem:[%s383 + $0x298] sm:$0xff]
          %v5217 = vld [vmem:[%s383 + $0x2a0] sm:$0xff]
          %v5218 = vld [vmem:[%s383 + $0x2a8] sm:$0xff]
          %v5219 = vld [vmem:[%s383 + $0x2b0] sm:$0xff]
          %v5220 = vld [vmem:[%s383 + $0x2b8] sm:$0xff]
          %v5221 = vld [vmem:[%s383 + $0x2c0] sm:$0xff]
          %v5222 = vld [vmem:[%s383 + $0x2c8] sm:$0xff]
          %v5223 = vld [vmem:[%s383 + $0x2d0] sm:$0xff]
          %v5224 = vld [vmem:[%s383 + $0x2d8] sm:$0xff]
          %v5225 = vld [vmem:[%s383 + $0x2e0] sm:$0xff]
          %v5226 = vld [vmem:[%s383 + $0x2e8] sm:$0xff]
          %v5227 = vld [vmem:[%s383 + $0x2f0] sm:$0xff]
          %v5228 = vld [vmem:[%s383 + $0x2f8] sm:$0xff]
          %v5229 = vld [vmem:[%s383 + $0x300] sm:$0xff]
          %v5230 = vld [vmem:[%s383 + $0x308] sm:$0xff]
          %v5231 = vld [vmem:[%s383 + $0x310] sm:$0xff]
          %v5232 = vld [vmem:[%s383 + $0x318] sm:$0xff]
          %v5233 = vld [vmem:[%s383 + $0x320] sm:$0xff]
          %v5234 = vld [vmem:[%s383 + $0x328] sm:$0xff]
          %v5235 = vld [vmem:[%s383 + $0x330] sm:$0xff]
          %v5236 = vld [vmem:[%s383 + $0x338] sm:$0xff]
          %v5237 = vld [vmem:[%s383 + $0x340] sm:$0xff]
          %v5238 = vld [vmem:[%s383 + $0x348] sm:$0xff]
          %v5239 = vld [vmem:[%s383 + $0x350] sm:$0xff]
          %v5240 = vld [vmem:[%s383 + $0x358] sm:$0xff]
          %v5241 = vld [vmem:[%s383 + $0x360] sm:$0xff]
          %v5242 = vld [vmem:[%s383 + $0x368] sm:$0xff]
          %v5243 = vld [vmem:[%s383 + $0x370] sm:$0xff]
          %v5244 = vld [vmem:[%s383 + $0x378] sm:$0xff]
          %v5245 = vld [vmem:[%s383 + $0x380] sm:$0xff]
          %v5246 = vld [vmem:[%s383 + $0x388] sm:$0xff]
          %v5247 = vld [vmem:[%s383 + $0x390] sm:$0xff]
          %v5248 = vld [vmem:[%s383 + $0x398] sm:$0xff]
          %v5249 = vld [vmem:[%s383 + $0x3a0] sm:$0xff]
          %v5250 = vld [vmem:[%s383 + $0x3a8] sm:$0xff]
          %v5251 = vld [vmem:[%s383 + $0x3b0] sm:$0xff]
          %v5252 = vld [vmem:[%s383 + $0x3b8] sm:$0xff]
          %v5253 = vld [vmem:[%s383 + $0x3c0] sm:$0xff]
          %v5254 = vld [vmem:[%s383 + $0x3c8] sm:$0xff]
          %v5255 = vld [vmem:[%s383 + $0x3d0] sm:$0xff]
          %v5256 = vld [vmem:[%s383 + $0x3d8] sm:$0xff]
          %v5257 = vld [vmem:[%s383 + $0x3e0] sm:$0xff]
          %v5258 = vld [vmem:[%s383 + $0x3e8] sm:$0xff]
          %v5259 = vld [vmem:[%s383 + $0x3f0] sm:$0xff]
          %v5260 = vld [vmem:[%s383 + $0x3f8] sm:$0xff]
          %v5261 = vld [vmem:[%s393] sm:$0xff]
          %v5263 = vperm.slane %v5261, 0
          %v5264 = vperm.slane %v5261, 1
          %v5265 = vperm.slane %v5261, 2
          %v5266 = vperm.slane %v5261, 3
          %v5267 = vperm.slane %v5261, 4
          %v5268 = vperm.slane %v5261, 5
          %v5269 = vperm.slane %v5261, 6
          %v5270 = vperm.slane %v5261, 7
          %5279 = vmatpush.msra.mxu0 %v5253
          %5280 = vmatpush.msra.mxu0 %v5245
          %5281 = vmatpush.msra.mxu0 %v5237
          %5282 = vmatpush.msra.mxu0 %v5229
          %5283 = vmatpush.msra.mxu0 %v5221
          %5284 = vmatpush.msra.mxu0 %v5213
          %5285 = vmatpush.msra.mxu0 %v5205
          %5286 = vmatpush.msra.mxu0 %v5197
          %5287 = vmatpush.msra.mxu0 %v5189
          %5288 = vmatpush.msra.mxu0 %v5181
          %5289 = vmatpush.msra.mxu0 %v5173
          %5290 = vmatpush.msra.mxu0 %v5165
          %5291 = vmatpush.msra.mxu0 %v5157
          %5292 = vmatpush.msra.mxu0 %v5149
          %5293 = vmatpush.msra.mxu0 %v5141
          %5294 = vmatpush.msra.mxu0 %v5133
          %5295 = vmatmul.f32.gmra.mxu0 %v5132
          %v5296 = vpop.f32.mrf.mxu0
          %v5297 = vadd.f32 %v5263, %v5296
          %5298 = vdwg.mxu0
          %5299 = vmatpush.msra.mxu0 %v5254
          %5300 = vmatpush.msra.mxu0 %v5246
          %5301 = vmatpush.msra.mxu0 %v5238
          %5302 = vmatpush.msra.mxu0 %v5230
          %5303 = vmatpush.msra.mxu0 %v5222
          %5304 = vmatpush.msra.mxu0 %v5214
          %5305 = vmatpush.msra.mxu0 %v5206
          %5306 = vmatpush.msra.mxu0 %v5198
          %5307 = vmatpush.msra.mxu0 %v5190
          %5308 = vmatpush.msra.mxu0 %v5182
          %5309 = vmatpush.msra.mxu0 %v5174
          %5310 = vmatpush.msra.mxu0 %v5166
          %5311 = vmatpush.msra.mxu0 %v5158
          %5312 = vmatpush.msra.mxu0 %v5150
          %5313 = vmatpush.msra.mxu0 %v5142
          %5314 = vmatpush.msra.mxu0 %v5134
          %5315 = vmatmul.f32.gmra.mxu0 %v5132
          %v5316 = vpop.f32.mrf.mxu0
          %v5317 = vadd.f32 %v5264, %v5316
          %5318 = vdwg.mxu0
          %5319 = vmatpush.msra.mxu0 %v5255
          %5320 = vmatpush.msra.mxu0 %v5247
          %5321 = vmatpush.msra.mxu0 %v5239
          %5322 = vmatpush.msra.mxu0 %v5231
          %5323 = vmatpush.msra.mxu0 %v5223
          %5324 = vmatpush.msra.mxu0 %v5215
          %5325 = vmatpush.msra.mxu0 %v5207
          %5326 = vmatpush.msra.mxu0 %v5199
          %5327 = vmatpush.msra.mxu0 %v5191
          %5328 = vmatpush.msra.mxu0 %v5183
          %5329 = vmatpush.msra.mxu0 %v5175
          %5330 = vmatpush.msra.mxu0 %v5167
          %5331 = vmatpush.msra.mxu0 %v5159
          %5332 = vmatpush.msra.mxu0 %v5151
          %5333 = vmatpush.msra.mxu0 %v5143
          %5334 = vmatpush.msra.mxu0 %v5135
          %5335 = vmatmul.f32.gmra.mxu0 %v5132
          %v5336 = vpop.f32.mrf.mxu0
          %v5337 = vadd.f32 %v5265, %v5336
          %5338 = vdwg.mxu0
          %5339 = vmatpush.msra.mxu0 %v5256
          %5340 = vmatpush.msra.mxu0 %v5248
          %5341 = vmatpush.msra.mxu0 %v5240
          %5342 = vmatpush.msra.mxu0 %v5232
          %5343 = vmatpush.msra.mxu0 %v5224
          %5344 = vmatpush.msra.mxu0 %v5216
          %5345 = vmatpush.msra.mxu0 %v5208
          %5346 = vmatpush.msra.mxu0 %v5200
          %5347 = vmatpush.msra.mxu0 %v5192
          %5348 = vmatpush.msra.mxu0 %v5184
          %5349 = vmatpush.msra.mxu0 %v5176
          %5350 = vmatpush.msra.mxu0 %v5168
          %5351 = vmatpush.msra.mxu0 %v5160
          %5352 = vmatpush.msra.mxu0 %v5152
          %5353 = vmatpush.msra.mxu0 %v5144
          %5354 = vmatpush.msra.mxu0 %v5136
          %5355 = vmatmul.f32.gmra.mxu0 %v5132
          %v5356 = vpop.f32.mrf.mxu0
          %v5357 = vadd.f32 %v5266, %v5356
          %5358 = vdwg.mxu0
          %5359 = vmatpush.msra.mxu0 %v5257
          %5360 = vmatpush.msra.mxu0 %v5249
          %5361 = vmatpush.msra.mxu0 %v5241
          %5362 = vmatpush.msra.mxu0 %v5233
          %5363 = vmatpush.msra.mxu0 %v5225
          %5364 = vmatpush.msra.mxu0 %v5217
          %5365 = vmatpush.msra.mxu0 %v5209
          %5366 = vmatpush.msra.mxu0 %v5201
          %5367 = vmatpush.msra.mxu0 %v5193
          %5368 = vmatpush.msra.mxu0 %v5185
          %5369 = vmatpush.msra.mxu0 %v5177
          %5370 = vmatpush.msra.mxu0 %v5169
          %5371 = vmatpush.msra.mxu0 %v5161
          %5372 = vmatpush.msra.mxu0 %v5153
          %5373 = vmatpush.msra.mxu0 %v5145
          %5374 = vmatpush.msra.mxu0 %v5137
          %5375 = vmatmul.f32.gmra.mxu0 %v5132
          %v5376 = vpop.f32.mrf.mxu0
          %v5377 = vadd.f32 %v5267, %v5376
          %5378 = vdwg.mxu0
          %5379 = vmatpush.msra.mxu0 %v5258
          %5380 = vmatpush.msra.mxu0 %v5250
          %5381 = vmatpush.msra.mxu0 %v5242
          %5382 = vmatpush.msra.mxu0 %v5234
          %5383 = vmatpush.msra.mxu0 %v5226
          %5384 = vmatpush.msra.mxu0 %v5218
          %5385 = vmatpush.msra.mxu0 %v5210
          %5386 = vmatpush.msra.mxu0 %v5202
          %5387 = vmatpush.msra.mxu0 %v5194
          %5388 = vmatpush.msra.mxu0 %v5186
          %5389 = vmatpush.msra.mxu0 %v5178
          %5390 = vmatpush.msra.mxu0 %v5170
          %5391 = vmatpush.msra.mxu0 %v5162
          %5392 = vmatpush.msra.mxu0 %v5154
          %5393 = vmatpush.msra.mxu0 %v5146
          %5394 = vmatpush.msra.mxu0 %v5138
          %5395 = vmatmul.f32.gmra.mxu0 %v5132
          %v5396 = vpop.f32.mrf.mxu0
          %v5397 = vadd.f32 %v5268, %v5396
          %5398 = vdwg.mxu0
          %5399 = vmatpush.msra.mxu0 %v5259
          %5400 = vmatpush.msra.mxu0 %v5251
          %5401 = vmatpush.msra.mxu0 %v5243
          %5402 = vmatpush.msra.mxu0 %v5235
          %5403 = vmatpush.msra.mxu0 %v5227
          %5404 = vmatpush.msra.mxu0 %v5219
          %5405 = vmatpush.msra.mxu0 %v5211
          %5406 = vmatpush.msra.mxu0 %v5203
          %5407 = vmatpush.msra.mxu0 %v5195
          %5408 = vmatpush.msra.mxu0 %v5187
          %5409 = vmatpush.msra.mxu0 %v5179
          %5410 = vmatpush.msra.mxu0 %v5171
          %5411 = vmatpush.msra.mxu0 %v5163
          %5412 = vmatpush.msra.mxu0 %v5155
          %5413 = vmatpush.msra.mxu0 %v5147
          %5414 = vmatpush.msra.mxu0 %v5139
          %5415 = vmatmul.f32.gmra.mxu0 %v5132
          %v5416 = vpop.f32.mrf.mxu0
          %v5417 = vadd.f32 %v5269, %v5416
          %5418 = vdwg.mxu0
          %5419 = vmatpush.msra.mxu0 %v5260
          %5420 = vmatpush.msra.mxu0 %v5252
          %5421 = vmatpush.msra.mxu0 %v5244
          %5422 = vmatpush.msra.mxu0 %v5236
          %5423 = vmatpush.msra.mxu0 %v5228
          %5424 = vmatpush.msra.mxu0 %v5220
          %5425 = vmatpush.msra.mxu0 %v5212
          %5426 = vmatpush.msra.mxu0 %v5204
          %5427 = vmatpush.msra.mxu0 %v5196
          %5428 = vmatpush.msra.mxu0 %v5188
          %5429 = vmatpush.msra.mxu0 %v5180
          %5430 = vmatpush.msra.mxu0 %v5172
          %5431 = vmatpush.msra.mxu0 %v5164
          %5432 = vmatpush.msra.mxu0 %v5156
          %5433 = vmatpush.msra.mxu0 %v5148
          %5434 = vmatpush.msra.mxu0 %v5140
          %5435 = vmatmul.f32.gmra.mxu0 %v5132
          %v5436 = vpop.f32.mrf.mxu0
          %v5437 = vadd.f32 %v5270, %v5436
          %5438 = vdwg.mxu0
          %v5439 = vtanh.pop %v5297
          %v5440 = vtanh.pop %v5317
          %v5441 = vtanh.pop %v5337
          %v5442 = vtanh.pop %v5357
          %v5443 = vtanh.pop %v5377
          %v5444 = vtanh.pop %v5397
          %v5445 = vtanh.pop %v5417
          %v5446 = vtanh.pop %v5437
          %v5447 = vld [vmem:[%s442] sm:$0xff]
          %v5448 = vld [vmem:[%s442 + $0x8] sm:$0xff]
          %v5449 = vld [vmem:[%s442 + $0x10] sm:$0xff]
          %v5450 = vld [vmem:[%s442 + $0x18] sm:$0xff]
          %v5451 = vld [vmem:[%s442 + $0x20] sm:$0xff]
          %v5452 = vld [vmem:[%s442 + $0x28] sm:$0xff]
          %v5453 = vld [vmem:[%s442 + $0x30] sm:$0xff]
          %v5454 = vld [vmem:[%s442 + $0x38] sm:$0xff]
          %v5455 = vadd.f32 %v5447, %v5439
          %v5456 = vadd.f32 %v5448, %v5440
          %v5457 = vadd.f32 %v5449, %v5441
          %v5458 = vadd.f32 %v5450, %v5442
          %v5459 = vadd.f32 %v5451, %v5443
          %v5460 = vadd.f32 %v5452, %v5444
          %v5461 = vadd.f32 %v5453, %v5445
          %v5462 = vadd.f32 %v5454, %v5446
          %5463 = vst [vmem:[%s442] sm:$0xff] %v5455
          %5464 = vst [vmem:[%s442 + $0x8] sm:$0xff] %v5456
          %5465 = vst [vmem:[%s442 + $0x10] sm:$0xff] %v5457
          %5466 = vst [vmem:[%s442 + $0x18] sm:$0xff] %v5458
          %5467 = vst [vmem:[%s442 + $0x20] sm:$0xff] %v5459
          %5468 = vst [vmem:[%s442 + $0x28] sm:$0xff] %v5460
          %5469 = vst [vmem:[%s442 + $0x30] sm:$0xff] %v5461
          %5470 = vst [vmem:[%s442 + $0x38] sm:$0xff] %v5462
        $region72: #{hopfield_xavier_forward.3} parent=43 // pred_fallthru
          _
        %s5471 = sand.u32 %s202, 1
        %s5472 = scalar_lea.sflag [#allocation4], %s5471
        %s5473 = sand.u32 %s202, 1
        %s5474 = smul.addr %s5473, 64
        %s5475 = scalar_lea.vmem [#allocation11], %s5474
        // Predicated region
        $region73: #{hopfield_xavier_forward.3} parent=43 // pred_check
          %p5476 = pneg %p212
        $region74: #{hopfield_xavier_forward.3} parent=43 // pred_check_branch
          %5478 = sbr.rel (%p5476) target = $region76
        $region75: #{hopfield_xavier_forward.3} parent=43 // pred_region
          %s5479 = smul.u32 8, %s33
          %5481 = vsyncadd %s5472, 0
          %s5482 = smul.addr %s5479, 8
          %s5483 = scalar_lea.hbm %s6, %s5482
          %s5485 = sshll.u32 %s5475, 4
          %s5486 = int_to_ptr.vmem [resolvable:$true] %s5485
          %s5487 = sshll.u32 %s5483, 4
          %s5488 = int_to_ptr.hbm [resolvable:$true] %s5487
          %5490 = dma.vmem_to_hbm [thread:$0]  %s5486, 1024, %s5488, %s5472
        $region76: #{hopfield_xavier_forward.3} parent=43 // pred_fallthru
          _
      $region44: #{hopfield_xavier_forward.3} parent=5 // pred_fallthru
        _
      %p5491 = scmp.le.s32.totalorder 2, %s24
      // Predicated region
      $region77: #{hopfield_xavier_forward.3} parent=5 // pred_check
        %p5492 = pneg %p5491
      $region78: #{hopfield_xavier_forward.3} parent=5 // pred_check_branch
        %5494 = sbr.rel (%p5492) target = $region80
      $region79: #{hopfield_xavier_forward.3} parent=5 // pred_region
        %s5495 = ssub.s32 %s24, 2
        // Predicated region
        $region81: #{hopfield_xavier_forward.3} parent=79 // pred_check
          %p5496 = pneg %p218
        $region82: #{hopfield_xavier_forward.3} parent=79 // pred_check_branch
          %5498 = sbr.rel (%p5496) target = $region84
        $region83: #{hopfield_xavier_forward.3} parent=79 // pred_region
          %s5499 = sand.u32 %s203, 1
          %s5500 = scalar_lea.sflag [#allocation4], %s5499
          %s5501 = sand.u32 %s203, 1
          %s5502 = smul.addr %s5501, 64
          %s5503 = scalar_lea.vmem [#allocation11], %s5502
          %5505 = dma.done %s5500, 1024
        $region84: #{hopfield_xavier_forward.3} parent=79 // pred_fallthru
          _
      $region80: #{hopfield_xavier_forward.3} parent=5 // pred_fallthru
        _
    $region6: #{hopfield_xavier_forward.3} parent=1 // loop_footer
      %s28 = sadd.s32 1, %s24
    $region7: #{hopfield_xavier_forward.3} parent=1 // loop_footer_branch
      %23 = sbr.rel target = $region3
    $region8: #{hopfield_xavier_forward.3} parent=1 // loop_exit
      _
    %5506 = vsyncpa [#allocation3], 1
    %s5507 = scalar_lea.sflag [#allocation3], 1
    %5508 = vsyncpa %s5507, 1
    %5509 = vsyncpa [#allocation6], 1
    %s5510 = scalar_lea.sflag [#allocation6], 1
    %5511 = vsyncpa %s5510, 1
    %5512 = vsyncpa [#allocation9], 1
    %s5513 = scalar_lea.sflag [#allocation9], 1
    %5514 = vsyncpa %s5513, 1
    %5515 = vsyncpa [#allocation4], 1
    %s5516 = scalar_lea.sflag [#allocation4], 1
    %5517 = vsyncpa %s5516, 1

</llo_original>
